<compile_context>
chip_gen: v7x
topology: tpu7x:2x2x1
jax: 0.10.0
libtpu: 0.0.40
codegen_flags: <defaults>
</compile_context>

<pallas_src>
import jax
import jax.numpy as jnp
from jax import lax
from jax.experimental import pallas as pl
from jax.experimental.pallas import tpu as pltpu


# ---------------- chip-dependent grid sizing ----------------

def _dual_tc():
    """True on dual-TensorCore chips (v7x); False on v5e/v6e."""
    try:
        kind = jax.devices()[0].device_kind.lower()
    except Exception:
        return False
    return ("v7" in kind) or ("7x" in kind)


def _conv1_tile(M):
    # Split only when there is enough work per core (review: conv2-sized
    # blocks are net overhead to split).
    if _dual_tc() and M >= 512 and (M % 2 == 0) and (M // 2) % 8 == 0:
        return M // 2
    return M


# ---------------- Pallas kernels ----------------

def _conv_relu_pool_kernel(p_ref, w_ref, b_ref, o_ref):
    # p_ref: (4, tm, K)  w_ref: (K, 128)  b_ref: (1, 128)  o_ref: (tm, 128)
    four, tm, K = p_ref.shape
    Cout = w_ref.shape[1]
    # One MXU matmul over all 4 pool positions (leading-dim reshape is a view).
    z = jnp.dot(p_ref[...].reshape(four * tm, K), w_ref[...],
                preferred_element_type=jnp.float32).reshape(four, tm, Cout)
    m = jnp.maximum(jnp.maximum(z[0], z[1]), jnp.maximum(z[2], z[3]))
    o_ref[...] = jnp.maximum(m + b_ref[...], 0.0).astype(o_ref.dtype)


def conv_relu_pool(patches, w_mat, b2d, *, tm):
    four, M, K = patches.shape
    Cout = w_mat.shape[1]
    assert four == 4 and M % tm == 0
    return pl.pallas_call(
        _conv_relu_pool_kernel,
        out_shape=jax.ShapeDtypeStruct((M, Cout), jnp.float32),
        grid_spec=pltpu.PrefetchScalarGridSpec(
            num_scalar_prefetch=0,
            grid=(M // tm,),
            in_specs=[
                pl.BlockSpec((4, tm, K), lambda i: (0, i, 0)),
                pl.BlockSpec((K, Cout), lambda i: (0, 0)),
                pl.BlockSpec((1, Cout), lambda i: (0, 0)),
            ],
            out_specs=pl.BlockSpec((tm, Cout), lambda i: (i, 0)),
        ),
        compiler_params=pltpu.CompilerParams(
            dimension_semantics=("parallel",)),
    )(patches, w_mat, b2d)


def _conv2_mlp_kernel(p_ref, w2_ref, b2_ref, wf1_hbm, bf1_ref, wf2_ref, bf2_ref,
                      o_ref, wf1_vmem, y2_vmem, sem):
    # p_ref: (4, 64*B, 288) conv2 pooled patches, rows ordered (spatial, batch)
    # wf1_hbm: (64, 64, 128) fc1 weights in HBM (manual DMA target: wf1_vmem)
    # Start the 2 MiB fc1-weight DMA first so it overlaps the conv2 matmul.
    wf1_cp = pltpu.make_async_copy(wf1_hbm, wf1_vmem, sem)
    wf1_cp.start()

    four, M, K = p_ref.shape
    Cout = w2_ref.shape[1]          # 128 (64 real channels + 64 zero pad)
    B = M // 64

    # conv2: one MXU matmul over all 4 pool positions, then pool-max+bias+ReLU.
    z = jnp.dot(p_ref[...].reshape(four * M, K), w2_ref[...],
                preferred_element_type=jnp.float32).reshape(four, M, Cout)
    y2 = jnp.maximum(jnp.maximum(z[0], z[1]), jnp.maximum(z[2], z[3]))
    y2 = jnp.maximum(y2 + b2_ref[...], 0.0)        # (64*B, 128)
    y2_vmem[...] = y2[:, :64]                       # drop zero-padded channels

    # fc1: contract (spatial, channel) against wf1 without materializing the
    # (B, 4096) flatten: 64 unrolled (B,64)x(64,128) dots accumulated.
    wf1_cp.wait()
    h = jnp.zeros((B, 128), jnp.float32)
    for s in range(64):
        h = h + jnp.dot(y2_vmem[pl.ds(s * B, B), :], wf1_vmem[s],
                        preferred_element_type=jnp.float32)
    h = jnp.maximum(h + bf1_ref[...], 0.0)

    # fc2: lane-dense 128-wide output (columns >= 10 are exactly zero).
    o = jnp.dot(h, wf2_ref[...], preferred_element_type=jnp.float32) + bf2_ref[...]
    o_ref[...] = o.astype(o_ref.dtype)


def conv2_mlp(p2, w2m, b2p, wf1_3d, bf1p, wf2p, bf2p):
    four, M, K = p2.shape
    assert four == 4 and M % 64 == 0
    B = M // 64
    return pl.pallas_call(
        _conv2_mlp_kernel,
        out_shape=jax.ShapeDtypeStruct((B, 128), jnp.float32),
        grid_spec=pltpu.PrefetchScalarGridSpec(
            num_scalar_prefetch=0,
            grid=(1,),
            in_specs=[
                pl.BlockSpec((4, M, K), lambda i: (0, 0, 0)),    # p2
                pl.BlockSpec((K, 128), lambda i: (0, 0)),        # w2
                pl.BlockSpec((1, 128), lambda i: (0, 0)),        # b2
                pl.BlockSpec(memory_space=pl.ANY),               # wf1 (HBM, manual DMA)
                pl.BlockSpec((1, 128), lambda i: (0, 0)),        # bf1
                pl.BlockSpec((128, 128), lambda i: (0, 0)),      # wf2 (padded)
                pl.BlockSpec((1, 128), lambda i: (0, 0)),        # bf2 (padded)
            ],
            out_specs=pl.BlockSpec((B, 128), lambda i: (0, 0)),
            scratch_shapes=[
                pltpu.VMEM((64, 64, 128), jnp.float32),   # fc1 weight DMA target
                pltpu.VMEM((M, 64), jnp.float32),         # pooled conv2 activations
                pltpu.SemaphoreType.DMA(()),
            ],
        ),
        compiler_params=pltpu.CompilerParams(
            dimension_semantics=("arbitrary",)),
    )(p2, w2m, b2p, wf1_3d, bf1p, wf2p, bf2p)


# ---------------- JAX glue (padding / patch extraction) ----------------

def extract_pooled_patches(x_nhwc, *, kpad=0, batch_major=True):
    """(B,H,W,C) -> (4, M, 9*C + kpad) pooled im2col patches (XLA glue only).
    batch_major=True : rows ordered (b, hp, wp)   -- conv1 (output reshaped NHWC)
    batch_major=False: rows ordered (hp, wp, b)   -- conv2 (feeds spatial fc1 loop)
    """
    B, H, W, C = x_nhwc.shape
    xp = jnp.pad(x_nhwc, ((0, 0), (1, 1), (1, 1), (0, 0)))          # conv padding=1
    taps = [xp[:, dy:dy + H, dx:dx + W, :] for dy in range(3) for dx in range(3)]
    pat = jnp.stack(taps, axis=3).reshape(B, H, W, 9 * C)
    if kpad:
        pat = jnp.pad(pat, ((0, 0), (0, 0), (0, 0), (0, kpad)))     # K pad, once
    K = 9 * C + kpad
    pat = pat.reshape(B, H // 2, 2, W // 2, 2, K)
    if batch_major:
        pat = pat.transpose(2, 4, 0, 1, 3, 5)                       # (2,2,B,Hp,Wp,K)
    else:
        pat = pat.transpose(2, 4, 1, 3, 0, 5)                       # (2,2,Hp,Wp,B,K)
    return pat.reshape(4, B * (H // 2) * (W // 2), K)


def prepare_params(params):
    """One-time weight packing (done OUTSIDE the jitted forward):
       * conv weights -> (K, 128) matrices, Cout zero-padded to 128 (lane-dense),
         conv1 K padded 27->32.
       * fc1 rows regrouped to (spatial s, channel c, out) so the fused kernel
         contracts over spatial+channel directly (NCHW row idx = c*64 + s).
       * fc2 zero-padded to (128, 128) for lane-dense stores."""
    w1, b1, w2, b2, wf1, bf1, wf2, bf2 = params
    w1m = jnp.pad(w1.reshape(-1, 32), ((0, 5), (0, 96)))        # (32, 128)
    b1p = jnp.pad(b1, (0, 96)).reshape(1, 128)
    w2m = jnp.pad(w2.reshape(-1, 64), ((0, 0), (0, 64)))        # (288, 128)
    b2p = jnp.pad(b2, (0, 64)).reshape(1, 128)
    s = jnp.arange(64)
    c = jnp.arange(64)
    rows = c[None, :] * 64 + s[:, None]                         # (64 s, 64 c)
    wf1_3d = wf1[rows]                                          # (64, 64, 128)
    bf1p = bf1.reshape(1, 128)
    wf2p = jnp.pad(wf2, ((0, 0), (0, 118)))                     # (128, 128)
    bf2p = jnp.pad(bf2, (0, 118)).reshape(1, 128)
    return (w1m, b1p, w2m, b2p, wf1_3d, bf1p, wf2p, bf2p)


def cnn_forward(x_nchw, prepped):
    w1m, b1p, w2m, b2p, wf1_3d, bf1p, wf2p, bf2p = prepped
    B = x_nchw.shape[0]
    x = jnp.transpose(x_nchw, (0, 2, 3, 1))                     # NCHW -> NHWC

    # conv1 (3->32, 3x3, pad 1) + ReLU + maxpool 2x2 : 32x32 -> 16x16
    p1 = extract_pooled_patches(x, kpad=5)                      # (4, B*256, 32)
    y1 = conv_relu_pool(p1, w1m, b1p, tm=_conv1_tile(p1.shape[1]))
    y1 = y1[:, :32].reshape(B, 16, 16, 32)                      # drop zero pad

    # conv2 + ReLU + maxpool + fc1 + ReLU + fc2, fused in one pallas_call
    p2 = extract_pooled_patches(y1, batch_major=False)          # (4, 64*B, 288)
    out = conv2_mlp(p2, w2m, b2p, wf1_3d, bf1p, wf2p, bf2p)     # (B, 128)
    return out[:, :10]


# ---------------- pure-JAX reference (for correctness check) ----------------

def cnn_reference(x_nchw, params):
    w1, b1, w2, b2, wf1, bf1, wf2, bf2 = params
    dn = ('NHWC', 'HWIO', 'NHWC')
    x = jnp.transpose(x_nchw, (0, 2, 3, 1))
    y = lax.conv_general_dilated(x, w1, (1, 1), 'SAME', dimension_numbers=dn) + b1
    y = jax.nn.relu(y)
    y = lax.reduce_window(y, -jnp.inf, lax.max, (1, 2, 2, 1), (1, 2, 2, 1), 'VALID')
    y = lax.conv_general_dilated(y, w2, (1, 1), 'SAME', dimension_numbers=dn) + b2
    y = jax.nn.relu(y)
    y = lax.reduce_window(y, -jnp.inf, lax.max, (1, 2, 2, 1), (1, 2, 2, 1), 'VALID')
    B = y.shape[0]
    flat = jnp.transpose(y, (0, 3, 1, 2)).reshape(B, -1)        # NCHW flatten
    h = jax.nn.relu(flat @ wf1 + bf1)
    return h @ wf2 + bf2


# ---------------- main ----------------

if __name__ == "__main__":
    key = jax.random.PRNGKey(0)
    keys = jax.random.split(key, 9)

    def uinit(k, shape, fan_in):          # PyTorch-style U(-1/sqrt(fan_in), +)
        bound = 1.0 / (fan_in ** 0.5)
        return jax.random.uniform(k, shape, jnp.float32, -bound, bound)

    w1 = uinit(keys[0], (3, 3, 3, 32), 27)       # HWIO
    b1 = uinit(keys[1], (32,), 27)
    w2 = uinit(keys[2], (3, 3, 32, 64), 288)
    b2 = uinit(keys[3], (64,), 288)
    wf1 = uinit(keys[4], (4096, 128), 4096)      # stored (in, out)
    bf1 = uinit(keys[5], (128,), 4096)
    wf2 = uinit(keys[6], (128, 10), 128)
    bf2 = uinit(keys[7], (10,), 128)
    params = (w1, b1, w2, b2, wf1, bf1, wf2, bf2)

    # input is NCHW like PyTorch; spatial must be 32 to match fc1 = 64*8*8
    x = jax.random.normal(keys[8], (2, 3, 32, 32), jnp.float32)

    prepped = prepare_params(params)                        # one-time packing
    out = jax.block_until_ready(jax.jit(cnn_forward)(x, prepped))
    ref = cnn_reference(x, params)

    assert out.shape == (2, 10)
    if not jnp.allclose(out, ref, atol=2e-3, rtol=2e-3):
        raise AssertionError("Pallas CNN output mismatch vs JAX reference")
    print("KERNEL_OK")
</pallas_src>

<mosaic_0001>
module attributes {stable_mosaic.version = 11 : i64} {
  func.func @_conv_relu_pool_kernel(%arg0: i32, %arg1: memref<4x512x32xf32, #tpu.memory_space<vmem>>, %arg2: memref<32x128xf32, #tpu.memory_space<vmem>>, %arg3: memref<1x128xf32, #tpu.memory_space<vmem>>, %arg4: memref<512x128xf32, #tpu.memory_space<vmem>>) attributes {dimension_semantics = [#tpu.dimension_semantics<parallel>], iteration_bounds = array<i64: 1>, scalar_prefetch = 0 : i64, scratch_operands = 0 : i64, tpu.core_type = #tpu.core_type<tc>, window_params = [{transform_indices = @transform_0, window_bounds = array<i64: 4, 512, 32>}, {pipeline_mode = #tpu.pipeline_mode<synchronous>, transform_indices = @transform_1, window_bounds = array<i64: 32, 128>}, {pipeline_mode = #tpu.pipeline_mode<synchronous>, transform_indices = @transform_2, window_bounds = array<i64: 1, 128>}, {transform_indices = @transform_3, window_bounds = array<i64: 512, 128>}]} {
    %c0 = arith.constant 0 : index
    %c0_0 = arith.constant 0 : index
    %c0_1 = arith.constant 0 : index
    %0 = vector.load %arg1[%c0, %c0_0, %c0_1] : memref<4x512x32xf32, #tpu.memory_space<vmem>>, vector<4x512x32xf32>
    %1 = vector.shape_cast %0 : vector<4x512x32xf32> to vector<2048x32xf32>
    %c0_2 = arith.constant 0 : index
    %c0_3 = arith.constant 0 : index
    %2 = vector.load %arg2[%c0_2, %c0_3] : memref<32x128xf32, #tpu.memory_space<vmem>>, vector<32x128xf32>
    %cst = arith.constant dense<0.000000e+00> : vector<2048x128xf32>
    %3 = tpu.matmul %1, %2, %cst {dimension_numbers = #tpu.dot_dimension_numbers<[1], [0], [0], [1], [0, 0, 1, 1], [], []>} : vector<2048x32xf32>, vector<32x128xf32>, vector<2048x128xf32> -> vector<2048x128xf32>
    %4 = vector.shape_cast %3 : vector<2048x128xf32> to vector<4x512x128xf32>
    %5 = vector.extract_strided_slice %4 {offsets = [0, 0, 0], sizes = [1, 512, 128], strides = [1, 1, 1]} : vector<4x512x128xf32> to vector<1x512x128xf32>
    %6 = vector.shape_cast %5 : vector<1x512x128xf32> to vector<512x128xf32>
    %7 = vector.extract_strided_slice %4 {offsets = [1, 0, 0], sizes = [1, 512, 128], strides = [1, 1, 1]} : vector<4x512x128xf32> to vector<1x512x128xf32>
    %8 = vector.shape_cast %7 : vector<1x512x128xf32> to vector<512x128xf32>
    %9 = arith.maximumf %6, %8 : vector<512x128xf32>
    %10 = vector.extract_strided_slice %4 {offsets = [2, 0, 0], sizes = [1, 512, 128], strides = [1, 1, 1]} : vector<4x512x128xf32> to vector<1x512x128xf32>
    %11 = vector.shape_cast %10 : vector<1x512x128xf32> to vector<512x128xf32>
    %12 = vector.extract_strided_slice %4 {offsets = [3, 0, 0], sizes = [1, 512, 128], strides = [1, 1, 1]} : vector<4x512x128xf32> to vector<1x512x128xf32>
    %13 = vector.shape_cast %12 : vector<1x512x128xf32> to vector<512x128xf32>
    %14 = arith.maximumf %11, %13 : vector<512x128xf32>
    %15 = arith.maximumf %9, %14 : vector<512x128xf32>
    %c0_4 = arith.constant 0 : index
    %c0_5 = arith.constant 0 : index
    %16 = vector.load %arg3[%c0_4, %c0_5] : memref<1x128xf32, #tpu.memory_space<vmem>>, vector<1x128xf32>
    %17 = vector.broadcast %16 : vector<1x128xf32> to vector<512x128xf32>
    %18 = arith.addf %15, %17 : vector<512x128xf32>
    %cst_6 = arith.constant 0.000000e+00 : f32
    %19 = vector.broadcast %cst_6 : f32 to vector<512x128xf32>
    %20 = arith.maximumf %18, %19 : vector<512x128xf32>
    %c0_7 = arith.constant 0 : index
    %c0_8 = arith.constant 0 : index
    %21 = vector.load %arg4[%c0_7, %c0_8] : memref<512x128xf32, #tpu.memory_space<vmem>>, vector<512x128xf32>
    tpu.vector_store %arg4[%c0_7, %c0_8], %20 {strides = array<i32>} : memref<512x128xf32, #tpu.memory_space<vmem>>, vector<512x128xf32>,
    return
  }
  func.func @transform_0(%arg0: i32) -> (i32, i32, i32) {
    %c0_i32 = arith.constant 0 : i32
    %c0_i32_0 = arith.constant 0 : i32
    %c0_i32_1 = arith.constant 0 : i32
    return %c0_i32, %arg0, %c0_i32_0 : i32, i32, i32
  }
  func.func @transform_1(%arg0: i32) -> (i32, i32) {
    %c0_i32 = arith.constant 0 : i32
    %c0_i32_0 = arith.constant 0 : i32
    %c0_i32_1 = arith.constant 0 : i32
    return %c0_i32, %c0_i32_0 : i32, i32
  }
  func.func @transform_2(%arg0: i32) -> (i32, i32) {
    %c0_i32 = arith.constant 0 : i32
    %c0_i32_0 = arith.constant 0 : i32
    %c0_i32_1 = arith.constant 0 : i32
    return %c0_i32, %c0_i32_0 : i32, i32
  }
  func.func @transform_3(%arg0: i32) -> (i32, i32) {
    %c0_i32 = arith.constant 0 : i32
    %c0_i32_0 = arith.constant 0 : i32
    return %arg0, %c0_i32 : i32, i32
  }
}

module attributes {stable_mosaic.version = 11 : i64} {
  func.func @_conv2_mlp_kernel(%arg0: i32, %arg1: memref<4x128x288xf32, #tpu.memory_space<vmem>>, %arg2: memref<288x128xf32, #tpu.memory_space<vmem>>, %arg3: memref<1x128xf32, #tpu.memory_space<vmem>>, %arg4: memref<64x64x128xf32, #tpu.memory_space<any>>, %arg5: memref<1x128xf32, #tpu.memory_space<vmem>>, %arg6: memref<128x128xf32, #tpu.memory_space<vmem>>, %arg7: memref<1x128xf32, #tpu.memory_space<vmem>>, %arg8: memref<2x128xf32, #tpu.memory_space<vmem>>, %arg9: memref<64x64x128xf32, #tpu.memory_space<vmem>>, %arg10: memref<128x64xf32, #tpu.memory_space<vmem>>, %arg11: memref<!tpu.dma_semaphore, #tpu.memory_space<semaphore_mem>>) attributes {dimension_semantics = [#tpu.dimension_semantics<arbitrary>], iteration_bounds = array<i64: 1>, scalar_prefetch = 0 : i64, scratch_operands = 3 : i64, tpu.core_type = #tpu.core_type<tc>, window_params = [{pipeline_mode = #tpu.pipeline_mode<synchronous>, transform_indices = @transform_0, window_bounds = array<i64: 4, 128, 288>}, {pipeline_mode = #tpu.pipeline_mode<synchronous>, transform_indices = @transform_1, window_bounds = array<i64: 288, 128>}, {pipeline_mode = #tpu.pipeline_mode<synchronous>, transform_indices = @transform_2, window_bounds = array<i64: 1, 128>}, {}, {pipeline_mode = #tpu.pipeline_mode<synchronous>, transform_indices = @transform_4, window_bounds = array<i64: 1, 128>}, {pipeline_mode = #tpu.pipeline_mode<synchronous>, transform_indices = @transform_5, window_bounds = array<i64: 128, 128>}, {pipeline_mode = #tpu.pipeline_mode<synchronous>, transform_indices = @transform_6, window_bounds = array<i64: 1, 128>}, {pipeline_mode = #tpu.pipeline_mode<synchronous>, transform_indices = @transform_7, window_bounds = array<i64: 2, 128>}]} {
    tpu.enqueue_dma source(%arg4 : memref<64x64x128xf32, #tpu.memory_space<any>>) target(%arg9 : memref<64x64x128xf32, #tpu.memory_space<vmem>>) target_semaphore(%arg11 : memref<!tpu.dma_semaphore, #tpu.memory_space<semaphore_mem>>)
    %c0 = arith.constant 0 : index
    %c0_0 = arith.constant 0 : index
    %c0_1 = arith.constant 0 : index
    %0 = vector.load %arg1[%c0, %c0_0, %c0_1] : memref<4x128x288xf32, #tpu.memory_space<vmem>>, vector<4x128x288xf32>
    %1 = vector.shape_cast %0 : vector<4x128x288xf32> to vector<512x288xf32>
    %c0_2 = arith.constant 0 : index
    %c0_3 = arith.constant 0 : index
    %2 = vector.load %arg2[%c0_2, %c0_3] : memref<288x128xf32, #tpu.memory_space<vmem>>, vector<288x128xf32>
    %cst = arith.constant dense<0.000000e+00> : vector<512x128xf32>
    %3 = tpu.matmul %1, %2, %cst {dimension_numbers = #tpu.dot_dimension_numbers<[1], [0], [0], [1], [0, 0, 1, 1], [], []>} : vector<512x288xf32>, vector<288x128xf32>, vector<512x128xf32> -> vector<512x128xf32>
    %4 = vector.shape_cast %3 : vector<512x128xf32> to vector<4x128x128xf32>
    %5 = vector.extract_strided_slice %4 {offsets = [0, 0, 0], sizes = [1, 128, 128], strides = [1, 1, 1]} : vector<4x128x128xf32> to vector<1x128x128xf32>
    %6 = vector.shape_cast %5 : vector<1x128x128xf32> to vector<128x128xf32>
    %7 = vector.extract_strided_slice %4 {offsets = [1, 0, 0], sizes = [1, 128, 128], strides = [1, 1, 1]} : vector<4x128x128xf32> to vector<1x128x128xf32>
    %8 = vector.shape_cast %7 : vector<1x128x128xf32> to vector<128x128xf32>
    %9 = arith.maximumf %6, %8 : vector<128x128xf32>
    %10 = vector.extract_strided_slice %4 {offsets = [2, 0, 0], sizes = [1, 128, 128], strides = [1, 1, 1]} : vector<4x128x128xf32> to vector<1x128x128xf32>
    %11 = vector.shape_cast %10 : vector<1x128x128xf32> to vector<128x128xf32>
    %12 = vector.extract_strided_slice %4 {offsets = [3, 0, 0], sizes = [1, 128, 128], strides = [1, 1, 1]} : vector<4x128x128xf32> to vector<1x128x128xf32>
    %13 = vector.shape_cast %12 : vector<1x128x128xf32> to vector<128x128xf32>
    %14 = arith.maximumf %11, %13 : vector<128x128xf32>
    %15 = arith.maximumf %9, %14 : vector<128x128xf32>
    %c0_4 = arith.constant 0 : index
    %c0_5 = arith.constant 0 : index
    %16 = vector.load %arg3[%c0_4, %c0_5] : memref<1x128xf32, #tpu.memory_space<vmem>>, vector<1x128xf32>
    %17 = vector.broadcast %16 : vector<1x128xf32> to vector<128x128xf32>
    %18 = arith.addf %15, %17 : vector<128x128xf32>
    %cst_6 = arith.constant 0.000000e+00 : f32
    %19 = vector.broadcast %cst_6 : f32 to vector<128x128xf32>
    %20 = arith.maximumf %18, %19 : vector<128x128xf32>
    %21 = vector.extract_strided_slice %20 {offsets = [0, 0], sizes = [128, 64], strides = [1, 1]} : vector<128x128xf32> to vector<128x64xf32>
    %c0_7 = arith.constant 0 : index
    %c0_8 = arith.constant 0 : index
    %22 = vector.load %arg10[%c0_7, %c0_8] : memref<128x64xf32, #tpu.memory_space<vmem>>, vector<128x64xf32>
    tpu.vector_store %arg10[%c0_7, %c0_8], %21 {strides = array<i32>} : memref<128x64xf32, #tpu.memory_space<vmem>>, vector<128x64xf32>,
    tpu.wait_dma2 semaphore(%arg11 : memref<!tpu.dma_semaphore, #tpu.memory_space<semaphore_mem>>) src(%arg4 : memref<64x64x128xf32, #tpu.memory_space<any>>) dst(%arg9 : memref<64x64x128xf32, #tpu.memory_space<vmem>>)
    %cst_9 = arith.constant 0.000000e+00 : f32
    %23 = vector.broadcast %cst_9 : f32 to vector<2x128xf32>
    %c0_10 = arith.constant 0 : index
    %c0_11 = arith.constant 0 : index
    %24 = vector.load %arg10[%c0_10, %c0_11] : memref<128x64xf32, #tpu.memory_space<vmem>>, vector<2x64xf32>
    %c0_12 = arith.constant 0 : index
    %c0_13 = arith.constant 0 : index
    %c0_14 = arith.constant 0 : index
    %25 = vector.load %arg9[%c0_12, %c0_13, %c0_14] : memref<64x64x128xf32, #tpu.memory_space<vmem>>, vector<1x64x128xf32>
    %26 = vector.shape_cast %25 : vector<1x64x128xf32> to vector<64x128xf32>
    %cst_15 = arith.constant dense<0.000000e+00> : vector<2x128xf32>
    %27 = tpu.matmul %24, %26, %cst_15 {dimension_numbers = #tpu.dot_dimension_numbers<[1], [0], [0], [1], [0, 0, 1, 1], [], []>} : vector<2x64xf32>, vector<64x128xf32>, vector<2x128xf32> -> vector<2x128xf32>
    %28 = arith.addf %23, %27 : vector<2x128xf32>
    %c2 = arith.constant 2 : index
    %c0_16 = arith.constant 0 : index
    %29 = vector.load %arg10[%c2, %c0_16] : memref<128x64xf32, #tpu.memory_space<vmem>>, vector<2x64xf32>
    %c1 = arith.constant 1 : index
    %c0_17 = arith.constant 0 : index
    %c0_18 = arith.constant 0 : index
    %30 = vector.load %arg9[%c1, %c0_17, %c0_18] : memref<64x64x128xf32, #tpu.memory_space<vmem>>, vector<1x64x128xf32>
    %31 = vector.shape_cast %30 : vector<1x64x128xf32> to vector<64x128xf32>
    %cst_19 = arith.constant dense<0.000000e+00> : vector<2x128xf32>
    %32 = tpu.matmul %29, %31, %cst_19 {dimension_numbers = #tpu.dot_dimension_numbers<[1], [0], [0], [1], [0, 0, 1, 1], [], []>} : vector<2x64xf32>, vector<64x128xf32>, vector<2x128xf32> -> vector<2x128xf32>
    %33 = arith.addf %28, %32 : vector<2x128xf32>
    %c4 = arith.constant 4 : index
    %c0_20 = arith.constant 0 : index
    %34 = vector.load %arg10[%c4, %c0_20] : memref<128x64xf32, #tpu.memory_space<vmem>>, vector<2x64xf32>
    %c2_21 = arith.constant 2 : index
    %c0_22 = arith.constant 0 : index
    %c0_23 = arith.constant 0 : index
    %35 = vector.load %arg9[%c2_21, %c0_22, %c0_23] : memref<64x64x128xf32, #tpu.memory_space<vmem>>, vector<1x64x128xf32>
    %36 = vector.shape_cast %35 : vector<1x64x128xf32> to vector<64x128xf32>
    %cst_24 = arith.constant dense<0.000000e+00> : vector<2x128xf32>
    %37 = tpu.matmul %34, %36, %cst_24 {dimension_numbers = #tpu.dot_dimension_numbers<[1], [0], [0], [1], [0, 0, 1, 1], [], []>} : vector<2x64xf32>, vector<64x128xf32>, vector<2x128xf32> -> vector<2x128xf32>
    %38 = arith.addf %33, %37 : vector<2x128xf32>
    %c6 = arith.constant 6 : index
    %c0_25 = arith.constant 0 : index
    %39 = vector.load %arg10[%c6, %c0_25] : memref<128x64xf32, #tpu.memory_space<vmem>>, vector<2x64xf32>
    %c3 = arith.constant 3 : index
    %c0_26 = arith.constant 0 : index
    %c0_27 = arith.constant 0 : index
    %40 = vector.load %arg9[%c3, %c0_26, %c0_27] : memref<64x64x128xf32, #tpu.memory_space<vmem>>, vector<1x64x128xf32>
    %41 = vector.shape_cast %40 : vector<1x64x128xf32> to vector<64x128xf32>
    %cst_28 = arith.constant dense<0.000000e+00> : vector<2x128xf32>
    %42 = tpu.matmul %39, %41, %cst_28 {dimension_numbers = #tpu.dot_dimension_numbers<[1], [0], [0], [1], [0, 0, 1, 1], [], []>} : vector<2x64xf32>, vector<64x128xf32>, vector<2x128xf32> -> vector<2x128xf32>
    %43 = arith.addf %38, %42 : vector<2x128xf32>
    %c8 = arith.constant 8 : index
    %c0_29 = arith.constant 0 : index
    %44 = vector.load %arg10[%c8, %c0_29] : memref<128x64xf32, #tpu.memory_space<vmem>>, vector<2x64xf32>
    %c4_30 = arith.constant 4 : index
    %c0_31 = arith.constant 0 : index
    %c0_32 = arith.constant 0 : index
    %45 = vector.load %arg9[%c4_30, %c0_31, %c0_32] : memref<64x64x128xf32, #tpu.memory_space<vmem>>, vector<1x64x128xf32>
    %46 = vector.shape_cast %45 : vector<1x64x128xf32> to vector<64x128xf32>
    %cst_33 = arith.constant dense<0.000000e+00> : vector<2x128xf32>
    %47 = tpu.matmul %44, %46, %cst_33 {dimension_numbers = #tpu.dot_dimension_numbers<[1], [0], [0], [1], [0, 0, 1, 1], [], []>} : vector<2x64xf32>, vector<64x128xf32>, vector<2x128xf32> -> vector<2x128xf32>
    %48 = arith.addf %43, %47 : vector<2x128xf32>
    %c10 = arith.constant 10 : index
    %c0_34 = arith.constant 0 : index
    %49 = vector.load %arg10[%c10, %c0_34] : memref<128x64xf32, #tpu.memory_space<vmem>>, vector<2x64xf32>
    %c5 = arith.constant 5 : index
    %c0_35 = arith.constant 0 : index
    %c0_36 = arith.constant 0 : index
    %50 = vector.load %arg9[%c5, %c0_35, %c0_36] : memref<64x64x128xf32, #tpu.memory_space<vmem>>, vector<1x64x128xf32>
    %51 = vector.shape_cast %50 : vector<1x64x128xf32> to vector<64x128xf32>
    %cst_37 = arith.constant dense<0.000000e+00> : vector<2x128xf32>
    %52 = tpu.matmul %49, %51, %cst_37 {dimension_numbers = #tpu.dot_dimension_numbers<[1], [0], [0], [1], [0, 0, 1, 1], [], []>} : vector<2x64xf32>, vector<64x128xf32>, vector<2x128xf32> -> vector<2x128xf32>
    %53 = arith.addf %48, %52 : vector<2x128xf32>
    %c12 = arith.constant 12 : index
    %c0_38 = arith.constant 0 : index
    %54 = vector.load %arg10[%c12, %c0_38] : memref<128x64xf32, #tpu.memory_space<vmem>>, vector<2x64xf32>
    %c6_39 = arith.constant 6 : index
    %c0_40 = arith.constant 0 : index
    %c0_41 = arith.constant 0 : index
    %55 = vector.load %arg9[%c6_39, %c0_40, %c0_41] : memref<64x64x128xf32, #tpu.memory_space<vmem>>, vector<1x64x128xf32>
    %56 = vector.shape_cast %55 : vector<1x64x128xf32> to vector<64x128xf32>
    %cst_42 = arith.constant dense<0.000000e+00> : vector<2x128xf32>
    %57 = tpu.matmul %54, %56, %cst_42 {dimension_numbers = #tpu.dot_dimension_numbers<[1], [0], [0], [1], [0, 0, 1, 1], [], []>} : vector<2x64xf32>, vector<64x128xf32>, vector<2x128xf32> -> vector<2x128xf32>
    %58 = arith.addf %53, %57 : vector<2x128xf32>
    %c14 = arith.constant 14 : index
    %c0_43 = arith.constant 0 : index
    %59 = vector.load %arg10[%c14, %c0_43] : memref<128x64xf32, #tpu.memory_space<vmem>>, vector<2x64xf32>
    %c7 = arith.constant 7 : index
    %c0_44 = arith.constant 0 : index
    %c0_45 = arith.constant 0 : index
    %60 = vector.load %arg9[%c7, %c0_44, %c0_45] : memref<64x64x128xf32, #tpu.memory_space<vmem>>, vector<1x64x128xf32>
    %61 = vector.shape_cast %60 : vector<1x64x128xf32> to vector<64x128xf32>
    %cst_46 = arith.constant dense<0.000000e+00> : vector<2x128xf32>
    %62 = tpu.matmul %59, %61, %cst_46 {dimension_numbers = #tpu.dot_dimension_numbers<[1], [0], [0], [1], [0, 0, 1, 1], [], []>} : vector<2x64xf32>, vector<64x128xf32>, vector<2x128xf32> -> vector<2x128xf32>
    %63 = arith.addf %58, %62 : vector<2x128xf32>
    %c16 = arith.constant 16 : index
    %c0_47 = arith.constant 0 : index
    %64 = vector.load %arg10[%c16, %c0_47] : memref<128x64xf32, #tpu.memory_space<vmem>>, vector<2x64xf32>
    %c8_48 = arith.constant 8 : index
    %c0_49 = arith.constant 0 : index
    %c0_50 = arith.constant 0 : index
    %65 = vector.load %arg9[%c8_48, %c0_49, %c0_50] : memref<64x64x128xf32, #tpu.memory_space<vmem>>, vector<1x64x128xf32>
    %66 = vector.shape_cast %65 : vector<1x64x128xf32> to vector<64x128xf32>
    %cst_51 = arith.constant dense<0.000000e+00> : vector<2x128xf32>
    %67 = tpu.matmul %64, %66, %cst_51 {dimension_numbers = #tpu.dot_dimension_numbers<[1], [0], [0], [1], [0, 0, 1, 1], [], []>} : vector<2x64xf32>, vector<64x128xf32>, vector<2x128xf32> -> vector<2x128xf32>
    %68 = arith.addf %63, %67 : vector<2x128xf32>
    %c18 = arith.constant 18 : index
    %c0_52 = arith.constant 0 : index
    %69 = vector.load %arg10[%c18, %c0_52] : memref<128x64xf32, #tpu.memory_space<vmem>>, vector<2x64xf32>
    %c9 = arith.constant 9 : index
    %c0_53 = arith.constant 0 : index
    %c0_54 = arith.constant 0 : index
    %70 = vector.load %arg9[%c9, %c0_53, %c0_54] : memref<64x64x128xf32, #tpu.memory_space<vmem>>, vector<1x64x128xf32>
    %71 = vector.shape_cast %70 : vector<1x64x128xf32> to vector<64x128xf32>
    %cst_55 = arith.constant dense<0.000000e+00> : vector<2x128xf32>
    %72 = tpu.matmul %69, %71, %cst_55 {dimension_numbers = #tpu.dot_dimension_numbers<[1], [0], [0], [1], [0, 0, 1, 1], [], []>} : vector<2x64xf32>, vector<64x128xf32>, vector<2x128xf32> -> vector<2x128xf32>
    %73 = arith.addf %68, %72 : vector<2x128xf32>
    %c20 = arith.constant 20 : index
    %c0_56 = arith.constant 0 : index
    %74 = vector.load %arg10[%c20, %c0_56] : memref<128x64xf32, #tpu.memory_space<vmem>>, vector<2x64xf32>
    %c10_57 = arith.constant 10 : index
    %c0_58 = arith.constant 0 : index
    %c0_59 = arith.constant 0 : index
    %75 = vector.load %arg9[%c10_57, %c0_58, %c0_59] : memref<64x64x128xf32, #tpu.memory_space<vmem>>, vector<1x64x128xf32>
    %76 = vector.shape_cast %75 : vector<1x64x128xf32> to vector<64x128xf32>
    %cst_60 = arith.constant dense<0.000000e+00> : vector<2x128xf32>
    %77 = tpu.matmul %74, %76, %cst_60 {dimension_numbers = #tpu.dot_dimension_numbers<[1], [0], [0], [1], [0, 0, 1, 1], [], []>} : vector<2x64xf32>, vector<64x128xf32>, vector<2x128xf32> -> vector<2x128xf32>
    %78 = arith.addf %73, %77 : vector<2x128xf32>
    %c22 = arith.constant 22 : index
    %c0_61 = arith.constant 0 : index
    %79 = vector.load %arg10[%c22, %c0_61] : memref<128x64xf32, #tpu.memory_space<vmem>>, vector<2x64xf32>
    %c11 = arith.constant 11 : index
    %c0_62 = arith.constant 0 : index
    %c0_63 = arith.constant 0 : index
    %80 = vector.load %arg9[%c11, %c0_62, %c0_63] : memref<64x64x128xf32, #tpu.memory_space<vmem>>, vector<1x64x128xf32>
    %81 = vector.shape_cast %80 : vector<1x64x128xf32> to vector<64x128xf32>
    %cst_64 = arith.constant dense<0.000000e+00> : vector<2x128xf32>
    %82 = tpu.matmul %79, %81, %cst_64 {dimension_numbers = #tpu.dot_dimension_numbers<[1], [0], [0], [1], [0, 0, 1, 1], [], []>} : vector<2x64xf32>, vector<64x128xf32>, vector<2x128xf32> -> vector<2x128xf32>
    %83 = arith.addf %78, %82 : vector<2x128xf32>
    %c24 = arith.constant 24 : index
    %c0_65 = arith.constant 0 : index
    %84 = vector.load %arg10[%c24, %c0_65] : memref<128x64xf32, #tpu.memory_space<vmem>>, vector<2x64xf32>
    %c12_66 = arith.constant 12 : index
    %c0_67 = arith.constant 0 : index
    %c0_68 = arith.constant 0 : index
    %85 = vector.load %arg9[%c12_66, %c0_67, %c0_68] : memref<64x64x128xf32, #tpu.memory_space<vmem>>, vector<1x64x128xf32>
    %86 = vector.shape_cast %85 : vector<1x64x128xf32> to vector<64x128xf32>
    %cst_69 = arith.constant dense<0.000000e+00> : vector<2x128xf32>
    %87 = tpu.matmul %84, %86, %cst_69 {dimension_numbers = #tpu.dot_dimension_numbers<[1], [0], [0], [1], [0, 0, 1, 1], [], []>} : vector<2x64xf32>, vector<64x128xf32>, vector<2x128xf32> -> vector<2x128xf32>
    %88 = arith.addf %83, %87 : vector<2x128xf32>
    %c26 = arith.constant 26 : index
    %c0_70 = arith.constant 0 : index
    %89 = vector.load %arg10[%c26, %c0_70] : memref<128x64xf32, #tpu.memory_space<vmem>>, vector<2x64xf32>
    %c13 = arith.constant 13 : index
    %c0_71 = arith.constant 0 : index
    %c0_72 = arith.constant 0 : index
    %90 = vector.load %arg9[%c13, %c0_71, %c0_72] : memref<64x64x128xf32, #tpu.memory_space<vmem>>, vector<1x64x128xf32>
    %91 = vector.shape_cast %90 : vector<1x64x128xf32> to vector<64x128xf32>
    %cst_73 = arith.constant dense<0.000000e+00> : vector<2x128xf32>
    %92 = tpu.matmul %89, %91, %cst_73 {dimension_numbers = #tpu.dot_dimension_numbers<[1], [0], [0], [1], [0, 0, 1, 1], [], []>} : vector<2x64xf32>, vector<64x128xf32>, vector<2x128xf32> -> vector<2x128xf32>
    %93 = arith.addf %88, %92 : vector<2x128xf32>
    %c28 = arith.constant 28 : index
    %c0_74 = arith.constant 0 : index
    %94 = vector.load %arg10[%c28, %c0_74] : memref<128x64xf32, #tpu.memory_space<vmem>>, vector<2x64xf32>
    %c14_75 = arith.constant 14 : index
    %c0_76 = arith.constant 0 : index
    %c0_77 = arith.constant 0 : index
    %95 = vector.load %arg9[%c14_75, %c0_76, %c0_77] : memref<64x64x128xf32, #tpu.memory_space<vmem>>, vector<1x64x128xf32>
    %96 = vector.shape_cast %95 : vector<1x64x128xf32> to vector<64x128xf32>
    %cst_78 = arith.constant dense<0.000000e+00> : vector<2x128xf32>
    %97 = tpu.matmul %94, %96, %cst_78 {dimension_numbers = #tpu.dot_dimension_numbers<[1], [0], [0], [1], [0, 0, 1, 1], [], []>} : vector<2x64xf32>, vector<64x128xf32>, vector<2x128xf32> -> vector<2x128xf32>
    %98 = arith.addf %93, %97 : vector<2x128xf32>
    %c30 = arith.constant 30 : index
    %c0_79 = arith.constant 0 : index
    %99 = vector.load %arg10[%c30, %c0_79] : memref<128x64xf32, #tpu.memory_space<vmem>>, vector<2x64xf32>
    %c15 = arith.constant 15 : index
    %c0_80 = arith.constant 0 : index
    %c0_81 = arith.constant 0 : index
    %100 = vector.load %arg9[%c15, %c0_80, %c0_81] : memref<64x64x128xf32, #tpu.memory_space<vmem>>, vector<1x64x128xf32>
    %101 = vector.shape_cast %100 : vector<1x64x128xf32> to vector<64x128xf32>
    %cst_82 = arith.constant dense<0.000000e+00> : vector<2x128xf32>
    %102 = tpu.matmul %99, %101, %cst_82 {dimension_numbers = #tpu.dot_dimension_numbers<[1], [0], [0], [1], [0, 0, 1, 1], [], []>} : vector<2x64xf32>, vector<64x128xf32>, vector<2x128xf32> -> vector<2x128xf32>
    %103 = arith.addf %98, %102 : vector<2x128xf32>
    %c32 = arith.constant 32 : index
    %c0_83 = arith.constant 0 : index
    %104 = vector.load %arg10[%c32, %c0_83] : memref<128x64xf32, #tpu.memory_space<vmem>>, vector<2x64xf32>
    %c16_84 = arith.constant 16 : index
    %c0_85 = arith.constant 0 : index
    %c0_86 = arith.constant 0 : index
    %105 = vector.load %arg9[%c16_84, %c0_85, %c0_86] : memref<64x64x128xf32, #tpu.memory_space<vmem>>, vector<1x64x128xf32>
    %106 = vector.shape_cast %105 : vector<1x64x128xf32> to vector<64x128xf32>
    %cst_87 = arith.constant dense<0.000000e+00> : vector<2x128xf32>
    %107 = tpu.matmul %104, %106, %cst_87 {dimension_numbers = #tpu.dot_dimension_numbers<[1], [0], [0], [1], [0, 0, 1, 1], [], []>} : vector<2x64xf32>, vector<64x128xf32>, vector<2x128xf32> -> vector<2x128xf32>
    %108 = arith.addf %103, %107 : vector<2x128xf32>
    %c34 = arith.constant 34 : index
    %c0_88 = arith.constant 0 : index
    %109 = vector.load %arg10[%c34, %c0_88] : memref<128x64xf32, #tpu.memory_space<vmem>>, vector<2x64xf32>
    %c17 = arith.constant 17 : index
    %c0_89 = arith.constant 0 : index
    %c0_90 = arith.constant 0 : index
    %110 = vector.load %arg9[%c17, %c0_89, %c0_90] : memref<64x64x128xf32, #tpu.memory_space<vmem>>, vector<1x64x128xf32>
    %111 = vector.shape_cast %110 : vector<1x64x128xf32> to vector<64x128xf32>
    %cst_91 = arith.constant dense<0.000000e+00> : vector<2x128xf32>
    %112 = tpu.matmul %109, %111, %cst_91 {dimension_numbers = #tpu.dot_dimension_numbers<[1], [0], [0], [1], [0, 0, 1, 1], [], []>} : vector<2x64xf32>, vector<64x128xf32>, vector<2x128xf32> -> vector<2x128xf32>
    %113 = arith.addf %108, %112 : vector<2x128xf32>
    %c36 = arith.constant 36 : index
    %c0_92 = arith.constant 0 : index
    %114 = vector.load %arg10[%c36, %c0_92] : memref<128x64xf32, #tpu.memory_space<vmem>>, vector<2x64xf32>
    %c18_93 = arith.constant 18 : index
    %c0_94 = arith.constant 0 : index
    %c0_95 = arith.constant 0 : index
    %115 = vector.load %arg9[%c18_93, %c0_94, %c0_95] : memref<64x64x128xf32, #tpu.memory_space<vmem>>, vector<1x64x128xf32>
    %116 = vector.shape_cast %115 : vector<1x64x128xf32> to vector<64x128xf32>
    %cst_96 = arith.constant dense<0.000000e+00> : vector<2x128xf32>
    %117 = tpu.matmul %114, %116, %cst_96 {dimension_numbers = #tpu.dot_dimension_numbers<[1], [0], [0], [1], [0, 0, 1, 1], [], []>} : vector<2x64xf32>, vector<64x128xf32>, vector<2x128xf32> -> vector<2x128xf32>
    %118 = arith.addf %113, %117 : vector<2x128xf32>
    %c38 = arith.constant 38 : index
    %c0_97 = arith.constant 0 : index
    %119 = vector.load %arg10[%c38, %c0_97] : memref<128x64xf32, #tpu.memory_space<vmem>>, vector<2x64xf32>
    %c19 = arith.constant 19 : index
    %c0_98 = arith.constant 0 : index
    %c0_99 = arith.constant 0 : index
    %120 = vector.load %arg9[%c19, %c0_98, %c0_99] : memref<64x64x128xf32, #tpu.memory_space<vmem>>, vector<1x64x128xf32>
    %121 = vector.shape_cast %120 : vector<1x64x128xf32> to vector<64x128xf32>
    %cst_100 = arith.constant dense<0.000000e+00> : vector<2x128xf32>
    %122 = tpu.matmul %119, %121, %cst_100 {dimension_numbers = #tpu.dot_dimension_numbers<[1], [0], [0], [1], [0, 0, 1, 1], [], []>} : vector<2x64xf32>, vector<64x128xf32>, vector<2x128xf32> -> vector<2x128xf32>
    %123 = arith.addf %118, %122 : vector<2x128xf32>
    %c40 = arith.constant 40 : index
    %c0_101 = arith.constant 0 : index
    %124 = vector.load %arg10[%c40, %c0_101] : memref<128x64xf32, #tpu.memory_space<vmem>>, vector<2x64xf32>
    %c20_102 = arith.constant 20 : index
    %c0_103 = arith.constant 0 : index
    %c0_104 = arith.constant 0 : index
    %125 = vector.load %arg9[%c20_102, %c0_103, %c0_104] : memref<64x64x128xf32, #tpu.memory_space<vmem>>, vector<1x64x128xf32>
    %126 = vector.shape_cast %125 : vector<1x64x128xf32> to vector<64x128xf32>
    %cst_105 = arith.constant dense<0.000000e+00> : vector<2x128xf32>
    %127 = tpu.matmul %124, %126, %cst_105 {dimension_numbers = #tpu.dot_dimension_numbers<[1], [0], [0], [1], [0, 0, 1, 1], [], []>} : vector<2x64xf32>, vector<64x128xf32>, vector<2x128xf32> -> vector<2x128xf32>
    %128 = arith.addf %123, %127 : vector<2x128xf32>
    %c42 = arith.constant 42 : index
    %c0_106 = arith.constant 0 : index
    %129 = vector.load %arg10[%c42, %c0_106] : memref<128x64xf32, #tpu.memory_space<vmem>>, vector<2x64xf32>
    %c21 = arith.constant 21 : index
    %c0_107 = arith.constant 0 : index
    %c0_108 = arith.constant 0 : index
    %130 = vector.load %arg9[%c21, %c0_107, %c0_108] : memref<64x64x128xf32, #tpu.memory_space<vmem>>, vector<1x64x128xf32>
    %131 = vector.shape_cast %130 : vector<1x64x128xf32> to vector<64x128xf32>
    %cst_109 = arith.constant dense<0.000000e+00> : vector<2x128xf32>
    %132 = tpu.matmul %129, %131, %cst_109 {dimension_numbers = #tpu.dot_dimension_numbers<[1], [0], [0], [1], [0, 0, 1, 1], [], []>} : vector<2x64xf32>, vector<64x128xf32>, vector<2x128xf32> -> vector<2x128xf32>
    %133 = arith.addf %128, %132 : vector<2x128xf32>
    %c44 = arith.constant 44 : index
    %c0_110 = arith.constant 0 : index
    %134 = vector.load %arg10[%c44, %c0_110] : memref<128x64xf32, #tpu.memory_space<vmem>>, vector<2x64xf32>
    %c22_111 = arith.constant 22 : index
    %c0_112 = arith.constant 0 : index
    %c0_113 = arith.constant 0 : index
    %135 = vector.load %arg9[%c22_111, %c0_112, %c0_113] : memref<64x64x128xf32, #tpu.memory_space<vmem>>, vector<1x64x128xf32>
    %136 = vector.shape_cast %135 : vector<1x64x128xf32> to vector<64x128xf32>
    %cst_114 = arith.constant dense<0.000000e+00> : vector<2x128xf32>
    %137 = tpu.matmul %134, %136, %cst_114 {dimension_numbers = #tpu.dot_dimension_numbers<[1], [0], [0], [1], [0, 0, 1, 1], [], []>} : vector<2x64xf32>, vector<64x128xf32>, vector<2x128xf32> -> vector<2x128xf32>
    %138 = arith.addf %133, %137 : vector<2x128xf32>
    %c46 = arith.constant 46 : index
    %c0_115 = arith.constant 0 : index
    %139 = vector.load %arg10[%c46, %c0_115] : memref<128x64xf32, #tpu.memory_space<vmem>>, vector<2x64xf32>
    %c23 = arith.constant 23 : index
    %c0_116 = arith.constant 0 : index
    %c0_117 = arith.constant 0 : index
    %140 = vector.load %arg9[%c23, %c0_116, %c0_117] : memref<64x64x128xf32, #tpu.memory_space<vmem>>, vector<1x64x128xf32>
    %141 = vector.shape_cast %140 : vector<1x64x128xf32> to vector<64x128xf32>
    %cst_118 = arith.constant dense<0.000000e+00> : vector<2x128xf32>
    %142 = tpu.matmul %139, %141, %cst_118 {dimension_numbers = #tpu.dot_dimension_numbers<[1], [0], [0], [1], [0, 0, 1, 1], [], []>} : vector<2x64xf32>, vector<64x128xf32>, vector<2x128xf32> -> vector<2x128xf32>
    %143 = arith.addf %138, %142 : vector<2x128xf32>
    %c48 = arith.constant 48 : index
    %c0_119 = arith.constant 0 : index
    %144 = vector.load %arg10[%c48, %c0_119] : memref<128x64xf32, #tpu.memory_space<vmem>>, vector<2x64xf32>
    %c24_120 = arith.constant 24 : index
    %c0_121 = arith.constant 0 : index
    %c0_122 = arith.constant 0 : index
    %145 = vector.load %arg9[%c24_120, %c0_121, %c0_122] : memref<64x64x128xf32, #tpu.memory_space<vmem>>, vector<1x64x128xf32>
    %146 = vector.shape_cast %145 : vector<1x64x128xf32> to vector<64x128xf32>
    %cst_123 = arith.constant dense<0.000000e+00> : vector<2x128xf32>
    %147 = tpu.matmul %144, %146, %cst_123 {dimension_numbers = #tpu.dot_dimension_numbers<[1], [0], [0], [1], [0, 0, 1, 1], [], []>} : vector<2x64xf32>, vector<64x128xf32>, vector<2x128xf32> -> vector<2x128xf32>
    %148 = arith.addf %143, %147 : vector<2x128xf32>
    %c50 = arith.constant 50 : index
    %c0_124 = arith.constant 0 : index
    %149 = vector.load %arg10[%c50, %c0_124] : memref<128x64xf32, #tpu.memory_space<vmem>>, vector<2x64xf32>
    %c25 = arith.constant 25 : index
    %c0_125 = arith.constant 0 : index
    %c0_126 = arith.constant 0 : index
    %150 = vector.load %arg9[%c25, %c0_125, %c0_126] : memref<64x64x128xf32, #tpu.memory_space<vmem>>, vector<1x64x128xf32>
    %151 = vector.shape_cast %150 : vector<1x64x128xf32> to vector<64x128xf32>
    %cst_127 = arith.constant dense<0.000000e+00> : vector<2x128xf32>
    %152 = tpu.matmul %149, %151, %cst_127 {dimension_numbers = #tpu.dot_dimension_numbers<[1], [0], [0], [1], [0, 0, 1, 1], [], []>} : vector<2x64xf32>, vector<64x128xf32>, vector<2x128xf32> -> vector<2x128xf32>
    %153 = arith.addf %148, %152 : vector<2x128xf32>
    %c52 = arith.constant 52 : index
    %c0_128 = arith.constant 0 : index
    %154 = vector.load %arg10[%c52, %c0_128] : memref<128x64xf32, #tpu.memory_space<vmem>>, vector<2x64xf32>
    %c26_129 = arith.constant 26 : index
    %c0_130 = arith.constant 0 : index
    %c0_131 = arith.constant 0 : index
    %155 = vector.load %arg9[%c26_129, %c0_130, %c0_131] : memref<64x64x128xf32, #tpu.memory_space<vmem>>, vector<1x64x128xf32>
    %156 = vector.shape_cast %155 : vector<1x64x128xf32> to vector<64x128xf32>
    %cst_132 = arith.constant dense<0.000000e+00> : vector<2x128xf32>
    %157 = tpu.matmul %154, %156, %cst_132 {dimension_numbers = #tpu.dot_dimension_numbers<[1], [0], [0], [1], [0, 0, 1, 1], [], []>} : vector<2x64xf32>, vector<64x128xf32>, vector<2x128xf32> -> vector<2x128xf32>
    %158 = arith.addf %153, %157 : vector<2x128xf32>
    %c54 = arith.constant 54 : index
    %c0_133 = arith.constant 0 : index
    %159 = vector.load %arg10[%c54, %c0_133] : memref<128x64xf32, #tpu.memory_space<vmem>>, vector<2x64xf32>
    %c27 = arith.constant 27 : index
    %c0_134 = arith.constant 0 : index
    %c0_135 = arith.constant 0 : index
    %160 = vector.load %arg9[%c27, %c0_134, %c0_135] : memref<64x64x128xf32, #tpu.memory_space<vmem>>, vector<1x64x128xf32>
    %161 = vector.shape_cast %160 : vector<1x64x128xf32> to vector<64x128xf32>
    %cst_136 = arith.constant dense<0.000000e+00> : vector<2x128xf32>
    %162 = tpu.matmul %159, %161, %cst_136 {dimension_numbers = #tpu.dot_dimension_numbers<[1], [0], [0], [1], [0, 0, 1, 1], [], []>} : vector<2x64xf32>, vector<64x128xf32>, vector<2x128xf32> -> vector<2x128xf32>
    %163 = arith.addf %158, %162 : vector<2x128xf32>
    %c56 = arith.constant 56 : index
    %c0_137 = arith.constant 0 : index
    %164 = vector.load %arg10[%c56, %c0_137] : memref<128x64xf32, #tpu.memory_space<vmem>>, vector<2x64xf32>
    %c28_138 = arith.constant 28 : index
    %c0_139 = arith.constant 0 : index
    %c0_140 = arith.constant 0 : index
    %165 = vector.load %arg9[%c28_138, %c0_139, %c0_140] : memref<64x64x128xf32, #tpu.memory_space<vmem>>, vector<1x64x128xf32>
    %166 = vector.shape_cast %165 : vector<1x64x128xf32> to vector<64x128xf32>
    %cst_141 = arith.constant dense<0.000000e+00> : vector<2x128xf32>
    %167 = tpu.matmul %164, %166, %cst_141 {dimension_numbers = #tpu.dot_dimension_numbers<[1], [0], [0], [1], [0, 0, 1, 1], [], []>} : vector<2x64xf32>, vector<64x128xf32>, vector<2x128xf32> -> vector<2x128xf32>
    %168 = arith.addf %163, %167 : vector<2x128xf32>
    %c58 = arith.constant 58 : index
    %c0_142 = arith.constant 0 : index
    %169 = vector.load %arg10[%c58, %c0_142] : memref<128x64xf32, #tpu.memory_space<vmem>>, vector<2x64xf32>
    %c29 = arith.constant 29 : index
    %c0_143 = arith.constant 0 : index
    %c0_144 = arith.constant 0 : index
    %170 = vector.load %arg9[%c29, %c0_143, %c0_144] : memref<64x64x128xf32, #tpu.memory_space<vmem>>, vector<1x64x128xf32>
    %171 = vector.shape_cast %170 : vector<1x64x128xf32> to vector<64x128xf32>
    %cst_145 = arith.constant dense<0.000000e+00> : vector<2x128xf32>
    %172 = tpu.matmul %169, %171, %cst_145 {dimension_numbers = #tpu.dot_dimension_numbers<[1], [0], [0], [1], [0, 0, 1, 1], [], []>} : vector<2x64xf32>, vector<64x128xf32>, vector<2x128xf32> -> vector<2x128xf32>
    %173 = arith.addf %168, %172 : vector<2x128xf32>
    %c60 = arith.constant 60 : index
    %c0_146 = arith.constant 0 : index
    %174 = vector.load %arg10[%c60, %c0_146] : memref<128x64xf32, #tpu.memory_space<vmem>>, vector<2x64xf32>
    %c30_147 = arith.constant 30 : index
    %c0_148 = arith.constant 0 : index
    %c0_149 = arith.constant 0 : index
    %175 = vector.load %arg9[%c30_147, %c0_148, %c0_149] : memref<64x64x128xf32, #tpu.memory_space<vmem>>, vector<1x64x128xf32>
    %176 = vector.shape_cast %175 : vector<1x64x128xf32> to vector<64x128xf32>
    %cst_150 = arith.constant dense<0.000000e+00> : vector<2x128xf32>
    %177 = tpu.matmul %174, %176, %cst_150 {dimension_numbers = #tpu.dot_dimension_numbers<[1], [0], [0], [1], [0, 0, 1, 1], [], []>} : vector<2x64xf32>, vector<64x128xf32>, vector<2x128xf32> -> vector<2x128xf32>
    %178 = arith.addf %173, %177 : vector<2x128xf32>
    %c62 = arith.constant 62 : index
    %c0_151 = arith.constant 0 : index
    %179 = vector.load %arg10[%c62, %c0_151] : memref<128x64xf32, #tpu.memory_space<vmem>>, vector<2x64xf32>
    %c31 = arith.constant 31 : index
    %c0_152 = arith.constant 0 : index
    %c0_153 = arith.constant 0 : index
    %180 = vector.load %arg9[%c31, %c0_152, %c0_153] : memref<64x64x128xf32, #tpu.memory_space<vmem>>, vector<1x64x128xf32>
    %181 = vector.shape_cast %180 : vector<1x64x128xf32> to vector<64x128xf32>
    %cst_154 = arith.constant dense<0.000000e+00> : vector<2x128xf32>
    %182 = tpu.matmul %179, %181, %cst_154 {dimension_numbers = #tpu.dot_dimension_numbers<[1], [0], [0], [1], [0, 0, 1, 1], [], []>} : vector<2x64xf32>, vector<64x128xf32>, vector<2x128xf32> -> vector<2x128xf32>
    %183 = arith.addf %178, %182 : vector<2x128xf32>
    %c64 = arith.constant 64 : index
    %c0_155 = arith.constant 0 : index
    %184 = vector.load %arg10[%c64, %c0_155] : memref<128x64xf32, #tpu.memory_space<vmem>>, vector<2x64xf32>
    %c32_156 = arith.constant 32 : index
    %c0_157 = arith.constant 0 : index
    %c0_158 = arith.constant 0 : index
    %185 = vector.load %arg9[%c32_156, %c0_157, %c0_158] : memref<64x64x128xf32, #tpu.memory_space<vmem>>, vector<1x64x128xf32>
    %186 = vector.shape_cast %185 : vector<1x64x128xf32> to vector<64x128xf32>
    %cst_159 = arith.constant dense<0.000000e+00> : vector<2x128xf32>
    %187 = tpu.matmul %184, %186, %cst_159 {dimension_numbers = #tpu.dot_dimension_numbers<[1], [0], [0], [1], [0, 0, 1, 1], [], []>} : vector<2x64xf32>, vector<64x128xf32>, vector<2x128xf32> -> vector<2x128xf32>
    %188 = arith.addf %183, %187 : vector<2x128xf32>
    %c66 = arith.constant 66 : index
    %c0_160 = arith.constant 0 : index
    %189 = vector.load %arg10[%c66, %c0_160] : memref<128x64xf32, #tpu.memory_space<vmem>>, vector<2x64xf32>
    %c33 = arith.constant 33 : index
    %c0_161 = arith.constant 0 : index
    %c0_162 = arith.constant 0 : index
    %190 = vector.load %arg9[%c33, %c0_161, %c0_162] : memref<64x64x128xf32, #tpu.memory_space<vmem>>, vector<1x64x128xf32>
    %191 = vector.shape_cast %190 : vector<1x64x128xf32> to vector<64x128xf32>
    %cst_163 = arith.constant dense<0.000000e+00> : vector<2x128xf32>
    %192 = tpu.matmul %189, %191, %cst_163 {dimension_numbers = #tpu.dot_dimension_numbers<[1], [0], [0], [1], [0, 0, 1, 1], [], []>} : vector<2x64xf32>, vector<64x128xf32>, vector<2x128xf32> -> vector<2x128xf32>
    %193 = arith.addf %188, %192 : vector<2x128xf32>
    %c68 = arith.constant 68 : index
    %c0_164 = arith.constant 0 : index
    %194 = vector.load %arg10[%c68, %c0_164] : memref<128x64xf32, #tpu.memory_space<vmem>>, vector<2x64xf32>
    %c34_165 = arith.constant 34 : index
    %c0_166 = arith.constant 0 : index
    %c0_167 = arith.constant 0 : index
    %195 = vector.load %arg9[%c34_165, %c0_166, %c0_167] : memref<64x64x128xf32, #tpu.memory_space<vmem>>, vector<1x64x128xf32>
    %196 = vector.shape_cast %195 : vector<1x64x128xf32> to vector<64x128xf32>
    %cst_168 = arith.constant dense<0.000000e+00> : vector<2x128xf32>
    %197 = tpu.matmul %194, %196, %cst_168 {dimension_numbers = #tpu.dot_dimension_numbers<[1], [0], [0], [1], [0, 0, 1, 1], [], []>} : vector<2x64xf32>, vector<64x128xf32>, vector<2x128xf32> -> vector<2x128xf32>
    %198 = arith.addf %193, %197 : vector<2x128xf32>
    %c70 = arith.constant 70 : index
    %c0_169 = arith.constant 0 : index
    %199 = vector.load %arg10[%c70, %c0_169] : memref<128x64xf32, #tpu.memory_space<vmem>>, vector<2x64xf32>
    %c35 = arith.constant 35 : index
    %c0_170 = arith.constant 0 : index
    %c0_171 = arith.constant 0 : index
    %200 = vector.load %arg9[%c35, %c0_170, %c0_171] : memref<64x64x128xf32, #tpu.memory_space<vmem>>, vector<1x64x128xf32>
    %201 = vector.shape_cast %200 : vector<1x64x128xf32> to vector<64x128xf32>
    %cst_172 = arith.constant dense<0.000000e+00> : vector<2x128xf32>
    %202 = tpu.matmul %199, %201, %cst_172 {dimension_numbers = #tpu.dot_dimension_numbers<[1], [0], [0], [1], [0, 0, 1, 1], [], []>} : vector<2x64xf32>, vector<64x128xf32>, vector<2x128xf32> -> vector<2x128xf32>
    %203 = arith.addf %198, %202 : vector<2x128xf32>
    %c72 = arith.constant 72 : index
    %c0_173 = arith.constant 0 : index
    %204 = vector.load %arg10[%c72, %c0_173] : memref<128x64xf32, #tpu.memory_space<vmem>>, vector<2x64xf32>
    %c36_174 = arith.constant 36 : index
    %c0_175 = arith.constant 0 : index
    %c0_176 = arith.constant 0 : index
    %205 = vector.load %arg9[%c36_174, %c0_175, %c0_176] : memref<64x64x128xf32, #tpu.memory_space<vmem>>, vector<1x64x128xf32>
    %206 = vector.shape_cast %205 : vector<1x64x128xf32> to vector<64x128xf32>
    %cst_177 = arith.constant dense<0.000000e+00> : vector<2x128xf32>
    %207 = tpu.matmul %204, %206, %cst_177 {dimension_numbers = #tpu.dot_dimension_numbers<[1], [0], [0], [1], [0, 0, 1, 1], [], []>} : vector<2x64xf32>, vector<64x128xf32>, vector<2x128xf32> -> vector<2x128xf32>
    %208 = arith.addf %203, %207 : vector<2x128xf32>
    %c74 = arith.constant 74 : index
    %c0_178 = arith.constant 0 : index
    %209 = vector.load %arg10[%c74, %c0_178] : memref<128x64xf32, #tpu.memory_space<vmem>>, vector<2x64xf32>
    %c37 = arith.constant 37 : index
    %c0_179 = arith.constant 0 : index
    %c0_180 = arith.constant 0 : index
    %210 = vector.load %arg9[%c37, %c0_179, %c0_180] : memref<64x64x128xf32, #tpu.memory_space<vmem>>, vector<1x64x128xf32>
    %211 = vector.shape_cast %210 : vector<1x64x128xf32> to vector<64x128xf32>
    %cst_181 = arith.constant dense<0.000000e+00> : vector<2x128xf32>
    %212 = tpu.matmul %209, %211, %cst_181 {dimension_numbers = #tpu.dot_dimension_numbers<[1], [0], [0], [1], [0, 0, 1, 1], [], []>} : vector<2x64xf32>, vector<64x128xf32>, vector<2x128xf32> -> vector<2x128xf32>
    %213 = arith.addf %208, %212 : vector<2x128xf32>
    %c76 = arith.constant 76 : index
    %c0_182 = arith.constant 0 : index
    %214 = vector.load %arg10[%c76, %c0_182] : memref<128x64xf32, #tpu.memory_space<vmem>>, vector<2x64xf32>
    %c38_183 = arith.constant 38 : index
    %c0_184 = arith.constant 0 : index
    %c0_185 = arith.constant 0 : index
    %215 = vector.load %arg9[%c38_183, %c0_184, %c0_185] : memref<64x64x128xf32, #tpu.memory_space<vmem>>, vector<1x64x128xf32>
    %216 = vector.shape_cast %215 : vector<1x64x128xf32> to vector<64x128xf32>
    %cst_186 = arith.constant dense<0.000000e+00> : vector<2x128xf32>
    %217 = tpu.matmul %214, %216, %cst_186 {dimension_numbers = #tpu.dot_dimension_numbers<[1], [0], [0], [1], [0, 0, 1, 1], [], []>} : vector<2x64xf32>, vector<64x128xf32>, vector<2x128xf32> -> vector<2x128xf32>
    %218 = arith.addf %213, %217 : vector<2x128xf32>
    %c78 = arith.constant 78 : index
    %c0_187 = arith.constant 0 : index
    %219 = vector.load %arg10[%c78, %c0_187] : memref<128x64xf32, #tpu.memory_space<vmem>>, vector<2x64xf32>
    %c39 = arith.constant 39 : index
    %c0_188 = arith.constant 0 : index
    %c0_189 = arith.constant 0 : index
    %220 = vector.load %arg9[%c39, %c0_188, %c0_189] : memref<64x64x128xf32, #tpu.memory_space<vmem>>, vector<1x64x128xf32>
    %221 = vector.shape_cast %220 : vector<1x64x128xf32> to vector<64x128xf32>
    %cst_190 = arith.constant dense<0.000000e+00> : vector<2x128xf32>
    %222 = tpu.matmul %219, %221, %cst_190 {dimension_numbers = #tpu.dot_dimension_numbers<[1], [0], [0], [1], [0, 0, 1, 1], [], []>} : vector<2x64xf32>, vector<64x128xf32>, vector<2x128xf32> -> vector<2x128xf32>
    %223 = arith.addf %218, %222 : vector<2x128xf32>
    %c80 = arith.constant 80 : index
    %c0_191 = arith.constant 0 : index
    %224 = vector.load %arg10[%c80, %c0_191] : memref<128x64xf32, #tpu.memory_space<vmem>>, vector<2x64xf32>
    %c40_192 = arith.constant 40 : index
    %c0_193 = arith.constant 0 : index
    %c0_194 = arith.constant 0 : index
    %225 = vector.load %arg9[%c40_192, %c0_193, %c0_194] : memref<64x64x128xf32, #tpu.memory_space<vmem>>, vector<1x64x128xf32>
    %226 = vector.shape_cast %225 : vector<1x64x128xf32> to vector<64x128xf32>
    %cst_195 = arith.constant dense<0.000000e+00> : vector<2x128xf32>
    %227 = tpu.matmul %224, %226, %cst_195 {dimension_numbers = #tpu.dot_dimension_numbers<[1], [0], [0], [1], [0, 0, 1, 1], [], []>} : vector<2x64xf32>, vector<64x128xf32>, vector<2x128xf32> -> vector<2x128xf32>
    %228 = arith.addf %223, %227 : vector<2x128xf32>
    %c82 = arith.constant 82 : index
    %c0_196 = arith.constant 0 : index
    %229 = vector.load %arg10[%c82, %c0_196] : memref<128x64xf32, #tpu.memory_space<vmem>>, vector<2x64xf32>
    %c41 = arith.constant 41 : index
    %c0_197 = arith.constant 0 : index
    %c0_198 = arith.constant 0 : index
    %230 = vector.load %arg9[%c41, %c0_197, %c0_198] : memref<64x64x128xf32, #tpu.memory_space<vmem>>, vector<1x64x128xf32>
    %231 = vector.shape_cast %230 : vector<1x64x128xf32> to vector<64x128xf32>
    %cst_199 = arith.constant dense<0.000000e+00> : vector<2x128xf32>
    %232 = tpu.matmul %229, %231, %cst_199 {dimension_numbers = #tpu.dot_dimension_numbers<[1], [0], [0], [1], [0, 0, 1, 1], [], []>} : vector<2x64xf32>, vector<64x128xf32>, vector<2x128xf32> -> vector<2x128xf32>
    %233 = arith.addf %228, %232 : vector<2x128xf32>
    %c84 = arith.constant 84 : index
    %c0_200 = arith.constant 0 : index
    %234 = vector.load %arg10[%c84, %c0_200] : memref<128x64xf32, #tpu.memory_space<vmem>>, vector<2x64xf32>
    %c42_201 = arith.constant 42 : index
    %c0_202 = arith.constant 0 : index
    %c0_203 = arith.constant 0 : index
    %235 = vector.load %arg9[%c42_201, %c0_202, %c0_203] : memref<64x64x128xf32, #tpu.memory_space<vmem>>, vector<1x64x128xf32>
    %236 = vector.shape_cast %235 : vector<1x64x128xf32> to vector<64x128xf32>
    %cst_204 = arith.constant dense<0.000000e+00> : vector<2x128xf32>
    %237 = tpu.matmul %234, %236, %cst_204 {dimension_numbers = #tpu.dot_dimension_numbers<[1], [0], [0], [1], [0, 0, 1, 1], [], []>} : vector<2x64xf32>, vector<64x128xf32>, vector<2x128xf32> -> vector<2x128xf32>
    %238 = arith.addf %233, %237 : vector<2x128xf32>
    %c86 = arith.constant 86 : index
    %c0_205 = arith.constant 0 : index
    %239 = vector.load %arg10[%c86, %c0_205] : memref<128x64xf32, #tpu.memory_space<vmem>>, vector<2x64xf32>
    %c43 = arith.constant 43 : index
    %c0_206 = arith.constant 0 : index
    %c0_207 = arith.constant 0 : index
    %240 = vector.load %arg9[%c43, %c0_206, %c0_207] : memref<64x64x128xf32, #tpu.memory_space<vmem>>, vector<1x64x128xf32>
    %241 = vector.shape_cast %240 : vector<1x64x128xf32> to vector<64x128xf32>
    %cst_208 = arith.constant dense<0.000000e+00> : vector<2x128xf32>
    %242 = tpu.matmul %239, %241, %cst_208 {dimension_numbers = #tpu.dot_dimension_numbers<[1], [0], [0], [1], [0, 0, 1, 1], [], []>} : vector<2x64xf32>, vector<64x128xf32>, vector<2x128xf32> -> vector<2x128xf32>
    %243 = arith.addf %238, %242 : vector<2x128xf32>
    %c88 = arith.constant 88 : index
    %c0_209 = arith.constant 0 : index
    %244 = vector.load %arg10[%c88, %c0_209] : memref<128x64xf32, #tpu.memory_space<vmem>>, vector<2x64xf32>
    %c44_210 = arith.constant 44 : index
    %c0_211 = arith.constant 0 : index
    %c0_212 = arith.constant 0 : index
    %245 = vector.load %arg9[%c44_210, %c0_211, %c0_212] : memref<64x64x128xf32, #tpu.memory_space<vmem>>, vector<1x64x128xf32>
    %246 = vector.shape_cast %245 : vector<1x64x128xf32> to vector<64x128xf32>
    %cst_213 = arith.constant dense<0.000000e+00> : vector<2x128xf32>
    %247 = tpu.matmul %244, %246, %cst_213 {dimension_numbers = #tpu.dot_dimension_numbers<[1], [0], [0], [1], [0, 0, 1, 1], [], []>} : vector<2x64xf32>, vector<64x128xf32>, vector<2x128xf32> -> vector<2x128xf32>
    %248 = arith.addf %243, %247 : vector<2x128xf32>
    %c90 = arith.constant 90 : index
    %c0_214 = arith.constant 0 : index
    %249 = vector.load %arg10[%c90, %c0_214] : memref<128x64xf32, #tpu.memory_space<vmem>>, vector<2x64xf32>
    %c45 = arith.constant 45 : index
    %c0_215 = arith.constant 0 : index
    %c0_216 = arith.constant 0 : index
    %250 = vector.load %arg9[%c45, %c0_215, %c0_216] : memref<64x64x128xf32, #tpu.memory_space<vmem>>, vector<1x64x128xf32>
    %251 = vector.shape_cast %250 : vector<1x64x128xf32> to vector<64x128xf32>
    %cst_217 = arith.constant dense<0.000000e+00> : vector<2x128xf32>
    %252 = tpu.matmul %249, %251, %cst_217 {dimension_numbers = #tpu.dot_dimension_numbers<[1], [0], [0], [1], [0, 0, 1, 1], [], []>} : vector<2x64xf32>, vector<64x128xf32>, vector<2x128xf32> -> vector<2x128xf32>
    %253 = arith.addf %248, %252 : vector<2x128xf32>
    %c92 = arith.constant 92 : index
    %c0_218 = arith.constant 0 : index
    %254 = vector.load %arg10[%c92, %c0_218] : memref<128x64xf32, #tpu.memory_space<vmem>>, vector<2x64xf32>
    %c46_219 = arith.constant 46 : index
    %c0_220 = arith.constant 0 : index
    %c0_221 = arith.constant 0 : index
    %255 = vector.load %arg9[%c46_219, %c0_220, %c0_221] : memref<64x64x128xf32, #tpu.memory_space<vmem>>, vector<1x64x128xf32>
    %256 = vector.shape_cast %255 : vector<1x64x128xf32> to vector<64x128xf32>
    %cst_222 = arith.constant dense<0.000000e+00> : vector<2x128xf32>
    %257 = tpu.matmul %254, %256, %cst_222 {dimension_numbers = #tpu.dot_dimension_numbers<[1], [0], [0], [1], [0, 0, 1, 1], [], []>} : vector<2x64xf32>, vector<64x128xf32>, vector<2x128xf32> -> vector<2x128xf32>
    %258 = arith.addf %253, %257 : vector<2x128xf32>
    %c94 = arith.constant 94 : index
    %c0_223 = arith.constant 0 : index
    %259 = vector.load %arg10[%c94, %c0_223] : memref<128x64xf32, #tpu.memory_space<vmem>>, vector<2x64xf32>
    %c47 = arith.constant 47 : index
    %c0_224 = arith.constant 0 : index
    %c0_225 = arith.constant 0 : index
    %260 = vector.load %arg9[%c47, %c0_224, %c0_225] : memref<64x64x128xf32, #tpu.memory_space<vmem>>, vector<1x64x128xf32>
    %261 = vector.shape_cast %260 : vector<1x64x128xf32> to vector<64x128xf32>
    %cst_226 = arith.constant dense<0.000000e+00> : vector<2x128xf32>
    %262 = tpu.matmul %259, %261, %cst_226 {dimension_numbers = #tpu.dot_dimension_numbers<[1], [0], [0], [1], [0, 0, 1, 1], [], []>} : vector<2x64xf32>, vector<64x128xf32>, vector<2x128xf32> -> vector<2x128xf32>
    %263 = arith.addf %258, %262 : vector<2x128xf32>
    %c96 = arith.constant 96 : index
    %c0_227 = arith.constant 0 : index
    %264 = vector.load %arg10[%c96, %c0_227] : memref<128x64xf32, #tpu.memory_space<vmem>>, vector<2x64xf32>
    %c48_228 = arith.constant 48 : index
    %c0_229 = arith.constant 0 : index
    %c0_230 = arith.constant 0 : index
    %265 = vector.load %arg9[%c48_228, %c0_229, %c0_230] : memref<64x64x128xf32, #tpu.memory_space<vmem>>, vector<1x64x128xf32>
    %266 = vector.shape_cast %265 : vector<1x64x128xf32> to vector<64x128xf32>
    %cst_231 = arith.constant dense<0.000000e+00> : vector<2x128xf32>
    %267 = tpu.matmul %264, %266, %cst_231 {dimension_numbers = #tpu.dot_dimension_numbers<[1], [0], [0], [1], [0, 0, 1, 1], [], []>} : vector<2x64xf32>, vector<64x128xf32>, vector<2x128xf32> -> vector<2x128xf32>
    %268 = arith.addf %263, %267 : vector<2x128xf32>
    %c98 = arith.constant 98 : index
    %c0_232 = arith.constant 0 : index
    %269 = vector.load %arg10[%c98, %c0_232] : memref<128x64xf32, #tpu.memory_space<vmem>>, vector<2x64xf32>
    %c49 = arith.constant 49 : index
    %c0_233 = arith.constant 0 : index
    %c0_234 = arith.constant 0 : index
    %270 = vector.load %arg9[%c49, %c0_233, %c0_234] : memref<64x64x128xf32, #tpu.memory_space<vmem>>, vector<1x64x128xf32>
    %271 = vector.shape_cast %270 : vector<1x64x128xf32> to vector<64x128xf32>
    %cst_235 = arith.constant dense<0.000000e+00> : vector<2x128xf32>
    %272 = tpu.matmul %269, %271, %cst_235 {dimension_numbers = #tpu.dot_dimension_numbers<[1], [0], [0], [1], [0, 0, 1, 1], [], []>} : vector<2x64xf32>, vector<64x128xf32>, vector<2x128xf32> -> vector<2x128xf32>
    %273 = arith.addf %268, %272 : vector<2x128xf32>
    %c100 = arith.constant 100 : index
    %c0_236 = arith.constant 0 : index
    %274 = vector.load %arg10[%c100, %c0_236] : memref<128x64xf32, #tpu.memory_space<vmem>>, vector<2x64xf32>
    %c50_237 = arith.constant 50 : index
    %c0_238 = arith.constant 0 : index
    %c0_239 = arith.constant 0 : index
    %275 = vector.load %arg9[%c50_237, %c0_238, %c0_239] : memref<64x64x128xf32, #tpu.memory_space<vmem>>, vector<1x64x128xf32>
    %276 = vector.shape_cast %275 : vector<1x64x128xf32> to vector<64x128xf32>
    %cst_240 = arith.constant dense<0.000000e+00> : vector<2x128xf32>
    %277 = tpu.matmul %274, %276, %cst_240 {dimension_numbers = #tpu.dot_dimension_numbers<[1], [0], [0], [1], [0, 0, 1, 1], [], []>} : vector<2x64xf32>, vector<64x128xf32>, vector<2x128xf32> -> vector<2x128xf32>
    %278 = arith.addf %273, %277 : vector<2x128xf32>
    %c102 = arith.constant 102 : index
    %c0_241 = arith.constant 0 : index
    %279 = vector.load %arg10[%c102, %c0_241] : memref<128x64xf32, #tpu.memory_space<vmem>>, vector<2x64xf32>
    %c51 = arith.constant 51 : index
    %c0_242 = arith.constant 0 : index
    %c0_243 = arith.constant 0 : index
    %280 = vector.load %arg9[%c51, %c0_242, %c0_243] : memref<64x64x128xf32, #tpu.memory_space<vmem>>, vector<1x64x128xf32>
    %281 = vector.shape_cast %280 : vector<1x64x128xf32> to vector<64x128xf32>
    %cst_244 = arith.constant dense<0.000000e+00> : vector<2x128xf32>
    %282 = tpu.matmul %279, %281, %cst_244 {dimension_numbers = #tpu.dot_dimension_numbers<[1], [0], [0], [1], [0, 0, 1, 1], [], []>} : vector<2x64xf32>, vector<64x128xf32>, vector<2x128xf32> -> vector<2x128xf32>
    %283 = arith.addf %278, %282 : vector<2x128xf32>
    %c104 = arith.constant 104 : index
    %c0_245 = arith.constant 0 : index
    %284 = vector.load %arg10[%c104, %c0_245] : memref<128x64xf32, #tpu.memory_space<vmem>>, vector<2x64xf32>
    %c52_246 = arith.constant 52 : index
    %c0_247 = arith.constant 0 : index
    %c0_248 = arith.constant 0 : index
    %285 = vector.load %arg9[%c52_246, %c0_247, %c0_248] : memref<64x64x128xf32, #tpu.memory_space<vmem>>, vector<1x64x128xf32>
    %286 = vector.shape_cast %285 : vector<1x64x128xf32> to vector<64x128xf32>
    %cst_249 = arith.constant dense<0.000000e+00> : vector<2x128xf32>
    %287 = tpu.matmul %284, %286, %cst_249 {dimension_numbers = #tpu.dot_dimension_numbers<[1], [0], [0], [1], [0, 0, 1, 1], [], []>} : vector<2x64xf32>, vector<64x128xf32>, vector<2x128xf32> -> vector<2x128xf32>
    %288 = arith.addf %283, %287 : vector<2x128xf32>
    %c106 = arith.constant 106 : index
    %c0_250 = arith.constant 0 : index
    %289 = vector.load %arg10[%c106, %c0_250] : memref<128x64xf32, #tpu.memory_space<vmem>>, vector<2x64xf32>
    %c53 = arith.constant 53 : index
    %c0_251 = arith.constant 0 : index
    %c0_252 = arith.constant 0 : index
    %290 = vector.load %arg9[%c53, %c0_251, %c0_252] : memref<64x64x128xf32, #tpu.memory_space<vmem>>, vector<1x64x128xf32>
    %291 = vector.shape_cast %290 : vector<1x64x128xf32> to vector<64x128xf32>
    %cst_253 = arith.constant dense<0.000000e+00> : vector<2x128xf32>
    %292 = tpu.matmul %289, %291, %cst_253 {dimension_numbers = #tpu.dot_dimension_numbers<[1], [0], [0], [1], [0, 0, 1, 1], [], []>} : vector<2x64xf32>, vector<64x128xf32>, vector<2x128xf32> -> vector<2x128xf32>
    %293 = arith.addf %288, %292 : vector<2x128xf32>
    %c108 = arith.constant 108 : index
    %c0_254 = arith.constant 0 : index
    %294 = vector.load %arg10[%c108, %c0_254] : memref<128x64xf32, #tpu.memory_space<vmem>>, vector<2x64xf32>
    %c54_255 = arith.constant 54 : index
    %c0_256 = arith.constant 0 : index
    %c0_257 = arith.constant 0 : index
    %295 = vector.load %arg9[%c54_255, %c0_256, %c0_257] : memref<64x64x128xf32, #tpu.memory_space<vmem>>, vector<1x64x128xf32>
    %296 = vector.shape_cast %295 : vector<1x64x128xf32> to vector<64x128xf32>
    %cst_258 = arith.constant dense<0.000000e+00> : vector<2x128xf32>
    %297 = tpu.matmul %294, %296, %cst_258 {dimension_numbers = #tpu.dot_dimension_numbers<[1], [0], [0], [1], [0, 0, 1, 1], [], []>} : vector<2x64xf32>, vector<64x128xf32>, vector<2x128xf32> -> vector<2x128xf32>
    %298 = arith.addf %293, %297 : vector<2x128xf32>
    %c110 = arith.constant 110 : index
    %c0_259 = arith.constant 0 : index
    %299 = vector.load %arg10[%c110, %c0_259] : memref<128x64xf32, #tpu.memory_space<vmem>>, vector<2x64xf32>
    %c55 = arith.constant 55 : index
    %c0_260 = arith.constant 0 : index
    %c0_261 = arith.constant 0 : index
    %300 = vector.load %arg9[%c55, %c0_260, %c0_261] : memref<64x64x128xf32, #tpu.memory_space<vmem>>, vector<1x64x128xf32>
    %301 = vector.shape_cast %300 : vector<1x64x128xf32> to vector<64x128xf32>
    %cst_262 = arith.constant dense<0.000000e+00> : vector<2x128xf32>
    %302 = tpu.matmul %299, %301, %cst_262 {dimension_numbers = #tpu.dot_dimension_numbers<[1], [0], [0], [1], [0, 0, 1, 1], [], []>} : vector<2x64xf32>, vector<64x128xf32>, vector<2x128xf32> -> vector<2x128xf32>
    %303 = arith.addf %298, %302 : vector<2x128xf32>
    %c112 = arith.constant 112 : index
    %c0_263 = arith.constant 0 : index
    %304 = vector.load %arg10[%c112, %c0_263] : memref<128x64xf32, #tpu.memory_space<vmem>>, vector<2x64xf32>
    %c56_264 = arith.constant 56 : index
    %c0_265 = arith.constant 0 : index
    %c0_266 = arith.constant 0 : index
    %305 = vector.load %arg9[%c56_264, %c0_265, %c0_266] : memref<64x64x128xf32, #tpu.memory_space<vmem>>, vector<1x64x128xf32>
    %306 = vector.shape_cast %305 : vector<1x64x128xf32> to vector<64x128xf32>
    %cst_267 = arith.constant dense<0.000000e+00> : vector<2x128xf32>
    %307 = tpu.matmul %304, %306, %cst_267 {dimension_numbers = #tpu.dot_dimension_numbers<[1], [0], [0], [1], [0, 0, 1, 1], [], []>} : vector<2x64xf32>, vector<64x128xf32>, vector<2x128xf32> -> vector<2x128xf32>
    %308 = arith.addf %303, %307 : vector<2x128xf32>
    %c114 = arith.constant 114 : index
    %c0_268 = arith.constant 0 : index
    %309 = vector.load %arg10[%c114, %c0_268] : memref<128x64xf32, #tpu.memory_space<vmem>>, vector<2x64xf32>
    %c57 = arith.constant 57 : index
    %c0_269 = arith.constant 0 : index
    %c0_270 = arith.constant 0 : index
    %310 = vector.load %arg9[%c57, %c0_269, %c0_270] : memref<64x64x128xf32, #tpu.memory_space<vmem>>, vector<1x64x128xf32>
    %311 = vector.shape_cast %310 : vector<1x64x128xf32> to vector<64x128xf32>
    %cst_271 = arith.constant dense<0.000000e+00> : vector<2x128xf32>
    %312 = tpu.matmul %309, %311, %cst_271 {dimension_numbers = #tpu.dot_dimension_numbers<[1], [0], [0], [1], [0, 0, 1, 1], [], []>} : vector<2x64xf32>, vector<64x128xf32>, vector<2x128xf32> -> vector<2x128xf32>
    %313 = arith.addf %308, %312 : vector<2x128xf32>
    %c116 = arith.constant 116 : index
    %c0_272 = arith.constant 0 : index
    %314 = vector.load %arg10[%c116, %c0_272] : memref<128x64xf32, #tpu.memory_space<vmem>>, vector<2x64xf32>
    %c58_273 = arith.constant 58 : index
    %c0_274 = arith.constant 0 : index
    %c0_275 = arith.constant 0 : index
    %315 = vector.load %arg9[%c58_273, %c0_274, %c0_275] : memref<64x64x128xf32, #tpu.memory_space<vmem>>, vector<1x64x128xf32>
    %316 = vector.shape_cast %315 : vector<1x64x128xf32> to vector<64x128xf32>
    %cst_276 = arith.constant dense<0.000000e+00> : vector<2x128xf32>
    %317 = tpu.matmul %314, %316, %cst_276 {dimension_numbers = #tpu.dot_dimension_numbers<[1], [0], [0], [1], [0, 0, 1, 1], [], []>} : vector<2x64xf32>, vector<64x128xf32>, vector<2x128xf32> -> vector<2x128xf32>
    %318 = arith.addf %313, %317 : vector<2x128xf32>
    %c118 = arith.constant 118 : index
    %c0_277 = arith.constant 0 : index
    %319 = vector.load %arg10[%c118, %c0_277] : memref<128x64xf32, #tpu.memory_space<vmem>>, vector<2x64xf32>
    %c59 = arith.constant 59 : index
    %c0_278 = arith.constant 0 : index
    %c0_279 = arith.constant 0 : index
    %320 = vector.load %arg9[%c59, %c0_278, %c0_279] : memref<64x64x128xf32, #tpu.memory_space<vmem>>, vector<1x64x128xf32>
    %321 = vector.shape_cast %320 : vector<1x64x128xf32> to vector<64x128xf32>
    %cst_280 = arith.constant dense<0.000000e+00> : vector<2x128xf32>
    %322 = tpu.matmul %319, %321, %cst_280 {dimension_numbers = #tpu.dot_dimension_numbers<[1], [0], [0], [1], [0, 0, 1, 1], [], []>} : vector<2x64xf32>, vector<64x128xf32>, vector<2x128xf32> -> vector<2x128xf32>
    %323 = arith.addf %318, %322 : vector<2x128xf32>
    %c120 = arith.constant 120 : index
    %c0_281 = arith.constant 0 : index
    %324 = vector.load %arg10[%c120, %c0_281] : memref<128x64xf32, #tpu.memory_space<vmem>>, vector<2x64xf32>
    %c60_282 = arith.constant 60 : index
    %c0_283 = arith.constant 0 : index
    %c0_284 = arith.constant 0 : index
    %325 = vector.load %arg9[%c60_282, %c0_283, %c0_284] : memref<64x64x128xf32, #tpu.memory_space<vmem>>, vector<1x64x128xf32>
    %326 = vector.shape_cast %325 : vector<1x64x128xf32> to vector<64x128xf32>
    %cst_285 = arith.constant dense<0.000000e+00> : vector<2x128xf32>
    %327 = tpu.matmul %324, %326, %cst_285 {dimension_numbers = #tpu.dot_dimension_numbers<[1], [0], [0], [1], [0, 0, 1, 1], [], []>} : vector<2x64xf32>, vector<64x128xf32>, vector<2x128xf32> -> vector<2x128xf32>
    %328 = arith.addf %323, %327 : vector<2x128xf32>
    %c122 = arith.constant 122 : index
    %c0_286 = arith.constant 0 : index
    %329 = vector.load %arg10[%c122, %c0_286] : memref<128x64xf32, #tpu.memory_space<vmem>>, vector<2x64xf32>
    %c61 = arith.constant 61 : index
    %c0_287 = arith.constant 0 : index
    %c0_288 = arith.constant 0 : index
    %330 = vector.load %arg9[%c61, %c0_287, %c0_288] : memref<64x64x128xf32, #tpu.memory_space<vmem>>, vector<1x64x128xf32>
    %331 = vector.shape_cast %330 : vector<1x64x128xf32> to vector<64x128xf32>
    %cst_289 = arith.constant dense<0.000000e+00> : vector<2x128xf32>
    %332 = tpu.matmul %329, %331, %cst_289 {dimension_numbers = #tpu.dot_dimension_numbers<[1], [0], [0], [1], [0, 0, 1, 1], [], []>} : vector<2x64xf32>, vector<64x128xf32>, vector<2x128xf32> -> vector<2x128xf32>
    %333 = arith.addf %328, %332 : vector<2x128xf32>
    %c124 = arith.constant 124 : index
    %c0_290 = arith.constant 0 : index
    %334 = vector.load %arg10[%c124, %c0_290] : memref<128x64xf32, #tpu.memory_space<vmem>>, vector<2x64xf32>
    %c62_291 = arith.constant 62 : index
    %c0_292 = arith.constant 0 : index
    %c0_293 = arith.constant 0 : index
    %335 = vector.load %arg9[%c62_291, %c0_292, %c0_293] : memref<64x64x128xf32, #tpu.memory_space<vmem>>, vector<1x64x128xf32>
    %336 = vector.shape_cast %335 : vector<1x64x128xf32> to vector<64x128xf32>
    %cst_294 = arith.constant dense<0.000000e+00> : vector<2x128xf32>
    %337 = tpu.matmul %334, %336, %cst_294 {dimension_numbers = #tpu.dot_dimension_numbers<[1], [0], [0], [1], [0, 0, 1, 1], [], []>} : vector<2x64xf32>, vector<64x128xf32>, vector<2x128xf32> -> vector<2x128xf32>
    %338 = arith.addf %333, %337 : vector<2x128xf32>
    %c126 = arith.constant 126 : index
    %c0_295 = arith.constant 0 : index
    %339 = vector.load %arg10[%c126, %c0_295] : memref<128x64xf32, #tpu.memory_space<vmem>>, vector<2x64xf32>
    %c63 = arith.constant 63 : index
    %c0_296 = arith.constant 0 : index
    %c0_297 = arith.constant 0 : index
    %340 = vector.load %arg9[%c63, %c0_296, %c0_297] : memref<64x64x128xf32, #tpu.memory_space<vmem>>, vector<1x64x128xf32>
    %341 = vector.shape_cast %340 : vector<1x64x128xf32> to vector<64x128xf32>
    %cst_298 = arith.constant dense<0.000000e+00> : vector<2x128xf32>
    %342 = tpu.matmul %339, %341, %cst_298 {dimension_numbers = #tpu.dot_dimension_numbers<[1], [0], [0], [1], [0, 0, 1, 1], [], []>} : vector<2x64xf32>, vector<64x128xf32>, vector<2x128xf32> -> vector<2x128xf32>
    %343 = arith.addf %338, %342 : vector<2x128xf32>
    %c0_299 = arith.constant 0 : index
    %c0_300 = arith.constant 0 : index
    %344 = vector.load %arg5[%c0_299, %c0_300] : memref<1x128xf32, #tpu.memory_space<vmem>>, vector<1x128xf32>
    %345 = vector.broadcast %344 : vector<1x128xf32> to vector<2x128xf32>
    %346 = arith.addf %343, %345 : vector<2x128xf32>
    %cst_301 = arith.constant 0.000000e+00 : f32
    %347 = vector.broadcast %cst_301 : f32 to vector<2x128xf32>
    %348 = arith.maximumf %346, %347 : vector<2x128xf32>
    %c0_302 = arith.constant 0 : index
    %c0_303 = arith.constant 0 : index
    %349 = vector.load %arg6[%c0_302, %c0_303] : memref<128x128xf32, #tpu.memory_space<vmem>>, vector<128x128xf32>
    %cst_304 = arith.constant dense<0.000000e+00> : vector<2x128xf32>
    %350 = tpu.matmul %348, %349, %cst_304 {dimension_numbers = #tpu.dot_dimension_numbers<[1], [0], [0], [1], [0, 0, 1, 1], [], []>} : vector<2x128xf32>, vector<128x128xf32>, vector<2x128xf32> -> vector<2x128xf32>
    %c0_305 = arith.constant 0 : index
    %c0_306 = arith.constant 0 : index
    %351 = vector.load %arg7[%c0_305, %c0_306] : memref<1x128xf32, #tpu.memory_space<vmem>>, vector<1x128xf32>
    %352 = vector.broadcast %351 : vector<1x128xf32> to vector<2x128xf32>
    %353 = arith.addf %350, %352 : vector<2x128xf32>
    %c0_307 = arith.constant 0 : index
    %c0_308 = arith.constant 0 : index
    %354 = vector.load %arg8[%c0_307, %c0_308] : memref<2x128xf32, #tpu.memory_space<vmem>>, vector<2x128xf32>
    tpu.vector_store %arg8[%c0_307, %c0_308], %353 {strides = array<i32>} : memref<2x128xf32, #tpu.memory_space<vmem>>, vector<2x128xf32>,
    return
  }
  func.func @transform_0(%arg0: i32) -> (i32, i32, i32) {
    %c0_i32 = arith.constant 0 : i32
    %c0_i32_0 = arith.constant 0 : i32
    %c0_i32_1 = arith.constant 0 : i32
    %c0_i32_2 = arith.constant 0 : i32
    return %c0_i32, %c0_i32_0, %c0_i32_1 : i32, i32, i32
  }
  func.func @transform_1(%arg0: i32) -> (i32, i32) {
    %c0_i32 = arith.constant 0 : i32
    %c0_i32_0 = arith.constant 0 : i32
    %c0_i32_1 = arith.constant 0 : i32
    return %c0_i32, %c0_i32_0 : i32, i32
  }
  func.func @transform_2(%arg0: i32) -> (i32, i32) {
    %c0_i32 = arith.constant 0 : i32
    %c0_i32_0 = arith.constant 0 : i32
    %c0_i32_1 = arith.constant 0 : i32
    return %c0_i32, %c0_i32_0 : i32, i32
  }
  func.func @transform_4(%arg0: i32) -> (i32, i32) {
    %c0_i32 = arith.constant 0 : i32
    %c0_i32_0 = arith.constant 0 : i32
    %c0_i32_1 = arith.constant 0 : i32
    return %c0_i32, %c0_i32_0 : i32, i32
  }
  func.func @transform_5(%arg0: i32) -> (i32, i32) {
    %c0_i32 = arith.constant 0 : i32
    %c0_i32_0 = arith.constant 0 : i32
    %c0_i32_1 = arith.constant 0 : i32
    return %c0_i32, %c0_i32_0 : i32, i32
  }
  func.func @transform_6(%arg0: i32) -> (i32, i32) {
    %c0_i32 = arith.constant 0 : i32
    %c0_i32_0 = arith.constant 0 : i32
    %c0_i32_1 = arith.constant 0 : i32
    return %c0_i32, %c0_i32_0 : i32, i32
  }
  func.func @transform_7(%arg0: i32) -> (i32, i32) {
    %c0_i32 = arith.constant 0 : i32
    %c0_i32_0 = arith.constant 0 : i32
    %c0_i32_1 = arith.constant 0 : i32
    return %c0_i32, %c0_i32_0 : i32, i32
  }
}

</mosaic_0001>

<llo_original>
// kernel: cnn_forward.2
$region0: #{cnn_forward.2}
  #allocation0 [shape = 'u32[]', space=smem, size = 0x4, offset = 0x4, fixed_abs, tag = 'smem constant byte address 0x4 - core index']
  #allocation1 [shape = 'u32[144,128]{1,0:T(1,128)}', space=vmem, size = 0x12000, scoped, tag = 'internal scratch']
  %s0 = inlined_call_operand.vmem [shape: f32[4,512,32], index: 0, kind: input, shape index: {}]
  %s1 = inlined_call_operand.vmem [shape: f32[32,128], index: 1, kind: input, shape index: {}]
  %s2 = inlined_call_operand.vmem [shape: f32[1,128], index: 2, kind: input, shape index: {}]
  %s3 = inlined_call_operand.vmem [shape: f32[512,128], index: 3, kind: output, shape index: {}]
  %s4 = sld [smem:[#allocation0]]
  $region22: #{cnn_forward.2} parent=0
    _
  %s6 = ssub.s32 1, %s4
  %s7 = scalar_select 0, %s6, %s4
  // Predicated region
  $region2: #{cnn_forward.2} parent=0 // pred_check
    _
  $region3: #{cnn_forward.2} parent=0 // pred_check_branch
    %9 = sbr.rel (0) target = $region5
  $region4: #{cnn_forward.2} parent=0 // pred_region
    _
  $region5: #{cnn_forward.2} parent=0 // pred_fallthru
    _
  // Predicated region
  $region6: #{cnn_forward.2} parent=0 // pred_check
    _
  $region7: #{cnn_forward.2} parent=0 // pred_check_branch
    %11 = sbr.rel (0) target = $region9
  $region8: #{cnn_forward.2} parent=0 // pred_region
    _
  $region9: #{cnn_forward.2} parent=0 // pred_fallthru
    _
  // Predicated region
  $region10: #{cnn_forward.2} parent=0 // pred_check
    _
  $region11: #{cnn_forward.2} parent=0 // pred_check_branch
    %13 = sbr.rel (0) target = $region13
  $region12: #{cnn_forward.2} parent=0 // pred_region
    _
  $region13: #{cnn_forward.2} parent=0 // pred_fallthru
    _
  %v14 = vld [vmem:[%s0] sm:$0xff]
  %v15 = vld [vmem:[%s0 + $0x8] sm:$0xff]
  %v16 = vld [vmem:[%s0 + $0x10] sm:$0xff]
  %v17 = vld [vmem:[%s0 + $0x18] sm:$0xff]
  %v18 = vld [vmem:[%s0 + $0x20] sm:$0xff]
  %v19 = vld [vmem:[%s0 + $0x28] sm:$0xff]
  %v20 = vld [vmem:[%s0 + $0x30] sm:$0xff]
  %v21 = vld [vmem:[%s0 + $0x38] sm:$0xff]
  %v22 = vld [vmem:[%s0 + $0x40] sm:$0xff]
  %v23 = vld [vmem:[%s0 + $0x48] sm:$0xff]
  %v24 = vld [vmem:[%s0 + $0x50] sm:$0xff]
  %v25 = vld [vmem:[%s0 + $0x58] sm:$0xff]
  %v26 = vld [vmem:[%s0 + $0x60] sm:$0xff]
  %v27 = vld [vmem:[%s0 + $0x68] sm:$0xff]
  %v28 = vld [vmem:[%s0 + $0x70] sm:$0xff]
  %v29 = vld [vmem:[%s0 + $0x78] sm:$0xff]
  %v30 = vld [vmem:[%s0 + $0x80] sm:$0xff]
  %v31 = vld [vmem:[%s0 + $0x88] sm:$0xff]
  %v32 = vld [vmem:[%s0 + $0x90] sm:$0xff]
  %v33 = vld [vmem:[%s0 + $0x98] sm:$0xff]
  %v34 = vld [vmem:[%s0 + $0xa0] sm:$0xff]
  %v35 = vld [vmem:[%s0 + $0xa8] sm:$0xff]
  %v36 = vld [vmem:[%s0 + $0xb0] sm:$0xff]
  %v37 = vld [vmem:[%s0 + $0xb8] sm:$0xff]
  %v38 = vld [vmem:[%s0 + $0xc0] sm:$0xff]
  %v39 = vld [vmem:[%s0 + $0xc8] sm:$0xff]
  %v40 = vld [vmem:[%s0 + $0xd0] sm:$0xff]
  %v41 = vld [vmem:[%s0 + $0xd8] sm:$0xff]
  %v42 = vld [vmem:[%s0 + $0xe0] sm:$0xff]
  %v43 = vld [vmem:[%s0 + $0xe8] sm:$0xff]
  %v44 = vld [vmem:[%s0 + $0xf0] sm:$0xff]
  %v45 = vld [vmem:[%s0 + $0xf8] sm:$0xff]
  %v46 = vld [vmem:[%s0 + $0x100] sm:$0xff]
  %v47 = vld [vmem:[%s0 + $0x108] sm:$0xff]
  %v48 = vld [vmem:[%s0 + $0x110] sm:$0xff]
  %v49 = vld [vmem:[%s0 + $0x118] sm:$0xff]
  %v50 = vld [vmem:[%s0 + $0x120] sm:$0xff]
  %v51 = vld [vmem:[%s0 + $0x128] sm:$0xff]
  %v52 = vld [vmem:[%s0 + $0x130] sm:$0xff]
  %v53 = vld [vmem:[%s0 + $0x138] sm:$0xff]
  %v54 = vld [vmem:[%s0 + $0x140] sm:$0xff]
  %v55 = vld [vmem:[%s0 + $0x148] sm:$0xff]
  %v56 = vld [vmem:[%s0 + $0x150] sm:$0xff]
  %v57 = vld [vmem:[%s0 + $0x158] sm:$0xff]
  %v58 = vld [vmem:[%s0 + $0x160] sm:$0xff]
  %v59 = vld [vmem:[%s0 + $0x168] sm:$0xff]
  %v60 = vld [vmem:[%s0 + $0x170] sm:$0xff]
  %v61 = vld [vmem:[%s0 + $0x178] sm:$0xff]
  %v62 = vld [vmem:[%s0 + $0x180] sm:$0xff]
  %v63 = vld [vmem:[%s0 + $0x188] sm:$0xff]
  %v64 = vld [vmem:[%s0 + $0x190] sm:$0xff]
  %v65 = vld [vmem:[%s0 + $0x198] sm:$0xff]
  %v66 = vld [vmem:[%s0 + $0x1a0] sm:$0xff]
  %v67 = vld [vmem:[%s0 + $0x1a8] sm:$0xff]
  %v68 = vld [vmem:[%s0 + $0x1b0] sm:$0xff]
  %v69 = vld [vmem:[%s0 + $0x1b8] sm:$0xff]
  %v70 = vld [vmem:[%s0 + $0x1c0] sm:$0xff]
  %v71 = vld [vmem:[%s0 + $0x1c8] sm:$0xff]
  %v72 = vld [vmem:[%s0 + $0x1d0] sm:$0xff]
  %v73 = vld [vmem:[%s0 + $0x1d8] sm:$0xff]
  %v74 = vld [vmem:[%s0 + $0x1e0] sm:$0xff]
  %v75 = vld [vmem:[%s0 + $0x1e8] sm:$0xff]
  %v76 = vld [vmem:[%s0 + $0x1f0] sm:$0xff]
  %v77 = vld [vmem:[%s0 + $0x1f8] sm:$0xff]
  %v78 = vld [vmem:[%s0 + $0x200] sm:$0xff]
  %v79 = vld [vmem:[%s0 + $0x208] sm:$0xff]
  %v80 = vld [vmem:[%s0 + $0x210] sm:$0xff]
  %v81 = vld [vmem:[%s0 + $0x218] sm:$0xff]
  %v82 = vld [vmem:[%s0 + $0x220] sm:$0xff]
  %v83 = vld [vmem:[%s0 + $0x228] sm:$0xff]
  %v84 = vld [vmem:[%s0 + $0x230] sm:$0xff]
  %v85 = vld [vmem:[%s0 + $0x238] sm:$0xff]
  %v86 = vld [vmem:[%s0 + $0x240] sm:$0xff]
  %v87 = vld [vmem:[%s0 + $0x248] sm:$0xff]
  %v88 = vld [vmem:[%s0 + $0x250] sm:$0xff]
  %v89 = vld [vmem:[%s0 + $0x258] sm:$0xff]
  %v90 = vld [vmem:[%s0 + $0x260] sm:$0xff]
  %v91 = vld [vmem:[%s0 + $0x268] sm:$0xff]
  %v92 = vld [vmem:[%s0 + $0x270] sm:$0xff]
  %v93 = vld [vmem:[%s0 + $0x278] sm:$0xff]
  %v94 = vld [vmem:[%s0 + $0x280] sm:$0xff]
  %v95 = vld [vmem:[%s0 + $0x288] sm:$0xff]
  %v96 = vld [vmem:[%s0 + $0x290] sm:$0xff]
  %v97 = vld [vmem:[%s0 + $0x298] sm:$0xff]
  %v98 = vld [vmem:[%s0 + $0x2a0] sm:$0xff]
  %v99 = vld [vmem:[%s0 + $0x2a8] sm:$0xff]
  %v100 = vld [vmem:[%s0 + $0x2b0] sm:$0xff]
  %v101 = vld [vmem:[%s0 + $0x2b8] sm:$0xff]
  %v102 = vld [vmem:[%s0 + $0x2c0] sm:$0xff]
  %v103 = vld [vmem:[%s0 + $0x2c8] sm:$0xff]
  %v104 = vld [vmem:[%s0 + $0x2d0] sm:$0xff]
  %v105 = vld [vmem:[%s0 + $0x2d8] sm:$0xff]
  %v106 = vld [vmem:[%s0 + $0x2e0] sm:$0xff]
  %v107 = vld [vmem:[%s0 + $0x2e8] sm:$0xff]
  %v108 = vld [vmem:[%s0 + $0x2f0] sm:$0xff]
  %v109 = vld [vmem:[%s0 + $0x2f8] sm:$0xff]
  %v110 = vld [vmem:[%s0 + $0x300] sm:$0xff]
  %v111 = vld [vmem:[%s0 + $0x308] sm:$0xff]
  %v112 = vld [vmem:[%s0 + $0x310] sm:$0xff]
  %v113 = vld [vmem:[%s0 + $0x318] sm:$0xff]
  %v114 = vld [vmem:[%s0 + $0x320] sm:$0xff]
  %v115 = vld [vmem:[%s0 + $0x328] sm:$0xff]
  %v116 = vld [vmem:[%s0 + $0x330] sm:$0xff]
  %v117 = vld [vmem:[%s0 + $0x338] sm:$0xff]
  %v118 = vld [vmem:[%s0 + $0x340] sm:$0xff]
  %v119 = vld [vmem:[%s0 + $0x348] sm:$0xff]
  %v120 = vld [vmem:[%s0 + $0x350] sm:$0xff]
  %v121 = vld [vmem:[%s0 + $0x358] sm:$0xff]
  %v122 = vld [vmem:[%s0 + $0x360] sm:$0xff]
  %v123 = vld [vmem:[%s0 + $0x368] sm:$0xff]
  %v124 = vld [vmem:[%s0 + $0x370] sm:$0xff]
  %v125 = vld [vmem:[%s0 + $0x378] sm:$0xff]
  %v126 = vld [vmem:[%s0 + $0x380] sm:$0xff]
  %v127 = vld [vmem:[%s0 + $0x388] sm:$0xff]
  %v128 = vld [vmem:[%s0 + $0x390] sm:$0xff]
  %v129 = vld [vmem:[%s0 + $0x398] sm:$0xff]
  %v130 = vld [vmem:[%s0 + $0x3a0] sm:$0xff]
  %v131 = vld [vmem:[%s0 + $0x3a8] sm:$0xff]
  %v132 = vld [vmem:[%s0 + $0x3b0] sm:$0xff]
  %v133 = vld [vmem:[%s0 + $0x3b8] sm:$0xff]
  %v134 = vld [vmem:[%s0 + $0x3c0] sm:$0xff]
  %v135 = vld [vmem:[%s0 + $0x3c8] sm:$0xff]
  %v136 = vld [vmem:[%s0 + $0x3d0] sm:$0xff]
  %v137 = vld [vmem:[%s0 + $0x3d8] sm:$0xff]
  %v138 = vld [vmem:[%s0 + $0x3e0] sm:$0xff]
  %v139 = vld [vmem:[%s0 + $0x3e8] sm:$0xff]
  %v140 = vld [vmem:[%s0 + $0x3f0] sm:$0xff]
  %v141 = vld [vmem:[%s0 + $0x3f8] sm:$0xff]
  %v142 = vld [vmem:[%s0 + $0x400] sm:$0xff]
  %v143 = vld [vmem:[%s0 + $0x408] sm:$0xff]
  %v144 = vld [vmem:[%s0 + $0x410] sm:$0xff]
  %v145 = vld [vmem:[%s0 + $0x418] sm:$0xff]
  %v146 = vld [vmem:[%s0 + $0x420] sm:$0xff]
  %v147 = vld [vmem:[%s0 + $0x428] sm:$0xff]
  %v148 = vld [vmem:[%s0 + $0x430] sm:$0xff]
  %v149 = vld [vmem:[%s0 + $0x438] sm:$0xff]
  %v150 = vld [vmem:[%s0 + $0x440] sm:$0xff]
  %v151 = vld [vmem:[%s0 + $0x448] sm:$0xff]
  %v152 = vld [vmem:[%s0 + $0x450] sm:$0xff]
  %v153 = vld [vmem:[%s0 + $0x458] sm:$0xff]
  %v154 = vld [vmem:[%s0 + $0x460] sm:$0xff]
  %v155 = vld [vmem:[%s0 + $0x468] sm:$0xff]
  %v156 = vld [vmem:[%s0 + $0x470] sm:$0xff]
  %v157 = vld [vmem:[%s0 + $0x478] sm:$0xff]
  %v158 = vld [vmem:[%s0 + $0x480] sm:$0xff]
  %v159 = vld [vmem:[%s0 + $0x488] sm:$0xff]
  %v160 = vld [vmem:[%s0 + $0x490] sm:$0xff]
  %v161 = vld [vmem:[%s0 + $0x498] sm:$0xff]
  %v162 = vld [vmem:[%s0 + $0x4a0] sm:$0xff]
  %v163 = vld [vmem:[%s0 + $0x4a8] sm:$0xff]
  %v164 = vld [vmem:[%s0 + $0x4b0] sm:$0xff]
  %v165 = vld [vmem:[%s0 + $0x4b8] sm:$0xff]
  %v166 = vld [vmem:[%s0 + $0x4c0] sm:$0xff]
  %v167 = vld [vmem:[%s0 + $0x4c8] sm:$0xff]
  %v168 = vld [vmem:[%s0 + $0x4d0] sm:$0xff]
  %v169 = vld [vmem:[%s0 + $0x4d8] sm:$0xff]
  %v170 = vld [vmem:[%s0 + $0x4e0] sm:$0xff]
  %v171 = vld [vmem:[%s0 + $0x4e8] sm:$0xff]
  %v172 = vld [vmem:[%s0 + $0x4f0] sm:$0xff]
  %v173 = vld [vmem:[%s0 + $0x4f8] sm:$0xff]
  %v174 = vld [vmem:[%s0 + $0x500] sm:$0xff]
  %v175 = vld [vmem:[%s0 + $0x508] sm:$0xff]
  %v176 = vld [vmem:[%s0 + $0x510] sm:$0xff]
  %v177 = vld [vmem:[%s0 + $0x518] sm:$0xff]
  %v178 = vld [vmem:[%s0 + $0x520] sm:$0xff]
  %v179 = vld [vmem:[%s0 + $0x528] sm:$0xff]
  %v180 = vld [vmem:[%s0 + $0x530] sm:$0xff]
  %v181 = vld [vmem:[%s0 + $0x538] sm:$0xff]
  %v182 = vld [vmem:[%s0 + $0x540] sm:$0xff]
  %v183 = vld [vmem:[%s0 + $0x548] sm:$0xff]
  %v184 = vld [vmem:[%s0 + $0x550] sm:$0xff]
  %v185 = vld [vmem:[%s0 + $0x558] sm:$0xff]
  %v186 = vld [vmem:[%s0 + $0x560] sm:$0xff]
  %v187 = vld [vmem:[%s0 + $0x568] sm:$0xff]
  %v188 = vld [vmem:[%s0 + $0x570] sm:$0xff]
  %v189 = vld [vmem:[%s0 + $0x578] sm:$0xff]
  %v190 = vld [vmem:[%s0 + $0x580] sm:$0xff]
  %v191 = vld [vmem:[%s0 + $0x588] sm:$0xff]
  %v192 = vld [vmem:[%s0 + $0x590] sm:$0xff]
  %v193 = vld [vmem:[%s0 + $0x598] sm:$0xff]
  %v194 = vld [vmem:[%s0 + $0x5a0] sm:$0xff]
  %v195 = vld [vmem:[%s0 + $0x5a8] sm:$0xff]
  %v196 = vld [vmem:[%s0 + $0x5b0] sm:$0xff]
  %v197 = vld [vmem:[%s0 + $0x5b8] sm:$0xff]
  %v198 = vld [vmem:[%s0 + $0x5c0] sm:$0xff]
  %v199 = vld [vmem:[%s0 + $0x5c8] sm:$0xff]
  %v200 = vld [vmem:[%s0 + $0x5d0] sm:$0xff]
  %v201 = vld [vmem:[%s0 + $0x5d8] sm:$0xff]
  %v202 = vld [vmem:[%s0 + $0x5e0] sm:$0xff]
  %v203 = vld [vmem:[%s0 + $0x5e8] sm:$0xff]
  %v204 = vld [vmem:[%s0 + $0x5f0] sm:$0xff]
  %v205 = vld [vmem:[%s0 + $0x5f8] sm:$0xff]
  %v206 = vld [vmem:[%s0 + $0x600] sm:$0xff]
  %v207 = vld [vmem:[%s0 + $0x608] sm:$0xff]
  %v208 = vld [vmem:[%s0 + $0x610] sm:$0xff]
  %v209 = vld [vmem:[%s0 + $0x618] sm:$0xff]
  %v210 = vld [vmem:[%s0 + $0x620] sm:$0xff]
  %v211 = vld [vmem:[%s0 + $0x628] sm:$0xff]
  %v212 = vld [vmem:[%s0 + $0x630] sm:$0xff]
  %v213 = vld [vmem:[%s0 + $0x638] sm:$0xff]
  %v214 = vld [vmem:[%s0 + $0x640] sm:$0xff]
  %v215 = vld [vmem:[%s0 + $0x648] sm:$0xff]
  %v216 = vld [vmem:[%s0 + $0x650] sm:$0xff]
  %v217 = vld [vmem:[%s0 + $0x658] sm:$0xff]
  %v218 = vld [vmem:[%s0 + $0x660] sm:$0xff]
  %v219 = vld [vmem:[%s0 + $0x668] sm:$0xff]
  %v220 = vld [vmem:[%s0 + $0x670] sm:$0xff]
  %v221 = vld [vmem:[%s0 + $0x678] sm:$0xff]
  %v222 = vld [vmem:[%s0 + $0x680] sm:$0xff]
  %v223 = vld [vmem:[%s0 + $0x688] sm:$0xff]
  %v224 = vld [vmem:[%s0 + $0x690] sm:$0xff]
  %v225 = vld [vmem:[%s0 + $0x698] sm:$0xff]
  %v226 = vld [vmem:[%s0 + $0x6a0] sm:$0xff]
  %v227 = vld [vmem:[%s0 + $0x6a8] sm:$0xff]
  %v228 = vld [vmem:[%s0 + $0x6b0] sm:$0xff]
  %v229 = vld [vmem:[%s0 + $0x6b8] sm:$0xff]
  %v230 = vld [vmem:[%s0 + $0x6c0] sm:$0xff]
  %v231 = vld [vmem:[%s0 + $0x6c8] sm:$0xff]
  %v232 = vld [vmem:[%s0 + $0x6d0] sm:$0xff]
  %v233 = vld [vmem:[%s0 + $0x6d8] sm:$0xff]
  %v234 = vld [vmem:[%s0 + $0x6e0] sm:$0xff]
  %v235 = vld [vmem:[%s0 + $0x6e8] sm:$0xff]
  %v236 = vld [vmem:[%s0 + $0x6f0] sm:$0xff]
  %v237 = vld [vmem:[%s0 + $0x6f8] sm:$0xff]
  %v238 = vld [vmem:[%s0 + $0x700] sm:$0xff]
  %v239 = vld [vmem:[%s0 + $0x708] sm:$0xff]
  %v240 = vld [vmem:[%s0 + $0x710] sm:$0xff]
  %v241 = vld [vmem:[%s0 + $0x718] sm:$0xff]
  %v242 = vld [vmem:[%s0 + $0x720] sm:$0xff]
  %v243 = vld [vmem:[%s0 + $0x728] sm:$0xff]
  %v244 = vld [vmem:[%s0 + $0x730] sm:$0xff]
  %v245 = vld [vmem:[%s0 + $0x738] sm:$0xff]
  %v246 = vld [vmem:[%s0 + $0x740] sm:$0xff]
  %v247 = vld [vmem:[%s0 + $0x748] sm:$0xff]
  %v248 = vld [vmem:[%s0 + $0x750] sm:$0xff]
  %v249 = vld [vmem:[%s0 + $0x758] sm:$0xff]
  %v250 = vld [vmem:[%s0 + $0x760] sm:$0xff]
  %v251 = vld [vmem:[%s0 + $0x768] sm:$0xff]
  %v252 = vld [vmem:[%s0 + $0x770] sm:$0xff]
  %v253 = vld [vmem:[%s0 + $0x778] sm:$0xff]
  %v254 = vld [vmem:[%s0 + $0x780] sm:$0xff]
  %v255 = vld [vmem:[%s0 + $0x788] sm:$0xff]
  %v256 = vld [vmem:[%s0 + $0x790] sm:$0xff]
  %v257 = vld [vmem:[%s0 + $0x798] sm:$0xff]
  %v258 = vld [vmem:[%s0 + $0x7a0] sm:$0xff]
  %v259 = vld [vmem:[%s0 + $0x7a8] sm:$0xff]
  %v260 = vld [vmem:[%s0 + $0x7b0] sm:$0xff]
  %v261 = vld [vmem:[%s0 + $0x7b8] sm:$0xff]
  %v262 = vld [vmem:[%s0 + $0x7c0] sm:$0xff]
  %v263 = vld [vmem:[%s0 + $0x7c8] sm:$0xff]
  %v264 = vld [vmem:[%s0 + $0x7d0] sm:$0xff]
  %v265 = vld [vmem:[%s0 + $0x7d8] sm:$0xff]
  %v266 = vld [vmem:[%s0 + $0x7e0] sm:$0xff]
  %v267 = vld [vmem:[%s0 + $0x7e8] sm:$0xff]
  %v268 = vld [vmem:[%s0 + $0x7f0] sm:$0xff]
  %v269 = vld [vmem:[%s0 + $0x7f8] sm:$0xff]
  %v270 = vld [vmem:[%s1] sm:$0xff]
  %v271 = vld [vmem:[%s1 + $0x8] sm:$0xff]
  %v272 = vld [vmem:[%s1 + $0x10] sm:$0xff]
  %v273 = vld [vmem:[%s1 + $0x18] sm:$0xff]
  %vm274 = vcmask 261120
  %v276 = vsel %vm274, %v14, 0
  %v279 = vsel %vm274, %v15, 0
  %v282 = vsel %vm274, %v16, 0
  %v285 = vsel %vm274, %v17, 0
  %v288 = vsel %vm274, %v18, 0
  %v291 = vsel %vm274, %v19, 0
  %v294 = vsel %vm274, %v20, 0
  %v297 = vsel %vm274, %v21, 0
  %v300 = vsel %vm274, %v22, 0
  %v303 = vsel %vm274, %v23, 0
  %v306 = vsel %vm274, %v24, 0
  %v309 = vsel %vm274, %v25, 0
  %v312 = vsel %vm274, %v26, 0
  %v315 = vsel %vm274, %v27, 0
  %v318 = vsel %vm274, %v28, 0
  %v321 = vsel %vm274, %v29, 0
  %v324 = vsel %vm274, %v30, 0
  %v327 = vsel %vm274, %v31, 0
  %v330 = vsel %vm274, %v32, 0
  %v333 = vsel %vm274, %v33, 0
  %v336 = vsel %vm274, %v34, 0
  %v339 = vsel %vm274, %v35, 0
  %v342 = vsel %vm274, %v36, 0
  %v345 = vsel %vm274, %v37, 0
  %v348 = vsel %vm274, %v38, 0
  %v351 = vsel %vm274, %v39, 0
  %v354 = vsel %vm274, %v40, 0
  %v357 = vsel %vm274, %v41, 0
  %v360 = vsel %vm274, %v42, 0
  %v363 = vsel %vm274, %v43, 0
  %v366 = vsel %vm274, %v44, 0
  %v369 = vsel %vm274, %v45, 0
  %v372 = vsel %vm274, %v46, 0
  %v375 = vsel %vm274, %v47, 0
  %v378 = vsel %vm274, %v48, 0
  %v381 = vsel %vm274, %v49, 0
  %v384 = vsel %vm274, %v50, 0
  %v387 = vsel %vm274, %v51, 0
  %v390 = vsel %vm274, %v52, 0
  %v393 = vsel %vm274, %v53, 0
  %v396 = vsel %vm274, %v54, 0
  %v399 = vsel %vm274, %v55, 0
  %v402 = vsel %vm274, %v56, 0
  %v405 = vsel %vm274, %v57, 0
  %v408 = vsel %vm274, %v58, 0
  %v411 = vsel %vm274, %v59, 0
  %v414 = vsel %vm274, %v60, 0
  %v417 = vsel %vm274, %v61, 0
  %v420 = vsel %vm274, %v62, 0
  %v423 = vsel %vm274, %v63, 0
  %v426 = vsel %vm274, %v64, 0
  %v429 = vsel %vm274, %v65, 0
  %v432 = vsel %vm274, %v66, 0
  %v435 = vsel %vm274, %v67, 0
  %v438 = vsel %vm274, %v68, 0
  %v441 = vsel %vm274, %v69, 0
  %v444 = vsel %vm274, %v70, 0
  %v447 = vsel %vm274, %v71, 0
  %v450 = vsel %vm274, %v72, 0
  %v453 = vsel %vm274, %v73, 0
  %v456 = vsel %vm274, %v74, 0
  %v459 = vsel %vm274, %v75, 0
  %v462 = vsel %vm274, %v76, 0
  %v465 = vsel %vm274, %v77, 0
  %v468 = vsel %vm274, %v78, 0
  %v471 = vsel %vm274, %v79, 0
  %v474 = vsel %vm274, %v80, 0
  %v477 = vsel %vm274, %v81, 0
  %v480 = vsel %vm274, %v82, 0
  %v483 = vsel %vm274, %v83, 0
  %v486 = vsel %vm274, %v84, 0
  %v489 = vsel %vm274, %v85, 0
  %v492 = vsel %vm274, %v86, 0
  %v495 = vsel %vm274, %v87, 0
  %v498 = vsel %vm274, %v88, 0
  %v501 = vsel %vm274, %v89, 0
  %v504 = vsel %vm274, %v90, 0
  %v507 = vsel %vm274, %v91, 0
  %v510 = vsel %vm274, %v92, 0
  %v513 = vsel %vm274, %v93, 0
  %v516 = vsel %vm274, %v94, 0
  %v519 = vsel %vm274, %v95, 0
  %v522 = vsel %vm274, %v96, 0
  %v525 = vsel %vm274, %v97, 0
  %v528 = vsel %vm274, %v98, 0
  %v531 = vsel %vm274, %v99, 0
  %v534 = vsel %vm274, %v100, 0
  %v537 = vsel %vm274, %v101, 0
  %v540 = vsel %vm274, %v102, 0
  %v543 = vsel %vm274, %v103, 0
  %v546 = vsel %vm274, %v104, 0
  %v549 = vsel %vm274, %v105, 0
  %v552 = vsel %vm274, %v106, 0
  %v555 = vsel %vm274, %v107, 0
  %v558 = vsel %vm274, %v108, 0
  %v561 = vsel %vm274, %v109, 0
  %v564 = vsel %vm274, %v110, 0
  %v567 = vsel %vm274, %v111, 0
  %v570 = vsel %vm274, %v112, 0
  %v573 = vsel %vm274, %v113, 0
  %v576 = vsel %vm274, %v114, 0
  %v579 = vsel %vm274, %v115, 0
  %v582 = vsel %vm274, %v116, 0
  %v585 = vsel %vm274, %v117, 0
  %v588 = vsel %vm274, %v118, 0
  %v591 = vsel %vm274, %v119, 0
  %v594 = vsel %vm274, %v120, 0
  %v597 = vsel %vm274, %v121, 0
  %v600 = vsel %vm274, %v122, 0
  %v603 = vsel %vm274, %v123, 0
  %v606 = vsel %vm274, %v124, 0
  %v609 = vsel %vm274, %v125, 0
  %v612 = vsel %vm274, %v126, 0
  %v615 = vsel %vm274, %v127, 0
  %v618 = vsel %vm274, %v128, 0
  %v621 = vsel %vm274, %v129, 0
  %v624 = vsel %vm274, %v130, 0
  %v627 = vsel %vm274, %v131, 0
  %v630 = vsel %vm274, %v132, 0
  %v633 = vsel %vm274, %v133, 0
  %v636 = vsel %vm274, %v134, 0
  %v639 = vsel %vm274, %v135, 0
  %v642 = vsel %vm274, %v136, 0
  %v645 = vsel %vm274, %v137, 0
  %v648 = vsel %vm274, %v138, 0
  %v651 = vsel %vm274, %v139, 0
  %v654 = vsel %vm274, %v140, 0
  %v657 = vsel %vm274, %v141, 0
  %v660 = vsel %vm274, %v142, 0
  %v663 = vsel %vm274, %v143, 0
  %v666 = vsel %vm274, %v144, 0
  %v669 = vsel %vm274, %v145, 0
  %v672 = vsel %vm274, %v146, 0
  %v675 = vsel %vm274, %v147, 0
  %v678 = vsel %vm274, %v148, 0
  %v681 = vsel %vm274, %v149, 0
  %v684 = vsel %vm274, %v150, 0
  %v687 = vsel %vm274, %v151, 0
  %v690 = vsel %vm274, %v152, 0
  %v693 = vsel %vm274, %v153, 0
  %v696 = vsel %vm274, %v154, 0
  %v699 = vsel %vm274, %v155, 0
  %v702 = vsel %vm274, %v156, 0
  %v705 = vsel %vm274, %v157, 0
  %v708 = vsel %vm274, %v158, 0
  %v711 = vsel %vm274, %v159, 0
  %v714 = vsel %vm274, %v160, 0
  %v717 = vsel %vm274, %v161, 0
  %v720 = vsel %vm274, %v162, 0
  %v723 = vsel %vm274, %v163, 0
  %v726 = vsel %vm274, %v164, 0
  %v729 = vsel %vm274, %v165, 0
  %v732 = vsel %vm274, %v166, 0
  %v735 = vsel %vm274, %v167, 0
  %v738 = vsel %vm274, %v168, 0
  %v741 = vsel %vm274, %v169, 0
  %v744 = vsel %vm274, %v170, 0
  %v747 = vsel %vm274, %v171, 0
  %v750 = vsel %vm274, %v172, 0
  %v753 = vsel %vm274, %v173, 0
  %v756 = vsel %vm274, %v174, 0
  %v759 = vsel %vm274, %v175, 0
  %v762 = vsel %vm274, %v176, 0
  %v765 = vsel %vm274, %v177, 0
  %v768 = vsel %vm274, %v178, 0
  %v771 = vsel %vm274, %v179, 0
  %v774 = vsel %vm274, %v180, 0
  %v777 = vsel %vm274, %v181, 0
  %v780 = vsel %vm274, %v182, 0
  %v783 = vsel %vm274, %v183, 0
  %v786 = vsel %vm274, %v184, 0
  %v789 = vsel %vm274, %v185, 0
  %v792 = vsel %vm274, %v186, 0
  %v795 = vsel %vm274, %v187, 0
  %v798 = vsel %vm274, %v188, 0
  %v801 = vsel %vm274, %v189, 0
  %v804 = vsel %vm274, %v190, 0
  %v807 = vsel %vm274, %v191, 0
  %v810 = vsel %vm274, %v192, 0
  %v813 = vsel %vm274, %v193, 0
  %v816 = vsel %vm274, %v194, 0
  %v819 = vsel %vm274, %v195, 0
  %v822 = vsel %vm274, %v196, 0
  %v825 = vsel %vm274, %v197, 0
  %v828 = vsel %vm274, %v198, 0
  %v831 = vsel %vm274, %v199, 0
  %v834 = vsel %vm274, %v200, 0
  %v837 = vsel %vm274, %v201, 0
  %v840 = vsel %vm274, %v202, 0
  %v843 = vsel %vm274, %v203, 0
  %v846 = vsel %vm274, %v204, 0
  %v849 = vsel %vm274, %v205, 0
  %v852 = vsel %vm274, %v206, 0
  %v855 = vsel %vm274, %v207, 0
  %v858 = vsel %vm274, %v208, 0
  %v861 = vsel %vm274, %v209, 0
  %v864 = vsel %vm274, %v210, 0
  %v867 = vsel %vm274, %v211, 0
  %v870 = vsel %vm274, %v212, 0
  %v873 = vsel %vm274, %v213, 0
  %v876 = vsel %vm274, %v214, 0
  %v879 = vsel %vm274, %v215, 0
  %v882 = vsel %vm274, %v216, 0
  %v885 = vsel %vm274, %v217, 0
  %v888 = vsel %vm274, %v218, 0
  %v891 = vsel %vm274, %v219, 0
  %v894 = vsel %vm274, %v220, 0
  %v897 = vsel %vm274, %v221, 0
  %v900 = vsel %vm274, %v222, 0
  %v903 = vsel %vm274, %v223, 0
  %v906 = vsel %vm274, %v224, 0
  %v909 = vsel %vm274, %v225, 0
  %v912 = vsel %vm274, %v226, 0
  %v915 = vsel %vm274, %v227, 0
  %v918 = vsel %vm274, %v228, 0
  %v921 = vsel %vm274, %v229, 0
  %v924 = vsel %vm274, %v230, 0
  %v927 = vsel %vm274, %v231, 0
  %v930 = vsel %vm274, %v232, 0
  %v933 = vsel %vm274, %v233, 0
  %v936 = vsel %vm274, %v234, 0
  %v939 = vsel %vm274, %v235, 0
  %v942 = vsel %vm274, %v236, 0
  %v945 = vsel %vm274, %v237, 0
  %v948 = vsel %vm274, %v238, 0
  %v951 = vsel %vm274, %v239, 0
  %v954 = vsel %vm274, %v240, 0
  %v957 = vsel %vm274, %v241, 0
  %v960 = vsel %vm274, %v242, 0
  %v963 = vsel %vm274, %v243, 0
  %v966 = vsel %vm274, %v244, 0
  %v969 = vsel %vm274, %v245, 0
  %v972 = vsel %vm274, %v246, 0
  %v975 = vsel %vm274, %v247, 0
  %v978 = vsel %vm274, %v248, 0
  %v981 = vsel %vm274, %v249, 0
  %v984 = vsel %vm274, %v250, 0
  %v987 = vsel %vm274, %v251, 0
  %v990 = vsel %vm274, %v252, 0
  %v993 = vsel %vm274, %v253, 0
  %v996 = vsel %vm274, %v254, 0
  %v999 = vsel %vm274, %v255, 0
  %v1002 = vsel %vm274, %v256, 0
  %v1005 = vsel %vm274, %v257, 0
  %v1008 = vsel %vm274, %v258, 0
  %v1011 = vsel %vm274, %v259, 0
  %v1014 = vsel %vm274, %v260, 0
  %v1017 = vsel %vm274, %v261, 0
  %v1020 = vsel %vm274, %v262, 0
  %v1023 = vsel %vm274, %v263, 0
  %v1026 = vsel %vm274, %v264, 0
  %v1029 = vsel %vm274, %v265, 0
  %v1032 = vsel %vm274, %v266, 0
  %v1035 = vsel %vm274, %v267, 0
  %v1038 = vsel %vm274, %v268, 0
  %v1041 = vsel %vm274, %v269, 0
  %1043 = vmatprep.subr.mxu0 0.0
  %1044 = vmatpush1.msra.mxu0 %v270
  %1045 = vmatprep.subr.mxu0 0.0
  %1046 = vmatpush1.msra.mxu0 %v271
  %1047 = vmatprep.subr.mxu0 0.0
  %1048 = vmatpush1.msra.mxu0 %v272
  %1049 = vmatprep.subr.mxu0 0.0
  %1050 = vmatpush1.msra.mxu0 %v273
  %1051 = vmatprep.subr.mxu0 0.0
  %1052 = vmatpush1.msra.mxu0 0.0
  %1053 = vmatprep.subr.mxu0 0.0
  %1054 = vmatpush1.msra.mxu0 0.0
  %1055 = vmatprep.subr.mxu0 0.0
  %1056 = vmatpush1.msra.mxu0 0.0
  %1057 = vmatprep.subr.mxu0 0.0
  %1058 = vmatpush1.msra.mxu0 0.0
  %1059 = vmatprep.subr.mxu0 0.0
  %1060 = vmatpush1.msra.mxu0 0.0
  %1061 = vmatprep.subr.mxu0 0.0
  %1062 = vmatpush1.msra.mxu0 0.0
  %1063 = vmatprep.subr.mxu0 0.0
  %1064 = vmatpush1.msra.mxu0 0.0
  %1065 = vmatprep.subr.mxu0 0.0
  %1066 = vmatpush1.msra.mxu0 0.0
  %1067 = vmatprep.subr.mxu0 0.0
  %1068 = vmatpush1.msra.mxu0 0.0
  %1069 = vmatprep.subr.mxu0 0.0
  %1070 = vmatpush1.msra.mxu0 0.0
  %1071 = vmatprep.subr.mxu0 0.0
  %1072 = vmatpush1.msra.mxu0 0.0
  %1073 = vmatprep.subr.mxu0 0.0
  %1074 = vmatpush1.msra.mxu0 0.0
  %1075 = vmatprep.subr.mxu0 0.0
  %1076 = vmatpush1.msra.mxu0 0.0
  %1077 = vmatprep.subr.mxu0 0.0
  %1078 = vmatpush1.msra.mxu0 0.0
  %1079 = vmatprep.subr.mxu0 0.0
  %1080 = vmatpush1.msra.mxu0 0.0
  %1081 = vmatprep.subr.mxu0 0.0
  %1082 = vmatpush1.msra.mxu0 0.0
  %1083 = vmatprep.subr.mxu0 0.0
  %1084 = vmatpush1.msra.mxu0 0.0
  %1085 = vmatprep.subr.mxu0 0.0
  %1086 = vmatpush1.msra.mxu0 0.0
  %1087 = vmatprep.subr.mxu0 0.0
  %1088 = vmatpush1.msra.mxu0 0.0
  %1089 = vmatprep.subr.mxu0 0.0
  %1090 = vmatpush1.msra.mxu0 0.0
  %1091 = vmatprep.subr.mxu0 0.0
  %1092 = vmatpush1.msra.mxu0 0.0
  %1093 = vmatprep.subr.mxu0 0.0
  %1094 = vmatpush1.msra.mxu0 0.0
  %1095 = vmatprep.subr.mxu0 0.0
  %1096 = vmatpush1.msra.mxu0 0.0
  %1097 = vmatprep.subr.mxu0 0.0
  %1098 = vmatpush1.msra.mxu0 0.0
  %1099 = vmatprep.subr.mxu0 0.0
  %1100 = vmatpush1.msra.mxu0 0.0
  %1101 = vmatprep.subr.mxu0 0.0
  %1102 = vmatpush1.msra.mxu0 0.0
  %1103 = vmatprep.subr.mxu0 0.0
  %1104 = vmatpush1.msra.mxu0 0.0
  %1105 = vmatprep.subr.mxu0 0.0
  %1106 = vmatpush1.msra.mxu0 0.0
  %1107 = vmatprep.mubr.f32.mxu0 0.0
  %1108 = vmatmul.mubr.f32.gmra.mrb[0].mxu0 %v276
  %v1109 = vpop.f32.mrb[0].mxu0
  %v1110 = vadd.f32 0.0, %v1109
  %v1111 = vpop.f32.mrb[0].mxu0
  %1112 = vmatprep.mubr.f32.mxu0 0.0
  %1113 = vmatmul.mubr.f32.gmra.mrb[0].mxu0 %v279
  %v1114 = vpop.f32.mrb[0].mxu0
  %v1115 = vadd.f32 0.0, %v1114
  %v1116 = vpop.f32.mrb[0].mxu0
  %1117 = vmatprep.mubr.f32.mxu0 0.0
  %1118 = vmatmul.mubr.f32.gmra.mrb[0].mxu0 %v282
  %v1119 = vpop.f32.mrb[0].mxu0
  %v1120 = vadd.f32 0.0, %v1119
  %v1121 = vpop.f32.mrb[0].mxu0
  %1122 = vmatprep.mubr.f32.mxu0 0.0
  %1123 = vmatmul.mubr.f32.gmra.mrb[0].mxu0 %v285
  %v1124 = vpop.f32.mrb[0].mxu0
  %v1125 = vadd.f32 0.0, %v1124
  %v1126 = vpop.f32.mrb[0].mxu0
  %1127 = vmatprep.mubr.f32.mxu0 0.0
  %1128 = vmatmul.mubr.f32.gmra.mrb[0].mxu0 %v288
  %v1129 = vpop.f32.mrb[0].mxu0
  %v1130 = vadd.f32 0.0, %v1129
  %v1131 = vpop.f32.mrb[0].mxu0
  %1132 = vmatprep.mubr.f32.mxu0 0.0
  %1133 = vmatmul.mubr.f32.gmra.mrb[0].mxu0 %v291
  %v1134 = vpop.f32.mrb[0].mxu0
  %v1135 = vadd.f32 0.0, %v1134
  %v1136 = vpop.f32.mrb[0].mxu0
  %1137 = vmatprep.mubr.f32.mxu0 0.0
  %1138 = vmatmul.mubr.f32.gmra.mrb[0].mxu0 %v294
  %v1139 = vpop.f32.mrb[0].mxu0
  %v1140 = vadd.f32 0.0, %v1139
  %v1141 = vpop.f32.mrb[0].mxu0
  %1142 = vmatprep.mubr.f32.mxu0 0.0
  %1143 = vmatmul.mubr.f32.gmra.mrb[0].mxu0 %v297
  %v1144 = vpop.f32.mrb[0].mxu0
  %v1145 = vadd.f32 0.0, %v1144
  %v1146 = vpop.f32.mrb[0].mxu0
  %1147 = vmatprep.mubr.f32.mxu0 0.0
  %1148 = vmatmul.mubr.f32.gmra.mrb[0].mxu0 %v300
  %v1149 = vpop.f32.mrb[0].mxu0
  %v1150 = vadd.f32 0.0, %v1149
  %v1151 = vpop.f32.mrb[0].mxu0
  %1152 = vmatprep.mubr.f32.mxu0 0.0
  %1153 = vmatmul.mubr.f32.gmra.mrb[0].mxu0 %v303
  %v1154 = vpop.f32.mrb[0].mxu0
  %v1155 = vadd.f32 0.0, %v1154
  %v1156 = vpop.f32.mrb[0].mxu0
  %1157 = vmatprep.mubr.f32.mxu0 0.0
  %1158 = vmatmul.mubr.f32.gmra.mrb[0].mxu0 %v306
  %v1159 = vpop.f32.mrb[0].mxu0
  %v1160 = vadd.f32 0.0, %v1159
  %v1161 = vpop.f32.mrb[0].mxu0
  %1162 = vmatprep.mubr.f32.mxu0 0.0
  %1163 = vmatmul.mubr.f32.gmra.mrb[0].mxu0 %v309
  %v1164 = vpop.f32.mrb[0].mxu0
  %v1165 = vadd.f32 0.0, %v1164
  %v1166 = vpop.f32.mrb[0].mxu0
  %1167 = vmatprep.mubr.f32.mxu0 0.0
  %1168 = vmatmul.mubr.f32.gmra.mrb[0].mxu0 %v312
  %v1169 = vpop.f32.mrb[0].mxu0
  %v1170 = vadd.f32 0.0, %v1169
  %v1171 = vpop.f32.mrb[0].mxu0
  %1172 = vmatprep.mubr.f32.mxu0 0.0
  %1173 = vmatmul.mubr.f32.gmra.mrb[0].mxu0 %v315
  %v1174 = vpop.f32.mrb[0].mxu0
  %v1175 = vadd.f32 0.0, %v1174
  %v1176 = vpop.f32.mrb[0].mxu0
  %1177 = vmatprep.mubr.f32.mxu0 0.0
  %1178 = vmatmul.mubr.f32.gmra.mrb[0].mxu0 %v318
  %v1179 = vpop.f32.mrb[0].mxu0
  %v1180 = vadd.f32 0.0, %v1179
  %v1181 = vpop.f32.mrb[0].mxu0
  %1182 = vmatprep.mubr.f32.mxu0 0.0
  %1183 = vmatmul.mubr.f32.gmra.mrb[0].mxu0 %v321
  %v1184 = vpop.f32.mrb[0].mxu0
  %v1185 = vadd.f32 0.0, %v1184
  %v1186 = vpop.f32.mrb[0].mxu0
  %1187 = vmatprep.mubr.f32.mxu0 0.0
  %1188 = vmatmul.mubr.f32.gmra.mrb[0].mxu0 %v324
  %v1189 = vpop.f32.mrb[0].mxu0
  %v1190 = vadd.f32 0.0, %v1189
  %v1191 = vpop.f32.mrb[0].mxu0
  %1192 = vmatprep.mubr.f32.mxu0 0.0
  %1193 = vmatmul.mubr.f32.gmra.mrb[0].mxu0 %v327
  %v1194 = vpop.f32.mrb[0].mxu0
  %v1195 = vadd.f32 0.0, %v1194
  %v1196 = vpop.f32.mrb[0].mxu0
  %1197 = vmatprep.mubr.f32.mxu0 0.0
  %1198 = vmatmul.mubr.f32.gmra.mrb[0].mxu0 %v330
  %v1199 = vpop.f32.mrb[0].mxu0
  %v1200 = vadd.f32 0.0, %v1199
  %v1201 = vpop.f32.mrb[0].mxu0
  %1202 = vmatprep.mubr.f32.mxu0 0.0
  %1203 = vmatmul.mubr.f32.gmra.mrb[0].mxu0 %v333
  %v1204 = vpop.f32.mrb[0].mxu0
  %v1205 = vadd.f32 0.0, %v1204
  %v1206 = vpop.f32.mrb[0].mxu0
  %1207 = vmatprep.mubr.f32.mxu0 0.0
  %1208 = vmatmul.mubr.f32.gmra.mrb[0].mxu0 %v336
  %v1209 = vpop.f32.mrb[0].mxu0
  %v1210 = vadd.f32 0.0, %v1209
  %v1211 = vpop.f32.mrb[0].mxu0
  %1212 = vmatprep.mubr.f32.mxu0 0.0
  %1213 = vmatmul.mubr.f32.gmra.mrb[0].mxu0 %v339
  %v1214 = vpop.f32.mrb[0].mxu0
  %v1215 = vadd.f32 0.0, %v1214
  %v1216 = vpop.f32.mrb[0].mxu0
  %1217 = vmatprep.mubr.f32.mxu0 0.0
  %1218 = vmatmul.mubr.f32.gmra.mrb[0].mxu0 %v342
  %v1219 = vpop.f32.mrb[0].mxu0
  %v1220 = vadd.f32 0.0, %v1219
  %v1221 = vpop.f32.mrb[0].mxu0
  %1222 = vmatprep.mubr.f32.mxu0 0.0
  %1223 = vmatmul.mubr.f32.gmra.mrb[0].mxu0 %v345
  %v1224 = vpop.f32.mrb[0].mxu0
  %v1225 = vadd.f32 0.0, %v1224
  %v1226 = vpop.f32.mrb[0].mxu0
  %1227 = vmatprep.mubr.f32.mxu0 0.0
  %1228 = vmatmul.mubr.f32.gmra.mrb[0].mxu0 %v348
  %v1229 = vpop.f32.mrb[0].mxu0
  %v1230 = vadd.f32 0.0, %v1229
  %v1231 = vpop.f32.mrb[0].mxu0
  %1232 = vmatprep.mubr.f32.mxu0 0.0
  %1233 = vmatmul.mubr.f32.gmra.mrb[0].mxu0 %v351
  %v1234 = vpop.f32.mrb[0].mxu0
  %v1235 = vadd.f32 0.0, %v1234
  %v1236 = vpop.f32.mrb[0].mxu0
  %1237 = vmatprep.mubr.f32.mxu0 0.0
  %1238 = vmatmul.mubr.f32.gmra.mrb[0].mxu0 %v354
  %v1239 = vpop.f32.mrb[0].mxu0
  %v1240 = vadd.f32 0.0, %v1239
  %v1241 = vpop.f32.mrb[0].mxu0
  %1242 = vmatprep.mubr.f32.mxu0 0.0
  %1243 = vmatmul.mubr.f32.gmra.mrb[0].mxu0 %v357
  %v1244 = vpop.f32.mrb[0].mxu0
  %v1245 = vadd.f32 0.0, %v1244
  %v1246 = vpop.f32.mrb[0].mxu0
  %1247 = vmatprep.mubr.f32.mxu0 0.0
  %1248 = vmatmul.mubr.f32.gmra.mrb[0].mxu0 %v360
  %v1249 = vpop.f32.mrb[0].mxu0
  %v1250 = vadd.f32 0.0, %v1249
  %v1251 = vpop.f32.mrb[0].mxu0
  %1252 = vmatprep.mubr.f32.mxu0 0.0
  %1253 = vmatmul.mubr.f32.gmra.mrb[0].mxu0 %v363
  %v1254 = vpop.f32.mrb[0].mxu0
  %v1255 = vadd.f32 0.0, %v1254
  %v1256 = vpop.f32.mrb[0].mxu0
  %1257 = vmatprep.mubr.f32.mxu0 0.0
  %1258 = vmatmul.mubr.f32.gmra.mrb[0].mxu0 %v366
  %v1259 = vpop.f32.mrb[0].mxu0
  %v1260 = vadd.f32 0.0, %v1259
  %v1261 = vpop.f32.mrb[0].mxu0
  %1262 = vmatprep.mubr.f32.mxu0 0.0
  %1263 = vmatmul.mubr.f32.gmra.mrb[0].mxu0 %v369
  %v1264 = vpop.f32.mrb[0].mxu0
  %v1265 = vadd.f32 0.0, %v1264
  %v1266 = vpop.f32.mrb[0].mxu0
  %1267 = vmatprep.mubr.f32.mxu0 0.0
  %1268 = vmatmul.mubr.f32.gmra.mrb[0].mxu0 %v372
  %v1269 = vpop.f32.mrb[0].mxu0
  %v1270 = vadd.f32 0.0, %v1269
  %v1271 = vpop.f32.mrb[0].mxu0
  %1272 = vmatprep.mubr.f32.mxu0 0.0
  %1273 = vmatmul.mubr.f32.gmra.mrb[0].mxu0 %v375
  %v1274 = vpop.f32.mrb[0].mxu0
  %v1275 = vadd.f32 0.0, %v1274
  %v1276 = vpop.f32.mrb[0].mxu0
  %1277 = vmatprep.mubr.f32.mxu0 0.0
  %1278 = vmatmul.mubr.f32.gmra.mrb[0].mxu0 %v378
  %v1279 = vpop.f32.mrb[0].mxu0
  %v1280 = vadd.f32 0.0, %v1279
  %v1281 = vpop.f32.mrb[0].mxu0
  %1282 = vmatprep.mubr.f32.mxu0 0.0
  %1283 = vmatmul.mubr.f32.gmra.mrb[0].mxu0 %v381
  %v1284 = vpop.f32.mrb[0].mxu0
  %v1285 = vadd.f32 0.0, %v1284
  %v1286 = vpop.f32.mrb[0].mxu0
  %1287 = vmatprep.mubr.f32.mxu0 0.0
  %1288 = vmatmul.mubr.f32.gmra.mrb[0].mxu0 %v384
  %v1289 = vpop.f32.mrb[0].mxu0
  %v1290 = vadd.f32 0.0, %v1289
  %v1291 = vpop.f32.mrb[0].mxu0
  %1292 = vmatprep.mubr.f32.mxu0 0.0
  %1293 = vmatmul.mubr.f32.gmra.mrb[0].mxu0 %v387
  %v1294 = vpop.f32.mrb[0].mxu0
  %v1295 = vadd.f32 0.0, %v1294
  %v1296 = vpop.f32.mrb[0].mxu0
  %1297 = vmatprep.mubr.f32.mxu0 0.0
  %1298 = vmatmul.mubr.f32.gmra.mrb[0].mxu0 %v390
  %v1299 = vpop.f32.mrb[0].mxu0
  %v1300 = vadd.f32 0.0, %v1299
  %v1301 = vpop.f32.mrb[0].mxu0
  %1302 = vmatprep.mubr.f32.mxu0 0.0
  %1303 = vmatmul.mubr.f32.gmra.mrb[0].mxu0 %v393
  %v1304 = vpop.f32.mrb[0].mxu0
  %v1305 = vadd.f32 0.0, %v1304
  %v1306 = vpop.f32.mrb[0].mxu0
  %1307 = vmatprep.mubr.f32.mxu0 0.0
  %1308 = vmatmul.mubr.f32.gmra.mrb[0].mxu0 %v396
  %v1309 = vpop.f32.mrb[0].mxu0
  %v1310 = vadd.f32 0.0, %v1309
  %v1311 = vpop.f32.mrb[0].mxu0
  %1312 = vmatprep.mubr.f32.mxu0 0.0
  %1313 = vmatmul.mubr.f32.gmra.mrb[0].mxu0 %v399
  %v1314 = vpop.f32.mrb[0].mxu0
  %v1315 = vadd.f32 0.0, %v1314
  %v1316 = vpop.f32.mrb[0].mxu0
  %1317 = vmatprep.mubr.f32.mxu0 0.0
  %1318 = vmatmul.mubr.f32.gmra.mrb[0].mxu0 %v402
  %v1319 = vpop.f32.mrb[0].mxu0
  %v1320 = vadd.f32 0.0, %v1319
  %v1321 = vpop.f32.mrb[0].mxu0
  %1322 = vmatprep.mubr.f32.mxu0 0.0
  %1323 = vmatmul.mubr.f32.gmra.mrb[0].mxu0 %v405
  %v1324 = vpop.f32.mrb[0].mxu0
  %v1325 = vadd.f32 0.0, %v1324
  %v1326 = vpop.f32.mrb[0].mxu0
  %1327 = vmatprep.mubr.f32.mxu0 0.0
  %1328 = vmatmul.mubr.f32.gmra.mrb[0].mxu0 %v408
  %v1329 = vpop.f32.mrb[0].mxu0
  %v1330 = vadd.f32 0.0, %v1329
  %v1331 = vpop.f32.mrb[0].mxu0
  %1332 = vmatprep.mubr.f32.mxu0 0.0
  %1333 = vmatmul.mubr.f32.gmra.mrb[0].mxu0 %v411
  %v1334 = vpop.f32.mrb[0].mxu0
  %v1335 = vadd.f32 0.0, %v1334
  %v1336 = vpop.f32.mrb[0].mxu0
  %1337 = vmatprep.mubr.f32.mxu0 0.0
  %1338 = vmatmul.mubr.f32.gmra.mrb[0].mxu0 %v414
  %v1339 = vpop.f32.mrb[0].mxu0
  %v1340 = vadd.f32 0.0, %v1339
  %v1341 = vpop.f32.mrb[0].mxu0
  %1342 = vmatprep.mubr.f32.mxu0 0.0
  %1343 = vmatmul.mubr.f32.gmra.mrb[0].mxu0 %v417
  %v1344 = vpop.f32.mrb[0].mxu0
  %v1345 = vadd.f32 0.0, %v1344
  %v1346 = vpop.f32.mrb[0].mxu0
  %1347 = vmatprep.mubr.f32.mxu0 0.0
  %1348 = vmatmul.mubr.f32.gmra.mrb[0].mxu0 %v420
  %v1349 = vpop.f32.mrb[0].mxu0
  %v1350 = vadd.f32 0.0, %v1349
  %v1351 = vpop.f32.mrb[0].mxu0
  %1352 = vmatprep.mubr.f32.mxu0 0.0
  %1353 = vmatmul.mubr.f32.gmra.mrb[0].mxu0 %v423
  %v1354 = vpop.f32.mrb[0].mxu0
  %v1355 = vadd.f32 0.0, %v1354
  %v1356 = vpop.f32.mrb[0].mxu0
  %1357 = vmatprep.mubr.f32.mxu0 0.0
  %1358 = vmatmul.mubr.f32.gmra.mrb[0].mxu0 %v426
  %v1359 = vpop.f32.mrb[0].mxu0
  %v1360 = vadd.f32 0.0, %v1359
  %v1361 = vpop.f32.mrb[0].mxu0
  %1362 = vmatprep.mubr.f32.mxu0 0.0
  %1363 = vmatmul.mubr.f32.gmra.mrb[0].mxu0 %v429
  %v1364 = vpop.f32.mrb[0].mxu0
  %v1365 = vadd.f32 0.0, %v1364
  %v1366 = vpop.f32.mrb[0].mxu0
  %1367 = vmatprep.mubr.f32.mxu0 0.0
  %1368 = vmatmul.mubr.f32.gmra.mrb[0].mxu0 %v432
  %v1369 = vpop.f32.mrb[0].mxu0
  %v1370 = vadd.f32 0.0, %v1369
  %v1371 = vpop.f32.mrb[0].mxu0
  %1372 = vmatprep.mubr.f32.mxu0 0.0
  %1373 = vmatmul.mubr.f32.gmra.mrb[0].mxu0 %v435
  %v1374 = vpop.f32.mrb[0].mxu0
  %v1375 = vadd.f32 0.0, %v1374
  %v1376 = vpop.f32.mrb[0].mxu0
  %1377 = vmatprep.mubr.f32.mxu0 0.0
  %1378 = vmatmul.mubr.f32.gmra.mrb[0].mxu0 %v438
  %v1379 = vpop.f32.mrb[0].mxu0
  %v1380 = vadd.f32 0.0, %v1379
  %v1381 = vpop.f32.mrb[0].mxu0
  %1382 = vmatprep.mubr.f32.mxu0 0.0
  %1383 = vmatmul.mubr.f32.gmra.mrb[0].mxu0 %v441
  %v1384 = vpop.f32.mrb[0].mxu0
  %v1385 = vadd.f32 0.0, %v1384
  %v1386 = vpop.f32.mrb[0].mxu0
  %1387 = vmatprep.mubr.f32.mxu0 0.0
  %1388 = vmatmul.mubr.f32.gmra.mrb[0].mxu0 %v444
  %v1389 = vpop.f32.mrb[0].mxu0
  %v1390 = vadd.f32 0.0, %v1389
  %v1391 = vpop.f32.mrb[0].mxu0
  %1392 = vmatprep.mubr.f32.mxu0 0.0
  %1393 = vmatmul.mubr.f32.gmra.mrb[0].mxu0 %v447
  %v1394 = vpop.f32.mrb[0].mxu0
  %v1395 = vadd.f32 0.0, %v1394
  %v1396 = vpop.f32.mrb[0].mxu0
  %1397 = vmatprep.mubr.f32.mxu0 0.0
  %1398 = vmatmul.mubr.f32.gmra.mrb[0].mxu0 %v450
  %v1399 = vpop.f32.mrb[0].mxu0
  %v1400 = vadd.f32 0.0, %v1399
  %v1401 = vpop.f32.mrb[0].mxu0
  %1402 = vmatprep.mubr.f32.mxu0 0.0
  %1403 = vmatmul.mubr.f32.gmra.mrb[0].mxu0 %v453
  %v1404 = vpop.f32.mrb[0].mxu0
  %v1405 = vadd.f32 0.0, %v1404
  %v1406 = vpop.f32.mrb[0].mxu0
  %1407 = vmatprep.mubr.f32.mxu0 0.0
  %1408 = vmatmul.mubr.f32.gmra.mrb[0].mxu0 %v456
  %v1409 = vpop.f32.mrb[0].mxu0
  %v1410 = vadd.f32 0.0, %v1409
  %v1411 = vpop.f32.mrb[0].mxu0
  %1412 = vmatprep.mubr.f32.mxu0 0.0
  %1413 = vmatmul.mubr.f32.gmra.mrb[0].mxu0 %v459
  %v1414 = vpop.f32.mrb[0].mxu0
  %v1415 = vadd.f32 0.0, %v1414
  %v1416 = vpop.f32.mrb[0].mxu0
  %1417 = vmatprep.mubr.f32.mxu0 0.0
  %1418 = vmatmul.mubr.f32.gmra.mrb[0].mxu0 %v462
  %v1419 = vpop.f32.mrb[0].mxu0
  %v1420 = vadd.f32 0.0, %v1419
  %v1421 = vpop.f32.mrb[0].mxu0
  %1422 = vmatprep.mubr.f32.mxu0 0.0
  %1423 = vmatmul.mubr.f32.gmra.mrb[0].mxu0 %v465
  %v1424 = vpop.f32.mrb[0].mxu0
  %v1425 = vadd.f32 0.0, %v1424
  %v1426 = vpop.f32.mrb[0].mxu0
  %1427 = vmatprep.mubr.f32.mxu0 0.0
  %1428 = vmatmul.mubr.f32.gmra.mrb[0].mxu0 %v468
  %v1429 = vpop.f32.mrb[0].mxu0
  %v1430 = vadd.f32 0.0, %v1429
  %v1431 = vpop.f32.mrb[0].mxu0
  %1432 = vmatprep.mubr.f32.mxu0 0.0
  %1433 = vmatmul.mubr.f32.gmra.mrb[0].mxu0 %v471
  %v1434 = vpop.f32.mrb[0].mxu0
  %v1435 = vadd.f32 0.0, %v1434
  %v1436 = vpop.f32.mrb[0].mxu0
  %1437 = vmatprep.mubr.f32.mxu0 0.0
  %1438 = vmatmul.mubr.f32.gmra.mrb[0].mxu0 %v474
  %v1439 = vpop.f32.mrb[0].mxu0
  %v1440 = vadd.f32 0.0, %v1439
  %v1441 = vpop.f32.mrb[0].mxu0
  %1442 = vmatprep.mubr.f32.mxu0 0.0
  %1443 = vmatmul.mubr.f32.gmra.mrb[0].mxu0 %v477
  %v1444 = vpop.f32.mrb[0].mxu0
  %v1445 = vadd.f32 0.0, %v1444
  %v1446 = vpop.f32.mrb[0].mxu0
  %1447 = vmatprep.mubr.f32.mxu0 0.0
  %1448 = vmatmul.mubr.f32.gmra.mrb[0].mxu0 %v480
  %v1449 = vpop.f32.mrb[0].mxu0
  %v1450 = vadd.f32 0.0, %v1449
  %v1451 = vpop.f32.mrb[0].mxu0
  %1452 = vmatprep.mubr.f32.mxu0 0.0
  %1453 = vmatmul.mubr.f32.gmra.mrb[0].mxu0 %v483
  %v1454 = vpop.f32.mrb[0].mxu0
  %v1455 = vadd.f32 0.0, %v1454
  %v1456 = vpop.f32.mrb[0].mxu0
  %1457 = vmatprep.mubr.f32.mxu0 0.0
  %1458 = vmatmul.mubr.f32.gmra.mrb[0].mxu0 %v486
  %v1459 = vpop.f32.mrb[0].mxu0
  %v1460 = vadd.f32 0.0, %v1459
  %v1461 = vpop.f32.mrb[0].mxu0
  %1462 = vmatprep.mubr.f32.mxu0 0.0
  %1463 = vmatmul.mubr.f32.gmra.mrb[0].mxu0 %v489
  %v1464 = vpop.f32.mrb[0].mxu0
  %v1465 = vadd.f32 0.0, %v1464
  %v1466 = vpop.f32.mrb[0].mxu0
  %1467 = vmatprep.mubr.f32.mxu0 0.0
  %1468 = vmatmul.mubr.f32.gmra.mrb[0].mxu0 %v492
  %v1469 = vpop.f32.mrb[0].mxu0
  %v1470 = vadd.f32 0.0, %v1469
  %v1471 = vpop.f32.mrb[0].mxu0
  %1472 = vmatprep.mubr.f32.mxu0 0.0
  %1473 = vmatmul.mubr.f32.gmra.mrb[0].mxu0 %v495
  %v1474 = vpop.f32.mrb[0].mxu0
  %v1475 = vadd.f32 0.0, %v1474
  %v1476 = vpop.f32.mrb[0].mxu0
  %1477 = vmatprep.mubr.f32.mxu0 0.0
  %1478 = vmatmul.mubr.f32.gmra.mrb[0].mxu0 %v498
  %v1479 = vpop.f32.mrb[0].mxu0
  %v1480 = vadd.f32 0.0, %v1479
  %v1481 = vpop.f32.mrb[0].mxu0
  %1482 = vmatprep.mubr.f32.mxu0 0.0
  %1483 = vmatmul.mubr.f32.gmra.mrb[0].mxu0 %v501
  %v1484 = vpop.f32.mrb[0].mxu0
  %v1485 = vadd.f32 0.0, %v1484
  %v1486 = vpop.f32.mrb[0].mxu0
  %1487 = vmatprep.mubr.f32.mxu0 0.0
  %1488 = vmatmul.mubr.f32.gmra.mrb[0].mxu0 %v504
  %v1489 = vpop.f32.mrb[0].mxu0
  %v1490 = vadd.f32 0.0, %v1489
  %v1491 = vpop.f32.mrb[0].mxu0
  %1492 = vmatprep.mubr.f32.mxu0 0.0
  %1493 = vmatmul.mubr.f32.gmra.mrb[0].mxu0 %v507
  %v1494 = vpop.f32.mrb[0].mxu0
  %v1495 = vadd.f32 0.0, %v1494
  %v1496 = vpop.f32.mrb[0].mxu0
  %1497 = vmatprep.mubr.f32.mxu0 0.0
  %1498 = vmatmul.mubr.f32.gmra.mrb[0].mxu0 %v510
  %v1499 = vpop.f32.mrb[0].mxu0
  %v1500 = vadd.f32 0.0, %v1499
  %v1501 = vpop.f32.mrb[0].mxu0
  %1502 = vmatprep.mubr.f32.mxu0 0.0
  %1503 = vmatmul.mubr.f32.gmra.mrb[0].mxu0 %v513
  %v1504 = vpop.f32.mrb[0].mxu0
  %v1505 = vadd.f32 0.0, %v1504
  %v1506 = vpop.f32.mrb[0].mxu0
  %1507 = vmatprep.mubr.f32.mxu0 0.0
  %1508 = vmatmul.mubr.f32.gmra.mrb[0].mxu0 %v516
  %v1509 = vpop.f32.mrb[0].mxu0
  %v1510 = vadd.f32 0.0, %v1509
  %v1511 = vpop.f32.mrb[0].mxu0
  %1512 = vmatprep.mubr.f32.mxu0 0.0
  %1513 = vmatmul.mubr.f32.gmra.mrb[0].mxu0 %v519
  %v1514 = vpop.f32.mrb[0].mxu0
  %v1515 = vadd.f32 0.0, %v1514
  %v1516 = vpop.f32.mrb[0].mxu0
  %1517 = vmatprep.mubr.f32.mxu0 0.0
  %1518 = vmatmul.mubr.f32.gmra.mrb[0].mxu0 %v522
  %v1519 = vpop.f32.mrb[0].mxu0
  %v1520 = vadd.f32 0.0, %v1519
  %v1521 = vpop.f32.mrb[0].mxu0
  %1522 = vmatprep.mubr.f32.mxu0 0.0
  %1523 = vmatmul.mubr.f32.gmra.mrb[0].mxu0 %v525
  %v1524 = vpop.f32.mrb[0].mxu0
  %v1525 = vadd.f32 0.0, %v1524
  %v1526 = vpop.f32.mrb[0].mxu0
  %1527 = vmatprep.mubr.f32.mxu0 0.0
  %1528 = vmatmul.mubr.f32.gmra.mrb[0].mxu0 %v528
  %v1529 = vpop.f32.mrb[0].mxu0
  %v1530 = vadd.f32 0.0, %v1529
  %v1531 = vpop.f32.mrb[0].mxu0
  %1532 = vmatprep.mubr.f32.mxu0 0.0
  %1533 = vmatmul.mubr.f32.gmra.mrb[0].mxu0 %v531
  %v1534 = vpop.f32.mrb[0].mxu0
  %v1535 = vadd.f32 0.0, %v1534
  %v1536 = vpop.f32.mrb[0].mxu0
  %1537 = vmatprep.mubr.f32.mxu0 0.0
  %1538 = vmatmul.mubr.f32.gmra.mrb[0].mxu0 %v534
  %v1539 = vpop.f32.mrb[0].mxu0
  %v1540 = vadd.f32 0.0, %v1539
  %v1541 = vpop.f32.mrb[0].mxu0
  %1542 = vmatprep.mubr.f32.mxu0 0.0
  %1543 = vmatmul.mubr.f32.gmra.mrb[0].mxu0 %v537
  %v1544 = vpop.f32.mrb[0].mxu0
  %v1545 = vadd.f32 0.0, %v1544
  %v1546 = vpop.f32.mrb[0].mxu0
  %1547 = vmatprep.mubr.f32.mxu0 0.0
  %1548 = vmatmul.mubr.f32.gmra.mrb[0].mxu0 %v540
  %v1549 = vpop.f32.mrb[0].mxu0
  %v1550 = vadd.f32 0.0, %v1549
  %v1551 = vpop.f32.mrb[0].mxu0
  %1552 = vmatprep.mubr.f32.mxu0 0.0
  %1553 = vmatmul.mubr.f32.gmra.mrb[0].mxu0 %v543
  %v1554 = vpop.f32.mrb[0].mxu0
  %v1555 = vadd.f32 0.0, %v1554
  %v1556 = vpop.f32.mrb[0].mxu0
  %1557 = vmatprep.mubr.f32.mxu0 0.0
  %1558 = vmatmul.mubr.f32.gmra.mrb[0].mxu0 %v546
  %v1559 = vpop.f32.mrb[0].mxu0
  %v1560 = vadd.f32 0.0, %v1559
  %v1561 = vpop.f32.mrb[0].mxu0
  %1562 = vmatprep.mubr.f32.mxu0 0.0
  %1563 = vmatmul.mubr.f32.gmra.mrb[0].mxu0 %v549
  %v1564 = vpop.f32.mrb[0].mxu0
  %v1565 = vadd.f32 0.0, %v1564
  %v1566 = vpop.f32.mrb[0].mxu0
  %1567 = vmatprep.mubr.f32.mxu0 0.0
  %1568 = vmatmul.mubr.f32.gmra.mrb[0].mxu0 %v552
  %v1569 = vpop.f32.mrb[0].mxu0
  %v1570 = vadd.f32 0.0, %v1569
  %v1571 = vpop.f32.mrb[0].mxu0
  %1572 = vmatprep.mubr.f32.mxu0 0.0
  %1573 = vmatmul.mubr.f32.gmra.mrb[0].mxu0 %v555
  %v1574 = vpop.f32.mrb[0].mxu0
  %v1575 = vadd.f32 0.0, %v1574
  %v1576 = vpop.f32.mrb[0].mxu0
  %1577 = vmatprep.mubr.f32.mxu0 0.0
  %1578 = vmatmul.mubr.f32.gmra.mrb[0].mxu0 %v558
  %v1579 = vpop.f32.mrb[0].mxu0
  %v1580 = vadd.f32 0.0, %v1579
  %v1581 = vpop.f32.mrb[0].mxu0
  %1582 = vmatprep.mubr.f32.mxu0 0.0
  %1583 = vmatmul.mubr.f32.gmra.mrb[0].mxu0 %v561
  %v1584 = vpop.f32.mrb[0].mxu0
  %v1585 = vadd.f32 0.0, %v1584
  %v1586 = vpop.f32.mrb[0].mxu0
  %1587 = vmatprep.mubr.f32.mxu0 0.0
  %1588 = vmatmul.mubr.f32.gmra.mrb[0].mxu0 %v564
  %v1589 = vpop.f32.mrb[0].mxu0
  %v1590 = vadd.f32 0.0, %v1589
  %v1591 = vpop.f32.mrb[0].mxu0
  %1592 = vmatprep.mubr.f32.mxu0 0.0
  %1593 = vmatmul.mubr.f32.gmra.mrb[0].mxu0 %v567
  %v1594 = vpop.f32.mrb[0].mxu0
  %v1595 = vadd.f32 0.0, %v1594
  %v1596 = vpop.f32.mrb[0].mxu0
  %1597 = vmatprep.mubr.f32.mxu0 0.0
  %1598 = vmatmul.mubr.f32.gmra.mrb[0].mxu0 %v570
  %v1599 = vpop.f32.mrb[0].mxu0
  %v1600 = vadd.f32 0.0, %v1599
  %v1601 = vpop.f32.mrb[0].mxu0
  %1602 = vmatprep.mubr.f32.mxu0 0.0
  %1603 = vmatmul.mubr.f32.gmra.mrb[0].mxu0 %v573
  %v1604 = vpop.f32.mrb[0].mxu0
  %v1605 = vadd.f32 0.0, %v1604
  %v1606 = vpop.f32.mrb[0].mxu0
  %1607 = vmatprep.mubr.f32.mxu0 0.0
  %1608 = vmatmul.mubr.f32.gmra.mrb[0].mxu0 %v576
  %v1609 = vpop.f32.mrb[0].mxu0
  %v1610 = vadd.f32 0.0, %v1609
  %v1611 = vpop.f32.mrb[0].mxu0
  %1612 = vmatprep.mubr.f32.mxu0 0.0
  %1613 = vmatmul.mubr.f32.gmra.mrb[0].mxu0 %v579
  %v1614 = vpop.f32.mrb[0].mxu0
  %v1615 = vadd.f32 0.0, %v1614
  %v1616 = vpop.f32.mrb[0].mxu0
  %1617 = vmatprep.mubr.f32.mxu0 0.0
  %1618 = vmatmul.mubr.f32.gmra.mrb[0].mxu0 %v582
  %v1619 = vpop.f32.mrb[0].mxu0
  %v1620 = vadd.f32 0.0, %v1619
  %v1621 = vpop.f32.mrb[0].mxu0
  %1622 = vmatprep.mubr.f32.mxu0 0.0
  %1623 = vmatmul.mubr.f32.gmra.mrb[0].mxu0 %v585
  %v1624 = vpop.f32.mrb[0].mxu0
  %v1625 = vadd.f32 0.0, %v1624
  %v1626 = vpop.f32.mrb[0].mxu0
  %1627 = vmatprep.mubr.f32.mxu0 0.0
  %1628 = vmatmul.mubr.f32.gmra.mrb[0].mxu0 %v588
  %v1629 = vpop.f32.mrb[0].mxu0
  %v1630 = vadd.f32 0.0, %v1629
  %v1631 = vpop.f32.mrb[0].mxu0
  %1632 = vmatprep.mubr.f32.mxu0 0.0
  %1633 = vmatmul.mubr.f32.gmra.mrb[0].mxu0 %v591
  %v1634 = vpop.f32.mrb[0].mxu0
  %v1635 = vadd.f32 0.0, %v1634
  %v1636 = vpop.f32.mrb[0].mxu0
  %1637 = vmatprep.mubr.f32.mxu0 0.0
  %1638 = vmatmul.mubr.f32.gmra.mrb[0].mxu0 %v594
  %v1639 = vpop.f32.mrb[0].mxu0
  %v1640 = vadd.f32 0.0, %v1639
  %v1641 = vpop.f32.mrb[0].mxu0
  %1642 = vmatprep.mubr.f32.mxu0 0.0
  %1643 = vmatmul.mubr.f32.gmra.mrb[0].mxu0 %v597
  %v1644 = vpop.f32.mrb[0].mxu0
  %v1645 = vadd.f32 0.0, %v1644
  %v1646 = vpop.f32.mrb[0].mxu0
  %1647 = vmatprep.mubr.f32.mxu0 0.0
  %1648 = vmatmul.mubr.f32.gmra.mrb[0].mxu0 %v600
  %v1649 = vpop.f32.mrb[0].mxu0
  %v1650 = vadd.f32 0.0, %v1649
  %v1651 = vpop.f32.mrb[0].mxu0
  %1652 = vmatprep.mubr.f32.mxu0 0.0
  %1653 = vmatmul.mubr.f32.gmra.mrb[0].mxu0 %v603
  %v1654 = vpop.f32.mrb[0].mxu0
  %v1655 = vadd.f32 0.0, %v1654
  %v1656 = vpop.f32.mrb[0].mxu0
  %1657 = vmatprep.mubr.f32.mxu0 0.0
  %1658 = vmatmul.mubr.f32.gmra.mrb[0].mxu0 %v606
  %v1659 = vpop.f32.mrb[0].mxu0
  %v1660 = vadd.f32 0.0, %v1659
  %v1661 = vpop.f32.mrb[0].mxu0
  %1662 = vmatprep.mubr.f32.mxu0 0.0
  %1663 = vmatmul.mubr.f32.gmra.mrb[0].mxu0 %v609
  %v1664 = vpop.f32.mrb[0].mxu0
  %v1665 = vadd.f32 0.0, %v1664
  %v1666 = vpop.f32.mrb[0].mxu0
  %1667 = vmatprep.mubr.f32.mxu0 0.0
  %1668 = vmatmul.mubr.f32.gmra.mrb[0].mxu0 %v612
  %v1669 = vpop.f32.mrb[0].mxu0
  %v1670 = vadd.f32 0.0, %v1669
  %v1671 = vpop.f32.mrb[0].mxu0
  %1672 = vmatprep.mubr.f32.mxu0 0.0
  %1673 = vmatmul.mubr.f32.gmra.mrb[0].mxu0 %v615
  %v1674 = vpop.f32.mrb[0].mxu0
  %v1675 = vadd.f32 0.0, %v1674
  %v1676 = vpop.f32.mrb[0].mxu0
  %1677 = vmatprep.mubr.f32.mxu0 0.0
  %1678 = vmatmul.mubr.f32.gmra.mrb[0].mxu0 %v618
  %v1679 = vpop.f32.mrb[0].mxu0
  %v1680 = vadd.f32 0.0, %v1679
  %v1681 = vpop.f32.mrb[0].mxu0
  %1682 = vmatprep.mubr.f32.mxu0 0.0
  %1683 = vmatmul.mubr.f32.gmra.mrb[0].mxu0 %v621
  %v1684 = vpop.f32.mrb[0].mxu0
  %v1685 = vadd.f32 0.0, %v1684
  %v1686 = vpop.f32.mrb[0].mxu0
  %1687 = vmatprep.mubr.f32.mxu0 0.0
  %1688 = vmatmul.mubr.f32.gmra.mrb[0].mxu0 %v624
  %v1689 = vpop.f32.mrb[0].mxu0
  %v1690 = vadd.f32 0.0, %v1689
  %v1691 = vpop.f32.mrb[0].mxu0
  %1692 = vmatprep.mubr.f32.mxu0 0.0
  %1693 = vmatmul.mubr.f32.gmra.mrb[0].mxu0 %v627
  %v1694 = vpop.f32.mrb[0].mxu0
  %v1695 = vadd.f32 0.0, %v1694
  %v1696 = vpop.f32.mrb[0].mxu0
  %1697 = vmatprep.mubr.f32.mxu0 0.0
  %1698 = vmatmul.mubr.f32.gmra.mrb[0].mxu0 %v630
  %v1699 = vpop.f32.mrb[0].mxu0
  %v1700 = vadd.f32 0.0, %v1699
  %v1701 = vpop.f32.mrb[0].mxu0
  %1702 = vmatprep.mubr.f32.mxu0 0.0
  %1703 = vmatmul.mubr.f32.gmra.mrb[0].mxu0 %v633
  %v1704 = vpop.f32.mrb[0].mxu0
  %v1705 = vadd.f32 0.0, %v1704
  %v1706 = vpop.f32.mrb[0].mxu0
  %1707 = vmatprep.mubr.f32.mxu0 0.0
  %1708 = vmatmul.mubr.f32.gmra.mrb[0].mxu0 %v636
  %v1709 = vpop.f32.mrb[0].mxu0
  %v1710 = vadd.f32 0.0, %v1709
  %v1711 = vpop.f32.mrb[0].mxu0
  %1712 = vmatprep.mubr.f32.mxu0 0.0
  %1713 = vmatmul.mubr.f32.gmra.mrb[0].mxu0 %v639
  %v1714 = vpop.f32.mrb[0].mxu0
  %v1715 = vadd.f32 0.0, %v1714
  %v1716 = vpop.f32.mrb[0].mxu0
  %1717 = vmatprep.mubr.f32.mxu0 0.0
  %1718 = vmatmul.mubr.f32.gmra.mrb[0].mxu0 %v642
  %v1719 = vpop.f32.mrb[0].mxu0
  %v1720 = vadd.f32 0.0, %v1719
  %v1721 = vpop.f32.mrb[0].mxu0
  %1722 = vmatprep.mubr.f32.mxu0 0.0
  %1723 = vmatmul.mubr.f32.gmra.mrb[0].mxu0 %v645
  %v1724 = vpop.f32.mrb[0].mxu0
  %v1725 = vadd.f32 0.0, %v1724
  %v1726 = vpop.f32.mrb[0].mxu0
  %1727 = vmatprep.mubr.f32.mxu0 0.0
  %1728 = vmatmul.mubr.f32.gmra.mrb[0].mxu0 %v648
  %v1729 = vpop.f32.mrb[0].mxu0
  %v1730 = vadd.f32 0.0, %v1729
  %v1731 = vpop.f32.mrb[0].mxu0
  %1732 = vmatprep.mubr.f32.mxu0 0.0
  %1733 = vmatmul.mubr.f32.gmra.mrb[0].mxu0 %v651
  %v1734 = vpop.f32.mrb[0].mxu0
  %v1735 = vadd.f32 0.0, %v1734
  %v1736 = vpop.f32.mrb[0].mxu0
  %1737 = vmatprep.mubr.f32.mxu0 0.0
  %1738 = vmatmul.mubr.f32.gmra.mrb[0].mxu0 %v654
  %v1739 = vpop.f32.mrb[0].mxu0
  %v1740 = vadd.f32 0.0, %v1739
  %v1741 = vpop.f32.mrb[0].mxu0
  %1742 = vmatprep.mubr.f32.mxu0 0.0
  %1743 = vmatmul.mubr.f32.gmra.mrb[0].mxu0 %v657
  %v1744 = vpop.f32.mrb[0].mxu0
  %v1745 = vadd.f32 0.0, %v1744
  %v1746 = vpop.f32.mrb[0].mxu0
  %1747 = vmatprep.mubr.f32.mxu0 0.0
  %1748 = vmatmul.mubr.f32.gmra.mrb[0].mxu0 %v660
  %v1749 = vpop.f32.mrb[0].mxu0
  %v1750 = vadd.f32 0.0, %v1749
  %v1751 = vpop.f32.mrb[0].mxu0
  %1752 = vmatprep.mubr.f32.mxu0 0.0
  %1753 = vmatmul.mubr.f32.gmra.mrb[0].mxu0 %v663
  %v1754 = vpop.f32.mrb[0].mxu0
  %v1755 = vadd.f32 0.0, %v1754
  %v1756 = vpop.f32.mrb[0].mxu0
  %1757 = vmatprep.mubr.f32.mxu0 0.0
  %1758 = vmatmul.mubr.f32.gmra.mrb[0].mxu0 %v666
  %v1759 = vpop.f32.mrb[0].mxu0
  %v1760 = vadd.f32 0.0, %v1759
  %v1761 = vpop.f32.mrb[0].mxu0
  %1762 = vmatprep.mubr.f32.mxu0 0.0
  %1763 = vmatmul.mubr.f32.gmra.mrb[0].mxu0 %v669
  %v1764 = vpop.f32.mrb[0].mxu0
  %v1765 = vadd.f32 0.0, %v1764
  %v1766 = vpop.f32.mrb[0].mxu0
  %1767 = vmatprep.mubr.f32.mxu0 0.0
  %1768 = vmatmul.mubr.f32.gmra.mrb[0].mxu0 %v672
  %v1769 = vpop.f32.mrb[0].mxu0
  %v1770 = vadd.f32 0.0, %v1769
  %v1771 = vpop.f32.mrb[0].mxu0
  %1772 = vmatprep.mubr.f32.mxu0 0.0
  %1773 = vmatmul.mubr.f32.gmra.mrb[0].mxu0 %v675
  %v1774 = vpop.f32.mrb[0].mxu0
  %v1775 = vadd.f32 0.0, %v1774
  %v1776 = vpop.f32.mrb[0].mxu0
  %1777 = vmatprep.mubr.f32.mxu0 0.0
  %1778 = vmatmul.mubr.f32.gmra.mrb[0].mxu0 %v678
  %v1779 = vpop.f32.mrb[0].mxu0
  %v1780 = vadd.f32 0.0, %v1779
  %v1781 = vpop.f32.mrb[0].mxu0
  %1782 = vmatprep.mubr.f32.mxu0 0.0
  %1783 = vmatmul.mubr.f32.gmra.mrb[0].mxu0 %v681
  %v1784 = vpop.f32.mrb[0].mxu0
  %v1785 = vadd.f32 0.0, %v1784
  %v1786 = vpop.f32.mrb[0].mxu0
  %1787 = vmatprep.mubr.f32.mxu0 0.0
  %1788 = vmatmul.mubr.f32.gmra.mrb[0].mxu0 %v684
  %v1789 = vpop.f32.mrb[0].mxu0
  %v1790 = vadd.f32 0.0, %v1789
  %v1791 = vpop.f32.mrb[0].mxu0
  %1792 = vmatprep.mubr.f32.mxu0 0.0
  %1793 = vmatmul.mubr.f32.gmra.mrb[0].mxu0 %v687
  %v1794 = vpop.f32.mrb[0].mxu0
  %v1795 = vadd.f32 0.0, %v1794
  %v1796 = vpop.f32.mrb[0].mxu0
  %1797 = vmatprep.mubr.f32.mxu0 0.0
  %1798 = vmatmul.mubr.f32.gmra.mrb[0].mxu0 %v690
  %v1799 = vpop.f32.mrb[0].mxu0
  %v1800 = vadd.f32 0.0, %v1799
  %v1801 = vpop.f32.mrb[0].mxu0
  %1802 = vmatprep.mubr.f32.mxu0 0.0
  %1803 = vmatmul.mubr.f32.gmra.mrb[0].mxu0 %v693
  %v1804 = vpop.f32.mrb[0].mxu0
  %v1805 = vadd.f32 0.0, %v1804
  %v1806 = vpop.f32.mrb[0].mxu0
  %1807 = vmatprep.mubr.f32.mxu0 0.0
  %1808 = vmatmul.mubr.f32.gmra.mrb[0].mxu0 %v696
  %v1809 = vpop.f32.mrb[0].mxu0
  %v1810 = vadd.f32 0.0, %v1809
  %v1811 = vpop.f32.mrb[0].mxu0
  %1812 = vmatprep.mubr.f32.mxu0 0.0
  %1813 = vmatmul.mubr.f32.gmra.mrb[0].mxu0 %v699
  %v1814 = vpop.f32.mrb[0].mxu0
  %v1815 = vadd.f32 0.0, %v1814
  %v1816 = vpop.f32.mrb[0].mxu0
  %1817 = vmatprep.mubr.f32.mxu0 0.0
  %1818 = vmatmul.mubr.f32.gmra.mrb[0].mxu0 %v702
  %v1819 = vpop.f32.mrb[0].mxu0
  %v1820 = vadd.f32 0.0, %v1819
  %v1821 = vpop.f32.mrb[0].mxu0
  %1822 = vmatprep.mubr.f32.mxu0 0.0
  %1823 = vmatmul.mubr.f32.gmra.mrb[0].mxu0 %v705
  %v1824 = vpop.f32.mrb[0].mxu0
  %v1825 = vadd.f32 0.0, %v1824
  %v1826 = vpop.f32.mrb[0].mxu0
  %1827 = vmatprep.mubr.f32.mxu0 0.0
  %1828 = vmatmul.mubr.f32.gmra.mrb[0].mxu0 %v708
  %v1829 = vpop.f32.mrb[0].mxu0
  %v1830 = vadd.f32 0.0, %v1829
  %v1831 = vpop.f32.mrb[0].mxu0
  %1832 = vmatprep.mubr.f32.mxu0 0.0
  %1833 = vmatmul.mubr.f32.gmra.mrb[0].mxu0 %v711
  %v1834 = vpop.f32.mrb[0].mxu0
  %v1835 = vadd.f32 0.0, %v1834
  %v1836 = vpop.f32.mrb[0].mxu0
  %1837 = vmatprep.mubr.f32.mxu0 0.0
  %1838 = vmatmul.mubr.f32.gmra.mrb[0].mxu0 %v714
  %v1839 = vpop.f32.mrb[0].mxu0
  %v1840 = vadd.f32 0.0, %v1839
  %v1841 = vpop.f32.mrb[0].mxu0
  %1842 = vmatprep.mubr.f32.mxu0 0.0
  %1843 = vmatmul.mubr.f32.gmra.mrb[0].mxu0 %v717
  %v1844 = vpop.f32.mrb[0].mxu0
  %v1845 = vadd.f32 0.0, %v1844
  %v1846 = vpop.f32.mrb[0].mxu0
  %1847 = vmatprep.mubr.f32.mxu0 0.0
  %1848 = vmatmul.mubr.f32.gmra.mrb[0].mxu0 %v720
  %v1849 = vpop.f32.mrb[0].mxu0
  %v1850 = vadd.f32 0.0, %v1849
  %v1851 = vpop.f32.mrb[0].mxu0
  %1852 = vmatprep.mubr.f32.mxu0 0.0
  %1853 = vmatmul.mubr.f32.gmra.mrb[0].mxu0 %v723
  %v1854 = vpop.f32.mrb[0].mxu0
  %v1855 = vadd.f32 0.0, %v1854
  %v1856 = vpop.f32.mrb[0].mxu0
  %1857 = vmatprep.mubr.f32.mxu0 0.0
  %1858 = vmatmul.mubr.f32.gmra.mrb[0].mxu0 %v726
  %v1859 = vpop.f32.mrb[0].mxu0
  %v1860 = vadd.f32 0.0, %v1859
  %v1861 = vpop.f32.mrb[0].mxu0
  %1862 = vmatprep.mubr.f32.mxu0 0.0
  %1863 = vmatmul.mubr.f32.gmra.mrb[0].mxu0 %v729
  %v1864 = vpop.f32.mrb[0].mxu0
  %v1865 = vadd.f32 0.0, %v1864
  %v1866 = vpop.f32.mrb[0].mxu0
  %1867 = vmatprep.mubr.f32.mxu0 0.0
  %1868 = vmatmul.mubr.f32.gmra.mrb[0].mxu0 %v732
  %v1869 = vpop.f32.mrb[0].mxu0
  %v1870 = vadd.f32 0.0, %v1869
  %v1871 = vpop.f32.mrb[0].mxu0
  %1872 = vmatprep.mubr.f32.mxu0 0.0
  %1873 = vmatmul.mubr.f32.gmra.mrb[0].mxu0 %v735
  %v1874 = vpop.f32.mrb[0].mxu0
  %v1875 = vadd.f32 0.0, %v1874
  %v1876 = vpop.f32.mrb[0].mxu0
  %1877 = vmatprep.mubr.f32.mxu0 0.0
  %1878 = vmatmul.mubr.f32.gmra.mrb[0].mxu0 %v738
  %v1879 = vpop.f32.mrb[0].mxu0
  %v1880 = vadd.f32 0.0, %v1879
  %v1881 = vpop.f32.mrb[0].mxu0
  %1882 = vmatprep.mubr.f32.mxu0 0.0
  %1883 = vmatmul.mubr.f32.gmra.mrb[0].mxu0 %v741
  %v1884 = vpop.f32.mrb[0].mxu0
  %v1885 = vadd.f32 0.0, %v1884
  %v1886 = vpop.f32.mrb[0].mxu0
  %1887 = vmatprep.mubr.f32.mxu0 0.0
  %1888 = vmatmul.mubr.f32.gmra.mrb[0].mxu0 %v744
  %v1889 = vpop.f32.mrb[0].mxu0
  %v1890 = vadd.f32 0.0, %v1889
  %v1891 = vpop.f32.mrb[0].mxu0
  %1892 = vmatprep.mubr.f32.mxu0 0.0
  %1893 = vmatmul.mubr.f32.gmra.mrb[0].mxu0 %v747
  %v1894 = vpop.f32.mrb[0].mxu0
  %v1895 = vadd.f32 0.0, %v1894
  %v1896 = vpop.f32.mrb[0].mxu0
  %1897 = vmatprep.mubr.f32.mxu0 0.0
  %1898 = vmatmul.mubr.f32.gmra.mrb[0].mxu0 %v750
  %v1899 = vpop.f32.mrb[0].mxu0
  %v1900 = vadd.f32 0.0, %v1899
  %v1901 = vpop.f32.mrb[0].mxu0
  %1902 = vmatprep.mubr.f32.mxu0 0.0
  %1903 = vmatmul.mubr.f32.gmra.mrb[0].mxu0 %v753
  %v1904 = vpop.f32.mrb[0].mxu0
  %v1905 = vadd.f32 0.0, %v1904
  %v1906 = vpop.f32.mrb[0].mxu0
  %1907 = vmatprep.mubr.f32.mxu0 0.0
  %1908 = vmatmul.mubr.f32.gmra.mrb[0].mxu0 %v756
  %v1909 = vpop.f32.mrb[0].mxu0
  %v1910 = vadd.f32 0.0, %v1909
  %v1911 = vpop.f32.mrb[0].mxu0
  %1912 = vmatprep.mubr.f32.mxu0 0.0
  %1913 = vmatmul.mubr.f32.gmra.mrb[0].mxu0 %v759
  %v1914 = vpop.f32.mrb[0].mxu0
  %v1915 = vadd.f32 0.0, %v1914
  %v1916 = vpop.f32.mrb[0].mxu0
  %1917 = vmatprep.mubr.f32.mxu0 0.0
  %1918 = vmatmul.mubr.f32.gmra.mrb[0].mxu0 %v762
  %v1919 = vpop.f32.mrb[0].mxu0
  %v1920 = vadd.f32 0.0, %v1919
  %v1921 = vpop.f32.mrb[0].mxu0
  %1922 = vmatprep.mubr.f32.mxu0 0.0
  %1923 = vmatmul.mubr.f32.gmra.mrb[0].mxu0 %v765
  %v1924 = vpop.f32.mrb[0].mxu0
  %v1925 = vadd.f32 0.0, %v1924
  %v1926 = vpop.f32.mrb[0].mxu0
  %1927 = vmatprep.mubr.f32.mxu0 0.0
  %1928 = vmatmul.mubr.f32.gmra.mrb[0].mxu0 %v768
  %v1929 = vpop.f32.mrb[0].mxu0
  %v1930 = vadd.f32 0.0, %v1929
  %v1931 = vpop.f32.mrb[0].mxu0
  %1932 = vmatprep.mubr.f32.mxu0 0.0
  %1933 = vmatmul.mubr.f32.gmra.mrb[0].mxu0 %v771
  %v1934 = vpop.f32.mrb[0].mxu0
  %v1935 = vadd.f32 0.0, %v1934
  %v1936 = vpop.f32.mrb[0].mxu0
  %1937 = vmatprep.mubr.f32.mxu0 0.0
  %1938 = vmatmul.mubr.f32.gmra.mrb[0].mxu0 %v774
  %v1939 = vpop.f32.mrb[0].mxu0
  %v1940 = vadd.f32 0.0, %v1939
  %v1941 = vpop.f32.mrb[0].mxu0
  %1942 = vmatprep.mubr.f32.mxu0 0.0
  %1943 = vmatmul.mubr.f32.gmra.mrb[0].mxu0 %v777
  %v1944 = vpop.f32.mrb[0].mxu0
  %v1945 = vadd.f32 0.0, %v1944
  %v1946 = vpop.f32.mrb[0].mxu0
  %1947 = vmatprep.mubr.f32.mxu0 0.0
  %1948 = vmatmul.mubr.f32.gmra.mrb[0].mxu0 %v780
  %v1949 = vpop.f32.mrb[0].mxu0
  %v1950 = vadd.f32 0.0, %v1949
  %v1951 = vpop.f32.mrb[0].mxu0
  %1952 = vmatprep.mubr.f32.mxu0 0.0
  %1953 = vmatmul.mubr.f32.gmra.mrb[0].mxu0 %v783
  %v1954 = vpop.f32.mrb[0].mxu0
  %v1955 = vadd.f32 0.0, %v1954
  %v1956 = vpop.f32.mrb[0].mxu0
  %1957 = vmatprep.mubr.f32.mxu0 0.0
  %1958 = vmatmul.mubr.f32.gmra.mrb[0].mxu0 %v786
  %v1959 = vpop.f32.mrb[0].mxu0
  %v1960 = vadd.f32 0.0, %v1959
  %v1961 = vpop.f32.mrb[0].mxu0
  %1962 = vmatprep.mubr.f32.mxu0 0.0
  %1963 = vmatmul.mubr.f32.gmra.mrb[0].mxu0 %v789
  %v1964 = vpop.f32.mrb[0].mxu0
  %v1965 = vadd.f32 0.0, %v1964
  %v1966 = vpop.f32.mrb[0].mxu0
  %1967 = vmatprep.mubr.f32.mxu0 0.0
  %1968 = vmatmul.mubr.f32.gmra.mrb[0].mxu0 %v792
  %v1969 = vpop.f32.mrb[0].mxu0
  %v1970 = vadd.f32 0.0, %v1969
  %v1971 = vpop.f32.mrb[0].mxu0
  %1972 = vmatprep.mubr.f32.mxu0 0.0
  %1973 = vmatmul.mubr.f32.gmra.mrb[0].mxu0 %v795
  %v1974 = vpop.f32.mrb[0].mxu0
  %v1975 = vadd.f32 0.0, %v1974
  %v1976 = vpop.f32.mrb[0].mxu0
  %1977 = vmatprep.mubr.f32.mxu0 0.0
  %1978 = vmatmul.mubr.f32.gmra.mrb[0].mxu0 %v798
  %v1979 = vpop.f32.mrb[0].mxu0
  %v1980 = vadd.f32 0.0, %v1979
  %v1981 = vpop.f32.mrb[0].mxu0
  %1982 = vmatprep.mubr.f32.mxu0 0.0
  %1983 = vmatmul.mubr.f32.gmra.mrb[0].mxu0 %v801
  %v1984 = vpop.f32.mrb[0].mxu0
  %v1985 = vadd.f32 0.0, %v1984
  %v1986 = vpop.f32.mrb[0].mxu0
  %1987 = vmatprep.mubr.f32.mxu0 0.0
  %1988 = vmatmul.mubr.f32.gmra.mrb[0].mxu0 %v804
  %v1989 = vpop.f32.mrb[0].mxu0
  %v1990 = vadd.f32 0.0, %v1989
  %v1991 = vpop.f32.mrb[0].mxu0
  %1992 = vmatprep.mubr.f32.mxu0 0.0
  %1993 = vmatmul.mubr.f32.gmra.mrb[0].mxu0 %v807
  %v1994 = vpop.f32.mrb[0].mxu0
  %v1995 = vadd.f32 0.0, %v1994
  %v1996 = vpop.f32.mrb[0].mxu0
  %1997 = vmatprep.mubr.f32.mxu0 0.0
  %1998 = vmatmul.mubr.f32.gmra.mrb[0].mxu0 %v810
  %v1999 = vpop.f32.mrb[0].mxu0
  %v2000 = vadd.f32 0.0, %v1999
  %v2001 = vpop.f32.mrb[0].mxu0
  %2002 = vmatprep.mubr.f32.mxu0 0.0
  %2003 = vmatmul.mubr.f32.gmra.mrb[0].mxu0 %v813
  %v2004 = vpop.f32.mrb[0].mxu0
  %v2005 = vadd.f32 0.0, %v2004
  %v2006 = vpop.f32.mrb[0].mxu0
  %2007 = vmatprep.mubr.f32.mxu0 0.0
  %2008 = vmatmul.mubr.f32.gmra.mrb[0].mxu0 %v816
  %v2009 = vpop.f32.mrb[0].mxu0
  %v2010 = vadd.f32 0.0, %v2009
  %v2011 = vpop.f32.mrb[0].mxu0
  %2012 = vmatprep.mubr.f32.mxu0 0.0
  %2013 = vmatmul.mubr.f32.gmra.mrb[0].mxu0 %v819
  %v2014 = vpop.f32.mrb[0].mxu0
  %v2015 = vadd.f32 0.0, %v2014
  %v2016 = vpop.f32.mrb[0].mxu0
  %2017 = vmatprep.mubr.f32.mxu0 0.0
  %2018 = vmatmul.mubr.f32.gmra.mrb[0].mxu0 %v822
  %v2019 = vpop.f32.mrb[0].mxu0
  %v2020 = vadd.f32 0.0, %v2019
  %v2021 = vpop.f32.mrb[0].mxu0
  %2022 = vmatprep.mubr.f32.mxu0 0.0
  %2023 = vmatmul.mubr.f32.gmra.mrb[0].mxu0 %v825
  %v2024 = vpop.f32.mrb[0].mxu0
  %v2025 = vadd.f32 0.0, %v2024
  %v2026 = vpop.f32.mrb[0].mxu0
  %2027 = vmatprep.mubr.f32.mxu0 0.0
  %2028 = vmatmul.mubr.f32.gmra.mrb[0].mxu0 %v828
  %v2029 = vpop.f32.mrb[0].mxu0
  %v2030 = vadd.f32 0.0, %v2029
  %v2031 = vpop.f32.mrb[0].mxu0
  %2032 = vmatprep.mubr.f32.mxu0 0.0
  %2033 = vmatmul.mubr.f32.gmra.mrb[0].mxu0 %v831
  %v2034 = vpop.f32.mrb[0].mxu0
  %v2035 = vadd.f32 0.0, %v2034
  %v2036 = vpop.f32.mrb[0].mxu0
  %2037 = vmatprep.mubr.f32.mxu0 0.0
  %2038 = vmatmul.mubr.f32.gmra.mrb[0].mxu0 %v834
  %v2039 = vpop.f32.mrb[0].mxu0
  %v2040 = vadd.f32 0.0, %v2039
  %v2041 = vpop.f32.mrb[0].mxu0
  %2042 = vmatprep.mubr.f32.mxu0 0.0
  %2043 = vmatmul.mubr.f32.gmra.mrb[0].mxu0 %v837
  %v2044 = vpop.f32.mrb[0].mxu0
  %v2045 = vadd.f32 0.0, %v2044
  %v2046 = vpop.f32.mrb[0].mxu0
  %2047 = vmatprep.mubr.f32.mxu0 0.0
  %2048 = vmatmul.mubr.f32.gmra.mrb[0].mxu0 %v840
  %v2049 = vpop.f32.mrb[0].mxu0
  %v2050 = vadd.f32 0.0, %v2049
  %v2051 = vpop.f32.mrb[0].mxu0
  %2052 = vmatprep.mubr.f32.mxu0 0.0
  %2053 = vmatmul.mubr.f32.gmra.mrb[0].mxu0 %v843
  %v2054 = vpop.f32.mrb[0].mxu0
  %v2055 = vadd.f32 0.0, %v2054
  %v2056 = vpop.f32.mrb[0].mxu0
  %2057 = vmatprep.mubr.f32.mxu0 0.0
  %2058 = vmatmul.mubr.f32.gmra.mrb[0].mxu0 %v846
  %v2059 = vpop.f32.mrb[0].mxu0
  %v2060 = vadd.f32 0.0, %v2059
  %v2061 = vpop.f32.mrb[0].mxu0
  %2062 = vmatprep.mubr.f32.mxu0 0.0
  %2063 = vmatmul.mubr.f32.gmra.mrb[0].mxu0 %v849
  %v2064 = vpop.f32.mrb[0].mxu0
  %v2065 = vadd.f32 0.0, %v2064
  %v2066 = vpop.f32.mrb[0].mxu0
  %2067 = vmatprep.mubr.f32.mxu0 0.0
  %2068 = vmatmul.mubr.f32.gmra.mrb[0].mxu0 %v852
  %v2069 = vpop.f32.mrb[0].mxu0
  %v2070 = vadd.f32 0.0, %v2069
  %v2071 = vpop.f32.mrb[0].mxu0
  %2072 = vmatprep.mubr.f32.mxu0 0.0
  %2073 = vmatmul.mubr.f32.gmra.mrb[0].mxu0 %v855
  %v2074 = vpop.f32.mrb[0].mxu0
  %v2075 = vadd.f32 0.0, %v2074
  %v2076 = vpop.f32.mrb[0].mxu0
  %2077 = vmatprep.mubr.f32.mxu0 0.0
  %2078 = vmatmul.mubr.f32.gmra.mrb[0].mxu0 %v858
  %v2079 = vpop.f32.mrb[0].mxu0
  %v2080 = vadd.f32 0.0, %v2079
  %v2081 = vpop.f32.mrb[0].mxu0
  %2082 = vmatprep.mubr.f32.mxu0 0.0
  %2083 = vmatmul.mubr.f32.gmra.mrb[0].mxu0 %v861
  %v2084 = vpop.f32.mrb[0].mxu0
  %v2085 = vadd.f32 0.0, %v2084
  %v2086 = vpop.f32.mrb[0].mxu0
  %2087 = vmatprep.mubr.f32.mxu0 0.0
  %2088 = vmatmul.mubr.f32.gmra.mrb[0].mxu0 %v864
  %v2089 = vpop.f32.mrb[0].mxu0
  %v2090 = vadd.f32 0.0, %v2089
  %v2091 = vpop.f32.mrb[0].mxu0
  %2092 = vmatprep.mubr.f32.mxu0 0.0
  %2093 = vmatmul.mubr.f32.gmra.mrb[0].mxu0 %v867
  %v2094 = vpop.f32.mrb[0].mxu0
  %v2095 = vadd.f32 0.0, %v2094
  %v2096 = vpop.f32.mrb[0].mxu0
  %2097 = vmatprep.mubr.f32.mxu0 0.0
  %2098 = vmatmul.mubr.f32.gmra.mrb[0].mxu0 %v870
  %v2099 = vpop.f32.mrb[0].mxu0
  %v2100 = vadd.f32 0.0, %v2099
  %v2101 = vpop.f32.mrb[0].mxu0
  %2102 = vmatprep.mubr.f32.mxu0 0.0
  %2103 = vmatmul.mubr.f32.gmra.mrb[0].mxu0 %v873
  %v2104 = vpop.f32.mrb[0].mxu0
  %v2105 = vadd.f32 0.0, %v2104
  %v2106 = vpop.f32.mrb[0].mxu0
  %2107 = vmatprep.mubr.f32.mxu0 0.0
  %2108 = vmatmul.mubr.f32.gmra.mrb[0].mxu0 %v876
  %v2109 = vpop.f32.mrb[0].mxu0
  %v2110 = vadd.f32 0.0, %v2109
  %v2111 = vpop.f32.mrb[0].mxu0
  %2112 = vmatprep.mubr.f32.mxu0 0.0
  %2113 = vmatmul.mubr.f32.gmra.mrb[0].mxu0 %v879
  %v2114 = vpop.f32.mrb[0].mxu0
  %v2115 = vadd.f32 0.0, %v2114
  %v2116 = vpop.f32.mrb[0].mxu0
  %2117 = vmatprep.mubr.f32.mxu0 0.0
  %2118 = vmatmul.mubr.f32.gmra.mrb[0].mxu0 %v882
  %v2119 = vpop.f32.mrb[0].mxu0
  %v2120 = vadd.f32 0.0, %v2119
  %v2121 = vpop.f32.mrb[0].mxu0
  %2122 = vmatprep.mubr.f32.mxu0 0.0
  %2123 = vmatmul.mubr.f32.gmra.mrb[0].mxu0 %v885
  %v2124 = vpop.f32.mrb[0].mxu0
  %v2125 = vadd.f32 0.0, %v2124
  %v2126 = vpop.f32.mrb[0].mxu0
  %2127 = vmatprep.mubr.f32.mxu0 0.0
  %2128 = vmatmul.mubr.f32.gmra.mrb[0].mxu0 %v888
  %v2129 = vpop.f32.mrb[0].mxu0
  %v2130 = vadd.f32 0.0, %v2129
  %v2131 = vpop.f32.mrb[0].mxu0
  %2132 = vmatprep.mubr.f32.mxu0 0.0
  %2133 = vmatmul.mubr.f32.gmra.mrb[0].mxu0 %v891
  %v2134 = vpop.f32.mrb[0].mxu0
  %v2135 = vadd.f32 0.0, %v2134
  %v2136 = vpop.f32.mrb[0].mxu0
  %2137 = vmatprep.mubr.f32.mxu0 0.0
  %2138 = vmatmul.mubr.f32.gmra.mrb[0].mxu0 %v894
  %v2139 = vpop.f32.mrb[0].mxu0
  %v2140 = vadd.f32 0.0, %v2139
  %v2141 = vpop.f32.mrb[0].mxu0
  %2142 = vmatprep.mubr.f32.mxu0 0.0
  %2143 = vmatmul.mubr.f32.gmra.mrb[0].mxu0 %v897
  %v2144 = vpop.f32.mrb[0].mxu0
  %v2145 = vadd.f32 0.0, %v2144
  %v2146 = vpop.f32.mrb[0].mxu0
  %2147 = vmatprep.mubr.f32.mxu0 0.0
  %2148 = vmatmul.mubr.f32.gmra.mrb[0].mxu0 %v900
  %v2149 = vpop.f32.mrb[0].mxu0
  %v2150 = vadd.f32 0.0, %v2149
  %v2151 = vpop.f32.mrb[0].mxu0
  %2152 = vmatprep.mubr.f32.mxu0 0.0
  %2153 = vmatmul.mubr.f32.gmra.mrb[0].mxu0 %v903
  %v2154 = vpop.f32.mrb[0].mxu0
  %v2155 = vadd.f32 0.0, %v2154
  %v2156 = vpop.f32.mrb[0].mxu0
  %2157 = vmatprep.mubr.f32.mxu0 0.0
  %2158 = vmatmul.mubr.f32.gmra.mrb[0].mxu0 %v906
  %v2159 = vpop.f32.mrb[0].mxu0
  %v2160 = vadd.f32 0.0, %v2159
  %v2161 = vpop.f32.mrb[0].mxu0
  %2162 = vmatprep.mubr.f32.mxu0 0.0
  %2163 = vmatmul.mubr.f32.gmra.mrb[0].mxu0 %v909
  %v2164 = vpop.f32.mrb[0].mxu0
  %v2165 = vadd.f32 0.0, %v2164
  %v2166 = vpop.f32.mrb[0].mxu0
  %2167 = vmatprep.mubr.f32.mxu0 0.0
  %2168 = vmatmul.mubr.f32.gmra.mrb[0].mxu0 %v912
  %v2169 = vpop.f32.mrb[0].mxu0
  %v2170 = vadd.f32 0.0, %v2169
  %v2171 = vpop.f32.mrb[0].mxu0
  %2172 = vmatprep.mubr.f32.mxu0 0.0
  %2173 = vmatmul.mubr.f32.gmra.mrb[0].mxu0 %v915
  %v2174 = vpop.f32.mrb[0].mxu0
  %v2175 = vadd.f32 0.0, %v2174
  %v2176 = vpop.f32.mrb[0].mxu0
  %2177 = vmatprep.mubr.f32.mxu0 0.0
  %2178 = vmatmul.mubr.f32.gmra.mrb[0].mxu0 %v918
  %v2179 = vpop.f32.mrb[0].mxu0
  %v2180 = vadd.f32 0.0, %v2179
  %v2181 = vpop.f32.mrb[0].mxu0
  %2182 = vmatprep.mubr.f32.mxu0 0.0
  %2183 = vmatmul.mubr.f32.gmra.mrb[0].mxu0 %v921
  %v2184 = vpop.f32.mrb[0].mxu0
  %v2185 = vadd.f32 0.0, %v2184
  %v2186 = vpop.f32.mrb[0].mxu0
  %2187 = vmatprep.mubr.f32.mxu0 0.0
  %2188 = vmatmul.mubr.f32.gmra.mrb[0].mxu0 %v924
  %v2189 = vpop.f32.mrb[0].mxu0
  %v2190 = vadd.f32 0.0, %v2189
  %v2191 = vpop.f32.mrb[0].mxu0
  %2192 = vmatprep.mubr.f32.mxu0 0.0
  %2193 = vmatmul.mubr.f32.gmra.mrb[0].mxu0 %v927
  %v2194 = vpop.f32.mrb[0].mxu0
  %v2195 = vadd.f32 0.0, %v2194
  %v2196 = vpop.f32.mrb[0].mxu0
  %2197 = vmatprep.mubr.f32.mxu0 0.0
  %2198 = vmatmul.mubr.f32.gmra.mrb[0].mxu0 %v930
  %v2199 = vpop.f32.mrb[0].mxu0
  %v2200 = vadd.f32 0.0, %v2199
  %v2201 = vpop.f32.mrb[0].mxu0
  %2202 = vmatprep.mubr.f32.mxu0 0.0
  %2203 = vmatmul.mubr.f32.gmra.mrb[0].mxu0 %v933
  %v2204 = vpop.f32.mrb[0].mxu0
  %v2205 = vadd.f32 0.0, %v2204
  %v2206 = vpop.f32.mrb[0].mxu0
  %2207 = vmatprep.mubr.f32.mxu0 0.0
  %2208 = vmatmul.mubr.f32.gmra.mrb[0].mxu0 %v936
  %v2209 = vpop.f32.mrb[0].mxu0
  %v2210 = vadd.f32 0.0, %v2209
  %v2211 = vpop.f32.mrb[0].mxu0
  %2212 = vmatprep.mubr.f32.mxu0 0.0
  %2213 = vmatmul.mubr.f32.gmra.mrb[0].mxu0 %v939
  %v2214 = vpop.f32.mrb[0].mxu0
  %v2215 = vadd.f32 0.0, %v2214
  %v2216 = vpop.f32.mrb[0].mxu0
  %2217 = vmatprep.mubr.f32.mxu0 0.0
  %2218 = vmatmul.mubr.f32.gmra.mrb[0].mxu0 %v942
  %v2219 = vpop.f32.mrb[0].mxu0
  %v2220 = vadd.f32 0.0, %v2219
  %v2221 = vpop.f32.mrb[0].mxu0
  %2222 = vmatprep.mubr.f32.mxu0 0.0
  %2223 = vmatmul.mubr.f32.gmra.mrb[0].mxu0 %v945
  %v2224 = vpop.f32.mrb[0].mxu0
  %v2225 = vadd.f32 0.0, %v2224
  %v2226 = vpop.f32.mrb[0].mxu0
  %2227 = vmatprep.mubr.f32.mxu0 0.0
  %2228 = vmatmul.mubr.f32.gmra.mrb[0].mxu0 %v948
  %v2229 = vpop.f32.mrb[0].mxu0
  %v2230 = vadd.f32 0.0, %v2229
  %v2231 = vpop.f32.mrb[0].mxu0
  %2232 = vmatprep.mubr.f32.mxu0 0.0
  %2233 = vmatmul.mubr.f32.gmra.mrb[0].mxu0 %v951
  %v2234 = vpop.f32.mrb[0].mxu0
  %v2235 = vadd.f32 0.0, %v2234
  %v2236 = vpop.f32.mrb[0].mxu0
  %2237 = vmatprep.mubr.f32.mxu0 0.0
  %2238 = vmatmul.mubr.f32.gmra.mrb[0].mxu0 %v954
  %v2239 = vpop.f32.mrb[0].mxu0
  %v2240 = vadd.f32 0.0, %v2239
  %v2241 = vpop.f32.mrb[0].mxu0
  %2242 = vmatprep.mubr.f32.mxu0 0.0
  %2243 = vmatmul.mubr.f32.gmra.mrb[0].mxu0 %v957
  %v2244 = vpop.f32.mrb[0].mxu0
  %v2245 = vadd.f32 0.0, %v2244
  %v2246 = vpop.f32.mrb[0].mxu0
  %2247 = vmatprep.mubr.f32.mxu0 0.0
  %2248 = vmatmul.mubr.f32.gmra.mrb[0].mxu0 %v960
  %v2249 = vpop.f32.mrb[0].mxu0
  %v2250 = vadd.f32 0.0, %v2249
  %v2251 = vpop.f32.mrb[0].mxu0
  %2252 = vmatprep.mubr.f32.mxu0 0.0
  %2253 = vmatmul.mubr.f32.gmra.mrb[0].mxu0 %v963
  %v2254 = vpop.f32.mrb[0].mxu0
  %v2255 = vadd.f32 0.0, %v2254
  %v2256 = vpop.f32.mrb[0].mxu0
  %2257 = vmatprep.mubr.f32.mxu0 0.0
  %2258 = vmatmul.mubr.f32.gmra.mrb[0].mxu0 %v966
  %v2259 = vpop.f32.mrb[0].mxu0
  %v2260 = vadd.f32 0.0, %v2259
  %v2261 = vpop.f32.mrb[0].mxu0
  %2262 = vmatprep.mubr.f32.mxu0 0.0
  %2263 = vmatmul.mubr.f32.gmra.mrb[0].mxu0 %v969
  %v2264 = vpop.f32.mrb[0].mxu0
  %v2265 = vadd.f32 0.0, %v2264
  %v2266 = vpop.f32.mrb[0].mxu0
  %2267 = vmatprep.mubr.f32.mxu0 0.0
  %2268 = vmatmul.mubr.f32.gmra.mrb[0].mxu0 %v972
  %v2269 = vpop.f32.mrb[0].mxu0
  %v2270 = vadd.f32 0.0, %v2269
  %v2271 = vpop.f32.mrb[0].mxu0
  %2272 = vmatprep.mubr.f32.mxu0 0.0
  %2273 = vmatmul.mubr.f32.gmra.mrb[0].mxu0 %v975
  %v2274 = vpop.f32.mrb[0].mxu0
  %v2275 = vadd.f32 0.0, %v2274
  %v2276 = vpop.f32.mrb[0].mxu0
  %2277 = vmatprep.mubr.f32.mxu0 0.0
  %2278 = vmatmul.mubr.f32.gmra.mrb[0].mxu0 %v978
  %v2279 = vpop.f32.mrb[0].mxu0
  %v2280 = vadd.f32 0.0, %v2279
  %v2281 = vpop.f32.mrb[0].mxu0
  %2282 = vmatprep.mubr.f32.mxu0 0.0
  %2283 = vmatmul.mubr.f32.gmra.mrb[0].mxu0 %v981
  %v2284 = vpop.f32.mrb[0].mxu0
  %v2285 = vadd.f32 0.0, %v2284
  %v2286 = vpop.f32.mrb[0].mxu0
  %2287 = vmatprep.mubr.f32.mxu0 0.0
  %2288 = vmatmul.mubr.f32.gmra.mrb[0].mxu0 %v984
  %v2289 = vpop.f32.mrb[0].mxu0
  %v2290 = vadd.f32 0.0, %v2289
  %v2291 = vpop.f32.mrb[0].mxu0
  %2292 = vmatprep.mubr.f32.mxu0 0.0
  %2293 = vmatmul.mubr.f32.gmra.mrb[0].mxu0 %v987
  %v2294 = vpop.f32.mrb[0].mxu0
  %v2295 = vadd.f32 0.0, %v2294
  %v2296 = vpop.f32.mrb[0].mxu0
  %2297 = vmatprep.mubr.f32.mxu0 0.0
  %2298 = vmatmul.mubr.f32.gmra.mrb[0].mxu0 %v990
  %v2299 = vpop.f32.mrb[0].mxu0
  %v2300 = vadd.f32 0.0, %v2299
  %v2301 = vpop.f32.mrb[0].mxu0
  %2302 = vmatprep.mubr.f32.mxu0 0.0
  %2303 = vmatmul.mubr.f32.gmra.mrb[0].mxu0 %v993
  %v2304 = vpop.f32.mrb[0].mxu0
  %v2305 = vadd.f32 0.0, %v2304
  %v2306 = vpop.f32.mrb[0].mxu0
  %2307 = vmatprep.mubr.f32.mxu0 0.0
  %2308 = vmatmul.mubr.f32.gmra.mrb[0].mxu0 %v996
  %v2309 = vpop.f32.mrb[0].mxu0
  %v2310 = vadd.f32 0.0, %v2309
  %v2311 = vpop.f32.mrb[0].mxu0
  %2312 = vmatprep.mubr.f32.mxu0 0.0
  %2313 = vmatmul.mubr.f32.gmra.mrb[0].mxu0 %v999
  %v2314 = vpop.f32.mrb[0].mxu0
  %v2315 = vadd.f32 0.0, %v2314
  %v2316 = vpop.f32.mrb[0].mxu0
  %2317 = vmatprep.mubr.f32.mxu0 0.0
  %2318 = vmatmul.mubr.f32.gmra.mrb[0].mxu0 %v1002
  %v2319 = vpop.f32.mrb[0].mxu0
  %v2320 = vadd.f32 0.0, %v2319
  %v2321 = vpop.f32.mrb[0].mxu0
  %2322 = vmatprep.mubr.f32.mxu0 0.0
  %2323 = vmatmul.mubr.f32.gmra.mrb[0].mxu0 %v1005
  %v2324 = vpop.f32.mrb[0].mxu0
  %v2325 = vadd.f32 0.0, %v2324
  %v2326 = vpop.f32.mrb[0].mxu0
  %2327 = vmatprep.mubr.f32.mxu0 0.0
  %2328 = vmatmul.mubr.f32.gmra.mrb[0].mxu0 %v1008
  %v2329 = vpop.f32.mrb[0].mxu0
  %v2330 = vadd.f32 0.0, %v2329
  %v2331 = vpop.f32.mrb[0].mxu0
  %2332 = vmatprep.mubr.f32.mxu0 0.0
  %2333 = vmatmul.mubr.f32.gmra.mrb[0].mxu0 %v1011
  %v2334 = vpop.f32.mrb[0].mxu0
  %v2335 = vadd.f32 0.0, %v2334
  %v2336 = vpop.f32.mrb[0].mxu0
  %2337 = vmatprep.mubr.f32.mxu0 0.0
  %2338 = vmatmul.mubr.f32.gmra.mrb[0].mxu0 %v1014
  %v2339 = vpop.f32.mrb[0].mxu0
  %v2340 = vadd.f32 0.0, %v2339
  %v2341 = vpop.f32.mrb[0].mxu0
  %2342 = vmatprep.mubr.f32.mxu0 0.0
  %2343 = vmatmul.mubr.f32.gmra.mrb[0].mxu0 %v1017
  %v2344 = vpop.f32.mrb[0].mxu0
  %v2345 = vadd.f32 0.0, %v2344
  %v2346 = vpop.f32.mrb[0].mxu0
  %2347 = vmatprep.mubr.f32.mxu0 0.0
  %2348 = vmatmul.mubr.f32.gmra.mrb[0].mxu0 %v1020
  %v2349 = vpop.f32.mrb[0].mxu0
  %v2350 = vadd.f32 0.0, %v2349
  %v2351 = vpop.f32.mrb[0].mxu0
  %2352 = vmatprep.mubr.f32.mxu0 0.0
  %2353 = vmatmul.mubr.f32.gmra.mrb[0].mxu0 %v1023
  %v2354 = vpop.f32.mrb[0].mxu0
  %v2355 = vadd.f32 0.0, %v2354
  %v2356 = vpop.f32.mrb[0].mxu0
  %2357 = vmatprep.mubr.f32.mxu0 0.0
  %2358 = vmatmul.mubr.f32.gmra.mrb[0].mxu0 %v1026
  %v2359 = vpop.f32.mrb[0].mxu0
  %v2360 = vadd.f32 0.0, %v2359
  %v2361 = vpop.f32.mrb[0].mxu0
  %2362 = vmatprep.mubr.f32.mxu0 0.0
  %2363 = vmatmul.mubr.f32.gmra.mrb[0].mxu0 %v1029
  %v2364 = vpop.f32.mrb[0].mxu0
  %v2365 = vadd.f32 0.0, %v2364
  %v2366 = vpop.f32.mrb[0].mxu0
  %2367 = vmatprep.mubr.f32.mxu0 0.0
  %2368 = vmatmul.mubr.f32.gmra.mrb[0].mxu0 %v1032
  %v2369 = vpop.f32.mrb[0].mxu0
  %v2370 = vadd.f32 0.0, %v2369
  %v2371 = vpop.f32.mrb[0].mxu0
  %2372 = vmatprep.mubr.f32.mxu0 0.0
  %2373 = vmatmul.mubr.f32.gmra.mrb[0].mxu0 %v1035
  %v2374 = vpop.f32.mrb[0].mxu0
  %v2375 = vadd.f32 0.0, %v2374
  %v2376 = vpop.f32.mrb[0].mxu0
  %2377 = vmatprep.mubr.f32.mxu0 0.0
  %2378 = vmatmul.mubr.f32.gmra.mrb[0].mxu0 %v1038
  %v2379 = vpop.f32.mrb[0].mxu0
  %v2380 = vadd.f32 0.0, %v2379
  %v2381 = vpop.f32.mrb[0].mxu0
  %2382 = vmatprep.mubr.f32.mxu0 0.0
  %2383 = vmatmul.mubr.f32.gmra.mrb[0].mxu0 %v1041
  %v2384 = vpop.f32.mrb[0].mxu0
  %v2385 = vadd.f32 0.0, %v2384
  %v2386 = vpop.f32.mrb[0].mxu0
  %2387 = vdwg.mxu0
  %v2388 = vmax.f32 %v1110, %v1430
  %v2389 = vmax.f32 %v1115, %v1435
  %v2390 = vmax.f32 %v1120, %v1440
  %v2391 = vmax.f32 %v1125, %v1445
  %v2392 = vmax.f32 %v1130, %v1450
  %v2393 = vmax.f32 %v1135, %v1455
  %v2394 = vmax.f32 %v1140, %v1460
  %v2395 = vmax.f32 %v1145, %v1465
  %v2396 = vmax.f32 %v1150, %v1470
  %v2397 = vmax.f32 %v1155, %v1475
  %v2398 = vmax.f32 %v1160, %v1480
  %v2399 = vmax.f32 %v1165, %v1485
  %v2400 = vmax.f32 %v1170, %v1490
  %v2401 = vmax.f32 %v1175, %v1495
  %v2402 = vmax.f32 %v1180, %v1500
  %v2403 = vmax.f32 %v1185, %v1505
  %v2404 = vmax.f32 %v1190, %v1510
  %v2405 = vmax.f32 %v1195, %v1515
  %v2406 = vmax.f32 %v1200, %v1520
  %v2407 = vmax.f32 %v1205, %v1525
  %v2408 = vmax.f32 %v1210, %v1530
  %v2409 = vmax.f32 %v1215, %v1535
  %v2410 = vmax.f32 %v1220, %v1540
  %v2411 = vmax.f32 %v1225, %v1545
  %v2412 = vmax.f32 %v1230, %v1550
  %v2413 = vmax.f32 %v1235, %v1555
  %v2414 = vmax.f32 %v1240, %v1560
  %v2415 = vmax.f32 %v1245, %v1565
  %v2416 = vmax.f32 %v1250, %v1570
  %v2417 = vmax.f32 %v1255, %v1575
  %v2418 = vmax.f32 %v1260, %v1580
  %v2419 = vmax.f32 %v1265, %v1585
  %v2420 = vmax.f32 %v1270, %v1590
  %v2421 = vmax.f32 %v1275, %v1595
  %v2422 = vmax.f32 %v1280, %v1600
  %v2423 = vmax.f32 %v1285, %v1605
  %v2424 = vmax.f32 %v1290, %v1610
  %v2425 = vmax.f32 %v1295, %v1615
  %v2426 = vmax.f32 %v1300, %v1620
  %v2427 = vmax.f32 %v1305, %v1625
  %v2428 = vmax.f32 %v1310, %v1630
  %v2429 = vmax.f32 %v1315, %v1635
  %v2430 = vmax.f32 %v1320, %v1640
  %v2431 = vmax.f32 %v1325, %v1645
  %v2432 = vmax.f32 %v1330, %v1650
  %v2433 = vmax.f32 %v1335, %v1655
  %v2434 = vmax.f32 %v1340, %v1660
  %v2435 = vmax.f32 %v1345, %v1665
  %v2436 = vmax.f32 %v1350, %v1670
  %v2437 = vmax.f32 %v1355, %v1675
  %v2438 = vmax.f32 %v1360, %v1680
  %v2439 = vmax.f32 %v1365, %v1685
  %v2440 = vmax.f32 %v1370, %v1690
  %v2441 = vmax.f32 %v1375, %v1695
  %v2442 = vmax.f32 %v1380, %v1700
  %v2443 = vmax.f32 %v1385, %v1705
  %v2444 = vmax.f32 %v1390, %v1710
  %v2445 = vmax.f32 %v1395, %v1715
  %v2446 = vmax.f32 %v1400, %v1720
  %v2447 = vmax.f32 %v1405, %v1725
  %v2448 = vmax.f32 %v1410, %v1730
  %v2449 = vmax.f32 %v1415, %v1735
  %v2450 = vmax.f32 %v1420, %v1740
  %v2451 = vmax.f32 %v1425, %v1745
  %v2452 = vmax.f32 %v1750, %v2070
  %v2453 = vmax.f32 %v1755, %v2075
  %v2454 = vmax.f32 %v1760, %v2080
  %v2455 = vmax.f32 %v1765, %v2085
  %v2456 = vmax.f32 %v1770, %v2090
  %v2457 = vmax.f32 %v1775, %v2095
  %v2458 = vmax.f32 %v1780, %v2100
  %v2459 = vmax.f32 %v1785, %v2105
  %v2460 = vmax.f32 %v1790, %v2110
  %v2461 = vmax.f32 %v1795, %v2115
  %v2462 = vmax.f32 %v1800, %v2120
  %v2463 = vmax.f32 %v1805, %v2125
  %v2464 = vmax.f32 %v1810, %v2130
  %v2465 = vmax.f32 %v1815, %v2135
  %v2466 = vmax.f32 %v1820, %v2140
  %v2467 = vmax.f32 %v1825, %v2145
  %v2468 = vmax.f32 %v1830, %v2150
  %v2469 = vmax.f32 %v1835, %v2155
  %v2470 = vmax.f32 %v1840, %v2160
  %v2471 = vmax.f32 %v1845, %v2165
  %v2472 = vmax.f32 %v1850, %v2170
  %v2473 = vmax.f32 %v1855, %v2175
  %v2474 = vmax.f32 %v1860, %v2180
  %v2475 = vmax.f32 %v1865, %v2185
  %v2476 = vmax.f32 %v1870, %v2190
  %v2477 = vmax.f32 %v1875, %v2195
  %v2478 = vmax.f32 %v1880, %v2200
  %v2479 = vmax.f32 %v1885, %v2205
  %v2480 = vmax.f32 %v1890, %v2210
  %v2481 = vmax.f32 %v1895, %v2215
  %v2482 = vmax.f32 %v1900, %v2220
  %v2483 = vmax.f32 %v1905, %v2225
  %v2484 = vmax.f32 %v1910, %v2230
  %v2485 = vmax.f32 %v1915, %v2235
  %v2486 = vmax.f32 %v1920, %v2240
  %v2487 = vmax.f32 %v1925, %v2245
  %v2488 = vmax.f32 %v1930, %v2250
  %v2489 = vmax.f32 %v1935, %v2255
  %v2490 = vmax.f32 %v1940, %v2260
  %v2491 = vmax.f32 %v1945, %v2265
  %v2492 = vmax.f32 %v1950, %v2270
  %v2493 = vmax.f32 %v1955, %v2275
  %v2494 = vmax.f32 %v1960, %v2280
  %v2495 = vmax.f32 %v1965, %v2285
  %v2496 = vmax.f32 %v1970, %v2290
  %v2497 = vmax.f32 %v1975, %v2295
  %v2498 = vmax.f32 %v1980, %v2300
  %v2499 = vmax.f32 %v1985, %v2305
  %v2500 = vmax.f32 %v1990, %v2310
  %v2501 = vmax.f32 %v1995, %v2315
  %v2502 = vmax.f32 %v2000, %v2320
  %v2503 = vmax.f32 %v2005, %v2325
  %v2504 = vmax.f32 %v2010, %v2330
  %v2505 = vmax.f32 %v2015, %v2335
  %v2506 = vmax.f32 %v2020, %v2340
  %v2507 = vmax.f32 %v2025, %v2345
  %v2508 = vmax.f32 %v2030, %v2350
  %v2509 = vmax.f32 %v2035, %v2355
  %v2510 = vmax.f32 %v2040, %v2360
  %v2511 = vmax.f32 %v2045, %v2365
  %v2512 = vmax.f32 %v2050, %v2370
  %v2513 = vmax.f32 %v2055, %v2375
  %v2514 = vmax.f32 %v2060, %v2380
  %v2515 = vmax.f32 %v2065, %v2385
  %v2516 = vmax.f32 %v2388, %v2452
  %v2517 = vmax.f32 %v2389, %v2453
  %v2518 = vmax.f32 %v2390, %v2454
  %v2519 = vmax.f32 %v2391, %v2455
  %v2520 = vmax.f32 %v2392, %v2456
  %v2521 = vmax.f32 %v2393, %v2457
  %v2522 = vmax.f32 %v2394, %v2458
  %v2523 = vmax.f32 %v2395, %v2459
  %v2524 = vmax.f32 %v2396, %v2460
  %v2525 = vmax.f32 %v2397, %v2461
  %v2526 = vmax.f32 %v2398, %v2462
  %v2527 = vmax.f32 %v2399, %v2463
  %v2528 = vmax.f32 %v2400, %v2464
  %v2529 = vmax.f32 %v2401, %v2465
  %v2530 = vmax.f32 %v2402, %v2466
  %v2531 = vmax.f32 %v2403, %v2467
  %v2532 = vmax.f32 %v2404, %v2468
  %v2533 = vmax.f32 %v2405, %v2469
  %v2534 = vmax.f32 %v2406, %v2470
  %v2535 = vmax.f32 %v2407, %v2471
  %v2536 = vmax.f32 %v2408, %v2472
  %v2537 = vmax.f32 %v2409, %v2473
  %v2538 = vmax.f32 %v2410, %v2474
  %v2539 = vmax.f32 %v2411, %v2475
  %v2540 = vmax.f32 %v2412, %v2476
  %v2541 = vmax.f32 %v2413, %v2477
  %v2542 = vmax.f32 %v2414, %v2478
  %v2543 = vmax.f32 %v2415, %v2479
  %v2544 = vmax.f32 %v2416, %v2480
  %v2545 = vmax.f32 %v2417, %v2481
  %v2546 = vmax.f32 %v2418, %v2482
  %v2547 = vmax.f32 %v2419, %v2483
  %v2548 = vmax.f32 %v2420, %v2484
  %v2549 = vmax.f32 %v2421, %v2485
  %v2550 = vmax.f32 %v2422, %v2486
  %v2551 = vmax.f32 %v2423, %v2487
  %v2552 = vmax.f32 %v2424, %v2488
  %v2553 = vmax.f32 %v2425, %v2489
  %v2554 = vmax.f32 %v2426, %v2490
  %v2555 = vmax.f32 %v2427, %v2491
  %v2556 = vmax.f32 %v2428, %v2492
  %v2557 = vmax.f32 %v2429, %v2493
  %v2558 = vmax.f32 %v2430, %v2494
  %v2559 = vmax.f32 %v2431, %v2495
  %v2560 = vmax.f32 %v2432, %v2496
  %v2561 = vmax.f32 %v2433, %v2497
  %v2562 = vmax.f32 %v2434, %v2498
  %v2563 = vmax.f32 %v2435, %v2499
  %v2564 = vmax.f32 %v2436, %v2500
  %v2565 = vmax.f32 %v2437, %v2501
  %v2566 = vmax.f32 %v2438, %v2502
  %v2567 = vmax.f32 %v2439, %v2503
  %v2568 = vmax.f32 %v2440, %v2504
  %v2569 = vmax.f32 %v2441, %v2505
  %v2570 = vmax.f32 %v2442, %v2506
  %v2571 = vmax.f32 %v2443, %v2507
  %v2572 = vmax.f32 %v2444, %v2508
  %v2573 = vmax.f32 %v2445, %v2509
  %v2574 = vmax.f32 %v2446, %v2510
  %v2575 = vmax.f32 %v2447, %v2511
  %v2576 = vmax.f32 %v2448, %v2512
  %v2577 = vmax.f32 %v2449, %v2513
  %v2578 = vmax.f32 %v2450, %v2514
  %v2579 = vmax.f32 %v2451, %v2515
  %v2580 = vld [vmem:[%s2] sm:$0x1]
  %v2582 = vlaneseq
  %v2583 = vshrl.u32 %v2582, 7
  %v2584 = vsub.s32 0, %v2583
  %v2585 = vrot.slane %v2580, %v2584
  %v2587 = vadd.f32 %v2516, %v2585
  %v2588 = vadd.f32 %v2517, %v2585
  %v2589 = vadd.f32 %v2518, %v2585
  %v2590 = vadd.f32 %v2519, %v2585
  %v2591 = vadd.f32 %v2520, %v2585
  %v2592 = vadd.f32 %v2521, %v2585
  %v2593 = vadd.f32 %v2522, %v2585
  %v2594 = vadd.f32 %v2523, %v2585
  %v2595 = vadd.f32 %v2524, %v2585
  %v2596 = vadd.f32 %v2525, %v2585
  %v2597 = vadd.f32 %v2526, %v2585
  %v2598 = vadd.f32 %v2527, %v2585
  %v2599 = vadd.f32 %v2528, %v2585
  %v2600 = vadd.f32 %v2529, %v2585
  %v2601 = vadd.f32 %v2530, %v2585
  %v2602 = vadd.f32 %v2531, %v2585
  %v2603 = vadd.f32 %v2532, %v2585
  %v2604 = vadd.f32 %v2533, %v2585
  %v2605 = vadd.f32 %v2534, %v2585
  %v2606 = vadd.f32 %v2535, %v2585
  %v2607 = vadd.f32 %v2536, %v2585
  %v2608 = vadd.f32 %v2537, %v2585
  %v2609 = vadd.f32 %v2538, %v2585
  %v2610 = vadd.f32 %v2539, %v2585
  %v2611 = vadd.f32 %v2540, %v2585
  %v2612 = vadd.f32 %v2541, %v2585
  %v2613 = vadd.f32 %v2542, %v2585
  %v2614 = vadd.f32 %v2543, %v2585
  %v2615 = vadd.f32 %v2544, %v2585
  %v2616 = vadd.f32 %v2545, %v2585
  %v2617 = vadd.f32 %v2546, %v2585
  %v2618 = vadd.f32 %v2547, %v2585
  %v2619 = vadd.f32 %v2548, %v2585
  %v2620 = vadd.f32 %v2549, %v2585
  %v2621 = vadd.f32 %v2550, %v2585
  %v2622 = vadd.f32 %v2551, %v2585
  %v2623 = vadd.f32 %v2552, %v2585
  %v2624 = vadd.f32 %v2553, %v2585
  %v2625 = vadd.f32 %v2554, %v2585
  %v2626 = vadd.f32 %v2555, %v2585
  %v2627 = vadd.f32 %v2556, %v2585
  %v2628 = vadd.f32 %v2557, %v2585
  %v2629 = vadd.f32 %v2558, %v2585
  %v2630 = vadd.f32 %v2559, %v2585
  %v2631 = vadd.f32 %v2560, %v2585
  %v2632 = vadd.f32 %v2561, %v2585
  %v2633 = vadd.f32 %v2562, %v2585
  %v2634 = vadd.f32 %v2563, %v2585
  %v2635 = vadd.f32 %v2564, %v2585
  %v2636 = vadd.f32 %v2565, %v2585
  %v2637 = vadd.f32 %v2566, %v2585
  %v2638 = vadd.f32 %v2567, %v2585
  %v2639 = vadd.f32 %v2568, %v2585
  %v2640 = vadd.f32 %v2569, %v2585
  %v2641 = vadd.f32 %v2570, %v2585
  %v2642 = vadd.f32 %v2571, %v2585
  %v2643 = vadd.f32 %v2572, %v2585
  %v2644 = vadd.f32 %v2573, %v2585
  %v2645 = vadd.f32 %v2574, %v2585
  %v2646 = vadd.f32 %v2575, %v2585
  %v2647 = vadd.f32 %v2576, %v2585
  %v2648 = vadd.f32 %v2577, %v2585
  %v2649 = vadd.f32 %v2578, %v2585
  %v2650 = vadd.f32 %v2579, %v2585
  %v2651 = vmax.f32 %v2587, 0.0
  %v2652 = vmax.f32 %v2588, 0.0
  %v2653 = vmax.f32 %v2589, 0.0
  %v2654 = vmax.f32 %v2590, 0.0
  %v2655 = vmax.f32 %v2591, 0.0
  %v2656 = vmax.f32 %v2592, 0.0
  %v2657 = vmax.f32 %v2593, 0.0
  %v2658 = vmax.f32 %v2594, 0.0
  %v2659 = vmax.f32 %v2595, 0.0
  %v2660 = vmax.f32 %v2596, 0.0
  %v2661 = vmax.f32 %v2597, 0.0
  %v2662 = vmax.f32 %v2598, 0.0
  %v2663 = vmax.f32 %v2599, 0.0
  %v2664 = vmax.f32 %v2600, 0.0
  %v2665 = vmax.f32 %v2601, 0.0
  %v2666 = vmax.f32 %v2602, 0.0
  %v2667 = vmax.f32 %v2603, 0.0
  %v2668 = vmax.f32 %v2604, 0.0
  %v2669 = vmax.f32 %v2605, 0.0
  %v2670 = vmax.f32 %v2606, 0.0
  %v2671 = vmax.f32 %v2607, 0.0
  %v2672 = vmax.f32 %v2608, 0.0
  %v2673 = vmax.f32 %v2609, 0.0
  %v2674 = vmax.f32 %v2610, 0.0
  %v2675 = vmax.f32 %v2611, 0.0
  %v2676 = vmax.f32 %v2612, 0.0
  %v2677 = vmax.f32 %v2613, 0.0
  %v2678 = vmax.f32 %v2614, 0.0
  %v2679 = vmax.f32 %v2615, 0.0
  %v2680 = vmax.f32 %v2616, 0.0
  %v2681 = vmax.f32 %v2617, 0.0
  %v2682 = vmax.f32 %v2618, 0.0
  %v2683 = vmax.f32 %v2619, 0.0
  %v2684 = vmax.f32 %v2620, 0.0
  %v2685 = vmax.f32 %v2621, 0.0
  %v2686 = vmax.f32 %v2622, 0.0
  %v2687 = vmax.f32 %v2623, 0.0
  %v2688 = vmax.f32 %v2624, 0.0
  %v2689 = vmax.f32 %v2625, 0.0
  %v2690 = vmax.f32 %v2626, 0.0
  %v2691 = vmax.f32 %v2627, 0.0
  %v2692 = vmax.f32 %v2628, 0.0
  %v2693 = vmax.f32 %v2629, 0.0
  %v2694 = vmax.f32 %v2630, 0.0
  %v2695 = vmax.f32 %v2631, 0.0
  %v2696 = vmax.f32 %v2632, 0.0
  %v2697 = vmax.f32 %v2633, 0.0
  %v2698 = vmax.f32 %v2634, 0.0
  %v2699 = vmax.f32 %v2635, 0.0
  %v2700 = vmax.f32 %v2636, 0.0
  %v2701 = vmax.f32 %v2637, 0.0
  %v2702 = vmax.f32 %v2638, 0.0
  %v2703 = vmax.f32 %v2639, 0.0
  %v2704 = vmax.f32 %v2640, 0.0
  %v2705 = vmax.f32 %v2641, 0.0
  %v2706 = vmax.f32 %v2642, 0.0
  %v2707 = vmax.f32 %v2643, 0.0
  %v2708 = vmax.f32 %v2644, 0.0
  %v2709 = vmax.f32 %v2645, 0.0
  %v2710 = vmax.f32 %v2646, 0.0
  %v2711 = vmax.f32 %v2647, 0.0
  %v2712 = vmax.f32 %v2648, 0.0
  %v2713 = vmax.f32 %v2649, 0.0
  %v2714 = vmax.f32 %v2650, 0.0
  %2715 = vst [vmem:[%s3] sm:$0xff] %v2651
  %2716 = vst [vmem:[%s3 + $0x8] sm:$0xff] %v2652
  %2717 = vst [vmem:[%s3 + $0x10] sm:$0xff] %v2653
  %2718 = vst [vmem:[%s3 + $0x18] sm:$0xff] %v2654
  %2719 = vst [vmem:[%s3 + $0x20] sm:$0xff] %v2655
  %2720 = vst [vmem:[%s3 + $0x28] sm:$0xff] %v2656
  %2721 = vst [vmem:[%s3 + $0x30] sm:$0xff] %v2657
  %2722 = vst [vmem:[%s3 + $0x38] sm:$0xff] %v2658
  %2723 = vst [vmem:[%s3 + $0x40] sm:$0xff] %v2659
  %2724 = vst [vmem:[%s3 + $0x48] sm:$0xff] %v2660
  %2725 = vst [vmem:[%s3 + $0x50] sm:$0xff] %v2661
  %2726 = vst [vmem:[%s3 + $0x58] sm:$0xff] %v2662
  %2727 = vst [vmem:[%s3 + $0x60] sm:$0xff] %v2663
  %2728 = vst [vmem:[%s3 + $0x68] sm:$0xff] %v2664
  %2729 = vst [vmem:[%s3 + $0x70] sm:$0xff] %v2665
  %2730 = vst [vmem:[%s3 + $0x78] sm:$0xff] %v2666
  %2731 = vst [vmem:[%s3 + $0x80] sm:$0xff] %v2667
  %2732 = vst [vmem:[%s3 + $0x88] sm:$0xff] %v2668
  %2733 = vst [vmem:[%s3 + $0x90] sm:$0xff] %v2669
  %2734 = vst [vmem:[%s3 + $0x98] sm:$0xff] %v2670
  %2735 = vst [vmem:[%s3 + $0xa0] sm:$0xff] %v2671
  %2736 = vst [vmem:[%s3 + $0xa8] sm:$0xff] %v2672
  %2737 = vst [vmem:[%s3 + $0xb0] sm:$0xff] %v2673
  %2738 = vst [vmem:[%s3 + $0xb8] sm:$0xff] %v2674
  %2739 = vst [vmem:[%s3 + $0xc0] sm:$0xff] %v2675
  %2740 = vst [vmem:[%s3 + $0xc8] sm:$0xff] %v2676
  %2741 = vst [vmem:[%s3 + $0xd0] sm:$0xff] %v2677
  %2742 = vst [vmem:[%s3 + $0xd8] sm:$0xff] %v2678
  %2743 = vst [vmem:[%s3 + $0xe0] sm:$0xff] %v2679
  %2744 = vst [vmem:[%s3 + $0xe8] sm:$0xff] %v2680
  %2745 = vst [vmem:[%s3 + $0xf0] sm:$0xff] %v2681
  %2746 = vst [vmem:[%s3 + $0xf8] sm:$0xff] %v2682
  %2747 = vst [vmem:[%s3 + $0x100] sm:$0xff] %v2683
  %2748 = vst [vmem:[%s3 + $0x108] sm:$0xff] %v2684
  %2749 = vst [vmem:[%s3 + $0x110] sm:$0xff] %v2685
  %2750 = vst [vmem:[%s3 + $0x118] sm:$0xff] %v2686
  %2751 = vst [vmem:[%s3 + $0x120] sm:$0xff] %v2687
  %2752 = vst [vmem:[%s3 + $0x128] sm:$0xff] %v2688
  %2753 = vst [vmem:[%s3 + $0x130] sm:$0xff] %v2689
  %2754 = vst [vmem:[%s3 + $0x138] sm:$0xff] %v2690
  %2755 = vst [vmem:[%s3 + $0x140] sm:$0xff] %v2691
  %2756 = vst [vmem:[%s3 + $0x148] sm:$0xff] %v2692
  %2757 = vst [vmem:[%s3 + $0x150] sm:$0xff] %v2693
  %2758 = vst [vmem:[%s3 + $0x158] sm:$0xff] %v2694
  %2759 = vst [vmem:[%s3 + $0x160] sm:$0xff] %v2695
  %2760 = vst [vmem:[%s3 + $0x168] sm:$0xff] %v2696
  %2761 = vst [vmem:[%s3 + $0x170] sm:$0xff] %v2697
  %2762 = vst [vmem:[%s3 + $0x178] sm:$0xff] %v2698
  %2763 = vst [vmem:[%s3 + $0x180] sm:$0xff] %v2699
  %2764 = vst [vmem:[%s3 + $0x188] sm:$0xff] %v2700
  %2765 = vst [vmem:[%s3 + $0x190] sm:$0xff] %v2701
  %2766 = vst [vmem:[%s3 + $0x198] sm:$0xff] %v2702
  %2767 = vst [vmem:[%s3 + $0x1a0] sm:$0xff] %v2703
  %2768 = vst [vmem:[%s3 + $0x1a8] sm:$0xff] %v2704
  %2769 = vst [vmem:[%s3 + $0x1b0] sm:$0xff] %v2705
  %2770 = vst [vmem:[%s3 + $0x1b8] sm:$0xff] %v2706
  %2771 = vst [vmem:[%s3 + $0x1c0] sm:$0xff] %v2707
  %2772 = vst [vmem:[%s3 + $0x1c8] sm:$0xff] %v2708
  %2773 = vst [vmem:[%s3 + $0x1d0] sm:$0xff] %v2709
  %2774 = vst [vmem:[%s3 + $0x1d8] sm:$0xff] %v2710
  %2775 = vst [vmem:[%s3 + $0x1e0] sm:$0xff] %v2711
  %2776 = vst [vmem:[%s3 + $0x1e8] sm:$0xff] %v2712
  %2777 = vst [vmem:[%s3 + $0x1f0] sm:$0xff] %v2713
  %2778 = vst [vmem:[%s3 + $0x1f8] sm:$0xff] %v2714
  // Predicated region
  $region14: #{cnn_forward.2} parent=0 // pred_check
    _
  $region15: #{cnn_forward.2} parent=0 // pred_check_branch
    %2780 = sbr.rel (0) target = $region17
  $region16: #{cnn_forward.2} parent=0 // pred_region
    _
  $region17: #{cnn_forward.2} parent=0 // pred_fallthru
    _
  // Predicated region
  $region18: #{cnn_forward.2} parent=0 // pred_check
    _
  $region19: #{cnn_forward.2} parent=0 // pred_check_branch
    %2782 = sbr.rel (0) target = $region21
  $region20: #{cnn_forward.2} parent=0 // pred_region
    _
  $region21: #{cnn_forward.2} parent=0 // pred_fallthru
    _

// kernel: cnn_forward.3
$region0: #{cnn_forward.3}
  #allocation0 [shape = 'u32[]', space=smem, size = 0x4, offset = 0x4, fixed_abs, tag = 'smem constant byte address 0x4 - core index']
  #allocation1 [shape = 'u32[144,128]{1,0:T(1,128)}', space=vmem, size = 0x12000, scoped, tag = 'internal scratch']
  #allocation2 [shape = 'f32[64,64,128]{2,1,0:T(8,128)}', space=vmem, size = 0x200000, scoped, tag = 'scratch operand']
  #allocation3 [shape = 'f32[128,64]{1,0:T(8,128)}', space=vmem, size = 0x10000, scoped, tag = 'scratch operand']
  #allocation4 [shape = 's32[1]{0}', space=sflag, size = 0x4, scoped, tag = 'scratch operand']
  #allocation7 [shape = 's32[]', space=sflag, size = 0x4, offset = 0, fixed_abs, tag = 'sflag constant byte address 0x0 - dummy sync flag']
  %s0 = inlined_call_operand.vmem [shape: f32[4,128,288], index: 0, kind: input, shape index: {}]
  %s1 = inlined_call_operand.vmem [shape: f32[288,128], index: 1, kind: input, shape index: {}]
  %s2 = inlined_call_operand.vmem [shape: f32[1,128], index: 2, kind: input, shape index: {}]
  %s3 = inlined_call_operand.vmem [shape: f32[64,64,128], index: 3, kind: input, shape index: {}]
  %s4 = inlined_call_operand.vmem [shape: f32[1,128], index: 4, kind: input, shape index: {}]
  %s5 = inlined_call_operand.vmem [shape: f32[128,128], index: 5, kind: input, shape index: {}]
  %s6 = inlined_call_operand.vmem [shape: f32[1,128], index: 6, kind: input, shape index: {}]
  %s7 = inlined_call_operand.hbm [shape: f32[2,128], index: 7, kind: output, shape index: {}]
  %s8 = sld [smem:[#allocation0]]
  $region68: #{cnn_forward.3} parent=0
    _
  %s10 = ssub.s32 1, %s8
  %s11 = scalar_select 0, %s10, %s8
  $region1: #{cnn_forward.3} parent=0
    #allocation5 [shape = 'u8[1024]{0}', space=vmem, size = 0x400, scoped, tag = 'output window, operand 0, single buffered']
    #allocation6 [shape = 's32[1]{0}', space=sflag, size = 0x4, scoped, tag = 'scoped memory for cnn_forward.3']
    %12 = vsyncpa [#allocation6], 0
    // Predicated region
    $region2: #{cnn_forward.3} parent=1 // pred_check
      _
    $region3: #{cnn_forward.3} parent=1 // pred_check_branch
      %14 = sbr.rel (0) target = $region5
    $region4: #{cnn_forward.3} parent=1 // pred_region
      _
    $region5: #{cnn_forward.3} parent=1 // pred_fallthru
      _
    // Predicated region
    $region6: #{cnn_forward.3} parent=1 // pred_check
      _
    $region7: #{cnn_forward.3} parent=1 // pred_check_branch
      %16 = sbr.rel (0) target = $region9
    $region8: #{cnn_forward.3} parent=1 // pred_region
      _
    $region9: #{cnn_forward.3} parent=1 // pred_fallthru
      _
    // Predicated region
    $region10: #{cnn_forward.3} parent=1 // pred_check
      _
    $region11: #{cnn_forward.3} parent=1 // pred_check_branch
      %18 = sbr.rel (0) target = $region13
    $region12: #{cnn_forward.3} parent=1 // pred_region
      _
    $region13: #{cnn_forward.3} parent=1 // pred_fallthru
      _
    // Predicated region
    $region14: #{cnn_forward.3} parent=1 // pred_check
      _
    $region15: #{cnn_forward.3} parent=1 // pred_check_branch
      %20 = sbr.rel (0) target = $region17
    $region16: #{cnn_forward.3} parent=1 // pred_region
      _
    $region17: #{cnn_forward.3} parent=1 // pred_fallthru
      _
    // Predicated region
    $region18: #{cnn_forward.3} parent=1 // pred_check
      _
    $region19: #{cnn_forward.3} parent=1 // pred_check_branch
      %22 = sbr.rel (0) target = $region21
    $region20: #{cnn_forward.3} parent=1 // pred_region
      _
    $region21: #{cnn_forward.3} parent=1 // pred_fallthru
      _
    // Predicated region
    $region22: #{cnn_forward.3} parent=1 // pred_check
      _
    $region23: #{cnn_forward.3} parent=1 // pred_check_branch
      %24 = sbr.rel (0) target = $region25
    $region24: #{cnn_forward.3} parent=1 // pred_region
      _
    $region25: #{cnn_forward.3} parent=1 // pred_fallthru
      _
    %p26 = scmp.lt.u32.totalorder 4096, 8
    %p27 = pneg %p26
    // Predicated region
    $region26: #{cnn_forward.3} parent=1 // pred_check
      _
    $region27: #{cnn_forward.3} parent=1 // pred_check_branch
      %29 = sbr.rel (%p26) target = $region29
    $region28: #{cnn_forward.3} parent=1 // pred_region
      %s44 = sand.u32 4096, 7
      %p45 = scmp.eq.s32.totalorder %s44, 0
      // Predicated region
      $region41: #{cnn_forward.3} parent=28 // pred_check
        %p46 = pneg %p45
      $region42: #{cnn_forward.3} parent=28 // pred_check_branch
        %48 = sbr.rel (%p46) target = $region44
      $region43: #{cnn_forward.3} parent=28 // pred_region
        loop: start=0, step=1, limit=1
        $region45: #{cnn_forward.3} parent=43 // loop_pre_header
          _
        $region46: #{cnn_forward.3} parent=43 // loop_header
          %s50 = sphi 0, %s54
          %p51 = scmp.ge.s32.totalorder %s50, 1
          %s55 = sphi %s3, %s3
          %s56 = sphi [#allocation2], [#allocation2]
        $region47: #{cnn_forward.3} parent=43 // loop_header_branch
          %53 = sbr.rel (%p51) target = $region51
        $region48: #{cnn_forward.3} parent=43 // loop_body
          %v57 = vld [vmem:[%s55] sm:$0xff]
          %58 = vst [vmem:[%s56] sm:$0xff] %v57
          %v59 = vld [vmem:[%s55 + $0x8] sm:$0xff]
          %60 = vst [vmem:[%s56 + $0x8] sm:$0xff] %v59
          %v61 = vld [vmem:[%s55 + $0x10] sm:$0xff]
          %62 = vst [vmem:[%s56 + $0x10] sm:$0xff] %v61
          %v63 = vld [vmem:[%s55 + $0x18] sm:$0xff]
          %64 = vst [vmem:[%s56 + $0x18] sm:$0xff] %v63
          %v65 = vld [vmem:[%s55 + $0x20] sm:$0xff]
          %66 = vst [vmem:[%s56 + $0x20] sm:$0xff] %v65
          %v67 = vld [vmem:[%s55 + $0x28] sm:$0xff]
          %68 = vst [vmem:[%s56 + $0x28] sm:$0xff] %v67
          %v69 = vld [vmem:[%s55 + $0x30] sm:$0xff]
          %70 = vst [vmem:[%s56 + $0x30] sm:$0xff] %v69
          %v71 = vld [vmem:[%s55 + $0x38] sm:$0xff]
          %72 = vst [vmem:[%s56 + $0x38] sm:$0xff] %v71
          %v73 = vld [vmem:[%s55 + $0x40] sm:$0xff]
          %74 = vst [vmem:[%s56 + $0x40] sm:$0xff] %v73
          %v75 = vld [vmem:[%s55 + $0x48] sm:$0xff]
          %76 = vst [vmem:[%s56 + $0x48] sm:$0xff] %v75
          %v77 = vld [vmem:[%s55 + $0x50] sm:$0xff]
          %78 = vst [vmem:[%s56 + $0x50] sm:$0xff] %v77
          %v79 = vld [vmem:[%s55 + $0x58] sm:$0xff]
          %80 = vst [vmem:[%s56 + $0x58] sm:$0xff] %v79
          %v81 = vld [vmem:[%s55 + $0x60] sm:$0xff]
          %82 = vst [vmem:[%s56 + $0x60] sm:$0xff] %v81
          %v83 = vld [vmem:[%s55 + $0x68] sm:$0xff]
          %84 = vst [vmem:[%s56 + $0x68] sm:$0xff] %v83
          %v85 = vld [vmem:[%s55 + $0x70] sm:$0xff]
          %86 = vst [vmem:[%s56 + $0x70] sm:$0xff] %v85
          %v87 = vld [vmem:[%s55 + $0x78] sm:$0xff]
          %88 = vst [vmem:[%s56 + $0x78] sm:$0xff] %v87
          %v89 = vld [vmem:[%s55 + $0x80] sm:$0xff]
          %90 = vst [vmem:[%s56 + $0x80] sm:$0xff] %v89
          %v91 = vld [vmem:[%s55 + $0x88] sm:$0xff]
          %92 = vst [vmem:[%s56 + $0x88] sm:$0xff] %v91
          %v93 = vld [vmem:[%s55 + $0x90] sm:$0xff]
          %94 = vst [vmem:[%s56 + $0x90] sm:$0xff] %v93
          %v95 = vld [vmem:[%s55 + $0x98] sm:$0xff]
          %96 = vst [vmem:[%s56 + $0x98] sm:$0xff] %v95
          %v97 = vld [vmem:[%s55 + $0xa0] sm:$0xff]
          %98 = vst [vmem:[%s56 + $0xa0] sm:$0xff] %v97
          %v99 = vld [vmem:[%s55 + $0xa8] sm:$0xff]
          %100 = vst [vmem:[%s56 + $0xa8] sm:$0xff] %v99
          %v101 = vld [vmem:[%s55 + $0xb0] sm:$0xff]
          %102 = vst [vmem:[%s56 + $0xb0] sm:$0xff] %v101
          %v103 = vld [vmem:[%s55 + $0xb8] sm:$0xff]
          %104 = vst [vmem:[%s56 + $0xb8] sm:$0xff] %v103
          %v105 = vld [vmem:[%s55 + $0xc0] sm:$0xff]
          %106 = vst [vmem:[%s56 + $0xc0] sm:$0xff] %v105
          %v107 = vld [vmem:[%s55 + $0xc8] sm:$0xff]
          %108 = vst [vmem:[%s56 + $0xc8] sm:$0xff] %v107
          %v109 = vld [vmem:[%s55 + $0xd0] sm:$0xff]
          %110 = vst [vmem:[%s56 + $0xd0] sm:$0xff] %v109
          %v111 = vld [vmem:[%s55 + $0xd8] sm:$0xff]
          %112 = vst [vmem:[%s56 + $0xd8] sm:$0xff] %v111
          %v113 = vld [vmem:[%s55 + $0xe0] sm:$0xff]
          %114 = vst [vmem:[%s56 + $0xe0] sm:$0xff] %v113
          %v115 = vld [vmem:[%s55 + $0xe8] sm:$0xff]
          %116 = vst [vmem:[%s56 + $0xe8] sm:$0xff] %v115
          %v117 = vld [vmem:[%s55 + $0xf0] sm:$0xff]
          %118 = vst [vmem:[%s56 + $0xf0] sm:$0xff] %v117
          %v119 = vld [vmem:[%s55 + $0xf8] sm:$0xff]
          %120 = vst [vmem:[%s56 + $0xf8] sm:$0xff] %v119
          %v121 = vld [vmem:[%s55 + $0x100] sm:$0xff]
          %122 = vst [vmem:[%s56 + $0x100] sm:$0xff] %v121
          %v123 = vld [vmem:[%s55 + $0x108] sm:$0xff]
          %124 = vst [vmem:[%s56 + $0x108] sm:$0xff] %v123
          %v125 = vld [vmem:[%s55 + $0x110] sm:$0xff]
          %126 = vst [vmem:[%s56 + $0x110] sm:$0xff] %v125
          %v127 = vld [vmem:[%s55 + $0x118] sm:$0xff]
          %128 = vst [vmem:[%s56 + $0x118] sm:$0xff] %v127
          %v129 = vld [vmem:[%s55 + $0x120] sm:$0xff]
          %130 = vst [vmem:[%s56 + $0x120] sm:$0xff] %v129
          %v131 = vld [vmem:[%s55 + $0x128] sm:$0xff]
          %132 = vst [vmem:[%s56 + $0x128] sm:$0xff] %v131
          %v133 = vld [vmem:[%s55 + $0x130] sm:$0xff]
          %134 = vst [vmem:[%s56 + $0x130] sm:$0xff] %v133
          %v135 = vld [vmem:[%s55 + $0x138] sm:$0xff]
          %136 = vst [vmem:[%s56 + $0x138] sm:$0xff] %v135
          %v137 = vld [vmem:[%s55 + $0x140] sm:$0xff]
          %138 = vst [vmem:[%s56 + $0x140] sm:$0xff] %v137
          %v139 = vld [vmem:[%s55 + $0x148] sm:$0xff]
          %140 = vst [vmem:[%s56 + $0x148] sm:$0xff] %v139
          %v141 = vld [vmem:[%s55 + $0x150] sm:$0xff]
          %142 = vst [vmem:[%s56 + $0x150] sm:$0xff] %v141
          %v143 = vld [vmem:[%s55 + $0x158] sm:$0xff]
          %144 = vst [vmem:[%s56 + $0x158] sm:$0xff] %v143
          %v145 = vld [vmem:[%s55 + $0x160] sm:$0xff]
          %146 = vst [vmem:[%s56 + $0x160] sm:$0xff] %v145
          %v147 = vld [vmem:[%s55 + $0x168] sm:$0xff]
          %148 = vst [vmem:[%s56 + $0x168] sm:$0xff] %v147
          %v149 = vld [vmem:[%s55 + $0x170] sm:$0xff]
          %150 = vst [vmem:[%s56 + $0x170] sm:$0xff] %v149
          %v151 = vld [vmem:[%s55 + $0x178] sm:$0xff]
          %152 = vst [vmem:[%s56 + $0x178] sm:$0xff] %v151
          %v153 = vld [vmem:[%s55 + $0x180] sm:$0xff]
          %154 = vst [vmem:[%s56 + $0x180] sm:$0xff] %v153
          %v155 = vld [vmem:[%s55 + $0x188] sm:$0xff]
          %156 = vst [vmem:[%s56 + $0x188] sm:$0xff] %v155
          %v157 = vld [vmem:[%s55 + $0x190] sm:$0xff]
          %158 = vst [vmem:[%s56 + $0x190] sm:$0xff] %v157
          %v159 = vld [vmem:[%s55 + $0x198] sm:$0xff]
          %160 = vst [vmem:[%s56 + $0x198] sm:$0xff] %v159
          %v161 = vld [vmem:[%s55 + $0x1a0] sm:$0xff]
          %162 = vst [vmem:[%s56 + $0x1a0] sm:$0xff] %v161
          %v163 = vld [vmem:[%s55 + $0x1a8] sm:$0xff]
          %164 = vst [vmem:[%s56 + $0x1a8] sm:$0xff] %v163
          %v165 = vld [vmem:[%s55 + $0x1b0] sm:$0xff]
          %166 = vst [vmem:[%s56 + $0x1b0] sm:$0xff] %v165
          %v167 = vld [vmem:[%s55 + $0x1b8] sm:$0xff]
          %168 = vst [vmem:[%s56 + $0x1b8] sm:$0xff] %v167
          %v169 = vld [vmem:[%s55 + $0x1c0] sm:$0xff]
          %170 = vst [vmem:[%s56 + $0x1c0] sm:$0xff] %v169
          %v171 = vld [vmem:[%s55 + $0x1c8] sm:$0xff]
          %172 = vst [vmem:[%s56 + $0x1c8] sm:$0xff] %v171
          %v173 = vld [vmem:[%s55 + $0x1d0] sm:$0xff]
          %174 = vst [vmem:[%s56 + $0x1d0] sm:$0xff] %v173
          %v175 = vld [vmem:[%s55 + $0x1d8] sm:$0xff]
          %176 = vst [vmem:[%s56 + $0x1d8] sm:$0xff] %v175
          %v177 = vld [vmem:[%s55 + $0x1e0] sm:$0xff]
          %178 = vst [vmem:[%s56 + $0x1e0] sm:$0xff] %v177
          %v179 = vld [vmem:[%s55 + $0x1e8] sm:$0xff]
          %180 = vst [vmem:[%s56 + $0x1e8] sm:$0xff] %v179
          %v181 = vld [vmem:[%s55 + $0x1f0] sm:$0xff]
          %182 = vst [vmem:[%s56 + $0x1f0] sm:$0xff] %v181
          %v183 = vld [vmem:[%s55 + $0x1f8] sm:$0xff]
          %184 = vst [vmem:[%s56 + $0x1f8] sm:$0xff] %v183
          %v185 = vld [vmem:[%s55 + $0x200] sm:$0xff]
          %186 = vst [vmem:[%s56 + $0x200] sm:$0xff] %v185
          %v187 = vld [vmem:[%s55 + $0x208] sm:$0xff]
          %188 = vst [vmem:[%s56 + $0x208] sm:$0xff] %v187
          %v189 = vld [vmem:[%s55 + $0x210] sm:$0xff]
          %190 = vst [vmem:[%s56 + $0x210] sm:$0xff] %v189
          %v191 = vld [vmem:[%s55 + $0x218] sm:$0xff]
          %192 = vst [vmem:[%s56 + $0x218] sm:$0xff] %v191
          %v193 = vld [vmem:[%s55 + $0x220] sm:$0xff]
          %194 = vst [vmem:[%s56 + $0x220] sm:$0xff] %v193
          %v195 = vld [vmem:[%s55 + $0x228] sm:$0xff]
          %196 = vst [vmem:[%s56 + $0x228] sm:$0xff] %v195
          %v197 = vld [vmem:[%s55 + $0x230] sm:$0xff]
          %198 = vst [vmem:[%s56 + $0x230] sm:$0xff] %v197
          %v199 = vld [vmem:[%s55 + $0x238] sm:$0xff]
          %200 = vst [vmem:[%s56 + $0x238] sm:$0xff] %v199
          %v201 = vld [vmem:[%s55 + $0x240] sm:$0xff]
          %202 = vst [vmem:[%s56 + $0x240] sm:$0xff] %v201
          %v203 = vld [vmem:[%s55 + $0x248] sm:$0xff]
          %204 = vst [vmem:[%s56 + $0x248] sm:$0xff] %v203
          %v205 = vld [vmem:[%s55 + $0x250] sm:$0xff]
          %206 = vst [vmem:[%s56 + $0x250] sm:$0xff] %v205
          %v207 = vld [vmem:[%s55 + $0x258] sm:$0xff]
          %208 = vst [vmem:[%s56 + $0x258] sm:$0xff] %v207
          %v209 = vld [vmem:[%s55 + $0x260] sm:$0xff]
          %210 = vst [vmem:[%s56 + $0x260] sm:$0xff] %v209
          %v211 = vld [vmem:[%s55 + $0x268] sm:$0xff]
          %212 = vst [vmem:[%s56 + $0x268] sm:$0xff] %v211
          %v213 = vld [vmem:[%s55 + $0x270] sm:$0xff]
          %214 = vst [vmem:[%s56 + $0x270] sm:$0xff] %v213
          %v215 = vld [vmem:[%s55 + $0x278] sm:$0xff]
          %216 = vst [vmem:[%s56 + $0x278] sm:$0xff] %v215
          %v217 = vld [vmem:[%s55 + $0x280] sm:$0xff]
          %218 = vst [vmem:[%s56 + $0x280] sm:$0xff] %v217
          %v219 = vld [vmem:[%s55 + $0x288] sm:$0xff]
          %220 = vst [vmem:[%s56 + $0x288] sm:$0xff] %v219
          %v221 = vld [vmem:[%s55 + $0x290] sm:$0xff]
          %222 = vst [vmem:[%s56 + $0x290] sm:$0xff] %v221
          %v223 = vld [vmem:[%s55 + $0x298] sm:$0xff]
          %224 = vst [vmem:[%s56 + $0x298] sm:$0xff] %v223
          %v225 = vld [vmem:[%s55 + $0x2a0] sm:$0xff]
          %226 = vst [vmem:[%s56 + $0x2a0] sm:$0xff] %v225
          %v227 = vld [vmem:[%s55 + $0x2a8] sm:$0xff]
          %228 = vst [vmem:[%s56 + $0x2a8] sm:$0xff] %v227
          %v229 = vld [vmem:[%s55 + $0x2b0] sm:$0xff]
          %230 = vst [vmem:[%s56 + $0x2b0] sm:$0xff] %v229
          %v231 = vld [vmem:[%s55 + $0x2b8] sm:$0xff]
          %232 = vst [vmem:[%s56 + $0x2b8] sm:$0xff] %v231
          %v233 = vld [vmem:[%s55 + $0x2c0] sm:$0xff]
          %234 = vst [vmem:[%s56 + $0x2c0] sm:$0xff] %v233
          %v235 = vld [vmem:[%s55 + $0x2c8] sm:$0xff]
          %236 = vst [vmem:[%s56 + $0x2c8] sm:$0xff] %v235
          %v237 = vld [vmem:[%s55 + $0x2d0] sm:$0xff]
          %238 = vst [vmem:[%s56 + $0x2d0] sm:$0xff] %v237
          %v239 = vld [vmem:[%s55 + $0x2d8] sm:$0xff]
          %240 = vst [vmem:[%s56 + $0x2d8] sm:$0xff] %v239
          %v241 = vld [vmem:[%s55 + $0x2e0] sm:$0xff]
          %242 = vst [vmem:[%s56 + $0x2e0] sm:$0xff] %v241
          %v243 = vld [vmem:[%s55 + $0x2e8] sm:$0xff]
          %244 = vst [vmem:[%s56 + $0x2e8] sm:$0xff] %v243
          %v245 = vld [vmem:[%s55 + $0x2f0] sm:$0xff]
          %246 = vst [vmem:[%s56 + $0x2f0] sm:$0xff] %v245
          %v247 = vld [vmem:[%s55 + $0x2f8] sm:$0xff]
          %248 = vst [vmem:[%s56 + $0x2f8] sm:$0xff] %v247
          %v249 = vld [vmem:[%s55 + $0x300] sm:$0xff]
          %250 = vst [vmem:[%s56 + $0x300] sm:$0xff] %v249
          %v251 = vld [vmem:[%s55 + $0x308] sm:$0xff]
          %252 = vst [vmem:[%s56 + $0x308] sm:$0xff] %v251
          %v253 = vld [vmem:[%s55 + $0x310] sm:$0xff]
          %254 = vst [vmem:[%s56 + $0x310] sm:$0xff] %v253
          %v255 = vld [vmem:[%s55 + $0x318] sm:$0xff]
          %256 = vst [vmem:[%s56 + $0x318] sm:$0xff] %v255
          %v257 = vld [vmem:[%s55 + $0x320] sm:$0xff]
          %258 = vst [vmem:[%s56 + $0x320] sm:$0xff] %v257
          %v259 = vld [vmem:[%s55 + $0x328] sm:$0xff]
          %260 = vst [vmem:[%s56 + $0x328] sm:$0xff] %v259
          %v261 = vld [vmem:[%s55 + $0x330] sm:$0xff]
          %262 = vst [vmem:[%s56 + $0x330] sm:$0xff] %v261
          %v263 = vld [vmem:[%s55 + $0x338] sm:$0xff]
          %264 = vst [vmem:[%s56 + $0x338] sm:$0xff] %v263
          %v265 = vld [vmem:[%s55 + $0x340] sm:$0xff]
          %266 = vst [vmem:[%s56 + $0x340] sm:$0xff] %v265
          %v267 = vld [vmem:[%s55 + $0x348] sm:$0xff]
          %268 = vst [vmem:[%s56 + $0x348] sm:$0xff] %v267
          %v269 = vld [vmem:[%s55 + $0x350] sm:$0xff]
          %270 = vst [vmem:[%s56 + $0x350] sm:$0xff] %v269
          %v271 = vld [vmem:[%s55 + $0x358] sm:$0xff]
          %272 = vst [vmem:[%s56 + $0x358] sm:$0xff] %v271
          %v273 = vld [vmem:[%s55 + $0x360] sm:$0xff]
          %274 = vst [vmem:[%s56 + $0x360] sm:$0xff] %v273
          %v275 = vld [vmem:[%s55 + $0x368] sm:$0xff]
          %276 = vst [vmem:[%s56 + $0x368] sm:$0xff] %v275
          %v277 = vld [vmem:[%s55 + $0x370] sm:$0xff]
          %278 = vst [vmem:[%s56 + $0x370] sm:$0xff] %v277
          %v279 = vld [vmem:[%s55 + $0x378] sm:$0xff]
          %280 = vst [vmem:[%s56 + $0x378] sm:$0xff] %v279
          %v281 = vld [vmem:[%s55 + $0x380] sm:$0xff]
          %282 = vst [vmem:[%s56 + $0x380] sm:$0xff] %v281
          %v283 = vld [vmem:[%s55 + $0x388] sm:$0xff]
          %284 = vst [vmem:[%s56 + $0x388] sm:$0xff] %v283
          %v285 = vld [vmem:[%s55 + $0x390] sm:$0xff]
          %286 = vst [vmem:[%s56 + $0x390] sm:$0xff] %v285
          %v287 = vld [vmem:[%s55 + $0x398] sm:$0xff]
          %288 = vst [vmem:[%s56 + $0x398] sm:$0xff] %v287
          %v289 = vld [vmem:[%s55 + $0x3a0] sm:$0xff]
          %290 = vst [vmem:[%s56 + $0x3a0] sm:$0xff] %v289
          %v291 = vld [vmem:[%s55 + $0x3a8] sm:$0xff]
          %292 = vst [vmem:[%s56 + $0x3a8] sm:$0xff] %v291
          %v293 = vld [vmem:[%s55 + $0x3b0] sm:$0xff]
          %294 = vst [vmem:[%s56 + $0x3b0] sm:$0xff] %v293
          %v295 = vld [vmem:[%s55 + $0x3b8] sm:$0xff]
          %296 = vst [vmem:[%s56 + $0x3b8] sm:$0xff] %v295
          %v297 = vld [vmem:[%s55 + $0x3c0] sm:$0xff]
          %298 = vst [vmem:[%s56 + $0x3c0] sm:$0xff] %v297
          %v299 = vld [vmem:[%s55 + $0x3c8] sm:$0xff]
          %300 = vst [vmem:[%s56 + $0x3c8] sm:$0xff] %v299
          %v301 = vld [vmem:[%s55 + $0x3d0] sm:$0xff]
          %302 = vst [vmem:[%s56 + $0x3d0] sm:$0xff] %v301
          %v303 = vld [vmem:[%s55 + $0x3d8] sm:$0xff]
          %304 = vst [vmem:[%s56 + $0x3d8] sm:$0xff] %v303
          %v305 = vld [vmem:[%s55 + $0x3e0] sm:$0xff]
          %306 = vst [vmem:[%s56 + $0x3e0] sm:$0xff] %v305
          %v307 = vld [vmem:[%s55 + $0x3e8] sm:$0xff]
          %308 = vst [vmem:[%s56 + $0x3e8] sm:$0xff] %v307
          %v309 = vld [vmem:[%s55 + $0x3f0] sm:$0xff]
          %310 = vst [vmem:[%s56 + $0x3f0] sm:$0xff] %v309
          %v311 = vld [vmem:[%s55 + $0x3f8] sm:$0xff]
          %312 = vst [vmem:[%s56 + $0x3f8] sm:$0xff] %v311
          %v313 = vld [vmem:[%s55 + $0x400] sm:$0xff]
          %314 = vst [vmem:[%s56 + $0x400] sm:$0xff] %v313
          %v315 = vld [vmem:[%s55 + $0x408] sm:$0xff]
          %316 = vst [vmem:[%s56 + $0x408] sm:$0xff] %v315
          %v317 = vld [vmem:[%s55 + $0x410] sm:$0xff]
          %318 = vst [vmem:[%s56 + $0x410] sm:$0xff] %v317
          %v319 = vld [vmem:[%s55 + $0x418] sm:$0xff]
          %320 = vst [vmem:[%s56 + $0x418] sm:$0xff] %v319
          %v321 = vld [vmem:[%s55 + $0x420] sm:$0xff]
          %322 = vst [vmem:[%s56 + $0x420] sm:$0xff] %v321
          %v323 = vld [vmem:[%s55 + $0x428] sm:$0xff]
          %324 = vst [vmem:[%s56 + $0x428] sm:$0xff] %v323
          %v325 = vld [vmem:[%s55 + $0x430] sm:$0xff]
          %326 = vst [vmem:[%s56 + $0x430] sm:$0xff] %v325
          %v327 = vld [vmem:[%s55 + $0x438] sm:$0xff]
          %328 = vst [vmem:[%s56 + $0x438] sm:$0xff] %v327
          %v329 = vld [vmem:[%s55 + $0x440] sm:$0xff]
          %330 = vst [vmem:[%s56 + $0x440] sm:$0xff] %v329
          %v331 = vld [vmem:[%s55 + $0x448] sm:$0xff]
          %332 = vst [vmem:[%s56 + $0x448] sm:$0xff] %v331
          %v333 = vld [vmem:[%s55 + $0x450] sm:$0xff]
          %334 = vst [vmem:[%s56 + $0x450] sm:$0xff] %v333
          %v335 = vld [vmem:[%s55 + $0x458] sm:$0xff]
          %336 = vst [vmem:[%s56 + $0x458] sm:$0xff] %v335
          %v337 = vld [vmem:[%s55 + $0x460] sm:$0xff]
          %338 = vst [vmem:[%s56 + $0x460] sm:$0xff] %v337
          %v339 = vld [vmem:[%s55 + $0x468] sm:$0xff]
          %340 = vst [vmem:[%s56 + $0x468] sm:$0xff] %v339
          %v341 = vld [vmem:[%s55 + $0x470] sm:$0xff]
          %342 = vst [vmem:[%s56 + $0x470] sm:$0xff] %v341
          %v343 = vld [vmem:[%s55 + $0x478] sm:$0xff]
          %344 = vst [vmem:[%s56 + $0x478] sm:$0xff] %v343
          %v345 = vld [vmem:[%s55 + $0x480] sm:$0xff]
          %346 = vst [vmem:[%s56 + $0x480] sm:$0xff] %v345
          %v347 = vld [vmem:[%s55 + $0x488] sm:$0xff]
          %348 = vst [vmem:[%s56 + $0x488] sm:$0xff] %v347
          %v349 = vld [vmem:[%s55 + $0x490] sm:$0xff]
          %350 = vst [vmem:[%s56 + $0x490] sm:$0xff] %v349
          %v351 = vld [vmem:[%s55 + $0x498] sm:$0xff]
          %352 = vst [vmem:[%s56 + $0x498] sm:$0xff] %v351
          %v353 = vld [vmem:[%s55 + $0x4a0] sm:$0xff]
          %354 = vst [vmem:[%s56 + $0x4a0] sm:$0xff] %v353
          %v355 = vld [vmem:[%s55 + $0x4a8] sm:$0xff]
          %356 = vst [vmem:[%s56 + $0x4a8] sm:$0xff] %v355
          %v357 = vld [vmem:[%s55 + $0x4b0] sm:$0xff]
          %358 = vst [vmem:[%s56 + $0x4b0] sm:$0xff] %v357
          %v359 = vld [vmem:[%s55 + $0x4b8] sm:$0xff]
          %360 = vst [vmem:[%s56 + $0x4b8] sm:$0xff] %v359
          %v361 = vld [vmem:[%s55 + $0x4c0] sm:$0xff]
          %362 = vst [vmem:[%s56 + $0x4c0] sm:$0xff] %v361
          %v363 = vld [vmem:[%s55 + $0x4c8] sm:$0xff]
          %364 = vst [vmem:[%s56 + $0x4c8] sm:$0xff] %v363
          %v365 = vld [vmem:[%s55 + $0x4d0] sm:$0xff]
          %366 = vst [vmem:[%s56 + $0x4d0] sm:$0xff] %v365
          %v367 = vld [vmem:[%s55 + $0x4d8] sm:$0xff]
          %368 = vst [vmem:[%s56 + $0x4d8] sm:$0xff] %v367
          %v369 = vld [vmem:[%s55 + $0x4e0] sm:$0xff]
          %370 = vst [vmem:[%s56 + $0x4e0] sm:$0xff] %v369
          %v371 = vld [vmem:[%s55 + $0x4e8] sm:$0xff]
          %372 = vst [vmem:[%s56 + $0x4e8] sm:$0xff] %v371
          %v373 = vld [vmem:[%s55 + $0x4f0] sm:$0xff]
          %374 = vst [vmem:[%s56 + $0x4f0] sm:$0xff] %v373
          %v375 = vld [vmem:[%s55 + $0x4f8] sm:$0xff]
          %376 = vst [vmem:[%s56 + $0x4f8] sm:$0xff] %v375
          %v377 = vld [vmem:[%s55 + $0x500] sm:$0xff]
          %378 = vst [vmem:[%s56 + $0x500] sm:$0xff] %v377
          %v379 = vld [vmem:[%s55 + $0x508] sm:$0xff]
          %380 = vst [vmem:[%s56 + $0x508] sm:$0xff] %v379
          %v381 = vld [vmem:[%s55 + $0x510] sm:$0xff]
          %382 = vst [vmem:[%s56 + $0x510] sm:$0xff] %v381
          %v383 = vld [vmem:[%s55 + $0x518] sm:$0xff]
          %384 = vst [vmem:[%s56 + $0x518] sm:$0xff] %v383
          %v385 = vld [vmem:[%s55 + $0x520] sm:$0xff]
          %386 = vst [vmem:[%s56 + $0x520] sm:$0xff] %v385
          %v387 = vld [vmem:[%s55 + $0x528] sm:$0xff]
          %388 = vst [vmem:[%s56 + $0x528] sm:$0xff] %v387
          %v389 = vld [vmem:[%s55 + $0x530] sm:$0xff]
          %390 = vst [vmem:[%s56 + $0x530] sm:$0xff] %v389
          %v391 = vld [vmem:[%s55 + $0x538] sm:$0xff]
          %392 = vst [vmem:[%s56 + $0x538] sm:$0xff] %v391
          %v393 = vld [vmem:[%s55 + $0x540] sm:$0xff]
          %394 = vst [vmem:[%s56 + $0x540] sm:$0xff] %v393
          %v395 = vld [vmem:[%s55 + $0x548] sm:$0xff]
          %396 = vst [vmem:[%s56 + $0x548] sm:$0xff] %v395
          %v397 = vld [vmem:[%s55 + $0x550] sm:$0xff]
          %398 = vst [vmem:[%s56 + $0x550] sm:$0xff] %v397
          %v399 = vld [vmem:[%s55 + $0x558] sm:$0xff]
          %400 = vst [vmem:[%s56 + $0x558] sm:$0xff] %v399
          %v401 = vld [vmem:[%s55 + $0x560] sm:$0xff]
          %402 = vst [vmem:[%s56 + $0x560] sm:$0xff] %v401
          %v403 = vld [vmem:[%s55 + $0x568] sm:$0xff]
          %404 = vst [vmem:[%s56 + $0x568] sm:$0xff] %v403
          %v405 = vld [vmem:[%s55 + $0x570] sm:$0xff]
          %406 = vst [vmem:[%s56 + $0x570] sm:$0xff] %v405
          %v407 = vld [vmem:[%s55 + $0x578] sm:$0xff]
          %408 = vst [vmem:[%s56 + $0x578] sm:$0xff] %v407
          %v409 = vld [vmem:[%s55 + $0x580] sm:$0xff]
          %410 = vst [vmem:[%s56 + $0x580] sm:$0xff] %v409
          %v411 = vld [vmem:[%s55 + $0x588] sm:$0xff]
          %412 = vst [vmem:[%s56 + $0x588] sm:$0xff] %v411
          %v413 = vld [vmem:[%s55 + $0x590] sm:$0xff]
          %414 = vst [vmem:[%s56 + $0x590] sm:$0xff] %v413
          %v415 = vld [vmem:[%s55 + $0x598] sm:$0xff]
          %416 = vst [vmem:[%s56 + $0x598] sm:$0xff] %v415
          %v417 = vld [vmem:[%s55 + $0x5a0] sm:$0xff]
          %418 = vst [vmem:[%s56 + $0x5a0] sm:$0xff] %v417
          %v419 = vld [vmem:[%s55 + $0x5a8] sm:$0xff]
          %420 = vst [vmem:[%s56 + $0x5a8] sm:$0xff] %v419
          %v421 = vld [vmem:[%s55 + $0x5b0] sm:$0xff]
          %422 = vst [vmem:[%s56 + $0x5b0] sm:$0xff] %v421
          %v423 = vld [vmem:[%s55 + $0x5b8] sm:$0xff]
          %424 = vst [vmem:[%s56 + $0x5b8] sm:$0xff] %v423
          %v425 = vld [vmem:[%s55 + $0x5c0] sm:$0xff]
          %426 = vst [vmem:[%s56 + $0x5c0] sm:$0xff] %v425
          %v427 = vld [vmem:[%s55 + $0x5c8] sm:$0xff]
          %428 = vst [vmem:[%s56 + $0x5c8] sm:$0xff] %v427
          %v429 = vld [vmem:[%s55 + $0x5d0] sm:$0xff]
          %430 = vst [vmem:[%s56 + $0x5d0] sm:$0xff] %v429
          %v431 = vld [vmem:[%s55 + $0x5d8] sm:$0xff]
          %432 = vst [vmem:[%s56 + $0x5d8] sm:$0xff] %v431
          %v433 = vld [vmem:[%s55 + $0x5e0] sm:$0xff]
          %434 = vst [vmem:[%s56 + $0x5e0] sm:$0xff] %v433
          %v435 = vld [vmem:[%s55 + $0x5e8] sm:$0xff]
          %436 = vst [vmem:[%s56 + $0x5e8] sm:$0xff] %v435
          %v437 = vld [vmem:[%s55 + $0x5f0] sm:$0xff]
          %438 = vst [vmem:[%s56 + $0x5f0] sm:$0xff] %v437
          %v439 = vld [vmem:[%s55 + $0x5f8] sm:$0xff]
          %440 = vst [vmem:[%s56 + $0x5f8] sm:$0xff] %v439
          %v441 = vld [vmem:[%s55 + $0x600] sm:$0xff]
          %442 = vst [vmem:[%s56 + $0x600] sm:$0xff] %v441
          %v443 = vld [vmem:[%s55 + $0x608] sm:$0xff]
          %444 = vst [vmem:[%s56 + $0x608] sm:$0xff] %v443
          %v445 = vld [vmem:[%s55 + $0x610] sm:$0xff]
          %446 = vst [vmem:[%s56 + $0x610] sm:$0xff] %v445
          %v447 = vld [vmem:[%s55 + $0x618] sm:$0xff]
          %448 = vst [vmem:[%s56 + $0x618] sm:$0xff] %v447
          %v449 = vld [vmem:[%s55 + $0x620] sm:$0xff]
          %450 = vst [vmem:[%s56 + $0x620] sm:$0xff] %v449
          %v451 = vld [vmem:[%s55 + $0x628] sm:$0xff]
          %452 = vst [vmem:[%s56 + $0x628] sm:$0xff] %v451
          %v453 = vld [vmem:[%s55 + $0x630] sm:$0xff]
          %454 = vst [vmem:[%s56 + $0x630] sm:$0xff] %v453
          %v455 = vld [vmem:[%s55 + $0x638] sm:$0xff]
          %456 = vst [vmem:[%s56 + $0x638] sm:$0xff] %v455
          %v457 = vld [vmem:[%s55 + $0x640] sm:$0xff]
          %458 = vst [vmem:[%s56 + $0x640] sm:$0xff] %v457
          %v459 = vld [vmem:[%s55 + $0x648] sm:$0xff]
          %460 = vst [vmem:[%s56 + $0x648] sm:$0xff] %v459
          %v461 = vld [vmem:[%s55 + $0x650] sm:$0xff]
          %462 = vst [vmem:[%s56 + $0x650] sm:$0xff] %v461
          %v463 = vld [vmem:[%s55 + $0x658] sm:$0xff]
          %464 = vst [vmem:[%s56 + $0x658] sm:$0xff] %v463
          %v465 = vld [vmem:[%s55 + $0x660] sm:$0xff]
          %466 = vst [vmem:[%s56 + $0x660] sm:$0xff] %v465
          %v467 = vld [vmem:[%s55 + $0x668] sm:$0xff]
          %468 = vst [vmem:[%s56 + $0x668] sm:$0xff] %v467
          %v469 = vld [vmem:[%s55 + $0x670] sm:$0xff]
          %470 = vst [vmem:[%s56 + $0x670] sm:$0xff] %v469
          %v471 = vld [vmem:[%s55 + $0x678] sm:$0xff]
          %472 = vst [vmem:[%s56 + $0x678] sm:$0xff] %v471
          %v473 = vld [vmem:[%s55 + $0x680] sm:$0xff]
          %474 = vst [vmem:[%s56 + $0x680] sm:$0xff] %v473
          %v475 = vld [vmem:[%s55 + $0x688] sm:$0xff]
          %476 = vst [vmem:[%s56 + $0x688] sm:$0xff] %v475
          %v477 = vld [vmem:[%s55 + $0x690] sm:$0xff]
          %478 = vst [vmem:[%s56 + $0x690] sm:$0xff] %v477
          %v479 = vld [vmem:[%s55 + $0x698] sm:$0xff]
          %480 = vst [vmem:[%s56 + $0x698] sm:$0xff] %v479
          %v481 = vld [vmem:[%s55 + $0x6a0] sm:$0xff]
          %482 = vst [vmem:[%s56 + $0x6a0] sm:$0xff] %v481
          %v483 = vld [vmem:[%s55 + $0x6a8] sm:$0xff]
          %484 = vst [vmem:[%s56 + $0x6a8] sm:$0xff] %v483
          %v485 = vld [vmem:[%s55 + $0x6b0] sm:$0xff]
          %486 = vst [vmem:[%s56 + $0x6b0] sm:$0xff] %v485
          %v487 = vld [vmem:[%s55 + $0x6b8] sm:$0xff]
          %488 = vst [vmem:[%s56 + $0x6b8] sm:$0xff] %v487
          %v489 = vld [vmem:[%s55 + $0x6c0] sm:$0xff]
          %490 = vst [vmem:[%s56 + $0x6c0] sm:$0xff] %v489
          %v491 = vld [vmem:[%s55 + $0x6c8] sm:$0xff]
          %492 = vst [vmem:[%s56 + $0x6c8] sm:$0xff] %v491
          %v493 = vld [vmem:[%s55 + $0x6d0] sm:$0xff]
          %494 = vst [vmem:[%s56 + $0x6d0] sm:$0xff] %v493
          %v495 = vld [vmem:[%s55 + $0x6d8] sm:$0xff]
          %496 = vst [vmem:[%s56 + $0x6d8] sm:$0xff] %v495
          %v497 = vld [vmem:[%s55 + $0x6e0] sm:$0xff]
          %498 = vst [vmem:[%s56 + $0x6e0] sm:$0xff] %v497
          %v499 = vld [vmem:[%s55 + $0x6e8] sm:$0xff]
          %500 = vst [vmem:[%s56 + $0x6e8] sm:$0xff] %v499
          %v501 = vld [vmem:[%s55 + $0x6f0] sm:$0xff]
          %502 = vst [vmem:[%s56 + $0x6f0] sm:$0xff] %v501
          %v503 = vld [vmem:[%s55 + $0x6f8] sm:$0xff]
          %504 = vst [vmem:[%s56 + $0x6f8] sm:$0xff] %v503
          %v505 = vld [vmem:[%s55 + $0x700] sm:$0xff]
          %506 = vst [vmem:[%s56 + $0x700] sm:$0xff] %v505
          %v507 = vld [vmem:[%s55 + $0x708] sm:$0xff]
          %508 = vst [vmem:[%s56 + $0x708] sm:$0xff] %v507
          %v509 = vld [vmem:[%s55 + $0x710] sm:$0xff]
          %510 = vst [vmem:[%s56 + $0x710] sm:$0xff] %v509
          %v511 = vld [vmem:[%s55 + $0x718] sm:$0xff]
          %512 = vst [vmem:[%s56 + $0x718] sm:$0xff] %v511
          %v513 = vld [vmem:[%s55 + $0x720] sm:$0xff]
          %514 = vst [vmem:[%s56 + $0x720] sm:$0xff] %v513
          %v515 = vld [vmem:[%s55 + $0x728] sm:$0xff]
          %516 = vst [vmem:[%s56 + $0x728] sm:$0xff] %v515
          %v517 = vld [vmem:[%s55 + $0x730] sm:$0xff]
          %518 = vst [vmem:[%s56 + $0x730] sm:$0xff] %v517
          %v519 = vld [vmem:[%s55 + $0x738] sm:$0xff]
          %520 = vst [vmem:[%s56 + $0x738] sm:$0xff] %v519
          %v521 = vld [vmem:[%s55 + $0x740] sm:$0xff]
          %522 = vst [vmem:[%s56 + $0x740] sm:$0xff] %v521
          %v523 = vld [vmem:[%s55 + $0x748] sm:$0xff]
          %524 = vst [vmem:[%s56 + $0x748] sm:$0xff] %v523
          %v525 = vld [vmem:[%s55 + $0x750] sm:$0xff]
          %526 = vst [vmem:[%s56 + $0x750] sm:$0xff] %v525
          %v527 = vld [vmem:[%s55 + $0x758] sm:$0xff]
          %528 = vst [vmem:[%s56 + $0x758] sm:$0xff] %v527
          %v529 = vld [vmem:[%s55 + $0x760] sm:$0xff]
          %530 = vst [vmem:[%s56 + $0x760] sm:$0xff] %v529
          %v531 = vld [vmem:[%s55 + $0x768] sm:$0xff]
          %532 = vst [vmem:[%s56 + $0x768] sm:$0xff] %v531
          %v533 = vld [vmem:[%s55 + $0x770] sm:$0xff]
          %534 = vst [vmem:[%s56 + $0x770] sm:$0xff] %v533
          %v535 = vld [vmem:[%s55 + $0x778] sm:$0xff]
          %536 = vst [vmem:[%s56 + $0x778] sm:$0xff] %v535
          %v537 = vld [vmem:[%s55 + $0x780] sm:$0xff]
          %538 = vst [vmem:[%s56 + $0x780] sm:$0xff] %v537
          %v539 = vld [vmem:[%s55 + $0x788] sm:$0xff]
          %540 = vst [vmem:[%s56 + $0x788] sm:$0xff] %v539
          %v541 = vld [vmem:[%s55 + $0x790] sm:$0xff]
          %542 = vst [vmem:[%s56 + $0x790] sm:$0xff] %v541
          %v543 = vld [vmem:[%s55 + $0x798] sm:$0xff]
          %544 = vst [vmem:[%s56 + $0x798] sm:$0xff] %v543
          %v545 = vld [vmem:[%s55 + $0x7a0] sm:$0xff]
          %546 = vst [vmem:[%s56 + $0x7a0] sm:$0xff] %v545
          %v547 = vld [vmem:[%s55 + $0x7a8] sm:$0xff]
          %548 = vst [vmem:[%s56 + $0x7a8] sm:$0xff] %v547
          %v549 = vld [vmem:[%s55 + $0x7b0] sm:$0xff]
          %550 = vst [vmem:[%s56 + $0x7b0] sm:$0xff] %v549
          %v551 = vld [vmem:[%s55 + $0x7b8] sm:$0xff]
          %552 = vst [vmem:[%s56 + $0x7b8] sm:$0xff] %v551
          %v553 = vld [vmem:[%s55 + $0x7c0] sm:$0xff]
          %554 = vst [vmem:[%s56 + $0x7c0] sm:$0xff] %v553
          %v555 = vld [vmem:[%s55 + $0x7c8] sm:$0xff]
          %556 = vst [vmem:[%s56 + $0x7c8] sm:$0xff] %v555
          %v557 = vld [vmem:[%s55 + $0x7d0] sm:$0xff]
          %558 = vst [vmem:[%s56 + $0x7d0] sm:$0xff] %v557
          %v559 = vld [vmem:[%s55 + $0x7d8] sm:$0xff]
          %560 = vst [vmem:[%s56 + $0x7d8] sm:$0xff] %v559
          %v561 = vld [vmem:[%s55 + $0x7e0] sm:$0xff]
          %562 = vst [vmem:[%s56 + $0x7e0] sm:$0xff] %v561
          %v563 = vld [vmem:[%s55 + $0x7e8] sm:$0xff]
          %564 = vst [vmem:[%s56 + $0x7e8] sm:$0xff] %v563
          %v565 = vld [vmem:[%s55 + $0x7f0] sm:$0xff]
          %566 = vst [vmem:[%s56 + $0x7f0] sm:$0xff] %v565
          %v567 = vld [vmem:[%s55 + $0x7f8] sm:$0xff]
          %568 = vst [vmem:[%s56 + $0x7f8] sm:$0xff] %v567
          %v569 = vld [vmem:[%s55 + $0x800] sm:$0xff]
          %570 = vst [vmem:[%s56 + $0x800] sm:$0xff] %v569
          %v571 = vld [vmem:[%s55 + $0x808] sm:$0xff]
          %572 = vst [vmem:[%s56 + $0x808] sm:$0xff] %v571
          %v573 = vld [vmem:[%s55 + $0x810] sm:$0xff]
          %574 = vst [vmem:[%s56 + $0x810] sm:$0xff] %v573
          %v575 = vld [vmem:[%s55 + $0x818] sm:$0xff]
          %576 = vst [vmem:[%s56 + $0x818] sm:$0xff] %v575
          %v577 = vld [vmem:[%s55 + $0x820] sm:$0xff]
          %578 = vst [vmem:[%s56 + $0x820] sm:$0xff] %v577
          %v579 = vld [vmem:[%s55 + $0x828] sm:$0xff]
          %580 = vst [vmem:[%s56 + $0x828] sm:$0xff] %v579
          %v581 = vld [vmem:[%s55 + $0x830] sm:$0xff]
          %582 = vst [vmem:[%s56 + $0x830] sm:$0xff] %v581
          %v583 = vld [vmem:[%s55 + $0x838] sm:$0xff]
          %584 = vst [vmem:[%s56 + $0x838] sm:$0xff] %v583
          %v585 = vld [vmem:[%s55 + $0x840] sm:$0xff]
          %586 = vst [vmem:[%s56 + $0x840] sm:$0xff] %v585
          %v587 = vld [vmem:[%s55 + $0x848] sm:$0xff]
          %588 = vst [vmem:[%s56 + $0x848] sm:$0xff] %v587
          %v589 = vld [vmem:[%s55 + $0x850] sm:$0xff]
          %590 = vst [vmem:[%s56 + $0x850] sm:$0xff] %v589
          %v591 = vld [vmem:[%s55 + $0x858] sm:$0xff]
          %592 = vst [vmem:[%s56 + $0x858] sm:$0xff] %v591
          %v593 = vld [vmem:[%s55 + $0x860] sm:$0xff]
          %594 = vst [vmem:[%s56 + $0x860] sm:$0xff] %v593
          %v595 = vld [vmem:[%s55 + $0x868] sm:$0xff]
          %596 = vst [vmem:[%s56 + $0x868] sm:$0xff] %v595
          %v597 = vld [vmem:[%s55 + $0x870] sm:$0xff]
          %598 = vst [vmem:[%s56 + $0x870] sm:$0xff] %v597
          %v599 = vld [vmem:[%s55 + $0x878] sm:$0xff]
          %600 = vst [vmem:[%s56 + $0x878] sm:$0xff] %v599
          %v601 = vld [vmem:[%s55 + $0x880] sm:$0xff]
          %602 = vst [vmem:[%s56 + $0x880] sm:$0xff] %v601
          %v603 = vld [vmem:[%s55 + $0x888] sm:$0xff]
          %604 = vst [vmem:[%s56 + $0x888] sm:$0xff] %v603
          %v605 = vld [vmem:[%s55 + $0x890] sm:$0xff]
          %606 = vst [vmem:[%s56 + $0x890] sm:$0xff] %v605
          %v607 = vld [vmem:[%s55 + $0x898] sm:$0xff]
          %608 = vst [vmem:[%s56 + $0x898] sm:$0xff] %v607
          %v609 = vld [vmem:[%s55 + $0x8a0] sm:$0xff]
          %610 = vst [vmem:[%s56 + $0x8a0] sm:$0xff] %v609
          %v611 = vld [vmem:[%s55 + $0x8a8] sm:$0xff]
          %612 = vst [vmem:[%s56 + $0x8a8] sm:$0xff] %v611
          %v613 = vld [vmem:[%s55 + $0x8b0] sm:$0xff]
          %614 = vst [vmem:[%s56 + $0x8b0] sm:$0xff] %v613
          %v615 = vld [vmem:[%s55 + $0x8b8] sm:$0xff]
          %616 = vst [vmem:[%s56 + $0x8b8] sm:$0xff] %v615
          %v617 = vld [vmem:[%s55 + $0x8c0] sm:$0xff]
          %618 = vst [vmem:[%s56 + $0x8c0] sm:$0xff] %v617
          %v619 = vld [vmem:[%s55 + $0x8c8] sm:$0xff]
          %620 = vst [vmem:[%s56 + $0x8c8] sm:$0xff] %v619
          %v621 = vld [vmem:[%s55 + $0x8d0] sm:$0xff]
          %622 = vst [vmem:[%s56 + $0x8d0] sm:$0xff] %v621
          %v623 = vld [vmem:[%s55 + $0x8d8] sm:$0xff]
          %624 = vst [vmem:[%s56 + $0x8d8] sm:$0xff] %v623
          %v625 = vld [vmem:[%s55 + $0x8e0] sm:$0xff]
          %626 = vst [vmem:[%s56 + $0x8e0] sm:$0xff] %v625
          %v627 = vld [vmem:[%s55 + $0x8e8] sm:$0xff]
          %628 = vst [vmem:[%s56 + $0x8e8] sm:$0xff] %v627
          %v629 = vld [vmem:[%s55 + $0x8f0] sm:$0xff]
          %630 = vst [vmem:[%s56 + $0x8f0] sm:$0xff] %v629
          %v631 = vld [vmem:[%s55 + $0x8f8] sm:$0xff]
          %632 = vst [vmem:[%s56 + $0x8f8] sm:$0xff] %v631
          %v633 = vld [vmem:[%s55 + $0x900] sm:$0xff]
          %634 = vst [vmem:[%s56 + $0x900] sm:$0xff] %v633
          %v635 = vld [vmem:[%s55 + $0x908] sm:$0xff]
          %636 = vst [vmem:[%s56 + $0x908] sm:$0xff] %v635
          %v637 = vld [vmem:[%s55 + $0x910] sm:$0xff]
          %638 = vst [vmem:[%s56 + $0x910] sm:$0xff] %v637
          %v639 = vld [vmem:[%s55 + $0x918] sm:$0xff]
          %640 = vst [vmem:[%s56 + $0x918] sm:$0xff] %v639
          %v641 = vld [vmem:[%s55 + $0x920] sm:$0xff]
          %642 = vst [vmem:[%s56 + $0x920] sm:$0xff] %v641
          %v643 = vld [vmem:[%s55 + $0x928] sm:$0xff]
          %644 = vst [vmem:[%s56 + $0x928] sm:$0xff] %v643
          %v645 = vld [vmem:[%s55 + $0x930] sm:$0xff]
          %646 = vst [vmem:[%s56 + $0x930] sm:$0xff] %v645
          %v647 = vld [vmem:[%s55 + $0x938] sm:$0xff]
          %648 = vst [vmem:[%s56 + $0x938] sm:$0xff] %v647
          %v649 = vld [vmem:[%s55 + $0x940] sm:$0xff]
          %650 = vst [vmem:[%s56 + $0x940] sm:$0xff] %v649
          %v651 = vld [vmem:[%s55 + $0x948] sm:$0xff]
          %652 = vst [vmem:[%s56 + $0x948] sm:$0xff] %v651
          %v653 = vld [vmem:[%s55 + $0x950] sm:$0xff]
          %654 = vst [vmem:[%s56 + $0x950] sm:$0xff] %v653
          %v655 = vld [vmem:[%s55 + $0x958] sm:$0xff]
          %656 = vst [vmem:[%s56 + $0x958] sm:$0xff] %v655
          %v657 = vld [vmem:[%s55 + $0x960] sm:$0xff]
          %658 = vst [vmem:[%s56 + $0x960] sm:$0xff] %v657
          %v659 = vld [vmem:[%s55 + $0x968] sm:$0xff]
          %660 = vst [vmem:[%s56 + $0x968] sm:$0xff] %v659
          %v661 = vld [vmem:[%s55 + $0x970] sm:$0xff]
          %662 = vst [vmem:[%s56 + $0x970] sm:$0xff] %v661
          %v663 = vld [vmem:[%s55 + $0x978] sm:$0xff]
          %664 = vst [vmem:[%s56 + $0x978] sm:$0xff] %v663
          %v665 = vld [vmem:[%s55 + $0x980] sm:$0xff]
          %666 = vst [vmem:[%s56 + $0x980] sm:$0xff] %v665
          %v667 = vld [vmem:[%s55 + $0x988] sm:$0xff]
          %668 = vst [vmem:[%s56 + $0x988] sm:$0xff] %v667
          %v669 = vld [vmem:[%s55 + $0x990] sm:$0xff]
          %670 = vst [vmem:[%s56 + $0x990] sm:$0xff] %v669
          %v671 = vld [vmem:[%s55 + $0x998] sm:$0xff]
          %672 = vst [vmem:[%s56 + $0x998] sm:$0xff] %v671
          %v673 = vld [vmem:[%s55 + $0x9a0] sm:$0xff]
          %674 = vst [vmem:[%s56 + $0x9a0] sm:$0xff] %v673
          %v675 = vld [vmem:[%s55 + $0x9a8] sm:$0xff]
          %676 = vst [vmem:[%s56 + $0x9a8] sm:$0xff] %v675
          %v677 = vld [vmem:[%s55 + $0x9b0] sm:$0xff]
          %678 = vst [vmem:[%s56 + $0x9b0] sm:$0xff] %v677
          %v679 = vld [vmem:[%s55 + $0x9b8] sm:$0xff]
          %680 = vst [vmem:[%s56 + $0x9b8] sm:$0xff] %v679
          %v681 = vld [vmem:[%s55 + $0x9c0] sm:$0xff]
          %682 = vst [vmem:[%s56 + $0x9c0] sm:$0xff] %v681
          %v683 = vld [vmem:[%s55 + $0x9c8] sm:$0xff]
          %684 = vst [vmem:[%s56 + $0x9c8] sm:$0xff] %v683
          %v685 = vld [vmem:[%s55 + $0x9d0] sm:$0xff]
          %686 = vst [vmem:[%s56 + $0x9d0] sm:$0xff] %v685
          %v687 = vld [vmem:[%s55 + $0x9d8] sm:$0xff]
          %688 = vst [vmem:[%s56 + $0x9d8] sm:$0xff] %v687
          %v689 = vld [vmem:[%s55 + $0x9e0] sm:$0xff]
          %690 = vst [vmem:[%s56 + $0x9e0] sm:$0xff] %v689
          %v691 = vld [vmem:[%s55 + $0x9e8] sm:$0xff]
          %692 = vst [vmem:[%s56 + $0x9e8] sm:$0xff] %v691
          %v693 = vld [vmem:[%s55 + $0x9f0] sm:$0xff]
          %694 = vst [vmem:[%s56 + $0x9f0] sm:$0xff] %v693
          %v695 = vld [vmem:[%s55 + $0x9f8] sm:$0xff]
          %696 = vst [vmem:[%s56 + $0x9f8] sm:$0xff] %v695
          %v697 = vld [vmem:[%s55 + $0xa00] sm:$0xff]
          %698 = vst [vmem:[%s56 + $0xa00] sm:$0xff] %v697
          %v699 = vld [vmem:[%s55 + $0xa08] sm:$0xff]
          %700 = vst [vmem:[%s56 + $0xa08] sm:$0xff] %v699
          %v701 = vld [vmem:[%s55 + $0xa10] sm:$0xff]
          %702 = vst [vmem:[%s56 + $0xa10] sm:$0xff] %v701
          %v703 = vld [vmem:[%s55 + $0xa18] sm:$0xff]
          %704 = vst [vmem:[%s56 + $0xa18] sm:$0xff] %v703
          %v705 = vld [vmem:[%s55 + $0xa20] sm:$0xff]
          %706 = vst [vmem:[%s56 + $0xa20] sm:$0xff] %v705
          %v707 = vld [vmem:[%s55 + $0xa28] sm:$0xff]
          %708 = vst [vmem:[%s56 + $0xa28] sm:$0xff] %v707
          %v709 = vld [vmem:[%s55 + $0xa30] sm:$0xff]
          %710 = vst [vmem:[%s56 + $0xa30] sm:$0xff] %v709
          %v711 = vld [vmem:[%s55 + $0xa38] sm:$0xff]
          %712 = vst [vmem:[%s56 + $0xa38] sm:$0xff] %v711
          %v713 = vld [vmem:[%s55 + $0xa40] sm:$0xff]
          %714 = vst [vmem:[%s56 + $0xa40] sm:$0xff] %v713
          %v715 = vld [vmem:[%s55 + $0xa48] sm:$0xff]
          %716 = vst [vmem:[%s56 + $0xa48] sm:$0xff] %v715
          %v717 = vld [vmem:[%s55 + $0xa50] sm:$0xff]
          %718 = vst [vmem:[%s56 + $0xa50] sm:$0xff] %v717
          %v719 = vld [vmem:[%s55 + $0xa58] sm:$0xff]
          %720 = vst [vmem:[%s56 + $0xa58] sm:$0xff] %v719
          %v721 = vld [vmem:[%s55 + $0xa60] sm:$0xff]
          %722 = vst [vmem:[%s56 + $0xa60] sm:$0xff] %v721
          %v723 = vld [vmem:[%s55 + $0xa68] sm:$0xff]
          %724 = vst [vmem:[%s56 + $0xa68] sm:$0xff] %v723
          %v725 = vld [vmem:[%s55 + $0xa70] sm:$0xff]
          %726 = vst [vmem:[%s56 + $0xa70] sm:$0xff] %v725
          %v727 = vld [vmem:[%s55 + $0xa78] sm:$0xff]
          %728 = vst [vmem:[%s56 + $0xa78] sm:$0xff] %v727
          %v729 = vld [vmem:[%s55 + $0xa80] sm:$0xff]
          %730 = vst [vmem:[%s56 + $0xa80] sm:$0xff] %v729
          %v731 = vld [vmem:[%s55 + $0xa88] sm:$0xff]
          %732 = vst [vmem:[%s56 + $0xa88] sm:$0xff] %v731
          %v733 = vld [vmem:[%s55 + $0xa90] sm:$0xff]
          %734 = vst [vmem:[%s56 + $0xa90] sm:$0xff] %v733
          %v735 = vld [vmem:[%s55 + $0xa98] sm:$0xff]
          %736 = vst [vmem:[%s56 + $0xa98] sm:$0xff] %v735
          %v737 = vld [vmem:[%s55 + $0xaa0] sm:$0xff]
          %738 = vst [vmem:[%s56 + $0xaa0] sm:$0xff] %v737
          %v739 = vld [vmem:[%s55 + $0xaa8] sm:$0xff]
          %740 = vst [vmem:[%s56 + $0xaa8] sm:$0xff] %v739
          %v741 = vld [vmem:[%s55 + $0xab0] sm:$0xff]
          %742 = vst [vmem:[%s56 + $0xab0] sm:$0xff] %v741
          %v743 = vld [vmem:[%s55 + $0xab8] sm:$0xff]
          %744 = vst [vmem:[%s56 + $0xab8] sm:$0xff] %v743
          %v745 = vld [vmem:[%s55 + $0xac0] sm:$0xff]
          %746 = vst [vmem:[%s56 + $0xac0] sm:$0xff] %v745
          %v747 = vld [vmem:[%s55 + $0xac8] sm:$0xff]
          %748 = vst [vmem:[%s56 + $0xac8] sm:$0xff] %v747
          %v749 = vld [vmem:[%s55 + $0xad0] sm:$0xff]
          %750 = vst [vmem:[%s56 + $0xad0] sm:$0xff] %v749
          %v751 = vld [vmem:[%s55 + $0xad8] sm:$0xff]
          %752 = vst [vmem:[%s56 + $0xad8] sm:$0xff] %v751
          %v753 = vld [vmem:[%s55 + $0xae0] sm:$0xff]
          %754 = vst [vmem:[%s56 + $0xae0] sm:$0xff] %v753
          %v755 = vld [vmem:[%s55 + $0xae8] sm:$0xff]
          %756 = vst [vmem:[%s56 + $0xae8] sm:$0xff] %v755
          %v757 = vld [vmem:[%s55 + $0xaf0] sm:$0xff]
          %758 = vst [vmem:[%s56 + $0xaf0] sm:$0xff] %v757
          %v759 = vld [vmem:[%s55 + $0xaf8] sm:$0xff]
          %760 = vst [vmem:[%s56 + $0xaf8] sm:$0xff] %v759
          %v761 = vld [vmem:[%s55 + $0xb00] sm:$0xff]
          %762 = vst [vmem:[%s56 + $0xb00] sm:$0xff] %v761
          %v763 = vld [vmem:[%s55 + $0xb08] sm:$0xff]
          %764 = vst [vmem:[%s56 + $0xb08] sm:$0xff] %v763
          %v765 = vld [vmem:[%s55 + $0xb10] sm:$0xff]
          %766 = vst [vmem:[%s56 + $0xb10] sm:$0xff] %v765
          %v767 = vld [vmem:[%s55 + $0xb18] sm:$0xff]
          %768 = vst [vmem:[%s56 + $0xb18] sm:$0xff] %v767
          %v769 = vld [vmem:[%s55 + $0xb20] sm:$0xff]
          %770 = vst [vmem:[%s56 + $0xb20] sm:$0xff] %v769
          %v771 = vld [vmem:[%s55 + $0xb28] sm:$0xff]
          %772 = vst [vmem:[%s56 + $0xb28] sm:$0xff] %v771
          %v773 = vld [vmem:[%s55 + $0xb30] sm:$0xff]
          %774 = vst [vmem:[%s56 + $0xb30] sm:$0xff] %v773
          %v775 = vld [vmem:[%s55 + $0xb38] sm:$0xff]
          %776 = vst [vmem:[%s56 + $0xb38] sm:$0xff] %v775
          %v777 = vld [vmem:[%s55 + $0xb40] sm:$0xff]
          %778 = vst [vmem:[%s56 + $0xb40] sm:$0xff] %v777
          %v779 = vld [vmem:[%s55 + $0xb48] sm:$0xff]
          %780 = vst [vmem:[%s56 + $0xb48] sm:$0xff] %v779
          %v781 = vld [vmem:[%s55 + $0xb50] sm:$0xff]
          %782 = vst [vmem:[%s56 + $0xb50] sm:$0xff] %v781
          %v783 = vld [vmem:[%s55 + $0xb58] sm:$0xff]
          %784 = vst [vmem:[%s56 + $0xb58] sm:$0xff] %v783
          %v785 = vld [vmem:[%s55 + $0xb60] sm:$0xff]
          %786 = vst [vmem:[%s56 + $0xb60] sm:$0xff] %v785
          %v787 = vld [vmem:[%s55 + $0xb68] sm:$0xff]
          %788 = vst [vmem:[%s56 + $0xb68] sm:$0xff] %v787
          %v789 = vld [vmem:[%s55 + $0xb70] sm:$0xff]
          %790 = vst [vmem:[%s56 + $0xb70] sm:$0xff] %v789
          %v791 = vld [vmem:[%s55 + $0xb78] sm:$0xff]
          %792 = vst [vmem:[%s56 + $0xb78] sm:$0xff] %v791
          %v793 = vld [vmem:[%s55 + $0xb80] sm:$0xff]
          %794 = vst [vmem:[%s56 + $0xb80] sm:$0xff] %v793
          %v795 = vld [vmem:[%s55 + $0xb88] sm:$0xff]
          %796 = vst [vmem:[%s56 + $0xb88] sm:$0xff] %v795
          %v797 = vld [vmem:[%s55 + $0xb90] sm:$0xff]
          %798 = vst [vmem:[%s56 + $0xb90] sm:$0xff] %v797
          %v799 = vld [vmem:[%s55 + $0xb98] sm:$0xff]
          %800 = vst [vmem:[%s56 + $0xb98] sm:$0xff] %v799
          %v801 = vld [vmem:[%s55 + $0xba0] sm:$0xff]
          %802 = vst [vmem:[%s56 + $0xba0] sm:$0xff] %v801
          %v803 = vld [vmem:[%s55 + $0xba8] sm:$0xff]
          %804 = vst [vmem:[%s56 + $0xba8] sm:$0xff] %v803
          %v805 = vld [vmem:[%s55 + $0xbb0] sm:$0xff]
          %806 = vst [vmem:[%s56 + $0xbb0] sm:$0xff] %v805
          %v807 = vld [vmem:[%s55 + $0xbb8] sm:$0xff]
          %808 = vst [vmem:[%s56 + $0xbb8] sm:$0xff] %v807
          %v809 = vld [vmem:[%s55 + $0xbc0] sm:$0xff]
          %810 = vst [vmem:[%s56 + $0xbc0] sm:$0xff] %v809
          %v811 = vld [vmem:[%s55 + $0xbc8] sm:$0xff]
          %812 = vst [vmem:[%s56 + $0xbc8] sm:$0xff] %v811
          %v813 = vld [vmem:[%s55 + $0xbd0] sm:$0xff]
          %814 = vst [vmem:[%s56 + $0xbd0] sm:$0xff] %v813
          %v815 = vld [vmem:[%s55 + $0xbd8] sm:$0xff]
          %816 = vst [vmem:[%s56 + $0xbd8] sm:$0xff] %v815
          %v817 = vld [vmem:[%s55 + $0xbe0] sm:$0xff]
          %818 = vst [vmem:[%s56 + $0xbe0] sm:$0xff] %v817
          %v819 = vld [vmem:[%s55 + $0xbe8] sm:$0xff]
          %820 = vst [vmem:[%s56 + $0xbe8] sm:$0xff] %v819
          %v821 = vld [vmem:[%s55 + $0xbf0] sm:$0xff]
          %822 = vst [vmem:[%s56 + $0xbf0] sm:$0xff] %v821
          %v823 = vld [vmem:[%s55 + $0xbf8] sm:$0xff]
          %824 = vst [vmem:[%s56 + $0xbf8] sm:$0xff] %v823
          %v825 = vld [vmem:[%s55 + $0xc00] sm:$0xff]
          %826 = vst [vmem:[%s56 + $0xc00] sm:$0xff] %v825
          %v827 = vld [vmem:[%s55 + $0xc08] sm:$0xff]
          %828 = vst [vmem:[%s56 + $0xc08] sm:$0xff] %v827
          %v829 = vld [vmem:[%s55 + $0xc10] sm:$0xff]
          %830 = vst [vmem:[%s56 + $0xc10] sm:$0xff] %v829
          %v831 = vld [vmem:[%s55 + $0xc18] sm:$0xff]
          %832 = vst [vmem:[%s56 + $0xc18] sm:$0xff] %v831
          %v833 = vld [vmem:[%s55 + $0xc20] sm:$0xff]
          %834 = vst [vmem:[%s56 + $0xc20] sm:$0xff] %v833
          %v835 = vld [vmem:[%s55 + $0xc28] sm:$0xff]
          %836 = vst [vmem:[%s56 + $0xc28] sm:$0xff] %v835
          %v837 = vld [vmem:[%s55 + $0xc30] sm:$0xff]
          %838 = vst [vmem:[%s56 + $0xc30] sm:$0xff] %v837
          %v839 = vld [vmem:[%s55 + $0xc38] sm:$0xff]
          %840 = vst [vmem:[%s56 + $0xc38] sm:$0xff] %v839
          %v841 = vld [vmem:[%s55 + $0xc40] sm:$0xff]
          %842 = vst [vmem:[%s56 + $0xc40] sm:$0xff] %v841
          %v843 = vld [vmem:[%s55 + $0xc48] sm:$0xff]
          %844 = vst [vmem:[%s56 + $0xc48] sm:$0xff] %v843
          %v845 = vld [vmem:[%s55 + $0xc50] sm:$0xff]
          %846 = vst [vmem:[%s56 + $0xc50] sm:$0xff] %v845
          %v847 = vld [vmem:[%s55 + $0xc58] sm:$0xff]
          %848 = vst [vmem:[%s56 + $0xc58] sm:$0xff] %v847
          %v849 = vld [vmem:[%s55 + $0xc60] sm:$0xff]
          %850 = vst [vmem:[%s56 + $0xc60] sm:$0xff] %v849
          %v851 = vld [vmem:[%s55 + $0xc68] sm:$0xff]
          %852 = vst [vmem:[%s56 + $0xc68] sm:$0xff] %v851
          %v853 = vld [vmem:[%s55 + $0xc70] sm:$0xff]
          %854 = vst [vmem:[%s56 + $0xc70] sm:$0xff] %v853
          %v855 = vld [vmem:[%s55 + $0xc78] sm:$0xff]
          %856 = vst [vmem:[%s56 + $0xc78] sm:$0xff] %v855
          %v857 = vld [vmem:[%s55 + $0xc80] sm:$0xff]
          %858 = vst [vmem:[%s56 + $0xc80] sm:$0xff] %v857
          %v859 = vld [vmem:[%s55 + $0xc88] sm:$0xff]
          %860 = vst [vmem:[%s56 + $0xc88] sm:$0xff] %v859
          %v861 = vld [vmem:[%s55 + $0xc90] sm:$0xff]
          %862 = vst [vmem:[%s56 + $0xc90] sm:$0xff] %v861
          %v863 = vld [vmem:[%s55 + $0xc98] sm:$0xff]
          %864 = vst [vmem:[%s56 + $0xc98] sm:$0xff] %v863
          %v865 = vld [vmem:[%s55 + $0xca0] sm:$0xff]
          %866 = vst [vmem:[%s56 + $0xca0] sm:$0xff] %v865
          %v867 = vld [vmem:[%s55 + $0xca8] sm:$0xff]
          %868 = vst [vmem:[%s56 + $0xca8] sm:$0xff] %v867
          %v869 = vld [vmem:[%s55 + $0xcb0] sm:$0xff]
          %870 = vst [vmem:[%s56 + $0xcb0] sm:$0xff] %v869
          %v871 = vld [vmem:[%s55 + $0xcb8] sm:$0xff]
          %872 = vst [vmem:[%s56 + $0xcb8] sm:$0xff] %v871
          %v873 = vld [vmem:[%s55 + $0xcc0] sm:$0xff]
          %874 = vst [vmem:[%s56 + $0xcc0] sm:$0xff] %v873
          %v875 = vld [vmem:[%s55 + $0xcc8] sm:$0xff]
          %876 = vst [vmem:[%s56 + $0xcc8] sm:$0xff] %v875
          %v877 = vld [vmem:[%s55 + $0xcd0] sm:$0xff]
          %878 = vst [vmem:[%s56 + $0xcd0] sm:$0xff] %v877
          %v879 = vld [vmem:[%s55 + $0xcd8] sm:$0xff]
          %880 = vst [vmem:[%s56 + $0xcd8] sm:$0xff] %v879
          %v881 = vld [vmem:[%s55 + $0xce0] sm:$0xff]
          %882 = vst [vmem:[%s56 + $0xce0] sm:$0xff] %v881
          %v883 = vld [vmem:[%s55 + $0xce8] sm:$0xff]
          %884 = vst [vmem:[%s56 + $0xce8] sm:$0xff] %v883
          %v885 = vld [vmem:[%s55 + $0xcf0] sm:$0xff]
          %886 = vst [vmem:[%s56 + $0xcf0] sm:$0xff] %v885
          %v887 = vld [vmem:[%s55 + $0xcf8] sm:$0xff]
          %888 = vst [vmem:[%s56 + $0xcf8] sm:$0xff] %v887
          %v889 = vld [vmem:[%s55 + $0xd00] sm:$0xff]
          %890 = vst [vmem:[%s56 + $0xd00] sm:$0xff] %v889
          %v891 = vld [vmem:[%s55 + $0xd08] sm:$0xff]
          %892 = vst [vmem:[%s56 + $0xd08] sm:$0xff] %v891
          %v893 = vld [vmem:[%s55 + $0xd10] sm:$0xff]
          %894 = vst [vmem:[%s56 + $0xd10] sm:$0xff] %v893
          %v895 = vld [vmem:[%s55 + $0xd18] sm:$0xff]
          %896 = vst [vmem:[%s56 + $0xd18] sm:$0xff] %v895
          %v897 = vld [vmem:[%s55 + $0xd20] sm:$0xff]
          %898 = vst [vmem:[%s56 + $0xd20] sm:$0xff] %v897
          %v899 = vld [vmem:[%s55 + $0xd28] sm:$0xff]
          %900 = vst [vmem:[%s56 + $0xd28] sm:$0xff] %v899
          %v901 = vld [vmem:[%s55 + $0xd30] sm:$0xff]
          %902 = vst [vmem:[%s56 + $0xd30] sm:$0xff] %v901
          %v903 = vld [vmem:[%s55 + $0xd38] sm:$0xff]
          %904 = vst [vmem:[%s56 + $0xd38] sm:$0xff] %v903
          %v905 = vld [vmem:[%s55 + $0xd40] sm:$0xff]
          %906 = vst [vmem:[%s56 + $0xd40] sm:$0xff] %v905
          %v907 = vld [vmem:[%s55 + $0xd48] sm:$0xff]
          %908 = vst [vmem:[%s56 + $0xd48] sm:$0xff] %v907
          %v909 = vld [vmem:[%s55 + $0xd50] sm:$0xff]
          %910 = vst [vmem:[%s56 + $0xd50] sm:$0xff] %v909
          %v911 = vld [vmem:[%s55 + $0xd58] sm:$0xff]
          %912 = vst [vmem:[%s56 + $0xd58] sm:$0xff] %v911
          %v913 = vld [vmem:[%s55 + $0xd60] sm:$0xff]
          %914 = vst [vmem:[%s56 + $0xd60] sm:$0xff] %v913
          %v915 = vld [vmem:[%s55 + $0xd68] sm:$0xff]
          %916 = vst [vmem:[%s56 + $0xd68] sm:$0xff] %v915
          %v917 = vld [vmem:[%s55 + $0xd70] sm:$0xff]
          %918 = vst [vmem:[%s56 + $0xd70] sm:$0xff] %v917
          %v919 = vld [vmem:[%s55 + $0xd78] sm:$0xff]
          %920 = vst [vmem:[%s56 + $0xd78] sm:$0xff] %v919
          %v921 = vld [vmem:[%s55 + $0xd80] sm:$0xff]
          %922 = vst [vmem:[%s56 + $0xd80] sm:$0xff] %v921
          %v923 = vld [vmem:[%s55 + $0xd88] sm:$0xff]
          %924 = vst [vmem:[%s56 + $0xd88] sm:$0xff] %v923
          %v925 = vld [vmem:[%s55 + $0xd90] sm:$0xff]
          %926 = vst [vmem:[%s56 + $0xd90] sm:$0xff] %v925
          %v927 = vld [vmem:[%s55 + $0xd98] sm:$0xff]
          %928 = vst [vmem:[%s56 + $0xd98] sm:$0xff] %v927
          %v929 = vld [vmem:[%s55 + $0xda0] sm:$0xff]
          %930 = vst [vmem:[%s56 + $0xda0] sm:$0xff] %v929
          %v931 = vld [vmem:[%s55 + $0xda8] sm:$0xff]
          %932 = vst [vmem:[%s56 + $0xda8] sm:$0xff] %v931
          %v933 = vld [vmem:[%s55 + $0xdb0] sm:$0xff]
          %934 = vst [vmem:[%s56 + $0xdb0] sm:$0xff] %v933
          %v935 = vld [vmem:[%s55 + $0xdb8] sm:$0xff]
          %936 = vst [vmem:[%s56 + $0xdb8] sm:$0xff] %v935
          %v937 = vld [vmem:[%s55 + $0xdc0] sm:$0xff]
          %938 = vst [vmem:[%s56 + $0xdc0] sm:$0xff] %v937
          %v939 = vld [vmem:[%s55 + $0xdc8] sm:$0xff]
          %940 = vst [vmem:[%s56 + $0xdc8] sm:$0xff] %v939
          %v941 = vld [vmem:[%s55 + $0xdd0] sm:$0xff]
          %942 = vst [vmem:[%s56 + $0xdd0] sm:$0xff] %v941
          %v943 = vld [vmem:[%s55 + $0xdd8] sm:$0xff]
          %944 = vst [vmem:[%s56 + $0xdd8] sm:$0xff] %v943
          %v945 = vld [vmem:[%s55 + $0xde0] sm:$0xff]
          %946 = vst [vmem:[%s56 + $0xde0] sm:$0xff] %v945
          %v947 = vld [vmem:[%s55 + $0xde8] sm:$0xff]
          %948 = vst [vmem:[%s56 + $0xde8] sm:$0xff] %v947
          %v949 = vld [vmem:[%s55 + $0xdf0] sm:$0xff]
          %950 = vst [vmem:[%s56 + $0xdf0] sm:$0xff] %v949
          %v951 = vld [vmem:[%s55 + $0xdf8] sm:$0xff]
          %952 = vst [vmem:[%s56 + $0xdf8] sm:$0xff] %v951
          %v953 = vld [vmem:[%s55 + $0xe00] sm:$0xff]
          %954 = vst [vmem:[%s56 + $0xe00] sm:$0xff] %v953
          %v955 = vld [vmem:[%s55 + $0xe08] sm:$0xff]
          %956 = vst [vmem:[%s56 + $0xe08] sm:$0xff] %v955
          %v957 = vld [vmem:[%s55 + $0xe10] sm:$0xff]
          %958 = vst [vmem:[%s56 + $0xe10] sm:$0xff] %v957
          %v959 = vld [vmem:[%s55 + $0xe18] sm:$0xff]
          %960 = vst [vmem:[%s56 + $0xe18] sm:$0xff] %v959
          %v961 = vld [vmem:[%s55 + $0xe20] sm:$0xff]
          %962 = vst [vmem:[%s56 + $0xe20] sm:$0xff] %v961
          %v963 = vld [vmem:[%s55 + $0xe28] sm:$0xff]
          %964 = vst [vmem:[%s56 + $0xe28] sm:$0xff] %v963
          %v965 = vld [vmem:[%s55 + $0xe30] sm:$0xff]
          %966 = vst [vmem:[%s56 + $0xe30] sm:$0xff] %v965
          %v967 = vld [vmem:[%s55 + $0xe38] sm:$0xff]
          %968 = vst [vmem:[%s56 + $0xe38] sm:$0xff] %v967
          %v969 = vld [vmem:[%s55 + $0xe40] sm:$0xff]
          %970 = vst [vmem:[%s56 + $0xe40] sm:$0xff] %v969
          %v971 = vld [vmem:[%s55 + $0xe48] sm:$0xff]
          %972 = vst [vmem:[%s56 + $0xe48] sm:$0xff] %v971
          %v973 = vld [vmem:[%s55 + $0xe50] sm:$0xff]
          %974 = vst [vmem:[%s56 + $0xe50] sm:$0xff] %v973
          %v975 = vld [vmem:[%s55 + $0xe58] sm:$0xff]
          %976 = vst [vmem:[%s56 + $0xe58] sm:$0xff] %v975
          %v977 = vld [vmem:[%s55 + $0xe60] sm:$0xff]
          %978 = vst [vmem:[%s56 + $0xe60] sm:$0xff] %v977
          %v979 = vld [vmem:[%s55 + $0xe68] sm:$0xff]
          %980 = vst [vmem:[%s56 + $0xe68] sm:$0xff] %v979
          %v981 = vld [vmem:[%s55 + $0xe70] sm:$0xff]
          %982 = vst [vmem:[%s56 + $0xe70] sm:$0xff] %v981
          %v983 = vld [vmem:[%s55 + $0xe78] sm:$0xff]
          %984 = vst [vmem:[%s56 + $0xe78] sm:$0xff] %v983
          %v985 = vld [vmem:[%s55 + $0xe80] sm:$0xff]
          %986 = vst [vmem:[%s56 + $0xe80] sm:$0xff] %v985
          %v987 = vld [vmem:[%s55 + $0xe88] sm:$0xff]
          %988 = vst [vmem:[%s56 + $0xe88] sm:$0xff] %v987
          %v989 = vld [vmem:[%s55 + $0xe90] sm:$0xff]
          %990 = vst [vmem:[%s56 + $0xe90] sm:$0xff] %v989
          %v991 = vld [vmem:[%s55 + $0xe98] sm:$0xff]
          %992 = vst [vmem:[%s56 + $0xe98] sm:$0xff] %v991
          %v993 = vld [vmem:[%s55 + $0xea0] sm:$0xff]
          %994 = vst [vmem:[%s56 + $0xea0] sm:$0xff] %v993
          %v995 = vld [vmem:[%s55 + $0xea8] sm:$0xff]
          %996 = vst [vmem:[%s56 + $0xea8] sm:$0xff] %v995
          %v997 = vld [vmem:[%s55 + $0xeb0] sm:$0xff]
          %998 = vst [vmem:[%s56 + $0xeb0] sm:$0xff] %v997
          %v999 = vld [vmem:[%s55 + $0xeb8] sm:$0xff]
          %1000 = vst [vmem:[%s56 + $0xeb8] sm:$0xff] %v999
          %v1001 = vld [vmem:[%s55 + $0xec0] sm:$0xff]
          %1002 = vst [vmem:[%s56 + $0xec0] sm:$0xff] %v1001
          %v1003 = vld [vmem:[%s55 + $0xec8] sm:$0xff]
          %1004 = vst [vmem:[%s56 + $0xec8] sm:$0xff] %v1003
          %v1005 = vld [vmem:[%s55 + $0xed0] sm:$0xff]
          %1006 = vst [vmem:[%s56 + $0xed0] sm:$0xff] %v1005
          %v1007 = vld [vmem:[%s55 + $0xed8] sm:$0xff]
          %1008 = vst [vmem:[%s56 + $0xed8] sm:$0xff] %v1007
          %v1009 = vld [vmem:[%s55 + $0xee0] sm:$0xff]
          %1010 = vst [vmem:[%s56 + $0xee0] sm:$0xff] %v1009
          %v1011 = vld [vmem:[%s55 + $0xee8] sm:$0xff]
          %1012 = vst [vmem:[%s56 + $0xee8] sm:$0xff] %v1011
          %v1013 = vld [vmem:[%s55 + $0xef0] sm:$0xff]
          %1014 = vst [vmem:[%s56 + $0xef0] sm:$0xff] %v1013
          %v1015 = vld [vmem:[%s55 + $0xef8] sm:$0xff]
          %1016 = vst [vmem:[%s56 + $0xef8] sm:$0xff] %v1015
          %v1017 = vld [vmem:[%s55 + $0xf00] sm:$0xff]
          %1018 = vst [vmem:[%s56 + $0xf00] sm:$0xff] %v1017
          %v1019 = vld [vmem:[%s55 + $0xf08] sm:$0xff]
          %1020 = vst [vmem:[%s56 + $0xf08] sm:$0xff] %v1019
          %v1021 = vld [vmem:[%s55 + $0xf10] sm:$0xff]
          %1022 = vst [vmem:[%s56 + $0xf10] sm:$0xff] %v1021
          %v1023 = vld [vmem:[%s55 + $0xf18] sm:$0xff]
          %1024 = vst [vmem:[%s56 + $0xf18] sm:$0xff] %v1023
          %v1025 = vld [vmem:[%s55 + $0xf20] sm:$0xff]
          %1026 = vst [vmem:[%s56 + $0xf20] sm:$0xff] %v1025
          %v1027 = vld [vmem:[%s55 + $0xf28] sm:$0xff]
          %1028 = vst [vmem:[%s56 + $0xf28] sm:$0xff] %v1027
          %v1029 = vld [vmem:[%s55 + $0xf30] sm:$0xff]
          %1030 = vst [vmem:[%s56 + $0xf30] sm:$0xff] %v1029
          %v1031 = vld [vmem:[%s55 + $0xf38] sm:$0xff]
          %1032 = vst [vmem:[%s56 + $0xf38] sm:$0xff] %v1031
          %v1033 = vld [vmem:[%s55 + $0xf40] sm:$0xff]
          %1034 = vst [vmem:[%s56 + $0xf40] sm:$0xff] %v1033
          %v1035 = vld [vmem:[%s55 + $0xf48] sm:$0xff]
          %1036 = vst [vmem:[%s56 + $0xf48] sm:$0xff] %v1035
          %v1037 = vld [vmem:[%s55 + $0xf50] sm:$0xff]
          %1038 = vst [vmem:[%s56 + $0xf50] sm:$0xff] %v1037
          %v1039 = vld [vmem:[%s55 + $0xf58] sm:$0xff]
          %1040 = vst [vmem:[%s56 + $0xf58] sm:$0xff] %v1039
          %v1041 = vld [vmem:[%s55 + $0xf60] sm:$0xff]
          %1042 = vst [vmem:[%s56 + $0xf60] sm:$0xff] %v1041
          %v1043 = vld [vmem:[%s55 + $0xf68] sm:$0xff]
          %1044 = vst [vmem:[%s56 + $0xf68] sm:$0xff] %v1043
          %v1045 = vld [vmem:[%s55 + $0xf70] sm:$0xff]
          %1046 = vst [vmem:[%s56 + $0xf70] sm:$0xff] %v1045
          %v1047 = vld [vmem:[%s55 + $0xf78] sm:$0xff]
          %1048 = vst [vmem:[%s56 + $0xf78] sm:$0xff] %v1047
          %v1049 = vld [vmem:[%s55 + $0xf80] sm:$0xff]
          %1050 = vst [vmem:[%s56 + $0xf80] sm:$0xff] %v1049
          %v1051 = vld [vmem:[%s55 + $0xf88] sm:$0xff]
          %1052 = vst [vmem:[%s56 + $0xf88] sm:$0xff] %v1051
          %v1053 = vld [vmem:[%s55 + $0xf90] sm:$0xff]
          %1054 = vst [vmem:[%s56 + $0xf90] sm:$0xff] %v1053
          %v1055 = vld [vmem:[%s55 + $0xf98] sm:$0xff]
          %1056 = vst [vmem:[%s56 + $0xf98] sm:$0xff] %v1055
          %v1057 = vld [vmem:[%s55 + $0xfa0] sm:$0xff]
          %1058 = vst [vmem:[%s56 + $0xfa0] sm:$0xff] %v1057
          %v1059 = vld [vmem:[%s55 + $0xfa8] sm:$0xff]
          %1060 = vst [vmem:[%s56 + $0xfa8] sm:$0xff] %v1059
          %v1061 = vld [vmem:[%s55 + $0xfb0] sm:$0xff]
          %1062 = vst [vmem:[%s56 + $0xfb0] sm:$0xff] %v1061
          %v1063 = vld [vmem:[%s55 + $0xfb8] sm:$0xff]
          %1064 = vst [vmem:[%s56 + $0xfb8] sm:$0xff] %v1063
          %v1065 = vld [vmem:[%s55 + $0xfc0] sm:$0xff]
          %1066 = vst [vmem:[%s56 + $0xfc0] sm:$0xff] %v1065
          %v1067 = vld [vmem:[%s55 + $0xfc8] sm:$0xff]
          %1068 = vst [vmem:[%s56 + $0xfc8] sm:$0xff] %v1067
          %v1069 = vld [vmem:[%s55 + $0xfd0] sm:$0xff]
          %1070 = vst [vmem:[%s56 + $0xfd0] sm:$0xff] %v1069
          %v1071 = vld [vmem:[%s55 + $0xfd8] sm:$0xff]
          %1072 = vst [vmem:[%s56 + $0xfd8] sm:$0xff] %v1071
          %v1073 = vld [vmem:[%s55 + $0xfe0] sm:$0xff]
          %1074 = vst [vmem:[%s56 + $0xfe0] sm:$0xff] %v1073
          %v1075 = vld [vmem:[%s55 + $0xfe8] sm:$0xff]
          %1076 = vst [vmem:[%s56 + $0xfe8] sm:$0xff] %v1075
          %v1077 = vld [vmem:[%s55 + $0xff0] sm:$0xff]
          %1078 = vst [vmem:[%s56 + $0xff0] sm:$0xff] %v1077
          %v1079 = vld [vmem:[%s55 + $0xff8] sm:$0xff]
          %1080 = vst [vmem:[%s56 + $0xff8] sm:$0xff] %v1079
        $region49: #{cnn_forward.3} parent=43 // loop_footer
          %s54 = sadd.s32 1, %s50
        $region50: #{cnn_forward.3} parent=43 // loop_footer_branch
          %49 = sbr.rel target = $region46
        $region51: #{cnn_forward.3} parent=43 // loop_exit
          _
      $region44: #{cnn_forward.3} parent=28 // pred_fallthru
        _
      %p1081 = pneg %p45
      // Predicated region
      $region52: #{cnn_forward.3} parent=28 // pred_check
        _
      $region53: #{cnn_forward.3} parent=28 // pred_check_branch
        %1083 = sbr.rel (%p45) target = $region55
      $region54: #{cnn_forward.3} parent=28 // pred_region
        %s1084 = sand.u32 4096, 7
      $region55: #{cnn_forward.3} parent=28 // pred_fallthru
        _
    $region29: #{cnn_forward.3} parent=1 // pred_fallthru
      _
    // Predicated region
    $region30: #{cnn_forward.3} parent=1 // pred_check
      %p30 = pneg %p26
    $region31: #{cnn_forward.3} parent=1 // pred_check_branch
      %32 = sbr.rel (%p30) target = $region33
    $region32: #{cnn_forward.3} parent=1 // pred_region
      %s33 = sshllo.u32 0, 4096
      loop: start=0, step=1, limit=1
      $region34: #{cnn_forward.3} parent=32 // loop_pre_header
        _
      $region35: #{cnn_forward.3} parent=32 // loop_header
        %s35 = sphi 0, %s39
        %p36 = scmp.ge.s32.totalorder %s35, 1
        %s40 = sphi %s3, %s3
        %s41 = sphi [#allocation2], [#allocation2]
      $region36: #{cnn_forward.3} parent=32 // loop_header_branch
        %38 = sbr.rel (%p36) target = $region40
      $region37: #{cnn_forward.3} parent=32 // loop_body
        %v42 = vld [vmem:[%s40] sm:%s33]
        %43 = vst [vmem:[%s41] sm:%s33] %v42
      $region38: #{cnn_forward.3} parent=32 // loop_footer
        %s39 = sadd.s32 1, %s35
      $region39: #{cnn_forward.3} parent=32 // loop_footer_branch
        %34 = sbr.rel target = $region35
      $region40: #{cnn_forward.3} parent=32 // loop_exit
        _
    $region33: #{cnn_forward.3} parent=1 // pred_fallthru
      _
    // Predicated region
    $region56: #{cnn_forward.3} parent=1 // pred_check
      _
    $region57: #{cnn_forward.3} parent=1 // pred_check_branch
      %1087 = sbr.rel (0) target = $region59
    $region58: #{cnn_forward.3} parent=1 // pred_region
      %1088 = vsyncadd [#allocation4], 65536
    $region59: #{cnn_forward.3} parent=1 // pred_fallthru
      _
    %v1089 = vld [vmem:[%s0] sm:$0xff]
    %v1090 = vld [vmem:[%s0 + $0x8] sm:$0xff]
    %v1091 = vld [vmem:[%s0 + $0x10] sm:$0xff]
    %v1092 = vld [vmem:[%s0 + $0x18] sm:$0xff]
    %v1093 = vld [vmem:[%s0 + $0x20] sm:$0xff]
    %v1094 = vld [vmem:[%s0 + $0x28] sm:$0xff]
    %v1095 = vld [vmem:[%s0 + $0x30] sm:$0xff]
    %v1096 = vld [vmem:[%s0 + $0x38] sm:$0xff]
    %v1097 = vld [vmem:[%s0 + $0x40] sm:$0xff]
    %v1098 = vld [vmem:[%s0 + $0x48] sm:$0xff]
    %v1099 = vld [vmem:[%s0 + $0x50] sm:$0xff]
    %v1100 = vld [vmem:[%s0 + $0x58] sm:$0xff]
    %v1101 = vld [vmem:[%s0 + $0x60] sm:$0xff]
    %v1102 = vld [vmem:[%s0 + $0x68] sm:$0xff]
    %v1103 = vld [vmem:[%s0 + $0x70] sm:$0xff]
    %v1104 = vld [vmem:[%s0 + $0x78] sm:$0xff]
    %v1105 = vld [vmem:[%s0 + $0x80] sm:$0xff]
    %v1106 = vld [vmem:[%s0 + $0x88] sm:$0xff]
    %v1107 = vld [vmem:[%s0 + $0x90] sm:$0xff]
    %v1108 = vld [vmem:[%s0 + $0x98] sm:$0xff]
    %v1109 = vld [vmem:[%s0 + $0xa0] sm:$0xff]
    %v1110 = vld [vmem:[%s0 + $0xa8] sm:$0xff]
    %v1111 = vld [vmem:[%s0 + $0xb0] sm:$0xff]
    %v1112 = vld [vmem:[%s0 + $0xb8] sm:$0xff]
    %v1113 = vld [vmem:[%s0 + $0xc0] sm:$0xff]
    %v1114 = vld [vmem:[%s0 + $0xc8] sm:$0xff]
    %v1115 = vld [vmem:[%s0 + $0xd0] sm:$0xff]
    %v1116 = vld [vmem:[%s0 + $0xd8] sm:$0xff]
    %v1117 = vld [vmem:[%s0 + $0xe0] sm:$0xff]
    %v1118 = vld [vmem:[%s0 + $0xe8] sm:$0xff]
    %v1119 = vld [vmem:[%s0 + $0xf0] sm:$0xff]
    %v1120 = vld [vmem:[%s0 + $0xf8] sm:$0xff]
    %v1121 = vld [vmem:[%s0 + $0x100] sm:$0xff]
    %v1122 = vld [vmem:[%s0 + $0x108] sm:$0xff]
    %v1123 = vld [vmem:[%s0 + $0x110] sm:$0xff]
    %v1124 = vld [vmem:[%s0 + $0x118] sm:$0xff]
    %v1125 = vld [vmem:[%s0 + $0x120] sm:$0xff]
    %v1126 = vld [vmem:[%s0 + $0x128] sm:$0xff]
    %v1127 = vld [vmem:[%s0 + $0x130] sm:$0xff]
    %v1128 = vld [vmem:[%s0 + $0x138] sm:$0xff]
    %v1129 = vld [vmem:[%s0 + $0x140] sm:$0xff]
    %v1130 = vld [vmem:[%s0 + $0x148] sm:$0xff]
    %v1131 = vld [vmem:[%s0 + $0x150] sm:$0xff]
    %v1132 = vld [vmem:[%s0 + $0x158] sm:$0xff]
    %v1133 = vld [vmem:[%s0 + $0x160] sm:$0xff]
    %v1134 = vld [vmem:[%s0 + $0x168] sm:$0xff]
    %v1135 = vld [vmem:[%s0 + $0x170] sm:$0xff]
    %v1136 = vld [vmem:[%s0 + $0x178] sm:$0xff]
    %v1137 = vld [vmem:[%s0 + $0x180] sm:$0xff]
    %v1138 = vld [vmem:[%s0 + $0x188] sm:$0xff]
    %v1139 = vld [vmem:[%s0 + $0x190] sm:$0xff]
    %v1140 = vld [vmem:[%s0 + $0x198] sm:$0xff]
    %v1141 = vld [vmem:[%s0 + $0x1a0] sm:$0xff]
    %v1142 = vld [vmem:[%s0 + $0x1a8] sm:$0xff]
    %v1143 = vld [vmem:[%s0 + $0x1b0] sm:$0xff]
    %v1144 = vld [vmem:[%s0 + $0x1b8] sm:$0xff]
    %v1145 = vld [vmem:[%s0 + $0x1c0] sm:$0xff]
    %v1146 = vld [vmem:[%s0 + $0x1c8] sm:$0xff]
    %v1147 = vld [vmem:[%s0 + $0x1d0] sm:$0xff]
    %v1148 = vld [vmem:[%s0 + $0x1d8] sm:$0xff]
    %v1149 = vld [vmem:[%s0 + $0x1e0] sm:$0xff]
    %v1150 = vld [vmem:[%s0 + $0x1e8] sm:$0xff]
    %v1151 = vld [vmem:[%s0 + $0x1f0] sm:$0xff]
    %v1152 = vld [vmem:[%s0 + $0x1f8] sm:$0xff]
    %v1153 = vld [vmem:[%s0 + $0x200] sm:$0xff]
    %v1154 = vld [vmem:[%s0 + $0x208] sm:$0xff]
    %v1155 = vld [vmem:[%s0 + $0x210] sm:$0xff]
    %v1156 = vld [vmem:[%s0 + $0x218] sm:$0xff]
    %v1157 = vld [vmem:[%s0 + $0x220] sm:$0xff]
    %v1158 = vld [vmem:[%s0 + $0x228] sm:$0xff]
    %v1159 = vld [vmem:[%s0 + $0x230] sm:$0xff]
    %v1160 = vld [vmem:[%s0 + $0x238] sm:$0xff]
    %v1161 = vld [vmem:[%s0 + $0x240] sm:$0xff]
    %v1162 = vld [vmem:[%s0 + $0x248] sm:$0xff]
    %v1163 = vld [vmem:[%s0 + $0x250] sm:$0xff]
    %v1164 = vld [vmem:[%s0 + $0x258] sm:$0xff]
    %v1165 = vld [vmem:[%s0 + $0x260] sm:$0xff]
    %v1166 = vld [vmem:[%s0 + $0x268] sm:$0xff]
    %v1167 = vld [vmem:[%s0 + $0x270] sm:$0xff]
    %v1168 = vld [vmem:[%s0 + $0x278] sm:$0xff]
    %v1169 = vld [vmem:[%s0 + $0x280] sm:$0xff]
    %v1170 = vld [vmem:[%s0 + $0x288] sm:$0xff]
    %v1171 = vld [vmem:[%s0 + $0x290] sm:$0xff]
    %v1172 = vld [vmem:[%s0 + $0x298] sm:$0xff]
    %v1173 = vld [vmem:[%s0 + $0x2a0] sm:$0xff]
    %v1174 = vld [vmem:[%s0 + $0x2a8] sm:$0xff]
    %v1175 = vld [vmem:[%s0 + $0x2b0] sm:$0xff]
    %v1176 = vld [vmem:[%s0 + $0x2b8] sm:$0xff]
    %v1177 = vld [vmem:[%s0 + $0x2c0] sm:$0xff]
    %v1178 = vld [vmem:[%s0 + $0x2c8] sm:$0xff]
    %v1179 = vld [vmem:[%s0 + $0x2d0] sm:$0xff]
    %v1180 = vld [vmem:[%s0 + $0x2d8] sm:$0xff]
    %v1181 = vld [vmem:[%s0 + $0x2e0] sm:$0xff]
    %v1182 = vld [vmem:[%s0 + $0x2e8] sm:$0xff]
    %v1183 = vld [vmem:[%s0 + $0x2f0] sm:$0xff]
    %v1184 = vld [vmem:[%s0 + $0x2f8] sm:$0xff]
    %v1185 = vld [vmem:[%s0 + $0x300] sm:$0xff]
    %v1186 = vld [vmem:[%s0 + $0x308] sm:$0xff]
    %v1187 = vld [vmem:[%s0 + $0x310] sm:$0xff]
    %v1188 = vld [vmem:[%s0 + $0x318] sm:$0xff]
    %v1189 = vld [vmem:[%s0 + $0x320] sm:$0xff]
    %v1190 = vld [vmem:[%s0 + $0x328] sm:$0xff]
    %v1191 = vld [vmem:[%s0 + $0x330] sm:$0xff]
    %v1192 = vld [vmem:[%s0 + $0x338] sm:$0xff]
    %v1193 = vld [vmem:[%s0 + $0x340] sm:$0xff]
    %v1194 = vld [vmem:[%s0 + $0x348] sm:$0xff]
    %v1195 = vld [vmem:[%s0 + $0x350] sm:$0xff]
    %v1196 = vld [vmem:[%s0 + $0x358] sm:$0xff]
    %v1197 = vld [vmem:[%s0 + $0x360] sm:$0xff]
    %v1198 = vld [vmem:[%s0 + $0x368] sm:$0xff]
    %v1199 = vld [vmem:[%s0 + $0x370] sm:$0xff]
    %v1200 = vld [vmem:[%s0 + $0x378] sm:$0xff]
    %v1201 = vld [vmem:[%s0 + $0x380] sm:$0xff]
    %v1202 = vld [vmem:[%s0 + $0x388] sm:$0xff]
    %v1203 = vld [vmem:[%s0 + $0x390] sm:$0xff]
    %v1204 = vld [vmem:[%s0 + $0x398] sm:$0xff]
    %v1205 = vld [vmem:[%s0 + $0x3a0] sm:$0xff]
    %v1206 = vld [vmem:[%s0 + $0x3a8] sm:$0xff]
    %v1207 = vld [vmem:[%s0 + $0x3b0] sm:$0xff]
    %v1208 = vld [vmem:[%s0 + $0x3b8] sm:$0xff]
    %v1209 = vld [vmem:[%s0 + $0x3c0] sm:$0xff]
    %v1210 = vld [vmem:[%s0 + $0x3c8] sm:$0xff]
    %v1211 = vld [vmem:[%s0 + $0x3d0] sm:$0xff]
    %v1212 = vld [vmem:[%s0 + $0x3d8] sm:$0xff]
    %v1213 = vld [vmem:[%s0 + $0x3e0] sm:$0xff]
    %v1214 = vld [vmem:[%s0 + $0x3e8] sm:$0xff]
    %v1215 = vld [vmem:[%s0 + $0x3f0] sm:$0xff]
    %v1216 = vld [vmem:[%s0 + $0x3f8] sm:$0xff]
    %v1217 = vld [vmem:[%s0 + $0x400] sm:$0xff]
    %v1218 = vld [vmem:[%s0 + $0x408] sm:$0xff]
    %v1219 = vld [vmem:[%s0 + $0x410] sm:$0xff]
    %v1220 = vld [vmem:[%s0 + $0x418] sm:$0xff]
    %v1221 = vld [vmem:[%s0 + $0x420] sm:$0xff]
    %v1222 = vld [vmem:[%s0 + $0x428] sm:$0xff]
    %v1223 = vld [vmem:[%s0 + $0x430] sm:$0xff]
    %v1224 = vld [vmem:[%s0 + $0x438] sm:$0xff]
    %v1225 = vld [vmem:[%s0 + $0x440] sm:$0xff]
    %v1226 = vld [vmem:[%s0 + $0x448] sm:$0xff]
    %v1227 = vld [vmem:[%s0 + $0x450] sm:$0xff]
    %v1228 = vld [vmem:[%s0 + $0x458] sm:$0xff]
    %v1229 = vld [vmem:[%s0 + $0x460] sm:$0xff]
    %v1230 = vld [vmem:[%s0 + $0x468] sm:$0xff]
    %v1231 = vld [vmem:[%s0 + $0x470] sm:$0xff]
    %v1232 = vld [vmem:[%s0 + $0x478] sm:$0xff]
    %v1233 = vld [vmem:[%s0 + $0x480] sm:$0xff]
    %v1234 = vld [vmem:[%s0 + $0x488] sm:$0xff]
    %v1235 = vld [vmem:[%s0 + $0x490] sm:$0xff]
    %v1236 = vld [vmem:[%s0 + $0x498] sm:$0xff]
    %v1237 = vld [vmem:[%s0 + $0x4a0] sm:$0xff]
    %v1238 = vld [vmem:[%s0 + $0x4a8] sm:$0xff]
    %v1239 = vld [vmem:[%s0 + $0x4b0] sm:$0xff]
    %v1240 = vld [vmem:[%s0 + $0x4b8] sm:$0xff]
    %v1241 = vld [vmem:[%s0 + $0x4c0] sm:$0xff]
    %v1242 = vld [vmem:[%s0 + $0x4c8] sm:$0xff]
    %v1243 = vld [vmem:[%s0 + $0x4d0] sm:$0xff]
    %v1244 = vld [vmem:[%s0 + $0x4d8] sm:$0xff]
    %v1245 = vld [vmem:[%s0 + $0x4e0] sm:$0xff]
    %v1246 = vld [vmem:[%s0 + $0x4e8] sm:$0xff]
    %v1247 = vld [vmem:[%s0 + $0x4f0] sm:$0xff]
    %v1248 = vld [vmem:[%s0 + $0x4f8] sm:$0xff]
    %v1249 = vld [vmem:[%s0 + $0x500] sm:$0xff]
    %v1250 = vld [vmem:[%s0 + $0x508] sm:$0xff]
    %v1251 = vld [vmem:[%s0 + $0x510] sm:$0xff]
    %v1252 = vld [vmem:[%s0 + $0x518] sm:$0xff]
    %v1253 = vld [vmem:[%s0 + $0x520] sm:$0xff]
    %v1254 = vld [vmem:[%s0 + $0x528] sm:$0xff]
    %v1255 = vld [vmem:[%s0 + $0x530] sm:$0xff]
    %v1256 = vld [vmem:[%s0 + $0x538] sm:$0xff]
    %v1257 = vld [vmem:[%s0 + $0x540] sm:$0xff]
    %v1258 = vld [vmem:[%s0 + $0x548] sm:$0xff]
    %v1259 = vld [vmem:[%s0 + $0x550] sm:$0xff]
    %v1260 = vld [vmem:[%s0 + $0x558] sm:$0xff]
    %v1261 = vld [vmem:[%s0 + $0x560] sm:$0xff]
    %v1262 = vld [vmem:[%s0 + $0x568] sm:$0xff]
    %v1263 = vld [vmem:[%s0 + $0x570] sm:$0xff]
    %v1264 = vld [vmem:[%s0 + $0x578] sm:$0xff]
    %v1265 = vld [vmem:[%s0 + $0x580] sm:$0xff]
    %v1266 = vld [vmem:[%s0 + $0x588] sm:$0xff]
    %v1267 = vld [vmem:[%s0 + $0x590] sm:$0xff]
    %v1268 = vld [vmem:[%s0 + $0x598] sm:$0xff]
    %v1269 = vld [vmem:[%s0 + $0x5a0] sm:$0xff]
    %v1270 = vld [vmem:[%s0 + $0x5a8] sm:$0xff]
    %v1271 = vld [vmem:[%s0 + $0x5b0] sm:$0xff]
    %v1272 = vld [vmem:[%s0 + $0x5b8] sm:$0xff]
    %v1273 = vld [vmem:[%s0 + $0x5c0] sm:$0xff]
    %v1274 = vld [vmem:[%s0 + $0x5c8] sm:$0xff]
    %v1275 = vld [vmem:[%s0 + $0x5d0] sm:$0xff]
    %v1276 = vld [vmem:[%s0 + $0x5d8] sm:$0xff]
    %v1277 = vld [vmem:[%s0 + $0x5e0] sm:$0xff]
    %v1278 = vld [vmem:[%s0 + $0x5e8] sm:$0xff]
    %v1279 = vld [vmem:[%s0 + $0x5f0] sm:$0xff]
    %v1280 = vld [vmem:[%s0 + $0x5f8] sm:$0xff]
    %v1281 = vld [vmem:[%s1] sm:$0xff]
    %v1282 = vld [vmem:[%s1 + $0x8] sm:$0xff]
    %v1283 = vld [vmem:[%s1 + $0x10] sm:$0xff]
    %v1284 = vld [vmem:[%s1 + $0x18] sm:$0xff]
    %v1285 = vld [vmem:[%s1 + $0x20] sm:$0xff]
    %v1286 = vld [vmem:[%s1 + $0x28] sm:$0xff]
    %v1287 = vld [vmem:[%s1 + $0x30] sm:$0xff]
    %v1288 = vld [vmem:[%s1 + $0x38] sm:$0xff]
    %v1289 = vld [vmem:[%s1 + $0x40] sm:$0xff]
    %v1290 = vld [vmem:[%s1 + $0x48] sm:$0xff]
    %v1291 = vld [vmem:[%s1 + $0x50] sm:$0xff]
    %v1292 = vld [vmem:[%s1 + $0x58] sm:$0xff]
    %v1293 = vld [vmem:[%s1 + $0x60] sm:$0xff]
    %v1294 = vld [vmem:[%s1 + $0x68] sm:$0xff]
    %v1295 = vld [vmem:[%s1 + $0x70] sm:$0xff]
    %v1296 = vld [vmem:[%s1 + $0x78] sm:$0xff]
    %v1297 = vld [vmem:[%s1 + $0x80] sm:$0xff]
    %v1298 = vld [vmem:[%s1 + $0x88] sm:$0xff]
    %v1299 = vld [vmem:[%s1 + $0x90] sm:$0xff]
    %v1300 = vld [vmem:[%s1 + $0x98] sm:$0xff]
    %v1301 = vld [vmem:[%s1 + $0xa0] sm:$0xff]
    %v1302 = vld [vmem:[%s1 + $0xa8] sm:$0xff]
    %v1303 = vld [vmem:[%s1 + $0xb0] sm:$0xff]
    %v1304 = vld [vmem:[%s1 + $0xb8] sm:$0xff]
    %v1305 = vld [vmem:[%s1 + $0xc0] sm:$0xff]
    %v1306 = vld [vmem:[%s1 + $0xc8] sm:$0xff]
    %v1307 = vld [vmem:[%s1 + $0xd0] sm:$0xff]
    %v1308 = vld [vmem:[%s1 + $0xd8] sm:$0xff]
    %v1309 = vld [vmem:[%s1 + $0xe0] sm:$0xff]
    %v1310 = vld [vmem:[%s1 + $0xe8] sm:$0xff]
    %v1311 = vld [vmem:[%s1 + $0xf0] sm:$0xff]
    %v1312 = vld [vmem:[%s1 + $0xf8] sm:$0xff]
    %v1313 = vld [vmem:[%s1 + $0x100] sm:$0xff]
    %v1314 = vld [vmem:[%s1 + $0x108] sm:$0xff]
    %v1315 = vld [vmem:[%s1 + $0x110] sm:$0xff]
    %v1316 = vld [vmem:[%s1 + $0x118] sm:$0xff]
    %vm1317 = vcmask 261120
    %v1319 = vsel %vm1317, %v1091, 0
    %v1322 = vsel %vm1317, %v1094, 0
    %v1325 = vsel %vm1317, %v1097, 0
    %v1328 = vsel %vm1317, %v1100, 0
    %v1331 = vsel %vm1317, %v1103, 0
    %v1334 = vsel %vm1317, %v1106, 0
    %v1337 = vsel %vm1317, %v1109, 0
    %v1340 = vsel %vm1317, %v1112, 0
    %v1343 = vsel %vm1317, %v1115, 0
    %v1346 = vsel %vm1317, %v1118, 0
    %v1349 = vsel %vm1317, %v1121, 0
    %v1352 = vsel %vm1317, %v1124, 0
    %v1355 = vsel %vm1317, %v1127, 0
    %v1358 = vsel %vm1317, %v1130, 0
    %v1361 = vsel %vm1317, %v1133, 0
    %v1364 = vsel %vm1317, %v1136, 0
    %v1367 = vsel %vm1317, %v1139, 0
    %v1370 = vsel %vm1317, %v1142, 0
    %v1373 = vsel %vm1317, %v1145, 0
    %v1376 = vsel %vm1317, %v1148, 0
    %v1379 = vsel %vm1317, %v1151, 0
    %v1382 = vsel %vm1317, %v1154, 0
    %v1385 = vsel %vm1317, %v1157, 0
    %v1388 = vsel %vm1317, %v1160, 0
    %v1391 = vsel %vm1317, %v1163, 0
    %v1394 = vsel %vm1317, %v1166, 0
    %v1397 = vsel %vm1317, %v1169, 0
    %v1400 = vsel %vm1317, %v1172, 0
    %v1403 = vsel %vm1317, %v1175, 0
    %v1406 = vsel %vm1317, %v1178, 0
    %v1409 = vsel %vm1317, %v1181, 0
    %v1412 = vsel %vm1317, %v1184, 0
    %v1415 = vsel %vm1317, %v1187, 0
    %v1418 = vsel %vm1317, %v1190, 0
    %v1421 = vsel %vm1317, %v1193, 0
    %v1424 = vsel %vm1317, %v1196, 0
    %v1427 = vsel %vm1317, %v1199, 0
    %v1430 = vsel %vm1317, %v1202, 0
    %v1433 = vsel %vm1317, %v1205, 0
    %v1436 = vsel %vm1317, %v1208, 0
    %v1439 = vsel %vm1317, %v1211, 0
    %v1442 = vsel %vm1317, %v1214, 0
    %v1445 = vsel %vm1317, %v1217, 0
    %v1448 = vsel %vm1317, %v1220, 0
    %v1451 = vsel %vm1317, %v1223, 0
    %v1454 = vsel %vm1317, %v1226, 0
    %v1457 = vsel %vm1317, %v1229, 0
    %v1460 = vsel %vm1317, %v1232, 0
    %v1463 = vsel %vm1317, %v1235, 0
    %v1466 = vsel %vm1317, %v1238, 0
    %v1469 = vsel %vm1317, %v1241, 0
    %v1472 = vsel %vm1317, %v1244, 0
    %v1475 = vsel %vm1317, %v1247, 0
    %v1478 = vsel %vm1317, %v1250, 0
    %v1481 = vsel %vm1317, %v1253, 0
    %v1484 = vsel %vm1317, %v1256, 0
    %v1487 = vsel %vm1317, %v1259, 0
    %v1490 = vsel %vm1317, %v1262, 0
    %v1493 = vsel %vm1317, %v1265, 0
    %v1496 = vsel %vm1317, %v1268, 0
    %v1499 = vsel %vm1317, %v1271, 0
    %v1502 = vsel %vm1317, %v1274, 0
    %v1505 = vsel %vm1317, %v1277, 0
    %v1508 = vsel %vm1317, %v1280, 0
    %1510 = vmatprep.subr.mxu0 0.0
    %1511 = vmatpush1.msra.mxu0 %v1281
    %1512 = vmatprep.subr.mxu0 0.0
    %1513 = vmatpush1.msra.mxu0 %v1282
    %1514 = vmatprep.subr.mxu0 0.0
    %1515 = vmatpush1.msra.mxu0 %v1283
    %1516 = vmatprep.subr.mxu0 0.0
    %1517 = vmatpush1.msra.mxu0 %v1284
    %1518 = vmatprep.subr.mxu0 0.0
    %1519 = vmatpush1.msra.mxu0 %v1285
    %1520 = vmatprep.subr.mxu0 0.0
    %1521 = vmatpush1.msra.mxu0 %v1286
    %1522 = vmatprep.subr.mxu0 0.0
    %1523 = vmatpush1.msra.mxu0 %v1287
    %1524 = vmatprep.subr.mxu0 0.0
    %1525 = vmatpush1.msra.mxu0 %v1288
    %1526 = vmatprep.subr.mxu0 0.0
    %1527 = vmatpush1.msra.mxu0 %v1289
    %1528 = vmatprep.subr.mxu0 0.0
    %1529 = vmatpush1.msra.mxu0 %v1290
    %1530 = vmatprep.subr.mxu0 0.0
    %1531 = vmatpush1.msra.mxu0 %v1291
    %1532 = vmatprep.subr.mxu0 0.0
    %1533 = vmatpush1.msra.mxu0 %v1292
    %1534 = vmatprep.subr.mxu0 0.0
    %1535 = vmatpush1.msra.mxu0 %v1293
    %1536 = vmatprep.subr.mxu0 0.0
    %1537 = vmatpush1.msra.mxu0 %v1294
    %1538 = vmatprep.subr.mxu0 0.0
    %1539 = vmatpush1.msra.mxu0 %v1295
    %1540 = vmatprep.subr.mxu0 0.0
    %1541 = vmatpush1.msra.mxu0 %v1296
    %1542 = vmatprep.subr.mxu0 0.0
    %1543 = vmatpush1.msra.mxu0 %v1297
    %1544 = vmatprep.subr.mxu0 0.0
    %1545 = vmatpush1.msra.mxu0 %v1298
    %1546 = vmatprep.subr.mxu0 0.0
    %1547 = vmatpush1.msra.mxu0 %v1299
    %1548 = vmatprep.subr.mxu0 0.0
    %1549 = vmatpush1.msra.mxu0 %v1300
    %1550 = vmatprep.subr.mxu0 0.0
    %1551 = vmatpush1.msra.mxu0 %v1301
    %1552 = vmatprep.subr.mxu0 0.0
    %1553 = vmatpush1.msra.mxu0 %v1302
    %1554 = vmatprep.subr.mxu0 0.0
    %1555 = vmatpush1.msra.mxu0 %v1303
    %1556 = vmatprep.subr.mxu0 0.0
    %1557 = vmatpush1.msra.mxu0 %v1304
    %1558 = vmatprep.subr.mxu0 0.0
    %1559 = vmatpush1.msra.mxu0 %v1305
    %1560 = vmatprep.subr.mxu0 0.0
    %1561 = vmatpush1.msra.mxu0 %v1306
    %1562 = vmatprep.subr.mxu0 0.0
    %1563 = vmatpush1.msra.mxu0 %v1307
    %1564 = vmatprep.subr.mxu0 0.0
    %1565 = vmatpush1.msra.mxu0 %v1308
    %1566 = vmatprep.subr.mxu0 0.0
    %1567 = vmatpush1.msra.mxu0 %v1309
    %1568 = vmatprep.subr.mxu0 0.0
    %1569 = vmatpush1.msra.mxu0 %v1310
    %1570 = vmatprep.subr.mxu0 0.0
    %1571 = vmatpush1.msra.mxu0 %v1311
    %1572 = vmatprep.subr.mxu0 0.0
    %1573 = vmatpush1.msra.mxu0 %v1312
    %1574 = vmatprep.mubr.f32.mxu0 %v1090
    %1575 = vmatmul.mubr.f32.gmra.mrb[0].mxu0 %v1089
    %v1576 = vpop.f32.mrb[0].mxu0
    %v1577 = vadd.f32 0.0, %v1576
    %v1578 = vpop.f32.mrb[0].mxu0
    %1579 = vmatprep.mubr.f32.mxu0 %v1093
    %1580 = vmatmul.mubr.f32.gmra.mrb[0].mxu0 %v1092
    %v1581 = vpop.f32.mrb[0].mxu0
    %v1582 = vadd.f32 0.0, %v1581
    %v1583 = vpop.f32.mrb[0].mxu0
    %1584 = vmatprep.mubr.f32.mxu0 %v1096
    %1585 = vmatmul.mubr.f32.gmra.mrb[0].mxu0 %v1095
    %v1586 = vpop.f32.mrb[0].mxu0
    %v1587 = vadd.f32 0.0, %v1586
    %v1588 = vpop.f32.mrb[0].mxu0
    %1589 = vmatprep.mubr.f32.mxu0 %v1099
    %1590 = vmatmul.mubr.f32.gmra.mrb[0].mxu0 %v1098
    %v1591 = vpop.f32.mrb[0].mxu0
    %v1592 = vadd.f32 0.0, %v1591
    %v1593 = vpop.f32.mrb[0].mxu0
    %1594 = vmatprep.mubr.f32.mxu0 %v1102
    %1595 = vmatmul.mubr.f32.gmra.mrb[0].mxu0 %v1101
    %v1596 = vpop.f32.mrb[0].mxu0
    %v1597 = vadd.f32 0.0, %v1596
    %v1598 = vpop.f32.mrb[0].mxu0
    %1599 = vmatprep.mubr.f32.mxu0 %v1105
    %1600 = vmatmul.mubr.f32.gmra.mrb[0].mxu0 %v1104
    %v1601 = vpop.f32.mrb[0].mxu0
    %v1602 = vadd.f32 0.0, %v1601
    %v1603 = vpop.f32.mrb[0].mxu0
    %1604 = vmatprep.mubr.f32.mxu0 %v1108
    %1605 = vmatmul.mubr.f32.gmra.mrb[0].mxu0 %v1107
    %v1606 = vpop.f32.mrb[0].mxu0
    %v1607 = vadd.f32 0.0, %v1606
    %v1608 = vpop.f32.mrb[0].mxu0
    %1609 = vmatprep.mubr.f32.mxu0 %v1111
    %1610 = vmatmul.mubr.f32.gmra.mrb[0].mxu0 %v1110
    %v1611 = vpop.f32.mrb[0].mxu0
    %v1612 = vadd.f32 0.0, %v1611
    %v1613 = vpop.f32.mrb[0].mxu0
    %1614 = vmatprep.mubr.f32.mxu0 %v1114
    %1615 = vmatmul.mubr.f32.gmra.mrb[0].mxu0 %v1113
    %v1616 = vpop.f32.mrb[0].mxu0
    %v1617 = vadd.f32 0.0, %v1616
    %v1618 = vpop.f32.mrb[0].mxu0
    %1619 = vmatprep.mubr.f32.mxu0 %v1117
    %1620 = vmatmul.mubr.f32.gmra.mrb[0].mxu0 %v1116
    %v1621 = vpop.f32.mrb[0].mxu0
    %v1622 = vadd.f32 0.0, %v1621
    %v1623 = vpop.f32.mrb[0].mxu0
    %1624 = vmatprep.mubr.f32.mxu0 %v1120
    %1625 = vmatmul.mubr.f32.gmra.mrb[0].mxu0 %v1119
    %v1626 = vpop.f32.mrb[0].mxu0
    %v1627 = vadd.f32 0.0, %v1626
    %v1628 = vpop.f32.mrb[0].mxu0
    %1629 = vmatprep.mubr.f32.mxu0 %v1123
    %1630 = vmatmul.mubr.f32.gmra.mrb[0].mxu0 %v1122
    %v1631 = vpop.f32.mrb[0].mxu0
    %v1632 = vadd.f32 0.0, %v1631
    %v1633 = vpop.f32.mrb[0].mxu0
    %1634 = vmatprep.mubr.f32.mxu0 %v1126
    %1635 = vmatmul.mubr.f32.gmra.mrb[0].mxu0 %v1125
    %v1636 = vpop.f32.mrb[0].mxu0
    %v1637 = vadd.f32 0.0, %v1636
    %v1638 = vpop.f32.mrb[0].mxu0
    %1639 = vmatprep.mubr.f32.mxu0 %v1129
    %1640 = vmatmul.mubr.f32.gmra.mrb[0].mxu0 %v1128
    %v1641 = vpop.f32.mrb[0].mxu0
    %v1642 = vadd.f32 0.0, %v1641
    %v1643 = vpop.f32.mrb[0].mxu0
    %1644 = vmatprep.mubr.f32.mxu0 %v1132
    %1645 = vmatmul.mubr.f32.gmra.mrb[0].mxu0 %v1131
    %v1646 = vpop.f32.mrb[0].mxu0
    %v1647 = vadd.f32 0.0, %v1646
    %v1648 = vpop.f32.mrb[0].mxu0
    %1649 = vmatprep.mubr.f32.mxu0 %v1135
    %1650 = vmatmul.mubr.f32.gmra.mrb[0].mxu0 %v1134
    %v1651 = vpop.f32.mrb[0].mxu0
    %v1652 = vadd.f32 0.0, %v1651
    %v1653 = vpop.f32.mrb[0].mxu0
    %1654 = vmatprep.mubr.f32.mxu0 %v1138
    %1655 = vmatmul.mubr.f32.gmra.mrb[0].mxu0 %v1137
    %v1656 = vpop.f32.mrb[0].mxu0
    %v1657 = vadd.f32 0.0, %v1656
    %v1658 = vpop.f32.mrb[0].mxu0
    %1659 = vmatprep.mubr.f32.mxu0 %v1141
    %1660 = vmatmul.mubr.f32.gmra.mrb[0].mxu0 %v1140
    %v1661 = vpop.f32.mrb[0].mxu0
    %v1662 = vadd.f32 0.0, %v1661
    %v1663 = vpop.f32.mrb[0].mxu0
    %1664 = vmatprep.mubr.f32.mxu0 %v1144
    %1665 = vmatmul.mubr.f32.gmra.mrb[0].mxu0 %v1143
    %v1666 = vpop.f32.mrb[0].mxu0
    %v1667 = vadd.f32 0.0, %v1666
    %v1668 = vpop.f32.mrb[0].mxu0
    %1669 = vmatprep.mubr.f32.mxu0 %v1147
    %1670 = vmatmul.mubr.f32.gmra.mrb[0].mxu0 %v1146
    %v1671 = vpop.f32.mrb[0].mxu0
    %v1672 = vadd.f32 0.0, %v1671
    %v1673 = vpop.f32.mrb[0].mxu0
    %1674 = vmatprep.mubr.f32.mxu0 %v1150
    %1675 = vmatmul.mubr.f32.gmra.mrb[0].mxu0 %v1149
    %v1676 = vpop.f32.mrb[0].mxu0
    %v1677 = vadd.f32 0.0, %v1676
    %v1678 = vpop.f32.mrb[0].mxu0
    %1679 = vmatprep.mubr.f32.mxu0 %v1153
    %1680 = vmatmul.mubr.f32.gmra.mrb[0].mxu0 %v1152
    %v1681 = vpop.f32.mrb[0].mxu0
    %v1682 = vadd.f32 0.0, %v1681
    %v1683 = vpop.f32.mrb[0].mxu0
    %1684 = vmatprep.mubr.f32.mxu0 %v1156
    %1685 = vmatmul.mubr.f32.gmra.mrb[0].mxu0 %v1155
    %v1686 = vpop.f32.mrb[0].mxu0
    %v1687 = vadd.f32 0.0, %v1686
    %v1688 = vpop.f32.mrb[0].mxu0
    %1689 = vmatprep.mubr.f32.mxu0 %v1159
    %1690 = vmatmul.mubr.f32.gmra.mrb[0].mxu0 %v1158
    %v1691 = vpop.f32.mrb[0].mxu0
    %v1692 = vadd.f32 0.0, %v1691
    %v1693 = vpop.f32.mrb[0].mxu0
    %1694 = vmatprep.mubr.f32.mxu0 %v1162
    %1695 = vmatmul.mubr.f32.gmra.mrb[0].mxu0 %v1161
    %v1696 = vpop.f32.mrb[0].mxu0
    %v1697 = vadd.f32 0.0, %v1696
    %v1698 = vpop.f32.mrb[0].mxu0
    %1699 = vmatprep.mubr.f32.mxu0 %v1165
    %1700 = vmatmul.mubr.f32.gmra.mrb[0].mxu0 %v1164
    %v1701 = vpop.f32.mrb[0].mxu0
    %v1702 = vadd.f32 0.0, %v1701
    %v1703 = vpop.f32.mrb[0].mxu0
    %1704 = vmatprep.mubr.f32.mxu0 %v1168
    %1705 = vmatmul.mubr.f32.gmra.mrb[0].mxu0 %v1167
    %v1706 = vpop.f32.mrb[0].mxu0
    %v1707 = vadd.f32 0.0, %v1706
    %v1708 = vpop.f32.mrb[0].mxu0
    %1709 = vmatprep.mubr.f32.mxu0 %v1171
    %1710 = vmatmul.mubr.f32.gmra.mrb[0].mxu0 %v1170
    %v1711 = vpop.f32.mrb[0].mxu0
    %v1712 = vadd.f32 0.0, %v1711
    %v1713 = vpop.f32.mrb[0].mxu0
    %1714 = vmatprep.mubr.f32.mxu0 %v1174
    %1715 = vmatmul.mubr.f32.gmra.mrb[0].mxu0 %v1173
    %v1716 = vpop.f32.mrb[0].mxu0
    %v1717 = vadd.f32 0.0, %v1716
    %v1718 = vpop.f32.mrb[0].mxu0
    %1719 = vmatprep.mubr.f32.mxu0 %v1177
    %1720 = vmatmul.mubr.f32.gmra.mrb[0].mxu0 %v1176
    %v1721 = vpop.f32.mrb[0].mxu0
    %v1722 = vadd.f32 0.0, %v1721
    %v1723 = vpop.f32.mrb[0].mxu0
    %1724 = vmatprep.mubr.f32.mxu0 %v1180
    %1725 = vmatmul.mubr.f32.gmra.mrb[0].mxu0 %v1179
    %v1726 = vpop.f32.mrb[0].mxu0
    %v1727 = vadd.f32 0.0, %v1726
    %v1728 = vpop.f32.mrb[0].mxu0
    %1729 = vmatprep.mubr.f32.mxu0 %v1183
    %1730 = vmatmul.mubr.f32.gmra.mrb[0].mxu0 %v1182
    %v1731 = vpop.f32.mrb[0].mxu0
    %v1732 = vadd.f32 0.0, %v1731
    %v1733 = vpop.f32.mrb[0].mxu0
    %1734 = vmatprep.mubr.f32.mxu0 %v1186
    %1735 = vmatmul.mubr.f32.gmra.mrb[0].mxu0 %v1185
    %v1736 = vpop.f32.mrb[0].mxu0
    %v1737 = vadd.f32 0.0, %v1736
    %v1738 = vpop.f32.mrb[0].mxu0
    %1739 = vmatprep.mubr.f32.mxu0 %v1189
    %1740 = vmatmul.mubr.f32.gmra.mrb[0].mxu0 %v1188
    %v1741 = vpop.f32.mrb[0].mxu0
    %v1742 = vadd.f32 0.0, %v1741
    %v1743 = vpop.f32.mrb[0].mxu0
    %1744 = vmatprep.mubr.f32.mxu0 %v1192
    %1745 = vmatmul.mubr.f32.gmra.mrb[0].mxu0 %v1191
    %v1746 = vpop.f32.mrb[0].mxu0
    %v1747 = vadd.f32 0.0, %v1746
    %v1748 = vpop.f32.mrb[0].mxu0
    %1749 = vmatprep.mubr.f32.mxu0 %v1195
    %1750 = vmatmul.mubr.f32.gmra.mrb[0].mxu0 %v1194
    %v1751 = vpop.f32.mrb[0].mxu0
    %v1752 = vadd.f32 0.0, %v1751
    %v1753 = vpop.f32.mrb[0].mxu0
    %1754 = vmatprep.mubr.f32.mxu0 %v1198
    %1755 = vmatmul.mubr.f32.gmra.mrb[0].mxu0 %v1197
    %v1756 = vpop.f32.mrb[0].mxu0
    %v1757 = vadd.f32 0.0, %v1756
    %v1758 = vpop.f32.mrb[0].mxu0
    %1759 = vmatprep.mubr.f32.mxu0 %v1201
    %1760 = vmatmul.mubr.f32.gmra.mrb[0].mxu0 %v1200
    %v1761 = vpop.f32.mrb[0].mxu0
    %v1762 = vadd.f32 0.0, %v1761
    %v1763 = vpop.f32.mrb[0].mxu0
    %1764 = vmatprep.mubr.f32.mxu0 %v1204
    %1765 = vmatmul.mubr.f32.gmra.mrb[0].mxu0 %v1203
    %v1766 = vpop.f32.mrb[0].mxu0
    %v1767 = vadd.f32 0.0, %v1766
    %v1768 = vpop.f32.mrb[0].mxu0
    %1769 = vmatprep.mubr.f32.mxu0 %v1207
    %1770 = vmatmul.mubr.f32.gmra.mrb[0].mxu0 %v1206
    %v1771 = vpop.f32.mrb[0].mxu0
    %v1772 = vadd.f32 0.0, %v1771
    %v1773 = vpop.f32.mrb[0].mxu0
    %1774 = vmatprep.mubr.f32.mxu0 %v1210
    %1775 = vmatmul.mubr.f32.gmra.mrb[0].mxu0 %v1209
    %v1776 = vpop.f32.mrb[0].mxu0
    %v1777 = vadd.f32 0.0, %v1776
    %v1778 = vpop.f32.mrb[0].mxu0
    %1779 = vmatprep.mubr.f32.mxu0 %v1213
    %1780 = vmatmul.mubr.f32.gmra.mrb[0].mxu0 %v1212
    %v1781 = vpop.f32.mrb[0].mxu0
    %v1782 = vadd.f32 0.0, %v1781
    %v1783 = vpop.f32.mrb[0].mxu0
    %1784 = vmatprep.mubr.f32.mxu0 %v1216
    %1785 = vmatmul.mubr.f32.gmra.mrb[0].mxu0 %v1215
    %v1786 = vpop.f32.mrb[0].mxu0
    %v1787 = vadd.f32 0.0, %v1786
    %v1788 = vpop.f32.mrb[0].mxu0
    %1789 = vmatprep.mubr.f32.mxu0 %v1219
    %1790 = vmatmul.mubr.f32.gmra.mrb[0].mxu0 %v1218
    %v1791 = vpop.f32.mrb[0].mxu0
    %v1792 = vadd.f32 0.0, %v1791
    %v1793 = vpop.f32.mrb[0].mxu0
    %1794 = vmatprep.mubr.f32.mxu0 %v1222
    %1795 = vmatmul.mubr.f32.gmra.mrb[0].mxu0 %v1221
    %v1796 = vpop.f32.mrb[0].mxu0
    %v1797 = vadd.f32 0.0, %v1796
    %v1798 = vpop.f32.mrb[0].mxu0
    %1799 = vmatprep.mubr.f32.mxu0 %v1225
    %1800 = vmatmul.mubr.f32.gmra.mrb[0].mxu0 %v1224
    %v1801 = vpop.f32.mrb[0].mxu0
    %v1802 = vadd.f32 0.0, %v1801
    %v1803 = vpop.f32.mrb[0].mxu0
    %1804 = vmatprep.mubr.f32.mxu0 %v1228
    %1805 = vmatmul.mubr.f32.gmra.mrb[0].mxu0 %v1227
    %v1806 = vpop.f32.mrb[0].mxu0
    %v1807 = vadd.f32 0.0, %v1806
    %v1808 = vpop.f32.mrb[0].mxu0
    %1809 = vmatprep.mubr.f32.mxu0 %v1231
    %1810 = vmatmul.mubr.f32.gmra.mrb[0].mxu0 %v1230
    %v1811 = vpop.f32.mrb[0].mxu0
    %v1812 = vadd.f32 0.0, %v1811
    %v1813 = vpop.f32.mrb[0].mxu0
    %1814 = vmatprep.mubr.f32.mxu0 %v1234
    %1815 = vmatmul.mubr.f32.gmra.mrb[0].mxu0 %v1233
    %v1816 = vpop.f32.mrb[0].mxu0
    %v1817 = vadd.f32 0.0, %v1816
    %v1818 = vpop.f32.mrb[0].mxu0
    %1819 = vmatprep.mubr.f32.mxu0 %v1237
    %1820 = vmatmul.mubr.f32.gmra.mrb[0].mxu0 %v1236
    %v1821 = vpop.f32.mrb[0].mxu0
    %v1822 = vadd.f32 0.0, %v1821
    %v1823 = vpop.f32.mrb[0].mxu0
    %1824 = vmatprep.mubr.f32.mxu0 %v1240
    %1825 = vmatmul.mubr.f32.gmra.mrb[0].mxu0 %v1239
    %v1826 = vpop.f32.mrb[0].mxu0
    %v1827 = vadd.f32 0.0, %v1826
    %v1828 = vpop.f32.mrb[0].mxu0
    %1829 = vmatprep.mubr.f32.mxu0 %v1243
    %1830 = vmatmul.mubr.f32.gmra.mrb[0].mxu0 %v1242
    %v1831 = vpop.f32.mrb[0].mxu0
    %v1832 = vadd.f32 0.0, %v1831
    %v1833 = vpop.f32.mrb[0].mxu0
    %1834 = vmatprep.mubr.f32.mxu0 %v1246
    %1835 = vmatmul.mubr.f32.gmra.mrb[0].mxu0 %v1245
    %v1836 = vpop.f32.mrb[0].mxu0
    %v1837 = vadd.f32 0.0, %v1836
    %v1838 = vpop.f32.mrb[0].mxu0
    %1839 = vmatprep.mubr.f32.mxu0 %v1249
    %1840 = vmatmul.mubr.f32.gmra.mrb[0].mxu0 %v1248
    %v1841 = vpop.f32.mrb[0].mxu0
    %v1842 = vadd.f32 0.0, %v1841
    %v1843 = vpop.f32.mrb[0].mxu0
    %1844 = vmatprep.mubr.f32.mxu0 %v1252
    %1845 = vmatmul.mubr.f32.gmra.mrb[0].mxu0 %v1251
    %v1846 = vpop.f32.mrb[0].mxu0
    %v1847 = vadd.f32 0.0, %v1846
    %v1848 = vpop.f32.mrb[0].mxu0
    %1849 = vmatprep.mubr.f32.mxu0 %v1255
    %1850 = vmatmul.mubr.f32.gmra.mrb[0].mxu0 %v1254
    %v1851 = vpop.f32.mrb[0].mxu0
    %v1852 = vadd.f32 0.0, %v1851
    %v1853 = vpop.f32.mrb[0].mxu0
    %1854 = vmatprep.mubr.f32.mxu0 %v1258
    %1855 = vmatmul.mubr.f32.gmra.mrb[0].mxu0 %v1257
    %v1856 = vpop.f32.mrb[0].mxu0
    %v1857 = vadd.f32 0.0, %v1856
    %v1858 = vpop.f32.mrb[0].mxu0
    %1859 = vmatprep.mubr.f32.mxu0 %v1261
    %1860 = vmatmul.mubr.f32.gmra.mrb[0].mxu0 %v1260
    %v1861 = vpop.f32.mrb[0].mxu0
    %v1862 = vadd.f32 0.0, %v1861
    %v1863 = vpop.f32.mrb[0].mxu0
    %1864 = vmatprep.mubr.f32.mxu0 %v1264
    %1865 = vmatmul.mubr.f32.gmra.mrb[0].mxu0 %v1263
    %v1866 = vpop.f32.mrb[0].mxu0
    %v1867 = vadd.f32 0.0, %v1866
    %v1868 = vpop.f32.mrb[0].mxu0
    %1869 = vmatprep.mubr.f32.mxu0 %v1267
    %1870 = vmatmul.mubr.f32.gmra.mrb[0].mxu0 %v1266
    %v1871 = vpop.f32.mrb[0].mxu0
    %v1872 = vadd.f32 0.0, %v1871
    %v1873 = vpop.f32.mrb[0].mxu0
    %1874 = vmatprep.mubr.f32.mxu0 %v1270
    %1875 = vmatmul.mubr.f32.gmra.mrb[0].mxu0 %v1269
    %v1876 = vpop.f32.mrb[0].mxu0
    %v1877 = vadd.f32 0.0, %v1876
    %v1878 = vpop.f32.mrb[0].mxu0
    %1879 = vmatprep.mubr.f32.mxu0 %v1273
    %1880 = vmatmul.mubr.f32.gmra.mrb[0].mxu0 %v1272
    %v1881 = vpop.f32.mrb[0].mxu0
    %v1882 = vadd.f32 0.0, %v1881
    %v1883 = vpop.f32.mrb[0].mxu0
    %1884 = vmatprep.mubr.f32.mxu0 %v1276
    %1885 = vmatmul.mubr.f32.gmra.mrb[0].mxu0 %v1275
    %v1886 = vpop.f32.mrb[0].mxu0
    %v1887 = vadd.f32 0.0, %v1886
    %v1888 = vpop.f32.mrb[0].mxu0
    %1889 = vmatprep.mubr.f32.mxu0 %v1279
    %1890 = vmatmul.mubr.f32.gmra.mrb[0].mxu0 %v1278
    %v1891 = vpop.f32.mrb[0].mxu0
    %v1892 = vadd.f32 0.0, %v1891
    %v1893 = vpop.f32.mrb[0].mxu0
    %1894 = vdwg.mxu0
    %1895 = vmatprep.subr.mxu0 0.0
    %1896 = vmatpush1.msra.mxu0 %v1313
    %1897 = vmatprep.subr.mxu0 0.0
    %1898 = vmatpush1.msra.mxu0 %v1314
    %1899 = vmatprep.subr.mxu0 0.0
    %1900 = vmatpush1.msra.mxu0 %v1315
    %1901 = vmatprep.subr.mxu0 0.0
    %1902 = vmatpush1.msra.mxu0 %v1316
    %1903 = vmatprep.subr.mxu0 0.0
    %1904 = vmatpush1.msra.mxu0 0.0
    %1905 = vmatprep.subr.mxu0 0.0
    %1906 = vmatpush1.msra.mxu0 0.0
    %1907 = vmatprep.subr.mxu0 0.0
    %1908 = vmatpush1.msra.mxu0 0.0
    %1909 = vmatprep.subr.mxu0 0.0
    %1910 = vmatpush1.msra.mxu0 0.0
    %1911 = vmatprep.subr.mxu0 0.0
    %1912 = vmatpush1.msra.mxu0 0.0
    %1913 = vmatprep.subr.mxu0 0.0
    %1914 = vmatpush1.msra.mxu0 0.0
    %1915 = vmatprep.subr.mxu0 0.0
    %1916 = vmatpush1.msra.mxu0 0.0
    %1917 = vmatprep.subr.mxu0 0.0
    %1918 = vmatpush1.msra.mxu0 0.0
    %1919 = vmatprep.subr.mxu0 0.0
    %1920 = vmatpush1.msra.mxu0 0.0
    %1921 = vmatprep.subr.mxu0 0.0
    %1922 = vmatpush1.msra.mxu0 0.0
    %1923 = vmatprep.subr.mxu0 0.0
    %1924 = vmatpush1.msra.mxu0 0.0
    %1925 = vmatprep.subr.mxu0 0.0
    %1926 = vmatpush1.msra.mxu0 0.0
    %1927 = vmatprep.subr.mxu0 0.0
    %1928 = vmatpush1.msra.mxu0 0.0
    %1929 = vmatprep.subr.mxu0 0.0
    %1930 = vmatpush1.msra.mxu0 0.0
    %1931 = vmatprep.subr.mxu0 0.0
    %1932 = vmatpush1.msra.mxu0 0.0
    %1933 = vmatprep.subr.mxu0 0.0
    %1934 = vmatpush1.msra.mxu0 0.0
    %1935 = vmatprep.subr.mxu0 0.0
    %1936 = vmatpush1.msra.mxu0 0.0
    %1937 = vmatprep.subr.mxu0 0.0
    %1938 = vmatpush1.msra.mxu0 0.0
    %1939 = vmatprep.subr.mxu0 0.0
    %1940 = vmatpush1.msra.mxu0 0.0
    %1941 = vmatprep.subr.mxu0 0.0
    %1942 = vmatpush1.msra.mxu0 0.0
    %1943 = vmatprep.subr.mxu0 0.0
    %1944 = vmatpush1.msra.mxu0 0.0
    %1945 = vmatprep.subr.mxu0 0.0
    %1946 = vmatpush1.msra.mxu0 0.0
    %1947 = vmatprep.subr.mxu0 0.0
    %1948 = vmatpush1.msra.mxu0 0.0
    %1949 = vmatprep.subr.mxu0 0.0
    %1950 = vmatpush1.msra.mxu0 0.0
    %1951 = vmatprep.subr.mxu0 0.0
    %1952 = vmatpush1.msra.mxu0 0.0
    %1953 = vmatprep.subr.mxu0 0.0
    %1954 = vmatpush1.msra.mxu0 0.0
    %1955 = vmatprep.subr.mxu0 0.0
    %1956 = vmatpush1.msra.mxu0 0.0
    %1957 = vmatprep.subr.mxu0 0.0
    %1958 = vmatpush1.msra.mxu0 0.0
    %1959 = vmatprep.mubr.f32.mxu0 0.0
    %1960 = vmatmul.mubr.f32.gmra.mrb[0].mxu0 %v1319
    %v1961 = vpop.f32.mrb[0].mxu0
    %v1962 = vadd.f32 %v1577, %v1961
    %v1963 = vpop.f32.mrb[0].mxu0
    %1964 = vmatprep.mubr.f32.mxu0 0.0
    %1965 = vmatmul.mubr.f32.gmra.mrb[0].mxu0 %v1322
    %v1966 = vpop.f32.mrb[0].mxu0
    %v1967 = vadd.f32 %v1582, %v1966
    %v1968 = vpop.f32.mrb[0].mxu0
    %1969 = vmatprep.mubr.f32.mxu0 0.0
    %1970 = vmatmul.mubr.f32.gmra.mrb[0].mxu0 %v1325
    %v1971 = vpop.f32.mrb[0].mxu0
    %v1972 = vadd.f32 %v1587, %v1971
    %v1973 = vpop.f32.mrb[0].mxu0
    %1974 = vmatprep.mubr.f32.mxu0 0.0
    %1975 = vmatmul.mubr.f32.gmra.mrb[0].mxu0 %v1328
    %v1976 = vpop.f32.mrb[0].mxu0
    %v1977 = vadd.f32 %v1592, %v1976
    %v1978 = vpop.f32.mrb[0].mxu0
    %1979 = vmatprep.mubr.f32.mxu0 0.0
    %1980 = vmatmul.mubr.f32.gmra.mrb[0].mxu0 %v1331
    %v1981 = vpop.f32.mrb[0].mxu0
    %v1982 = vadd.f32 %v1597, %v1981
    %v1983 = vpop.f32.mrb[0].mxu0
    %1984 = vmatprep.mubr.f32.mxu0 0.0
    %1985 = vmatmul.mubr.f32.gmra.mrb[0].mxu0 %v1334
    %v1986 = vpop.f32.mrb[0].mxu0
    %v1987 = vadd.f32 %v1602, %v1986
    %v1988 = vpop.f32.mrb[0].mxu0
    %1989 = vmatprep.mubr.f32.mxu0 0.0
    %1990 = vmatmul.mubr.f32.gmra.mrb[0].mxu0 %v1337
    %v1991 = vpop.f32.mrb[0].mxu0
    %v1992 = vadd.f32 %v1607, %v1991
    %v1993 = vpop.f32.mrb[0].mxu0
    %1994 = vmatprep.mubr.f32.mxu0 0.0
    %1995 = vmatmul.mubr.f32.gmra.mrb[0].mxu0 %v1340
    %v1996 = vpop.f32.mrb[0].mxu0
    %v1997 = vadd.f32 %v1612, %v1996
    %v1998 = vpop.f32.mrb[0].mxu0
    %1999 = vmatprep.mubr.f32.mxu0 0.0
    %2000 = vmatmul.mubr.f32.gmra.mrb[0].mxu0 %v1343
    %v2001 = vpop.f32.mrb[0].mxu0
    %v2002 = vadd.f32 %v1617, %v2001
    %v2003 = vpop.f32.mrb[0].mxu0
    %2004 = vmatprep.mubr.f32.mxu0 0.0
    %2005 = vmatmul.mubr.f32.gmra.mrb[0].mxu0 %v1346
    %v2006 = vpop.f32.mrb[0].mxu0
    %v2007 = vadd.f32 %v1622, %v2006
    %v2008 = vpop.f32.mrb[0].mxu0
    %2009 = vmatprep.mubr.f32.mxu0 0.0
    %2010 = vmatmul.mubr.f32.gmra.mrb[0].mxu0 %v1349
    %v2011 = vpop.f32.mrb[0].mxu0
    %v2012 = vadd.f32 %v1627, %v2011
    %v2013 = vpop.f32.mrb[0].mxu0
    %2014 = vmatprep.mubr.f32.mxu0 0.0
    %2015 = vmatmul.mubr.f32.gmra.mrb[0].mxu0 %v1352
    %v2016 = vpop.f32.mrb[0].mxu0
    %v2017 = vadd.f32 %v1632, %v2016
    %v2018 = vpop.f32.mrb[0].mxu0
    %2019 = vmatprep.mubr.f32.mxu0 0.0
    %2020 = vmatmul.mubr.f32.gmra.mrb[0].mxu0 %v1355
    %v2021 = vpop.f32.mrb[0].mxu0
    %v2022 = vadd.f32 %v1637, %v2021
    %v2023 = vpop.f32.mrb[0].mxu0
    %2024 = vmatprep.mubr.f32.mxu0 0.0
    %2025 = vmatmul.mubr.f32.gmra.mrb[0].mxu0 %v1358
    %v2026 = vpop.f32.mrb[0].mxu0
    %v2027 = vadd.f32 %v1642, %v2026
    %v2028 = vpop.f32.mrb[0].mxu0
    %2029 = vmatprep.mubr.f32.mxu0 0.0
    %2030 = vmatmul.mubr.f32.gmra.mrb[0].mxu0 %v1361
    %v2031 = vpop.f32.mrb[0].mxu0
    %v2032 = vadd.f32 %v1647, %v2031
    %v2033 = vpop.f32.mrb[0].mxu0
    %2034 = vmatprep.mubr.f32.mxu0 0.0
    %2035 = vmatmul.mubr.f32.gmra.mrb[0].mxu0 %v1364
    %v2036 = vpop.f32.mrb[0].mxu0
    %v2037 = vadd.f32 %v1652, %v2036
    %v2038 = vpop.f32.mrb[0].mxu0
    %2039 = vmatprep.mubr.f32.mxu0 0.0
    %2040 = vmatmul.mubr.f32.gmra.mrb[0].mxu0 %v1367
    %v2041 = vpop.f32.mrb[0].mxu0
    %v2042 = vadd.f32 %v1657, %v2041
    %v2043 = vpop.f32.mrb[0].mxu0
    %2044 = vmatprep.mubr.f32.mxu0 0.0
    %2045 = vmatmul.mubr.f32.gmra.mrb[0].mxu0 %v1370
    %v2046 = vpop.f32.mrb[0].mxu0
    %v2047 = vadd.f32 %v1662, %v2046
    %v2048 = vpop.f32.mrb[0].mxu0
    %2049 = vmatprep.mubr.f32.mxu0 0.0
    %2050 = vmatmul.mubr.f32.gmra.mrb[0].mxu0 %v1373
    %v2051 = vpop.f32.mrb[0].mxu0
    %v2052 = vadd.f32 %v1667, %v2051
    %v2053 = vpop.f32.mrb[0].mxu0
    %2054 = vmatprep.mubr.f32.mxu0 0.0
    %2055 = vmatmul.mubr.f32.gmra.mrb[0].mxu0 %v1376
    %v2056 = vpop.f32.mrb[0].mxu0
    %v2057 = vadd.f32 %v1672, %v2056
    %v2058 = vpop.f32.mrb[0].mxu0
    %2059 = vmatprep.mubr.f32.mxu0 0.0
    %2060 = vmatmul.mubr.f32.gmra.mrb[0].mxu0 %v1379
    %v2061 = vpop.f32.mrb[0].mxu0
    %v2062 = vadd.f32 %v1677, %v2061
    %v2063 = vpop.f32.mrb[0].mxu0
    %2064 = vmatprep.mubr.f32.mxu0 0.0
    %2065 = vmatmul.mubr.f32.gmra.mrb[0].mxu0 %v1382
    %v2066 = vpop.f32.mrb[0].mxu0
    %v2067 = vadd.f32 %v1682, %v2066
    %v2068 = vpop.f32.mrb[0].mxu0
    %2069 = vmatprep.mubr.f32.mxu0 0.0
    %2070 = vmatmul.mubr.f32.gmra.mrb[0].mxu0 %v1385
    %v2071 = vpop.f32.mrb[0].mxu0
    %v2072 = vadd.f32 %v1687, %v2071
    %v2073 = vpop.f32.mrb[0].mxu0
    %2074 = vmatprep.mubr.f32.mxu0 0.0
    %2075 = vmatmul.mubr.f32.gmra.mrb[0].mxu0 %v1388
    %v2076 = vpop.f32.mrb[0].mxu0
    %v2077 = vadd.f32 %v1692, %v2076
    %v2078 = vpop.f32.mrb[0].mxu0
    %2079 = vmatprep.mubr.f32.mxu0 0.0
    %2080 = vmatmul.mubr.f32.gmra.mrb[0].mxu0 %v1391
    %v2081 = vpop.f32.mrb[0].mxu0
    %v2082 = vadd.f32 %v1697, %v2081
    %v2083 = vpop.f32.mrb[0].mxu0
    %2084 = vmatprep.mubr.f32.mxu0 0.0
    %2085 = vmatmul.mubr.f32.gmra.mrb[0].mxu0 %v1394
    %v2086 = vpop.f32.mrb[0].mxu0
    %v2087 = vadd.f32 %v1702, %v2086
    %v2088 = vpop.f32.mrb[0].mxu0
    %2089 = vmatprep.mubr.f32.mxu0 0.0
    %2090 = vmatmul.mubr.f32.gmra.mrb[0].mxu0 %v1397
    %v2091 = vpop.f32.mrb[0].mxu0
    %v2092 = vadd.f32 %v1707, %v2091
    %v2093 = vpop.f32.mrb[0].mxu0
    %2094 = vmatprep.mubr.f32.mxu0 0.0
    %2095 = vmatmul.mubr.f32.gmra.mrb[0].mxu0 %v1400
    %v2096 = vpop.f32.mrb[0].mxu0
    %v2097 = vadd.f32 %v1712, %v2096
    %v2098 = vpop.f32.mrb[0].mxu0
    %2099 = vmatprep.mubr.f32.mxu0 0.0
    %2100 = vmatmul.mubr.f32.gmra.mrb[0].mxu0 %v1403
    %v2101 = vpop.f32.mrb[0].mxu0
    %v2102 = vadd.f32 %v1717, %v2101
    %v2103 = vpop.f32.mrb[0].mxu0
    %2104 = vmatprep.mubr.f32.mxu0 0.0
    %2105 = vmatmul.mubr.f32.gmra.mrb[0].mxu0 %v1406
    %v2106 = vpop.f32.mrb[0].mxu0
    %v2107 = vadd.f32 %v1722, %v2106
    %v2108 = vpop.f32.mrb[0].mxu0
    %2109 = vmatprep.mubr.f32.mxu0 0.0
    %2110 = vmatmul.mubr.f32.gmra.mrb[0].mxu0 %v1409
    %v2111 = vpop.f32.mrb[0].mxu0
    %v2112 = vadd.f32 %v1727, %v2111
    %v2113 = vpop.f32.mrb[0].mxu0
    %2114 = vmatprep.mubr.f32.mxu0 0.0
    %2115 = vmatmul.mubr.f32.gmra.mrb[0].mxu0 %v1412
    %v2116 = vpop.f32.mrb[0].mxu0
    %v2117 = vadd.f32 %v1732, %v2116
    %v2118 = vpop.f32.mrb[0].mxu0
    %2119 = vmatprep.mubr.f32.mxu0 0.0
    %2120 = vmatmul.mubr.f32.gmra.mrb[0].mxu0 %v1415
    %v2121 = vpop.f32.mrb[0].mxu0
    %v2122 = vadd.f32 %v1737, %v2121
    %v2123 = vpop.f32.mrb[0].mxu0
    %2124 = vmatprep.mubr.f32.mxu0 0.0
    %2125 = vmatmul.mubr.f32.gmra.mrb[0].mxu0 %v1418
    %v2126 = vpop.f32.mrb[0].mxu0
    %v2127 = vadd.f32 %v1742, %v2126
    %v2128 = vpop.f32.mrb[0].mxu0
    %2129 = vmatprep.mubr.f32.mxu0 0.0
    %2130 = vmatmul.mubr.f32.gmra.mrb[0].mxu0 %v1421
    %v2131 = vpop.f32.mrb[0].mxu0
    %v2132 = vadd.f32 %v1747, %v2131
    %v2133 = vpop.f32.mrb[0].mxu0
    %2134 = vmatprep.mubr.f32.mxu0 0.0
    %2135 = vmatmul.mubr.f32.gmra.mrb[0].mxu0 %v1424
    %v2136 = vpop.f32.mrb[0].mxu0
    %v2137 = vadd.f32 %v1752, %v2136
    %v2138 = vpop.f32.mrb[0].mxu0
    %2139 = vmatprep.mubr.f32.mxu0 0.0
    %2140 = vmatmul.mubr.f32.gmra.mrb[0].mxu0 %v1427
    %v2141 = vpop.f32.mrb[0].mxu0
    %v2142 = vadd.f32 %v1757, %v2141
    %v2143 = vpop.f32.mrb[0].mxu0
    %2144 = vmatprep.mubr.f32.mxu0 0.0
    %2145 = vmatmul.mubr.f32.gmra.mrb[0].mxu0 %v1430
    %v2146 = vpop.f32.mrb[0].mxu0
    %v2147 = vadd.f32 %v1762, %v2146
    %v2148 = vpop.f32.mrb[0].mxu0
    %2149 = vmatprep.mubr.f32.mxu0 0.0
    %2150 = vmatmul.mubr.f32.gmra.mrb[0].mxu0 %v1433
    %v2151 = vpop.f32.mrb[0].mxu0
    %v2152 = vadd.f32 %v1767, %v2151
    %v2153 = vpop.f32.mrb[0].mxu0
    %2154 = vmatprep.mubr.f32.mxu0 0.0
    %2155 = vmatmul.mubr.f32.gmra.mrb[0].mxu0 %v1436
    %v2156 = vpop.f32.mrb[0].mxu0
    %v2157 = vadd.f32 %v1772, %v2156
    %v2158 = vpop.f32.mrb[0].mxu0
    %2159 = vmatprep.mubr.f32.mxu0 0.0
    %2160 = vmatmul.mubr.f32.gmra.mrb[0].mxu0 %v1439
    %v2161 = vpop.f32.mrb[0].mxu0
    %v2162 = vadd.f32 %v1777, %v2161
    %v2163 = vpop.f32.mrb[0].mxu0
    %2164 = vmatprep.mubr.f32.mxu0 0.0
    %2165 = vmatmul.mubr.f32.gmra.mrb[0].mxu0 %v1442
    %v2166 = vpop.f32.mrb[0].mxu0
    %v2167 = vadd.f32 %v1782, %v2166
    %v2168 = vpop.f32.mrb[0].mxu0
    %2169 = vmatprep.mubr.f32.mxu0 0.0
    %2170 = vmatmul.mubr.f32.gmra.mrb[0].mxu0 %v1445
    %v2171 = vpop.f32.mrb[0].mxu0
    %v2172 = vadd.f32 %v1787, %v2171
    %v2173 = vpop.f32.mrb[0].mxu0
    %2174 = vmatprep.mubr.f32.mxu0 0.0
    %2175 = vmatmul.mubr.f32.gmra.mrb[0].mxu0 %v1448
    %v2176 = vpop.f32.mrb[0].mxu0
    %v2177 = vadd.f32 %v1792, %v2176
    %v2178 = vpop.f32.mrb[0].mxu0
    %2179 = vmatprep.mubr.f32.mxu0 0.0
    %2180 = vmatmul.mubr.f32.gmra.mrb[0].mxu0 %v1451
    %v2181 = vpop.f32.mrb[0].mxu0
    %v2182 = vadd.f32 %v1797, %v2181
    %v2183 = vpop.f32.mrb[0].mxu0
    %2184 = vmatprep.mubr.f32.mxu0 0.0
    %2185 = vmatmul.mubr.f32.gmra.mrb[0].mxu0 %v1454
    %v2186 = vpop.f32.mrb[0].mxu0
    %v2187 = vadd.f32 %v1802, %v2186
    %v2188 = vpop.f32.mrb[0].mxu0
    %2189 = vmatprep.mubr.f32.mxu0 0.0
    %2190 = vmatmul.mubr.f32.gmra.mrb[0].mxu0 %v1457
    %v2191 = vpop.f32.mrb[0].mxu0
    %v2192 = vadd.f32 %v1807, %v2191
    %v2193 = vpop.f32.mrb[0].mxu0
    %2194 = vmatprep.mubr.f32.mxu0 0.0
    %2195 = vmatmul.mubr.f32.gmra.mrb[0].mxu0 %v1460
    %v2196 = vpop.f32.mrb[0].mxu0
    %v2197 = vadd.f32 %v1812, %v2196
    %v2198 = vpop.f32.mrb[0].mxu0
    %2199 = vmatprep.mubr.f32.mxu0 0.0
    %2200 = vmatmul.mubr.f32.gmra.mrb[0].mxu0 %v1463
    %v2201 = vpop.f32.mrb[0].mxu0
    %v2202 = vadd.f32 %v1817, %v2201
    %v2203 = vpop.f32.mrb[0].mxu0
    %2204 = vmatprep.mubr.f32.mxu0 0.0
    %2205 = vmatmul.mubr.f32.gmra.mrb[0].mxu0 %v1466
    %v2206 = vpop.f32.mrb[0].mxu0
    %v2207 = vadd.f32 %v1822, %v2206
    %v2208 = vpop.f32.mrb[0].mxu0
    %2209 = vmatprep.mubr.f32.mxu0 0.0
    %2210 = vmatmul.mubr.f32.gmra.mrb[0].mxu0 %v1469
    %v2211 = vpop.f32.mrb[0].mxu0
    %v2212 = vadd.f32 %v1827, %v2211
    %v2213 = vpop.f32.mrb[0].mxu0
    %2214 = vmatprep.mubr.f32.mxu0 0.0
    %2215 = vmatmul.mubr.f32.gmra.mrb[0].mxu0 %v1472
    %v2216 = vpop.f32.mrb[0].mxu0
    %v2217 = vadd.f32 %v1832, %v2216
    %v2218 = vpop.f32.mrb[0].mxu0
    %2219 = vmatprep.mubr.f32.mxu0 0.0
    %2220 = vmatmul.mubr.f32.gmra.mrb[0].mxu0 %v1475
    %v2221 = vpop.f32.mrb[0].mxu0
    %v2222 = vadd.f32 %v1837, %v2221
    %v2223 = vpop.f32.mrb[0].mxu0
    %2224 = vmatprep.mubr.f32.mxu0 0.0
    %2225 = vmatmul.mubr.f32.gmra.mrb[0].mxu0 %v1478
    %v2226 = vpop.f32.mrb[0].mxu0
    %v2227 = vadd.f32 %v1842, %v2226
    %v2228 = vpop.f32.mrb[0].mxu0
    %2229 = vmatprep.mubr.f32.mxu0 0.0
    %2230 = vmatmul.mubr.f32.gmra.mrb[0].mxu0 %v1481
    %v2231 = vpop.f32.mrb[0].mxu0
    %v2232 = vadd.f32 %v1847, %v2231
    %v2233 = vpop.f32.mrb[0].mxu0
    %2234 = vmatprep.mubr.f32.mxu0 0.0
    %2235 = vmatmul.mubr.f32.gmra.mrb[0].mxu0 %v1484
    %v2236 = vpop.f32.mrb[0].mxu0
    %v2237 = vadd.f32 %v1852, %v2236
    %v2238 = vpop.f32.mrb[0].mxu0
    %2239 = vmatprep.mubr.f32.mxu0 0.0
    %2240 = vmatmul.mubr.f32.gmra.mrb[0].mxu0 %v1487
    %v2241 = vpop.f32.mrb[0].mxu0
    %v2242 = vadd.f32 %v1857, %v2241
    %v2243 = vpop.f32.mrb[0].mxu0
    %2244 = vmatprep.mubr.f32.mxu0 0.0
    %2245 = vmatmul.mubr.f32.gmra.mrb[0].mxu0 %v1490
    %v2246 = vpop.f32.mrb[0].mxu0
    %v2247 = vadd.f32 %v1862, %v2246
    %v2248 = vpop.f32.mrb[0].mxu0
    %2249 = vmatprep.mubr.f32.mxu0 0.0
    %2250 = vmatmul.mubr.f32.gmra.mrb[0].mxu0 %v1493
    %v2251 = vpop.f32.mrb[0].mxu0
    %v2252 = vadd.f32 %v1867, %v2251
    %v2253 = vpop.f32.mrb[0].mxu0
    %2254 = vmatprep.mubr.f32.mxu0 0.0
    %2255 = vmatmul.mubr.f32.gmra.mrb[0].mxu0 %v1496
    %v2256 = vpop.f32.mrb[0].mxu0
    %v2257 = vadd.f32 %v1872, %v2256
    %v2258 = vpop.f32.mrb[0].mxu0
    %2259 = vmatprep.mubr.f32.mxu0 0.0
    %2260 = vmatmul.mubr.f32.gmra.mrb[0].mxu0 %v1499
    %v2261 = vpop.f32.mrb[0].mxu0
    %v2262 = vadd.f32 %v1877, %v2261
    %v2263 = vpop.f32.mrb[0].mxu0
    %2264 = vmatprep.mubr.f32.mxu0 0.0
    %2265 = vmatmul.mubr.f32.gmra.mrb[0].mxu0 %v1502
    %v2266 = vpop.f32.mrb[0].mxu0
    %v2267 = vadd.f32 %v1882, %v2266
    %v2268 = vpop.f32.mrb[0].mxu0
    %2269 = vmatprep.mubr.f32.mxu0 0.0
    %2270 = vmatmul.mubr.f32.gmra.mrb[0].mxu0 %v1505
    %v2271 = vpop.f32.mrb[0].mxu0
    %v2272 = vadd.f32 %v1887, %v2271
    %v2273 = vpop.f32.mrb[0].mxu0
    %2274 = vmatprep.mubr.f32.mxu0 0.0
    %2275 = vmatmul.mubr.f32.gmra.mrb[0].mxu0 %v1508
    %v2276 = vpop.f32.mrb[0].mxu0
    %v2277 = vadd.f32 %v1892, %v2276
    %v2278 = vpop.f32.mrb[0].mxu0
    %2279 = vdwg.mxu0
    %v2280 = vmax.f32 %v1962, %v2042
    %v2281 = vmax.f32 %v1967, %v2047
    %v2282 = vmax.f32 %v1972, %v2052
    %v2283 = vmax.f32 %v1977, %v2057
    %v2284 = vmax.f32 %v1982, %v2062
    %v2285 = vmax.f32 %v1987, %v2067
    %v2286 = vmax.f32 %v1992, %v2072
    %v2287 = vmax.f32 %v1997, %v2077
    %v2288 = vmax.f32 %v2002, %v2082
    %v2289 = vmax.f32 %v2007, %v2087
    %v2290 = vmax.f32 %v2012, %v2092
    %v2291 = vmax.f32 %v2017, %v2097
    %v2292 = vmax.f32 %v2022, %v2102
    %v2293 = vmax.f32 %v2027, %v2107
    %v2294 = vmax.f32 %v2032, %v2112
    %v2295 = vmax.f32 %v2037, %v2117
    %v2296 = vmax.f32 %v2122, %v2202
    %v2297 = vmax.f32 %v2127, %v2207
    %v2298 = vmax.f32 %v2132, %v2212
    %v2299 = vmax.f32 %v2137, %v2217
    %v2300 = vmax.f32 %v2142, %v2222
    %v2301 = vmax.f32 %v2147, %v2227
    %v2302 = vmax.f32 %v2152, %v2232
    %v2303 = vmax.f32 %v2157, %v2237
    %v2304 = vmax.f32 %v2162, %v2242
    %v2305 = vmax.f32 %v2167, %v2247
    %v2306 = vmax.f32 %v2172, %v2252
    %v2307 = vmax.f32 %v2177, %v2257
    %v2308 = vmax.f32 %v2182, %v2262
    %v2309 = vmax.f32 %v2187, %v2267
    %v2310 = vmax.f32 %v2192, %v2272
    %v2311 = vmax.f32 %v2197, %v2277
    %v2312 = vmax.f32 %v2280, %v2296
    %v2313 = vmax.f32 %v2281, %v2297
    %v2314 = vmax.f32 %v2282, %v2298
    %v2315 = vmax.f32 %v2283, %v2299
    %v2316 = vmax.f32 %v2284, %v2300
    %v2317 = vmax.f32 %v2285, %v2301
    %v2318 = vmax.f32 %v2286, %v2302
    %v2319 = vmax.f32 %v2287, %v2303
    %v2320 = vmax.f32 %v2288, %v2304
    %v2321 = vmax.f32 %v2289, %v2305
    %v2322 = vmax.f32 %v2290, %v2306
    %v2323 = vmax.f32 %v2291, %v2307
    %v2324 = vmax.f32 %v2292, %v2308
    %v2325 = vmax.f32 %v2293, %v2309
    %v2326 = vmax.f32 %v2294, %v2310
    %v2327 = vmax.f32 %v2295, %v2311
    %v2328 = vld [vmem:[%s2] sm:$0x1]
    %v2330 = vlaneseq
    %v2331 = vshrl.u32 %v2330, 7
    %v2332 = vsub.s32 0, %v2331
    %v2333 = vrot.slane %v2328, %v2332
    %v2335 = vadd.f32 %v2312, %v2333
    %v2336 = vadd.f32 %v2313, %v2333
    %v2337 = vadd.f32 %v2314, %v2333
    %v2338 = vadd.f32 %v2315, %v2333
    %v2339 = vadd.f32 %v2316, %v2333
    %v2340 = vadd.f32 %v2317, %v2333
    %v2341 = vadd.f32 %v2318, %v2333
    %v2342 = vadd.f32 %v2319, %v2333
    %v2343 = vadd.f32 %v2320, %v2333
    %v2344 = vadd.f32 %v2321, %v2333
    %v2345 = vadd.f32 %v2322, %v2333
    %v2346 = vadd.f32 %v2323, %v2333
    %v2347 = vadd.f32 %v2324, %v2333
    %v2348 = vadd.f32 %v2325, %v2333
    %v2349 = vadd.f32 %v2326, %v2333
    %v2350 = vadd.f32 %v2327, %v2333
    %v2351 = vmax.f32 %v2335, 0.0
    %v2352 = vmax.f32 %v2336, 0.0
    %v2353 = vmax.f32 %v2337, 0.0
    %v2354 = vmax.f32 %v2338, 0.0
    %v2355 = vmax.f32 %v2339, 0.0
    %v2356 = vmax.f32 %v2340, 0.0
    %v2357 = vmax.f32 %v2341, 0.0
    %v2358 = vmax.f32 %v2342, 0.0
    %v2359 = vmax.f32 %v2343, 0.0
    %v2360 = vmax.f32 %v2344, 0.0
    %v2361 = vmax.f32 %v2345, 0.0
    %v2362 = vmax.f32 %v2346, 0.0
    %v2363 = vmax.f32 %v2347, 0.0
    %v2364 = vmax.f32 %v2348, 0.0
    %v2365 = vmax.f32 %v2349, 0.0
    %v2366 = vmax.f32 %v2350, 0.0
    %vm2367 = vcmask 523264
    %2368 = vst.msk [vmem:[#allocation3] sm:$0xff] %vm2367, %v2351
    %2369 = vst.msk [vmem:[#allocation3 + $0x8] sm:$0xff] %vm2367, %v2352
    %2370 = vst.msk [vmem:[#allocation3 + $0x10] sm:$0xff] %vm2367, %v2353
    %2371 = vst.msk [vmem:[#allocation3 + $0x18] sm:$0xff] %vm2367, %v2354
    %2372 = vst.msk [vmem:[#allocation3 + $0x20] sm:$0xff] %vm2367, %v2355
    %2373 = vst.msk [vmem:[#allocation3 + $0x28] sm:$0xff] %vm2367, %v2356
    %2374 = vst.msk [vmem:[#allocation3 + $0x30] sm:$0xff] %vm2367, %v2357
    %2375 = vst.msk [vmem:[#allocation3 + $0x38] sm:$0xff] %vm2367, %v2358
    %2376 = vst.msk [vmem:[#allocation3 + $0x40] sm:$0xff] %vm2367, %v2359
    %2377 = vst.msk [vmem:[#allocation3 + $0x48] sm:$0xff] %vm2367, %v2360
    %2378 = vst.msk [vmem:[#allocation3 + $0x50] sm:$0xff] %vm2367, %v2361
    %2379 = vst.msk [vmem:[#allocation3 + $0x58] sm:$0xff] %vm2367, %v2362
    %2380 = vst.msk [vmem:[#allocation3 + $0x60] sm:$0xff] %vm2367, %v2363
    %2381 = vst.msk [vmem:[#allocation3 + $0x68] sm:$0xff] %vm2367, %v2364
    %2382 = vst.msk [vmem:[#allocation3 + $0x70] sm:$0xff] %vm2367, %v2365
    %2383 = vst.msk [vmem:[#allocation3 + $0x78] sm:$0xff] %vm2367, %v2366
    %s2384 = smul.u32 64, 64
    %s2385 = smul.u32 %s2384, 1
    %s2386 = sshll.u32 %s2385, 4
    %2387 = dma.done [#allocation4], %s2386
    %v2388 = vld [vmem:[#allocation3] sm:$0x3]
    %v2389 = vld [vmem:[#allocation2] sm:$0xff]
    %v2390 = vld [vmem:[#allocation2 + $0x8] sm:$0xff]
    %v2391 = vld [vmem:[#allocation2 + $0x10] sm:$0xff]
    %v2392 = vld [vmem:[#allocation2 + $0x18] sm:$0xff]
    %v2393 = vld [vmem:[#allocation2 + $0x20] sm:$0xff]
    %v2394 = vld [vmem:[#allocation2 + $0x28] sm:$0xff]
    %v2395 = vld [vmem:[#allocation2 + $0x30] sm:$0xff]
    %v2396 = vld [vmem:[#allocation2 + $0x38] sm:$0xff]
    %v2397 = vld [vmem:[#allocation3 + $0x2] sm:$0x3]
    %s2398 = scalar_lea.vmem [#allocation2], 64
    %v2399 = vld [vmem:[%s2398] sm:$0xff]
    %v2400 = vld [vmem:[%s2398 + $0x8] sm:$0xff]
    %v2401 = vld [vmem:[%s2398 + $0x10] sm:$0xff]
    %v2402 = vld [vmem:[%s2398 + $0x18] sm:$0xff]
    %v2403 = vld [vmem:[%s2398 + $0x20] sm:$0xff]
    %v2404 = vld [vmem:[%s2398 + $0x28] sm:$0xff]
    %v2405 = vld [vmem:[%s2398 + $0x30] sm:$0xff]
    %v2406 = vld [vmem:[%s2398 + $0x38] sm:$0xff]
    %v2408 = vsel %vm2367, %v2397, 0
    %2410 = vmatprep.subr.mxu0 0.0
    %2411 = vmatpush1.msra.mxu0 %v2399
    %2412 = vmatprep.subr.mxu0 0.0
    %2413 = vmatpush1.msra.mxu0 %v2400
    %2414 = vmatprep.subr.mxu0 0.0
    %2415 = vmatpush1.msra.mxu0 %v2401
    %2416 = vmatprep.subr.mxu0 0.0
    %2417 = vmatpush1.msra.mxu0 %v2402
    %2418 = vmatprep.subr.mxu0 0.0
    %2419 = vmatpush1.msra.mxu0 %v2403
    %2420 = vmatprep.subr.mxu0 0.0
    %2421 = vmatpush1.msra.mxu0 %v2404
    %2422 = vmatprep.subr.mxu0 0.0
    %2423 = vmatpush1.msra.mxu0 %v2405
    %2424 = vmatprep.subr.mxu0 0.0
    %2425 = vmatpush1.msra.mxu0 %v2406
    %2426 = vmatprep.subr.mxu0 0.0
    %2427 = vmatpush1.msra.mxu0 0.0
    %2428 = vmatprep.subr.mxu0 0.0
    %2429 = vmatpush1.msra.mxu0 0.0
    %2430 = vmatprep.subr.mxu0 0.0
    %2431 = vmatpush1.msra.mxu0 0.0
    %2432 = vmatprep.subr.mxu0 0.0
    %2433 = vmatpush1.msra.mxu0 0.0
    %2434 = vmatprep.subr.mxu0 0.0
    %2435 = vmatpush1.msra.mxu0 0.0
    %2436 = vmatprep.subr.mxu0 0.0
    %2437 = vmatpush1.msra.mxu0 0.0
    %2438 = vmatprep.subr.mxu0 0.0
    %2439 = vmatpush1.msra.mxu0 0.0
    %2440 = vmatprep.subr.mxu0 0.0
    %2441 = vmatpush1.msra.mxu0 0.0
    %2442 = vmatprep.subr.mxu0 0.0
    %2443 = vmatpush1.msra.mxu0 0.0
    %2444 = vmatprep.subr.mxu0 0.0
    %2445 = vmatpush1.msra.mxu0 0.0
    %2446 = vmatprep.subr.mxu0 0.0
    %2447 = vmatpush1.msra.mxu0 0.0
    %2448 = vmatprep.subr.mxu0 0.0
    %2449 = vmatpush1.msra.mxu0 0.0
    %2450 = vmatprep.subr.mxu0 0.0
    %2451 = vmatpush1.msra.mxu0 0.0
    %2452 = vmatprep.subr.mxu0 0.0
    %2453 = vmatpush1.msra.mxu0 0.0
    %2454 = vmatprep.subr.mxu0 0.0
    %2455 = vmatpush1.msra.mxu0 0.0
    %2456 = vmatprep.subr.mxu0 0.0
    %2457 = vmatpush1.msra.mxu0 0.0
    %2458 = vmatprep.subr.mxu0 0.0
    %2459 = vmatpush1.msra.mxu0 0.0
    %2460 = vmatprep.subr.mxu0 0.0
    %2461 = vmatpush1.msra.mxu0 0.0
    %2462 = vmatprep.subr.mxu0 0.0
    %2463 = vmatpush1.msra.mxu0 0.0
    %2464 = vmatprep.subr.mxu0 0.0
    %2465 = vmatpush1.msra.mxu0 0.0
    %2466 = vmatprep.subr.mxu0 0.0
    %2467 = vmatpush1.msra.mxu0 0.0
    %2468 = vmatprep.subr.mxu0 0.0
    %2469 = vmatpush1.msra.mxu0 0.0
    %2470 = vmatprep.subr.mxu0 0.0
    %2471 = vmatpush1.msra.mxu0 0.0
    %2472 = vmatprep.subr.mxu0 0.0
    %2473 = vmatpush1.msra.mxu0 0.0
    %2474 = vmatprep.mubr.f32.mxu0 0.0
    %2475 = vmatmul.mubr.f32.gmra.mrb[0].mxu0 %v2408
    %v2476 = vpop.f32.mrb[0].mxu0
    %v2477 = vadd.f32 0.0, %v2476
    %v2478 = vpop.f32.mrb[0].mxu0
    %2479 = vdwg.mxu0
    %v2481 = vsel %vm2367, %v2388, 0
    %2483 = vmatprep.subr.mxu0 0.0
    %2484 = vmatpush1.msra.mxu0 %v2389
    %2485 = vmatprep.subr.mxu0 0.0
    %2486 = vmatpush1.msra.mxu0 %v2390
    %2487 = vmatprep.subr.mxu0 0.0
    %2488 = vmatpush1.msra.mxu0 %v2391
    %2489 = vmatprep.subr.mxu0 0.0
    %2490 = vmatpush1.msra.mxu0 %v2392
    %2491 = vmatprep.subr.mxu0 0.0
    %2492 = vmatpush1.msra.mxu0 %v2393
    %2493 = vmatprep.subr.mxu0 0.0
    %2494 = vmatpush1.msra.mxu0 %v2394
    %2495 = vmatprep.subr.mxu0 0.0
    %2496 = vmatpush1.msra.mxu0 %v2395
    %2497 = vmatprep.subr.mxu0 0.0
    %2498 = vmatpush1.msra.mxu0 %v2396
    %2499 = vmatprep.subr.mxu0 0.0
    %2500 = vmatpush1.msra.mxu0 0.0
    %2501 = vmatprep.subr.mxu0 0.0
    %2502 = vmatpush1.msra.mxu0 0.0
    %2503 = vmatprep.subr.mxu0 0.0
    %2504 = vmatpush1.msra.mxu0 0.0
    %2505 = vmatprep.subr.mxu0 0.0
    %2506 = vmatpush1.msra.mxu0 0.0
    %2507 = vmatprep.subr.mxu0 0.0
    %2508 = vmatpush1.msra.mxu0 0.0
    %2509 = vmatprep.subr.mxu0 0.0
    %2510 = vmatpush1.msra.mxu0 0.0
    %2511 = vmatprep.subr.mxu0 0.0
    %2512 = vmatpush1.msra.mxu0 0.0
    %2513 = vmatprep.subr.mxu0 0.0
    %2514 = vmatpush1.msra.mxu0 0.0
    %2515 = vmatprep.subr.mxu0 0.0
    %2516 = vmatpush1.msra.mxu0 0.0
    %2517 = vmatprep.subr.mxu0 0.0
    %2518 = vmatpush1.msra.mxu0 0.0
    %2519 = vmatprep.subr.mxu0 0.0
    %2520 = vmatpush1.msra.mxu0 0.0
    %2521 = vmatprep.subr.mxu0 0.0
    %2522 = vmatpush1.msra.mxu0 0.0
    %2523 = vmatprep.subr.mxu0 0.0
    %2524 = vmatpush1.msra.mxu0 0.0
    %2525 = vmatprep.subr.mxu0 0.0
    %2526 = vmatpush1.msra.mxu0 0.0
    %2527 = vmatprep.subr.mxu0 0.0
    %2528 = vmatpush1.msra.mxu0 0.0
    %2529 = vmatprep.subr.mxu0 0.0
    %2530 = vmatpush1.msra.mxu0 0.0
    %2531 = vmatprep.subr.mxu0 0.0
    %2532 = vmatpush1.msra.mxu0 0.0
    %2533 = vmatprep.subr.mxu0 0.0
    %2534 = vmatpush1.msra.mxu0 0.0
    %2535 = vmatprep.subr.mxu0 0.0
    %2536 = vmatpush1.msra.mxu0 0.0
    %2537 = vmatprep.subr.mxu0 0.0
    %2538 = vmatpush1.msra.mxu0 0.0
    %2539 = vmatprep.subr.mxu0 0.0
    %2540 = vmatpush1.msra.mxu0 0.0
    %2541 = vmatprep.subr.mxu0 0.0
    %2542 = vmatpush1.msra.mxu0 0.0
    %2543 = vmatprep.subr.mxu0 0.0
    %2544 = vmatpush1.msra.mxu0 0.0
    %2545 = vmatprep.subr.mxu0 0.0
    %2546 = vmatpush1.msra.mxu0 0.0
    %2547 = vmatprep.mubr.f32.mxu0 0.0
    %2548 = vmatmul.mubr.f32.gmra.mrb[0].mxu0 %v2481
    %v2549 = vpop.f32.mrb[0].mxu0
    %v2550 = vadd.f32 %v2477, %v2549
    %v2551 = vpop.f32.mrb[0].mxu0
    %2552 = vdwg.mxu0
    %v2553 = vld [vmem:[#allocation3 + $0x4] sm:$0x3]
    %s2554 = scalar_lea.vmem [#allocation2], 128
    %v2555 = vld [vmem:[%s2554] sm:$0xff]
    %v2556 = vld [vmem:[%s2554 + $0x8] sm:$0xff]
    %v2557 = vld [vmem:[%s2554 + $0x10] sm:$0xff]
    %v2558 = vld [vmem:[%s2554 + $0x18] sm:$0xff]
    %v2559 = vld [vmem:[%s2554 + $0x20] sm:$0xff]
    %v2560 = vld [vmem:[%s2554 + $0x28] sm:$0xff]
    %v2561 = vld [vmem:[%s2554 + $0x30] sm:$0xff]
    %v2562 = vld [vmem:[%s2554 + $0x38] sm:$0xff]
    %v2564 = vsel %vm2367, %v2553, 0
    %2566 = vmatprep.subr.mxu0 0.0
    %2567 = vmatpush1.msra.mxu0 %v2555
    %2568 = vmatprep.subr.mxu0 0.0
    %2569 = vmatpush1.msra.mxu0 %v2556
    %2570 = vmatprep.subr.mxu0 0.0
    %2571 = vmatpush1.msra.mxu0 %v2557
    %2572 = vmatprep.subr.mxu0 0.0
    %2573 = vmatpush1.msra.mxu0 %v2558
    %2574 = vmatprep.subr.mxu0 0.0
    %2575 = vmatpush1.msra.mxu0 %v2559
    %2576 = vmatprep.subr.mxu0 0.0
    %2577 = vmatpush1.msra.mxu0 %v2560
    %2578 = vmatprep.subr.mxu0 0.0
    %2579 = vmatpush1.msra.mxu0 %v2561
    %2580 = vmatprep.subr.mxu0 0.0
    %2581 = vmatpush1.msra.mxu0 %v2562
    %2582 = vmatprep.subr.mxu0 0.0
    %2583 = vmatpush1.msra.mxu0 0.0
    %2584 = vmatprep.subr.mxu0 0.0
    %2585 = vmatpush1.msra.mxu0 0.0
    %2586 = vmatprep.subr.mxu0 0.0
    %2587 = vmatpush1.msra.mxu0 0.0
    %2588 = vmatprep.subr.mxu0 0.0
    %2589 = vmatpush1.msra.mxu0 0.0
    %2590 = vmatprep.subr.mxu0 0.0
    %2591 = vmatpush1.msra.mxu0 0.0
    %2592 = vmatprep.subr.mxu0 0.0
    %2593 = vmatpush1.msra.mxu0 0.0
    %2594 = vmatprep.subr.mxu0 0.0
    %2595 = vmatpush1.msra.mxu0 0.0
    %2596 = vmatprep.subr.mxu0 0.0
    %2597 = vmatpush1.msra.mxu0 0.0
    %2598 = vmatprep.subr.mxu0 0.0
    %2599 = vmatpush1.msra.mxu0 0.0
    %2600 = vmatprep.subr.mxu0 0.0
    %2601 = vmatpush1.msra.mxu0 0.0
    %2602 = vmatprep.subr.mxu0 0.0
    %2603 = vmatpush1.msra.mxu0 0.0
    %2604 = vmatprep.subr.mxu0 0.0
    %2605 = vmatpush1.msra.mxu0 0.0
    %2606 = vmatprep.subr.mxu0 0.0
    %2607 = vmatpush1.msra.mxu0 0.0
    %2608 = vmatprep.subr.mxu0 0.0
    %2609 = vmatpush1.msra.mxu0 0.0
    %2610 = vmatprep.subr.mxu0 0.0
    %2611 = vmatpush1.msra.mxu0 0.0
    %2612 = vmatprep.subr.mxu0 0.0
    %2613 = vmatpush1.msra.mxu0 0.0
    %2614 = vmatprep.subr.mxu0 0.0
    %2615 = vmatpush1.msra.mxu0 0.0
    %2616 = vmatprep.subr.mxu0 0.0
    %2617 = vmatpush1.msra.mxu0 0.0
    %2618 = vmatprep.subr.mxu0 0.0
    %2619 = vmatpush1.msra.mxu0 0.0
    %2620 = vmatprep.subr.mxu0 0.0
    %2621 = vmatpush1.msra.mxu0 0.0
    %2622 = vmatprep.subr.mxu0 0.0
    %2623 = vmatpush1.msra.mxu0 0.0
    %2624 = vmatprep.subr.mxu0 0.0
    %2625 = vmatpush1.msra.mxu0 0.0
    %2626 = vmatprep.subr.mxu0 0.0
    %2627 = vmatpush1.msra.mxu0 0.0
    %2628 = vmatprep.subr.mxu0 0.0
    %2629 = vmatpush1.msra.mxu0 0.0
    %2630 = vmatprep.mubr.f32.mxu0 0.0
    %2631 = vmatmul.mubr.f32.gmra.mrb[0].mxu0 %v2564
    %v2632 = vpop.f32.mrb[0].mxu0
    %v2633 = vadd.f32 0.0, %v2632
    %v2634 = vpop.f32.mrb[0].mxu0
    %2635 = vdwg.mxu0
    %v2636 = vadd.f32 %v2550, %v2633
    %v2637 = vld [vmem:[#allocation3 + $0x6] sm:$0x3]
    %s2638 = scalar_lea.vmem [#allocation2], 192
    %v2639 = vld [vmem:[%s2638] sm:$0xff]
    %v2640 = vld [vmem:[%s2638 + $0x8] sm:$0xff]
    %v2641 = vld [vmem:[%s2638 + $0x10] sm:$0xff]
    %v2642 = vld [vmem:[%s2638 + $0x18] sm:$0xff]
    %v2643 = vld [vmem:[%s2638 + $0x20] sm:$0xff]
    %v2644 = vld [vmem:[%s2638 + $0x28] sm:$0xff]
    %v2645 = vld [vmem:[%s2638 + $0x30] sm:$0xff]
    %v2646 = vld [vmem:[%s2638 + $0x38] sm:$0xff]
    %v2648 = vsel %vm2367, %v2637, 0
    %2650 = vmatprep.subr.mxu0 0.0
    %2651 = vmatpush1.msra.mxu0 %v2639
    %2652 = vmatprep.subr.mxu0 0.0
    %2653 = vmatpush1.msra.mxu0 %v2640
    %2654 = vmatprep.subr.mxu0 0.0
    %2655 = vmatpush1.msra.mxu0 %v2641
    %2656 = vmatprep.subr.mxu0 0.0
    %2657 = vmatpush1.msra.mxu0 %v2642
    %2658 = vmatprep.subr.mxu0 0.0
    %2659 = vmatpush1.msra.mxu0 %v2643
    %2660 = vmatprep.subr.mxu0 0.0
    %2661 = vmatpush1.msra.mxu0 %v2644
    %2662 = vmatprep.subr.mxu0 0.0
    %2663 = vmatpush1.msra.mxu0 %v2645
    %2664 = vmatprep.subr.mxu0 0.0
    %2665 = vmatpush1.msra.mxu0 %v2646
    %2666 = vmatprep.subr.mxu0 0.0
    %2667 = vmatpush1.msra.mxu0 0.0
    %2668 = vmatprep.subr.mxu0 0.0
    %2669 = vmatpush1.msra.mxu0 0.0
    %2670 = vmatprep.subr.mxu0 0.0
    %2671 = vmatpush1.msra.mxu0 0.0
    %2672 = vmatprep.subr.mxu0 0.0
    %2673 = vmatpush1.msra.mxu0 0.0
    %2674 = vmatprep.subr.mxu0 0.0
    %2675 = vmatpush1.msra.mxu0 0.0
    %2676 = vmatprep.subr.mxu0 0.0
    %2677 = vmatpush1.msra.mxu0 0.0
    %2678 = vmatprep.subr.mxu0 0.0
    %2679 = vmatpush1.msra.mxu0 0.0
    %2680 = vmatprep.subr.mxu0 0.0
    %2681 = vmatpush1.msra.mxu0 0.0
    %2682 = vmatprep.subr.mxu0 0.0
    %2683 = vmatpush1.msra.mxu0 0.0
    %2684 = vmatprep.subr.mxu0 0.0
    %2685 = vmatpush1.msra.mxu0 0.0
    %2686 = vmatprep.subr.mxu0 0.0
    %2687 = vmatpush1.msra.mxu0 0.0
    %2688 = vmatprep.subr.mxu0 0.0
    %2689 = vmatpush1.msra.mxu0 0.0
    %2690 = vmatprep.subr.mxu0 0.0
    %2691 = vmatpush1.msra.mxu0 0.0
    %2692 = vmatprep.subr.mxu0 0.0
    %2693 = vmatpush1.msra.mxu0 0.0
    %2694 = vmatprep.subr.mxu0 0.0
    %2695 = vmatpush1.msra.mxu0 0.0
    %2696 = vmatprep.subr.mxu0 0.0
    %2697 = vmatpush1.msra.mxu0 0.0
    %2698 = vmatprep.subr.mxu0 0.0
    %2699 = vmatpush1.msra.mxu0 0.0
    %2700 = vmatprep.subr.mxu0 0.0
    %2701 = vmatpush1.msra.mxu0 0.0
    %2702 = vmatprep.subr.mxu0 0.0
    %2703 = vmatpush1.msra.mxu0 0.0
    %2704 = vmatprep.subr.mxu0 0.0
    %2705 = vmatpush1.msra.mxu0 0.0
    %2706 = vmatprep.subr.mxu0 0.0
    %2707 = vmatpush1.msra.mxu0 0.0
    %2708 = vmatprep.subr.mxu0 0.0
    %2709 = vmatpush1.msra.mxu0 0.0
    %2710 = vmatprep.subr.mxu0 0.0
    %2711 = vmatpush1.msra.mxu0 0.0
    %2712 = vmatprep.subr.mxu0 0.0
    %2713 = vmatpush1.msra.mxu0 0.0
    %2714 = vmatprep.mubr.f32.mxu0 0.0
    %2715 = vmatmul.mubr.f32.gmra.mrb[0].mxu0 %v2648
    %v2716 = vpop.f32.mrb[0].mxu0
    %v2717 = vadd.f32 0.0, %v2716
    %v2718 = vpop.f32.mrb[0].mxu0
    %2719 = vdwg.mxu0
    %v2720 = vadd.f32 %v2636, %v2717
    %v2721 = vld [vmem:[#allocation3 + $0x8] sm:$0x3]
    %s2722 = scalar_lea.vmem [#allocation2], 256
    %v2723 = vld [vmem:[%s2722] sm:$0xff]
    %v2724 = vld [vmem:[%s2722 + $0x8] sm:$0xff]
    %v2725 = vld [vmem:[%s2722 + $0x10] sm:$0xff]
    %v2726 = vld [vmem:[%s2722 + $0x18] sm:$0xff]
    %v2727 = vld [vmem:[%s2722 + $0x20] sm:$0xff]
    %v2728 = vld [vmem:[%s2722 + $0x28] sm:$0xff]
    %v2729 = vld [vmem:[%s2722 + $0x30] sm:$0xff]
    %v2730 = vld [vmem:[%s2722 + $0x38] sm:$0xff]
    %v2732 = vsel %vm2367, %v2721, 0
    %2734 = vmatprep.subr.mxu0 0.0
    %2735 = vmatpush1.msra.mxu0 %v2723
    %2736 = vmatprep.subr.mxu0 0.0
    %2737 = vmatpush1.msra.mxu0 %v2724
    %2738 = vmatprep.subr.mxu0 0.0
    %2739 = vmatpush1.msra.mxu0 %v2725
    %2740 = vmatprep.subr.mxu0 0.0
    %2741 = vmatpush1.msra.mxu0 %v2726
    %2742 = vmatprep.subr.mxu0 0.0
    %2743 = vmatpush1.msra.mxu0 %v2727
    %2744 = vmatprep.subr.mxu0 0.0
    %2745 = vmatpush1.msra.mxu0 %v2728
    %2746 = vmatprep.subr.mxu0 0.0
    %2747 = vmatpush1.msra.mxu0 %v2729
    %2748 = vmatprep.subr.mxu0 0.0
    %2749 = vmatpush1.msra.mxu0 %v2730
    %2750 = vmatprep.subr.mxu0 0.0
    %2751 = vmatpush1.msra.mxu0 0.0
    %2752 = vmatprep.subr.mxu0 0.0
    %2753 = vmatpush1.msra.mxu0 0.0
    %2754 = vmatprep.subr.mxu0 0.0
    %2755 = vmatpush1.msra.mxu0 0.0
    %2756 = vmatprep.subr.mxu0 0.0
    %2757 = vmatpush1.msra.mxu0 0.0
    %2758 = vmatprep.subr.mxu0 0.0
    %2759 = vmatpush1.msra.mxu0 0.0
    %2760 = vmatprep.subr.mxu0 0.0
    %2761 = vmatpush1.msra.mxu0 0.0
    %2762 = vmatprep.subr.mxu0 0.0
    %2763 = vmatpush1.msra.mxu0 0.0
    %2764 = vmatprep.subr.mxu0 0.0
    %2765 = vmatpush1.msra.mxu0 0.0
    %2766 = vmatprep.subr.mxu0 0.0
    %2767 = vmatpush1.msra.mxu0 0.0
    %2768 = vmatprep.subr.mxu0 0.0
    %2769 = vmatpush1.msra.mxu0 0.0
    %2770 = vmatprep.subr.mxu0 0.0
    %2771 = vmatpush1.msra.mxu0 0.0
    %2772 = vmatprep.subr.mxu0 0.0
    %2773 = vmatpush1.msra.mxu0 0.0
    %2774 = vmatprep.subr.mxu0 0.0
    %2775 = vmatpush1.msra.mxu0 0.0
    %2776 = vmatprep.subr.mxu0 0.0
    %2777 = vmatpush1.msra.mxu0 0.0
    %2778 = vmatprep.subr.mxu0 0.0
    %2779 = vmatpush1.msra.mxu0 0.0
    %2780 = vmatprep.subr.mxu0 0.0
    %2781 = vmatpush1.msra.mxu0 0.0
    %2782 = vmatprep.subr.mxu0 0.0
    %2783 = vmatpush1.msra.mxu0 0.0
    %2784 = vmatprep.subr.mxu0 0.0
    %2785 = vmatpush1.msra.mxu0 0.0
    %2786 = vmatprep.subr.mxu0 0.0
    %2787 = vmatpush1.msra.mxu0 0.0
    %2788 = vmatprep.subr.mxu0 0.0
    %2789 = vmatpush1.msra.mxu0 0.0
    %2790 = vmatprep.subr.mxu0 0.0
    %2791 = vmatpush1.msra.mxu0 0.0
    %2792 = vmatprep.subr.mxu0 0.0
    %2793 = vmatpush1.msra.mxu0 0.0
    %2794 = vmatprep.subr.mxu0 0.0
    %2795 = vmatpush1.msra.mxu0 0.0
    %2796 = vmatprep.subr.mxu0 0.0
    %2797 = vmatpush1.msra.mxu0 0.0
    %2798 = vmatprep.mubr.f32.mxu0 0.0
    %2799 = vmatmul.mubr.f32.gmra.mrb[0].mxu0 %v2732
    %v2800 = vpop.f32.mrb[0].mxu0
    %v2801 = vadd.f32 0.0, %v2800
    %v2802 = vpop.f32.mrb[0].mxu0
    %2803 = vdwg.mxu0
    %v2804 = vadd.f32 %v2720, %v2801
    %v2805 = vld [vmem:[#allocation3 + $0xa] sm:$0x3]
    %s2806 = scalar_lea.vmem [#allocation2], 320
    %v2807 = vld [vmem:[%s2806] sm:$0xff]
    %v2808 = vld [vmem:[%s2806 + $0x8] sm:$0xff]
    %v2809 = vld [vmem:[%s2806 + $0x10] sm:$0xff]
    %v2810 = vld [vmem:[%s2806 + $0x18] sm:$0xff]
    %v2811 = vld [vmem:[%s2806 + $0x20] sm:$0xff]
    %v2812 = vld [vmem:[%s2806 + $0x28] sm:$0xff]
    %v2813 = vld [vmem:[%s2806 + $0x30] sm:$0xff]
    %v2814 = vld [vmem:[%s2806 + $0x38] sm:$0xff]
    %v2816 = vsel %vm2367, %v2805, 0
    %2818 = vmatprep.subr.mxu0 0.0
    %2819 = vmatpush1.msra.mxu0 %v2807
    %2820 = vmatprep.subr.mxu0 0.0
    %2821 = vmatpush1.msra.mxu0 %v2808
    %2822 = vmatprep.subr.mxu0 0.0
    %2823 = vmatpush1.msra.mxu0 %v2809
    %2824 = vmatprep.subr.mxu0 0.0
    %2825 = vmatpush1.msra.mxu0 %v2810
    %2826 = vmatprep.subr.mxu0 0.0
    %2827 = vmatpush1.msra.mxu0 %v2811
    %2828 = vmatprep.subr.mxu0 0.0
    %2829 = vmatpush1.msra.mxu0 %v2812
    %2830 = vmatprep.subr.mxu0 0.0
    %2831 = vmatpush1.msra.mxu0 %v2813
    %2832 = vmatprep.subr.mxu0 0.0
    %2833 = vmatpush1.msra.mxu0 %v2814
    %2834 = vmatprep.subr.mxu0 0.0
    %2835 = vmatpush1.msra.mxu0 0.0
    %2836 = vmatprep.subr.mxu0 0.0
    %2837 = vmatpush1.msra.mxu0 0.0
    %2838 = vmatprep.subr.mxu0 0.0
    %2839 = vmatpush1.msra.mxu0 0.0
    %2840 = vmatprep.subr.mxu0 0.0
    %2841 = vmatpush1.msra.mxu0 0.0
    %2842 = vmatprep.subr.mxu0 0.0
    %2843 = vmatpush1.msra.mxu0 0.0
    %2844 = vmatprep.subr.mxu0 0.0
    %2845 = vmatpush1.msra.mxu0 0.0
    %2846 = vmatprep.subr.mxu0 0.0
    %2847 = vmatpush1.msra.mxu0 0.0
    %2848 = vmatprep.subr.mxu0 0.0
    %2849 = vmatpush1.msra.mxu0 0.0
    %2850 = vmatprep.subr.mxu0 0.0
    %2851 = vmatpush1.msra.mxu0 0.0
    %2852 = vmatprep.subr.mxu0 0.0
    %2853 = vmatpush1.msra.mxu0 0.0
    %2854 = vmatprep.subr.mxu0 0.0
    %2855 = vmatpush1.msra.mxu0 0.0
    %2856 = vmatprep.subr.mxu0 0.0
    %2857 = vmatpush1.msra.mxu0 0.0
    %2858 = vmatprep.subr.mxu0 0.0
    %2859 = vmatpush1.msra.mxu0 0.0
    %2860 = vmatprep.subr.mxu0 0.0
    %2861 = vmatpush1.msra.mxu0 0.0
    %2862 = vmatprep.subr.mxu0 0.0
    %2863 = vmatpush1.msra.mxu0 0.0
    %2864 = vmatprep.subr.mxu0 0.0
    %2865 = vmatpush1.msra.mxu0 0.0
    %2866 = vmatprep.subr.mxu0 0.0
    %2867 = vmatpush1.msra.mxu0 0.0
    %2868 = vmatprep.subr.mxu0 0.0
    %2869 = vmatpush1.msra.mxu0 0.0
    %2870 = vmatprep.subr.mxu0 0.0
    %2871 = vmatpush1.msra.mxu0 0.0
    %2872 = vmatprep.subr.mxu0 0.0
    %2873 = vmatpush1.msra.mxu0 0.0
    %2874 = vmatprep.subr.mxu0 0.0
    %2875 = vmatpush1.msra.mxu0 0.0
    %2876 = vmatprep.subr.mxu0 0.0
    %2877 = vmatpush1.msra.mxu0 0.0
    %2878 = vmatprep.subr.mxu0 0.0
    %2879 = vmatpush1.msra.mxu0 0.0
    %2880 = vmatprep.subr.mxu0 0.0
    %2881 = vmatpush1.msra.mxu0 0.0
    %2882 = vmatprep.mubr.f32.mxu0 0.0
    %2883 = vmatmul.mubr.f32.gmra.mrb[0].mxu0 %v2816
    %v2884 = vpop.f32.mrb[0].mxu0
    %v2885 = vadd.f32 0.0, %v2884
    %v2886 = vpop.f32.mrb[0].mxu0
    %2887 = vdwg.mxu0
    %v2888 = vadd.f32 %v2804, %v2885
    %v2889 = vld [vmem:[#allocation3 + $0xc] sm:$0x3]
    %s2890 = scalar_lea.vmem [#allocation2], 384
    %v2891 = vld [vmem:[%s2890] sm:$0xff]
    %v2892 = vld [vmem:[%s2890 + $0x8] sm:$0xff]
    %v2893 = vld [vmem:[%s2890 + $0x10] sm:$0xff]
    %v2894 = vld [vmem:[%s2890 + $0x18] sm:$0xff]
    %v2895 = vld [vmem:[%s2890 + $0x20] sm:$0xff]
    %v2896 = vld [vmem:[%s2890 + $0x28] sm:$0xff]
    %v2897 = vld [vmem:[%s2890 + $0x30] sm:$0xff]
    %v2898 = vld [vmem:[%s2890 + $0x38] sm:$0xff]
    %v2900 = vsel %vm2367, %v2889, 0
    %2902 = vmatprep.subr.mxu0 0.0
    %2903 = vmatpush1.msra.mxu0 %v2891
    %2904 = vmatprep.subr.mxu0 0.0
    %2905 = vmatpush1.msra.mxu0 %v2892
    %2906 = vmatprep.subr.mxu0 0.0
    %2907 = vmatpush1.msra.mxu0 %v2893
    %2908 = vmatprep.subr.mxu0 0.0
    %2909 = vmatpush1.msra.mxu0 %v2894
    %2910 = vmatprep.subr.mxu0 0.0
    %2911 = vmatpush1.msra.mxu0 %v2895
    %2912 = vmatprep.subr.mxu0 0.0
    %2913 = vmatpush1.msra.mxu0 %v2896
    %2914 = vmatprep.subr.mxu0 0.0
    %2915 = vmatpush1.msra.mxu0 %v2897
    %2916 = vmatprep.subr.mxu0 0.0
    %2917 = vmatpush1.msra.mxu0 %v2898
    %2918 = vmatprep.subr.mxu0 0.0
    %2919 = vmatpush1.msra.mxu0 0.0
    %2920 = vmatprep.subr.mxu0 0.0
    %2921 = vmatpush1.msra.mxu0 0.0
    %2922 = vmatprep.subr.mxu0 0.0
    %2923 = vmatpush1.msra.mxu0 0.0
    %2924 = vmatprep.subr.mxu0 0.0
    %2925 = vmatpush1.msra.mxu0 0.0
    %2926 = vmatprep.subr.mxu0 0.0
    %2927 = vmatpush1.msra.mxu0 0.0
    %2928 = vmatprep.subr.mxu0 0.0
    %2929 = vmatpush1.msra.mxu0 0.0
    %2930 = vmatprep.subr.mxu0 0.0
    %2931 = vmatpush1.msra.mxu0 0.0
    %2932 = vmatprep.subr.mxu0 0.0
    %2933 = vmatpush1.msra.mxu0 0.0
    %2934 = vmatprep.subr.mxu0 0.0
    %2935 = vmatpush1.msra.mxu0 0.0
    %2936 = vmatprep.subr.mxu0 0.0
    %2937 = vmatpush1.msra.mxu0 0.0
    %2938 = vmatprep.subr.mxu0 0.0
    %2939 = vmatpush1.msra.mxu0 0.0
    %2940 = vmatprep.subr.mxu0 0.0
    %2941 = vmatpush1.msra.mxu0 0.0
    %2942 = vmatprep.subr.mxu0 0.0
    %2943 = vmatpush1.msra.mxu0 0.0
    %2944 = vmatprep.subr.mxu0 0.0
    %2945 = vmatpush1.msra.mxu0 0.0
    %2946 = vmatprep.subr.mxu0 0.0
    %2947 = vmatpush1.msra.mxu0 0.0
    %2948 = vmatprep.subr.mxu0 0.0
    %2949 = vmatpush1.msra.mxu0 0.0
    %2950 = vmatprep.subr.mxu0 0.0
    %2951 = vmatpush1.msra.mxu0 0.0
    %2952 = vmatprep.subr.mxu0 0.0
    %2953 = vmatpush1.msra.mxu0 0.0
    %2954 = vmatprep.subr.mxu0 0.0
    %2955 = vmatpush1.msra.mxu0 0.0
    %2956 = vmatprep.subr.mxu0 0.0
    %2957 = vmatpush1.msra.mxu0 0.0
    %2958 = vmatprep.subr.mxu0 0.0
    %2959 = vmatpush1.msra.mxu0 0.0
    %2960 = vmatprep.subr.mxu0 0.0
    %2961 = vmatpush1.msra.mxu0 0.0
    %2962 = vmatprep.subr.mxu0 0.0
    %2963 = vmatpush1.msra.mxu0 0.0
    %2964 = vmatprep.subr.mxu0 0.0
    %2965 = vmatpush1.msra.mxu0 0.0
    %2966 = vmatprep.mubr.f32.mxu0 0.0
    %2967 = vmatmul.mubr.f32.gmra.mrb[0].mxu0 %v2900
    %v2968 = vpop.f32.mrb[0].mxu0
    %v2969 = vadd.f32 0.0, %v2968
    %v2970 = vpop.f32.mrb[0].mxu0
    %2971 = vdwg.mxu0
    %v2972 = vadd.f32 %v2888, %v2969
    %v2973 = vld [vmem:[#allocation3 + $0xe] sm:$0x3]
    %s2974 = scalar_lea.vmem [#allocation2], 448
    %v2975 = vld [vmem:[%s2974] sm:$0xff]
    %v2976 = vld [vmem:[%s2974 + $0x8] sm:$0xff]
    %v2977 = vld [vmem:[%s2974 + $0x10] sm:$0xff]
    %v2978 = vld [vmem:[%s2974 + $0x18] sm:$0xff]
    %v2979 = vld [vmem:[%s2974 + $0x20] sm:$0xff]
    %v2980 = vld [vmem:[%s2974 + $0x28] sm:$0xff]
    %v2981 = vld [vmem:[%s2974 + $0x30] sm:$0xff]
    %v2982 = vld [vmem:[%s2974 + $0x38] sm:$0xff]
    %v2984 = vsel %vm2367, %v2973, 0
    %2986 = vmatprep.subr.mxu0 0.0
    %2987 = vmatpush1.msra.mxu0 %v2975
    %2988 = vmatprep.subr.mxu0 0.0
    %2989 = vmatpush1.msra.mxu0 %v2976
    %2990 = vmatprep.subr.mxu0 0.0
    %2991 = vmatpush1.msra.mxu0 %v2977
    %2992 = vmatprep.subr.mxu0 0.0
    %2993 = vmatpush1.msra.mxu0 %v2978
    %2994 = vmatprep.subr.mxu0 0.0
    %2995 = vmatpush1.msra.mxu0 %v2979
    %2996 = vmatprep.subr.mxu0 0.0
    %2997 = vmatpush1.msra.mxu0 %v2980
    %2998 = vmatprep.subr.mxu0 0.0
    %2999 = vmatpush1.msra.mxu0 %v2981
    %3000 = vmatprep.subr.mxu0 0.0
    %3001 = vmatpush1.msra.mxu0 %v2982
    %3002 = vmatprep.subr.mxu0 0.0
    %3003 = vmatpush1.msra.mxu0 0.0
    %3004 = vmatprep.subr.mxu0 0.0
    %3005 = vmatpush1.msra.mxu0 0.0
    %3006 = vmatprep.subr.mxu0 0.0
    %3007 = vmatpush1.msra.mxu0 0.0
    %3008 = vmatprep.subr.mxu0 0.0
    %3009 = vmatpush1.msra.mxu0 0.0
    %3010 = vmatprep.subr.mxu0 0.0
    %3011 = vmatpush1.msra.mxu0 0.0
    %3012 = vmatprep.subr.mxu0 0.0
    %3013 = vmatpush1.msra.mxu0 0.0
    %3014 = vmatprep.subr.mxu0 0.0
    %3015 = vmatpush1.msra.mxu0 0.0
    %3016 = vmatprep.subr.mxu0 0.0
    %3017 = vmatpush1.msra.mxu0 0.0
    %3018 = vmatprep.subr.mxu0 0.0
    %3019 = vmatpush1.msra.mxu0 0.0
    %3020 = vmatprep.subr.mxu0 0.0
    %3021 = vmatpush1.msra.mxu0 0.0
    %3022 = vmatprep.subr.mxu0 0.0
    %3023 = vmatpush1.msra.mxu0 0.0
    %3024 = vmatprep.subr.mxu0 0.0
    %3025 = vmatpush1.msra.mxu0 0.0
    %3026 = vmatprep.subr.mxu0 0.0
    %3027 = vmatpush1.msra.mxu0 0.0
    %3028 = vmatprep.subr.mxu0 0.0
    %3029 = vmatpush1.msra.mxu0 0.0
    %3030 = vmatprep.subr.mxu0 0.0
    %3031 = vmatpush1.msra.mxu0 0.0
    %3032 = vmatprep.subr.mxu0 0.0
    %3033 = vmatpush1.msra.mxu0 0.0
    %3034 = vmatprep.subr.mxu0 0.0
    %3035 = vmatpush1.msra.mxu0 0.0
    %3036 = vmatprep.subr.mxu0 0.0
    %3037 = vmatpush1.msra.mxu0 0.0
    %3038 = vmatprep.subr.mxu0 0.0
    %3039 = vmatpush1.msra.mxu0 0.0
    %3040 = vmatprep.subr.mxu0 0.0
    %3041 = vmatpush1.msra.mxu0 0.0
    %3042 = vmatprep.subr.mxu0 0.0
    %3043 = vmatpush1.msra.mxu0 0.0
    %3044 = vmatprep.subr.mxu0 0.0
    %3045 = vmatpush1.msra.mxu0 0.0
    %3046 = vmatprep.subr.mxu0 0.0
    %3047 = vmatpush1.msra.mxu0 0.0
    %3048 = vmatprep.subr.mxu0 0.0
    %3049 = vmatpush1.msra.mxu0 0.0
    %3050 = vmatprep.mubr.f32.mxu0 0.0
    %3051 = vmatmul.mubr.f32.gmra.mrb[0].mxu0 %v2984
    %v3052 = vpop.f32.mrb[0].mxu0
    %v3053 = vadd.f32 0.0, %v3052
    %v3054 = vpop.f32.mrb[0].mxu0
    %3055 = vdwg.mxu0
    %v3056 = vadd.f32 %v2972, %v3053
    %v3057 = vld [vmem:[#allocation3 + $0x10] sm:$0x3]
    %s3058 = scalar_lea.vmem [#allocation2], 512
    %v3059 = vld [vmem:[%s3058] sm:$0xff]
    %v3060 = vld [vmem:[%s3058 + $0x8] sm:$0xff]
    %v3061 = vld [vmem:[%s3058 + $0x10] sm:$0xff]
    %v3062 = vld [vmem:[%s3058 + $0x18] sm:$0xff]
    %v3063 = vld [vmem:[%s3058 + $0x20] sm:$0xff]
    %v3064 = vld [vmem:[%s3058 + $0x28] sm:$0xff]
    %v3065 = vld [vmem:[%s3058 + $0x30] sm:$0xff]
    %v3066 = vld [vmem:[%s3058 + $0x38] sm:$0xff]
    %v3068 = vsel %vm2367, %v3057, 0
    %3070 = vmatprep.subr.mxu0 0.0
    %3071 = vmatpush1.msra.mxu0 %v3059
    %3072 = vmatprep.subr.mxu0 0.0
    %3073 = vmatpush1.msra.mxu0 %v3060
    %3074 = vmatprep.subr.mxu0 0.0
    %3075 = vmatpush1.msra.mxu0 %v3061
    %3076 = vmatprep.subr.mxu0 0.0
    %3077 = vmatpush1.msra.mxu0 %v3062
    %3078 = vmatprep.subr.mxu0 0.0
    %3079 = vmatpush1.msra.mxu0 %v3063
    %3080 = vmatprep.subr.mxu0 0.0
    %3081 = vmatpush1.msra.mxu0 %v3064
    %3082 = vmatprep.subr.mxu0 0.0
    %3083 = vmatpush1.msra.mxu0 %v3065
    %3084 = vmatprep.subr.mxu0 0.0
    %3085 = vmatpush1.msra.mxu0 %v3066
    %3086 = vmatprep.subr.mxu0 0.0
    %3087 = vmatpush1.msra.mxu0 0.0
    %3088 = vmatprep.subr.mxu0 0.0
    %3089 = vmatpush1.msra.mxu0 0.0
    %3090 = vmatprep.subr.mxu0 0.0
    %3091 = vmatpush1.msra.mxu0 0.0
    %3092 = vmatprep.subr.mxu0 0.0
    %3093 = vmatpush1.msra.mxu0 0.0
    %3094 = vmatprep.subr.mxu0 0.0
    %3095 = vmatpush1.msra.mxu0 0.0
    %3096 = vmatprep.subr.mxu0 0.0
    %3097 = vmatpush1.msra.mxu0 0.0
    %3098 = vmatprep.subr.mxu0 0.0
    %3099 = vmatpush1.msra.mxu0 0.0
    %3100 = vmatprep.subr.mxu0 0.0
    %3101 = vmatpush1.msra.mxu0 0.0
    %3102 = vmatprep.subr.mxu0 0.0
    %3103 = vmatpush1.msra.mxu0 0.0
    %3104 = vmatprep.subr.mxu0 0.0
    %3105 = vmatpush1.msra.mxu0 0.0
    %3106 = vmatprep.subr.mxu0 0.0
    %3107 = vmatpush1.msra.mxu0 0.0
    %3108 = vmatprep.subr.mxu0 0.0
    %3109 = vmatpush1.msra.mxu0 0.0
    %3110 = vmatprep.subr.mxu0 0.0
    %3111 = vmatpush1.msra.mxu0 0.0
    %3112 = vmatprep.subr.mxu0 0.0
    %3113 = vmatpush1.msra.mxu0 0.0
    %3114 = vmatprep.subr.mxu0 0.0
    %3115 = vmatpush1.msra.mxu0 0.0
    %3116 = vmatprep.subr.mxu0 0.0
    %3117 = vmatpush1.msra.mxu0 0.0
    %3118 = vmatprep.subr.mxu0 0.0
    %3119 = vmatpush1.msra.mxu0 0.0
    %3120 = vmatprep.subr.mxu0 0.0
    %3121 = vmatpush1.msra.mxu0 0.0
    %3122 = vmatprep.subr.mxu0 0.0
    %3123 = vmatpush1.msra.mxu0 0.0
    %3124 = vmatprep.subr.mxu0 0.0
    %3125 = vmatpush1.msra.mxu0 0.0
    %3126 = vmatprep.subr.mxu0 0.0
    %3127 = vmatpush1.msra.mxu0 0.0
    %3128 = vmatprep.subr.mxu0 0.0
    %3129 = vmatpush1.msra.mxu0 0.0
    %3130 = vmatprep.subr.mxu0 0.0
    %3131 = vmatpush1.msra.mxu0 0.0
    %3132 = vmatprep.subr.mxu0 0.0
    %3133 = vmatpush1.msra.mxu0 0.0
    %3134 = vmatprep.mubr.f32.mxu0 0.0
    %3135 = vmatmul.mubr.f32.gmra.mrb[0].mxu0 %v3068
    %v3136 = vpop.f32.mrb[0].mxu0
    %v3137 = vadd.f32 0.0, %v3136
    %v3138 = vpop.f32.mrb[0].mxu0
    %3139 = vdwg.mxu0
    %v3140 = vadd.f32 %v3056, %v3137
    %v3141 = vld [vmem:[#allocation3 + $0x12] sm:$0x3]
    %s3142 = scalar_lea.vmem [#allocation2], 576
    %v3143 = vld [vmem:[%s3142] sm:$0xff]
    %v3144 = vld [vmem:[%s3142 + $0x8] sm:$0xff]
    %v3145 = vld [vmem:[%s3142 + $0x10] sm:$0xff]
    %v3146 = vld [vmem:[%s3142 + $0x18] sm:$0xff]
    %v3147 = vld [vmem:[%s3142 + $0x20] sm:$0xff]
    %v3148 = vld [vmem:[%s3142 + $0x28] sm:$0xff]
    %v3149 = vld [vmem:[%s3142 + $0x30] sm:$0xff]
    %v3150 = vld [vmem:[%s3142 + $0x38] sm:$0xff]
    %v3152 = vsel %vm2367, %v3141, 0
    %3154 = vmatprep.subr.mxu0 0.0
    %3155 = vmatpush1.msra.mxu0 %v3143
    %3156 = vmatprep.subr.mxu0 0.0
    %3157 = vmatpush1.msra.mxu0 %v3144
    %3158 = vmatprep.subr.mxu0 0.0
    %3159 = vmatpush1.msra.mxu0 %v3145
    %3160 = vmatprep.subr.mxu0 0.0
    %3161 = vmatpush1.msra.mxu0 %v3146
    %3162 = vmatprep.subr.mxu0 0.0
    %3163 = vmatpush1.msra.mxu0 %v3147
    %3164 = vmatprep.subr.mxu0 0.0
    %3165 = vmatpush1.msra.mxu0 %v3148
    %3166 = vmatprep.subr.mxu0 0.0
    %3167 = vmatpush1.msra.mxu0 %v3149
    %3168 = vmatprep.subr.mxu0 0.0
    %3169 = vmatpush1.msra.mxu0 %v3150
    %3170 = vmatprep.subr.mxu0 0.0
    %3171 = vmatpush1.msra.mxu0 0.0
    %3172 = vmatprep.subr.mxu0 0.0
    %3173 = vmatpush1.msra.mxu0 0.0
    %3174 = vmatprep.subr.mxu0 0.0
    %3175 = vmatpush1.msra.mxu0 0.0
    %3176 = vmatprep.subr.mxu0 0.0
    %3177 = vmatpush1.msra.mxu0 0.0
    %3178 = vmatprep.subr.mxu0 0.0
    %3179 = vmatpush1.msra.mxu0 0.0
    %3180 = vmatprep.subr.mxu0 0.0
    %3181 = vmatpush1.msra.mxu0 0.0
    %3182 = vmatprep.subr.mxu0 0.0
    %3183 = vmatpush1.msra.mxu0 0.0
    %3184 = vmatprep.subr.mxu0 0.0
    %3185 = vmatpush1.msra.mxu0 0.0
    %3186 = vmatprep.subr.mxu0 0.0
    %3187 = vmatpush1.msra.mxu0 0.0
    %3188 = vmatprep.subr.mxu0 0.0
    %3189 = vmatpush1.msra.mxu0 0.0
    %3190 = vmatprep.subr.mxu0 0.0
    %3191 = vmatpush1.msra.mxu0 0.0
    %3192 = vmatprep.subr.mxu0 0.0
    %3193 = vmatpush1.msra.mxu0 0.0
    %3194 = vmatprep.subr.mxu0 0.0
    %3195 = vmatpush1.msra.mxu0 0.0
    %3196 = vmatprep.subr.mxu0 0.0
    %3197 = vmatpush1.msra.mxu0 0.0
    %3198 = vmatprep.subr.mxu0 0.0
    %3199 = vmatpush1.msra.mxu0 0.0
    %3200 = vmatprep.subr.mxu0 0.0
    %3201 = vmatpush1.msra.mxu0 0.0
    %3202 = vmatprep.subr.mxu0 0.0
    %3203 = vmatpush1.msra.mxu0 0.0
    %3204 = vmatprep.subr.mxu0 0.0
    %3205 = vmatpush1.msra.mxu0 0.0
    %3206 = vmatprep.subr.mxu0 0.0
    %3207 = vmatpush1.msra.mxu0 0.0
    %3208 = vmatprep.subr.mxu0 0.0
    %3209 = vmatpush1.msra.mxu0 0.0
    %3210 = vmatprep.subr.mxu0 0.0
    %3211 = vmatpush1.msra.mxu0 0.0
    %3212 = vmatprep.subr.mxu0 0.0
    %3213 = vmatpush1.msra.mxu0 0.0
    %3214 = vmatprep.subr.mxu0 0.0
    %3215 = vmatpush1.msra.mxu0 0.0
    %3216 = vmatprep.subr.mxu0 0.0
    %3217 = vmatpush1.msra.mxu0 0.0
    %3218 = vmatprep.mubr.f32.mxu0 0.0
    %3219 = vmatmul.mubr.f32.gmra.mrb[0].mxu0 %v3152
    %v3220 = vpop.f32.mrb[0].mxu0
    %v3221 = vadd.f32 0.0, %v3220
    %v3222 = vpop.f32.mrb[0].mxu0
    %3223 = vdwg.mxu0
    %v3224 = vadd.f32 %v3140, %v3221
    %v3225 = vld [vmem:[#allocation3 + $0x14] sm:$0x3]
    %s3226 = scalar_lea.vmem [#allocation2], 640
    %v3227 = vld [vmem:[%s3226] sm:$0xff]
    %v3228 = vld [vmem:[%s3226 + $0x8] sm:$0xff]
    %v3229 = vld [vmem:[%s3226 + $0x10] sm:$0xff]
    %v3230 = vld [vmem:[%s3226 + $0x18] sm:$0xff]
    %v3231 = vld [vmem:[%s3226 + $0x20] sm:$0xff]
    %v3232 = vld [vmem:[%s3226 + $0x28] sm:$0xff]
    %v3233 = vld [vmem:[%s3226 + $0x30] sm:$0xff]
    %v3234 = vld [vmem:[%s3226 + $0x38] sm:$0xff]
    %v3236 = vsel %vm2367, %v3225, 0
    %3238 = vmatprep.subr.mxu0 0.0
    %3239 = vmatpush1.msra.mxu0 %v3227
    %3240 = vmatprep.subr.mxu0 0.0
    %3241 = vmatpush1.msra.mxu0 %v3228
    %3242 = vmatprep.subr.mxu0 0.0
    %3243 = vmatpush1.msra.mxu0 %v3229
    %3244 = vmatprep.subr.mxu0 0.0
    %3245 = vmatpush1.msra.mxu0 %v3230
    %3246 = vmatprep.subr.mxu0 0.0
    %3247 = vmatpush1.msra.mxu0 %v3231
    %3248 = vmatprep.subr.mxu0 0.0
    %3249 = vmatpush1.msra.mxu0 %v3232
    %3250 = vmatprep.subr.mxu0 0.0
    %3251 = vmatpush1.msra.mxu0 %v3233
    %3252 = vmatprep.subr.mxu0 0.0
    %3253 = vmatpush1.msra.mxu0 %v3234
    %3254 = vmatprep.subr.mxu0 0.0
    %3255 = vmatpush1.msra.mxu0 0.0
    %3256 = vmatprep.subr.mxu0 0.0
    %3257 = vmatpush1.msra.mxu0 0.0
    %3258 = vmatprep.subr.mxu0 0.0
    %3259 = vmatpush1.msra.mxu0 0.0
    %3260 = vmatprep.subr.mxu0 0.0
    %3261 = vmatpush1.msra.mxu0 0.0
    %3262 = vmatprep.subr.mxu0 0.0
    %3263 = vmatpush1.msra.mxu0 0.0
    %3264 = vmatprep.subr.mxu0 0.0
    %3265 = vmatpush1.msra.mxu0 0.0
    %3266 = vmatprep.subr.mxu0 0.0
    %3267 = vmatpush1.msra.mxu0 0.0
    %3268 = vmatprep.subr.mxu0 0.0
    %3269 = vmatpush1.msra.mxu0 0.0
    %3270 = vmatprep.subr.mxu0 0.0
    %3271 = vmatpush1.msra.mxu0 0.0
    %3272 = vmatprep.subr.mxu0 0.0
    %3273 = vmatpush1.msra.mxu0 0.0
    %3274 = vmatprep.subr.mxu0 0.0
    %3275 = vmatpush1.msra.mxu0 0.0
    %3276 = vmatprep.subr.mxu0 0.0
    %3277 = vmatpush1.msra.mxu0 0.0
    %3278 = vmatprep.subr.mxu0 0.0
    %3279 = vmatpush1.msra.mxu0 0.0
    %3280 = vmatprep.subr.mxu0 0.0
    %3281 = vmatpush1.msra.mxu0 0.0
    %3282 = vmatprep.subr.mxu0 0.0
    %3283 = vmatpush1.msra.mxu0 0.0
    %3284 = vmatprep.subr.mxu0 0.0
    %3285 = vmatpush1.msra.mxu0 0.0
    %3286 = vmatprep.subr.mxu0 0.0
    %3287 = vmatpush1.msra.mxu0 0.0
    %3288 = vmatprep.subr.mxu0 0.0
    %3289 = vmatpush1.msra.mxu0 0.0
    %3290 = vmatprep.subr.mxu0 0.0
    %3291 = vmatpush1.msra.mxu0 0.0
    %3292 = vmatprep.subr.mxu0 0.0
    %3293 = vmatpush1.msra.mxu0 0.0
    %3294 = vmatprep.subr.mxu0 0.0
    %3295 = vmatpush1.msra.mxu0 0.0
    %3296 = vmatprep.subr.mxu0 0.0
    %3297 = vmatpush1.msra.mxu0 0.0
    %3298 = vmatprep.subr.mxu0 0.0
    %3299 = vmatpush1.msra.mxu0 0.0
    %3300 = vmatprep.subr.mxu0 0.0
    %3301 = vmatpush1.msra.mxu0 0.0
    %3302 = vmatprep.mubr.f32.mxu0 0.0
    %3303 = vmatmul.mubr.f32.gmra.mrb[0].mxu0 %v3236
    %v3304 = vpop.f32.mrb[0].mxu0
    %v3305 = vadd.f32 0.0, %v3304
    %v3306 = vpop.f32.mrb[0].mxu0
    %3307 = vdwg.mxu0
    %v3308 = vadd.f32 %v3224, %v3305
    %v3309 = vld [vmem:[#allocation3 + $0x16] sm:$0x3]
    %s3310 = scalar_lea.vmem [#allocation2], 704
    %v3311 = vld [vmem:[%s3310] sm:$0xff]
    %v3312 = vld [vmem:[%s3310 + $0x8] sm:$0xff]
    %v3313 = vld [vmem:[%s3310 + $0x10] sm:$0xff]
    %v3314 = vld [vmem:[%s3310 + $0x18] sm:$0xff]
    %v3315 = vld [vmem:[%s3310 + $0x20] sm:$0xff]
    %v3316 = vld [vmem:[%s3310 + $0x28] sm:$0xff]
    %v3317 = vld [vmem:[%s3310 + $0x30] sm:$0xff]
    %v3318 = vld [vmem:[%s3310 + $0x38] sm:$0xff]
    %v3320 = vsel %vm2367, %v3309, 0
    %3322 = vmatprep.subr.mxu0 0.0
    %3323 = vmatpush1.msra.mxu0 %v3311
    %3324 = vmatprep.subr.mxu0 0.0
    %3325 = vmatpush1.msra.mxu0 %v3312
    %3326 = vmatprep.subr.mxu0 0.0
    %3327 = vmatpush1.msra.mxu0 %v3313
    %3328 = vmatprep.subr.mxu0 0.0
    %3329 = vmatpush1.msra.mxu0 %v3314
    %3330 = vmatprep.subr.mxu0 0.0
    %3331 = vmatpush1.msra.mxu0 %v3315
    %3332 = vmatprep.subr.mxu0 0.0
    %3333 = vmatpush1.msra.mxu0 %v3316
    %3334 = vmatprep.subr.mxu0 0.0
    %3335 = vmatpush1.msra.mxu0 %v3317
    %3336 = vmatprep.subr.mxu0 0.0
    %3337 = vmatpush1.msra.mxu0 %v3318
    %3338 = vmatprep.subr.mxu0 0.0
    %3339 = vmatpush1.msra.mxu0 0.0
    %3340 = vmatprep.subr.mxu0 0.0
    %3341 = vmatpush1.msra.mxu0 0.0
    %3342 = vmatprep.subr.mxu0 0.0
    %3343 = vmatpush1.msra.mxu0 0.0
    %3344 = vmatprep.subr.mxu0 0.0
    %3345 = vmatpush1.msra.mxu0 0.0
    %3346 = vmatprep.subr.mxu0 0.0
    %3347 = vmatpush1.msra.mxu0 0.0
    %3348 = vmatprep.subr.mxu0 0.0
    %3349 = vmatpush1.msra.mxu0 0.0
    %3350 = vmatprep.subr.mxu0 0.0
    %3351 = vmatpush1.msra.mxu0 0.0
    %3352 = vmatprep.subr.mxu0 0.0
    %3353 = vmatpush1.msra.mxu0 0.0
    %3354 = vmatprep.subr.mxu0 0.0
    %3355 = vmatpush1.msra.mxu0 0.0
    %3356 = vmatprep.subr.mxu0 0.0
    %3357 = vmatpush1.msra.mxu0 0.0
    %3358 = vmatprep.subr.mxu0 0.0
    %3359 = vmatpush1.msra.mxu0 0.0
    %3360 = vmatprep.subr.mxu0 0.0
    %3361 = vmatpush1.msra.mxu0 0.0
    %3362 = vmatprep.subr.mxu0 0.0
    %3363 = vmatpush1.msra.mxu0 0.0
    %3364 = vmatprep.subr.mxu0 0.0
    %3365 = vmatpush1.msra.mxu0 0.0
    %3366 = vmatprep.subr.mxu0 0.0
    %3367 = vmatpush1.msra.mxu0 0.0
    %3368 = vmatprep.subr.mxu0 0.0
    %3369 = vmatpush1.msra.mxu0 0.0
    %3370 = vmatprep.subr.mxu0 0.0
    %3371 = vmatpush1.msra.mxu0 0.0
    %3372 = vmatprep.subr.mxu0 0.0
    %3373 = vmatpush1.msra.mxu0 0.0
    %3374 = vmatprep.subr.mxu0 0.0
    %3375 = vmatpush1.msra.mxu0 0.0
    %3376 = vmatprep.subr.mxu0 0.0
    %3377 = vmatpush1.msra.mxu0 0.0
    %3378 = vmatprep.subr.mxu0 0.0
    %3379 = vmatpush1.msra.mxu0 0.0
    %3380 = vmatprep.subr.mxu0 0.0
    %3381 = vmatpush1.msra.mxu0 0.0
    %3382 = vmatprep.subr.mxu0 0.0
    %3383 = vmatpush1.msra.mxu0 0.0
    %3384 = vmatprep.subr.mxu0 0.0
    %3385 = vmatpush1.msra.mxu0 0.0
    %3386 = vmatprep.mubr.f32.mxu0 0.0
    %3387 = vmatmul.mubr.f32.gmra.mrb[0].mxu0 %v3320
    %v3388 = vpop.f32.mrb[0].mxu0
    %v3389 = vadd.f32 0.0, %v3388
    %v3390 = vpop.f32.mrb[0].mxu0
    %3391 = vdwg.mxu0
    %v3392 = vadd.f32 %v3308, %v3389
    %v3393 = vld [vmem:[#allocation3 + $0x18] sm:$0x3]
    %s3394 = scalar_lea.vmem [#allocation2], 768
    %v3395 = vld [vmem:[%s3394] sm:$0xff]
    %v3396 = vld [vmem:[%s3394 + $0x8] sm:$0xff]
    %v3397 = vld [vmem:[%s3394 + $0x10] sm:$0xff]
    %v3398 = vld [vmem:[%s3394 + $0x18] sm:$0xff]
    %v3399 = vld [vmem:[%s3394 + $0x20] sm:$0xff]
    %v3400 = vld [vmem:[%s3394 + $0x28] sm:$0xff]
    %v3401 = vld [vmem:[%s3394 + $0x30] sm:$0xff]
    %v3402 = vld [vmem:[%s3394 + $0x38] sm:$0xff]
    %v3404 = vsel %vm2367, %v3393, 0
    %3406 = vmatprep.subr.mxu0 0.0
    %3407 = vmatpush1.msra.mxu0 %v3395
    %3408 = vmatprep.subr.mxu0 0.0
    %3409 = vmatpush1.msra.mxu0 %v3396
    %3410 = vmatprep.subr.mxu0 0.0
    %3411 = vmatpush1.msra.mxu0 %v3397
    %3412 = vmatprep.subr.mxu0 0.0
    %3413 = vmatpush1.msra.mxu0 %v3398
    %3414 = vmatprep.subr.mxu0 0.0
    %3415 = vmatpush1.msra.mxu0 %v3399
    %3416 = vmatprep.subr.mxu0 0.0
    %3417 = vmatpush1.msra.mxu0 %v3400
    %3418 = vmatprep.subr.mxu0 0.0
    %3419 = vmatpush1.msra.mxu0 %v3401
    %3420 = vmatprep.subr.mxu0 0.0
    %3421 = vmatpush1.msra.mxu0 %v3402
    %3422 = vmatprep.subr.mxu0 0.0
    %3423 = vmatpush1.msra.mxu0 0.0
    %3424 = vmatprep.subr.mxu0 0.0
    %3425 = vmatpush1.msra.mxu0 0.0
    %3426 = vmatprep.subr.mxu0 0.0
    %3427 = vmatpush1.msra.mxu0 0.0
    %3428 = vmatprep.subr.mxu0 0.0
    %3429 = vmatpush1.msra.mxu0 0.0
    %3430 = vmatprep.subr.mxu0 0.0
    %3431 = vmatpush1.msra.mxu0 0.0
    %3432 = vmatprep.subr.mxu0 0.0
    %3433 = vmatpush1.msra.mxu0 0.0
    %3434 = vmatprep.subr.mxu0 0.0
    %3435 = vmatpush1.msra.mxu0 0.0
    %3436 = vmatprep.subr.mxu0 0.0
    %3437 = vmatpush1.msra.mxu0 0.0
    %3438 = vmatprep.subr.mxu0 0.0
    %3439 = vmatpush1.msra.mxu0 0.0
    %3440 = vmatprep.subr.mxu0 0.0
    %3441 = vmatpush1.msra.mxu0 0.0
    %3442 = vmatprep.subr.mxu0 0.0
    %3443 = vmatpush1.msra.mxu0 0.0
    %3444 = vmatprep.subr.mxu0 0.0
    %3445 = vmatpush1.msra.mxu0 0.0
    %3446 = vmatprep.subr.mxu0 0.0
    %3447 = vmatpush1.msra.mxu0 0.0
    %3448 = vmatprep.subr.mxu0 0.0
    %3449 = vmatpush1.msra.mxu0 0.0
    %3450 = vmatprep.subr.mxu0 0.0
    %3451 = vmatpush1.msra.mxu0 0.0
    %3452 = vmatprep.subr.mxu0 0.0
    %3453 = vmatpush1.msra.mxu0 0.0
    %3454 = vmatprep.subr.mxu0 0.0
    %3455 = vmatpush1.msra.mxu0 0.0
    %3456 = vmatprep.subr.mxu0 0.0
    %3457 = vmatpush1.msra.mxu0 0.0
    %3458 = vmatprep.subr.mxu0 0.0
    %3459 = vmatpush1.msra.mxu0 0.0
    %3460 = vmatprep.subr.mxu0 0.0
    %3461 = vmatpush1.msra.mxu0 0.0
    %3462 = vmatprep.subr.mxu0 0.0
    %3463 = vmatpush1.msra.mxu0 0.0
    %3464 = vmatprep.subr.mxu0 0.0
    %3465 = vmatpush1.msra.mxu0 0.0
    %3466 = vmatprep.subr.mxu0 0.0
    %3467 = vmatpush1.msra.mxu0 0.0
    %3468 = vmatprep.subr.mxu0 0.0
    %3469 = vmatpush1.msra.mxu0 0.0
    %3470 = vmatprep.mubr.f32.mxu0 0.0
    %3471 = vmatmul.mubr.f32.gmra.mrb[0].mxu0 %v3404
    %v3472 = vpop.f32.mrb[0].mxu0
    %v3473 = vadd.f32 0.0, %v3472
    %v3474 = vpop.f32.mrb[0].mxu0
    %3475 = vdwg.mxu0
    %v3476 = vadd.f32 %v3392, %v3473
    %v3477 = vld [vmem:[#allocation3 + $0x1a] sm:$0x3]
    %s3478 = scalar_lea.vmem [#allocation2], 832
    %v3479 = vld [vmem:[%s3478] sm:$0xff]
    %v3480 = vld [vmem:[%s3478 + $0x8] sm:$0xff]
    %v3481 = vld [vmem:[%s3478 + $0x10] sm:$0xff]
    %v3482 = vld [vmem:[%s3478 + $0x18] sm:$0xff]
    %v3483 = vld [vmem:[%s3478 + $0x20] sm:$0xff]
    %v3484 = vld [vmem:[%s3478 + $0x28] sm:$0xff]
    %v3485 = vld [vmem:[%s3478 + $0x30] sm:$0xff]
    %v3486 = vld [vmem:[%s3478 + $0x38] sm:$0xff]
    %v3488 = vsel %vm2367, %v3477, 0
    %3490 = vmatprep.subr.mxu0 0.0
    %3491 = vmatpush1.msra.mxu0 %v3479
    %3492 = vmatprep.subr.mxu0 0.0
    %3493 = vmatpush1.msra.mxu0 %v3480
    %3494 = vmatprep.subr.mxu0 0.0
    %3495 = vmatpush1.msra.mxu0 %v3481
    %3496 = vmatprep.subr.mxu0 0.0
    %3497 = vmatpush1.msra.mxu0 %v3482
    %3498 = vmatprep.subr.mxu0 0.0
    %3499 = vmatpush1.msra.mxu0 %v3483
    %3500 = vmatprep.subr.mxu0 0.0
    %3501 = vmatpush1.msra.mxu0 %v3484
    %3502 = vmatprep.subr.mxu0 0.0
    %3503 = vmatpush1.msra.mxu0 %v3485
    %3504 = vmatprep.subr.mxu0 0.0
    %3505 = vmatpush1.msra.mxu0 %v3486
    %3506 = vmatprep.subr.mxu0 0.0
    %3507 = vmatpush1.msra.mxu0 0.0
    %3508 = vmatprep.subr.mxu0 0.0
    %3509 = vmatpush1.msra.mxu0 0.0
    %3510 = vmatprep.subr.mxu0 0.0
    %3511 = vmatpush1.msra.mxu0 0.0
    %3512 = vmatprep.subr.mxu0 0.0
    %3513 = vmatpush1.msra.mxu0 0.0
    %3514 = vmatprep.subr.mxu0 0.0
    %3515 = vmatpush1.msra.mxu0 0.0
    %3516 = vmatprep.subr.mxu0 0.0
    %3517 = vmatpush1.msra.mxu0 0.0
    %3518 = vmatprep.subr.mxu0 0.0
    %3519 = vmatpush1.msra.mxu0 0.0
    %3520 = vmatprep.subr.mxu0 0.0
    %3521 = vmatpush1.msra.mxu0 0.0
    %3522 = vmatprep.subr.mxu0 0.0
    %3523 = vmatpush1.msra.mxu0 0.0
    %3524 = vmatprep.subr.mxu0 0.0
    %3525 = vmatpush1.msra.mxu0 0.0
    %3526 = vmatprep.subr.mxu0 0.0
    %3527 = vmatpush1.msra.mxu0 0.0
    %3528 = vmatprep.subr.mxu0 0.0
    %3529 = vmatpush1.msra.mxu0 0.0
    %3530 = vmatprep.subr.mxu0 0.0
    %3531 = vmatpush1.msra.mxu0 0.0
    %3532 = vmatprep.subr.mxu0 0.0
    %3533 = vmatpush1.msra.mxu0 0.0
    %3534 = vmatprep.subr.mxu0 0.0
    %3535 = vmatpush1.msra.mxu0 0.0
    %3536 = vmatprep.subr.mxu0 0.0
    %3537 = vmatpush1.msra.mxu0 0.0
    %3538 = vmatprep.subr.mxu0 0.0
    %3539 = vmatpush1.msra.mxu0 0.0
    %3540 = vmatprep.subr.mxu0 0.0
    %3541 = vmatpush1.msra.mxu0 0.0
    %3542 = vmatprep.subr.mxu0 0.0
    %3543 = vmatpush1.msra.mxu0 0.0
    %3544 = vmatprep.subr.mxu0 0.0
    %3545 = vmatpush1.msra.mxu0 0.0
    %3546 = vmatprep.subr.mxu0 0.0
    %3547 = vmatpush1.msra.mxu0 0.0
    %3548 = vmatprep.subr.mxu0 0.0
    %3549 = vmatpush1.msra.mxu0 0.0
    %3550 = vmatprep.subr.mxu0 0.0
    %3551 = vmatpush1.msra.mxu0 0.0
    %3552 = vmatprep.subr.mxu0 0.0
    %3553 = vmatpush1.msra.mxu0 0.0
    %3554 = vmatprep.mubr.f32.mxu0 0.0
    %3555 = vmatmul.mubr.f32.gmra.mrb[0].mxu0 %v3488
    %v3556 = vpop.f32.mrb[0].mxu0
    %v3557 = vadd.f32 0.0, %v3556
    %v3558 = vpop.f32.mrb[0].mxu0
    %3559 = vdwg.mxu0
    %v3560 = vadd.f32 %v3476, %v3557
    %v3561 = vld [vmem:[#allocation3 + $0x1c] sm:$0x3]
    %s3562 = scalar_lea.vmem [#allocation2], 896
    %v3563 = vld [vmem:[%s3562] sm:$0xff]
    %v3564 = vld [vmem:[%s3562 + $0x8] sm:$0xff]
    %v3565 = vld [vmem:[%s3562 + $0x10] sm:$0xff]
    %v3566 = vld [vmem:[%s3562 + $0x18] sm:$0xff]
    %v3567 = vld [vmem:[%s3562 + $0x20] sm:$0xff]
    %v3568 = vld [vmem:[%s3562 + $0x28] sm:$0xff]
    %v3569 = vld [vmem:[%s3562 + $0x30] sm:$0xff]
    %v3570 = vld [vmem:[%s3562 + $0x38] sm:$0xff]
    %v3572 = vsel %vm2367, %v3561, 0
    %3574 = vmatprep.subr.mxu0 0.0
    %3575 = vmatpush1.msra.mxu0 %v3563
    %3576 = vmatprep.subr.mxu0 0.0
    %3577 = vmatpush1.msra.mxu0 %v3564
    %3578 = vmatprep.subr.mxu0 0.0
    %3579 = vmatpush1.msra.mxu0 %v3565
    %3580 = vmatprep.subr.mxu0 0.0
    %3581 = vmatpush1.msra.mxu0 %v3566
    %3582 = vmatprep.subr.mxu0 0.0
    %3583 = vmatpush1.msra.mxu0 %v3567
    %3584 = vmatprep.subr.mxu0 0.0
    %3585 = vmatpush1.msra.mxu0 %v3568
    %3586 = vmatprep.subr.mxu0 0.0
    %3587 = vmatpush1.msra.mxu0 %v3569
    %3588 = vmatprep.subr.mxu0 0.0
    %3589 = vmatpush1.msra.mxu0 %v3570
    %3590 = vmatprep.subr.mxu0 0.0
    %3591 = vmatpush1.msra.mxu0 0.0
    %3592 = vmatprep.subr.mxu0 0.0
    %3593 = vmatpush1.msra.mxu0 0.0
    %3594 = vmatprep.subr.mxu0 0.0
    %3595 = vmatpush1.msra.mxu0 0.0
    %3596 = vmatprep.subr.mxu0 0.0
    %3597 = vmatpush1.msra.mxu0 0.0
    %3598 = vmatprep.subr.mxu0 0.0
    %3599 = vmatpush1.msra.mxu0 0.0
    %3600 = vmatprep.subr.mxu0 0.0
    %3601 = vmatpush1.msra.mxu0 0.0
    %3602 = vmatprep.subr.mxu0 0.0
    %3603 = vmatpush1.msra.mxu0 0.0
    %3604 = vmatprep.subr.mxu0 0.0
    %3605 = vmatpush1.msra.mxu0 0.0
    %3606 = vmatprep.subr.mxu0 0.0
    %3607 = vmatpush1.msra.mxu0 0.0
    %3608 = vmatprep.subr.mxu0 0.0
    %3609 = vmatpush1.msra.mxu0 0.0
    %3610 = vmatprep.subr.mxu0 0.0
    %3611 = vmatpush1.msra.mxu0 0.0
    %3612 = vmatprep.subr.mxu0 0.0
    %3613 = vmatpush1.msra.mxu0 0.0
    %3614 = vmatprep.subr.mxu0 0.0
    %3615 = vmatpush1.msra.mxu0 0.0
    %3616 = vmatprep.subr.mxu0 0.0
    %3617 = vmatpush1.msra.mxu0 0.0
    %3618 = vmatprep.subr.mxu0 0.0
    %3619 = vmatpush1.msra.mxu0 0.0
    %3620 = vmatprep.subr.mxu0 0.0
    %3621 = vmatpush1.msra.mxu0 0.0
    %3622 = vmatprep.subr.mxu0 0.0
    %3623 = vmatpush1.msra.mxu0 0.0
    %3624 = vmatprep.subr.mxu0 0.0
    %3625 = vmatpush1.msra.mxu0 0.0
    %3626 = vmatprep.subr.mxu0 0.0
    %3627 = vmatpush1.msra.mxu0 0.0
    %3628 = vmatprep.subr.mxu0 0.0
    %3629 = vmatpush1.msra.mxu0 0.0
    %3630 = vmatprep.subr.mxu0 0.0
    %3631 = vmatpush1.msra.mxu0 0.0
    %3632 = vmatprep.subr.mxu0 0.0
    %3633 = vmatpush1.msra.mxu0 0.0
    %3634 = vmatprep.subr.mxu0 0.0
    %3635 = vmatpush1.msra.mxu0 0.0
    %3636 = vmatprep.subr.mxu0 0.0
    %3637 = vmatpush1.msra.mxu0 0.0
    %3638 = vmatprep.mubr.f32.mxu0 0.0
    %3639 = vmatmul.mubr.f32.gmra.mrb[0].mxu0 %v3572
    %v3640 = vpop.f32.mrb[0].mxu0
    %v3641 = vadd.f32 0.0, %v3640
    %v3642 = vpop.f32.mrb[0].mxu0
    %3643 = vdwg.mxu0
    %v3644 = vadd.f32 %v3560, %v3641
    %v3645 = vld [vmem:[#allocation3 + $0x1e] sm:$0x3]
    %s3646 = scalar_lea.vmem [#allocation2], 960
    %v3647 = vld [vmem:[%s3646] sm:$0xff]
    %v3648 = vld [vmem:[%s3646 + $0x8] sm:$0xff]
    %v3649 = vld [vmem:[%s3646 + $0x10] sm:$0xff]
    %v3650 = vld [vmem:[%s3646 + $0x18] sm:$0xff]
    %v3651 = vld [vmem:[%s3646 + $0x20] sm:$0xff]
    %v3652 = vld [vmem:[%s3646 + $0x28] sm:$0xff]
    %v3653 = vld [vmem:[%s3646 + $0x30] sm:$0xff]
    %v3654 = vld [vmem:[%s3646 + $0x38] sm:$0xff]
    %v3656 = vsel %vm2367, %v3645, 0
    %3658 = vmatprep.subr.mxu0 0.0
    %3659 = vmatpush1.msra.mxu0 %v3647
    %3660 = vmatprep.subr.mxu0 0.0
    %3661 = vmatpush1.msra.mxu0 %v3648
    %3662 = vmatprep.subr.mxu0 0.0
    %3663 = vmatpush1.msra.mxu0 %v3649
    %3664 = vmatprep.subr.mxu0 0.0
    %3665 = vmatpush1.msra.mxu0 %v3650
    %3666 = vmatprep.subr.mxu0 0.0
    %3667 = vmatpush1.msra.mxu0 %v3651
    %3668 = vmatprep.subr.mxu0 0.0
    %3669 = vmatpush1.msra.mxu0 %v3652
    %3670 = vmatprep.subr.mxu0 0.0
    %3671 = vmatpush1.msra.mxu0 %v3653
    %3672 = vmatprep.subr.mxu0 0.0
    %3673 = vmatpush1.msra.mxu0 %v3654
    %3674 = vmatprep.subr.mxu0 0.0
    %3675 = vmatpush1.msra.mxu0 0.0
    %3676 = vmatprep.subr.mxu0 0.0
    %3677 = vmatpush1.msra.mxu0 0.0
    %3678 = vmatprep.subr.mxu0 0.0
    %3679 = vmatpush1.msra.mxu0 0.0
    %3680 = vmatprep.subr.mxu0 0.0
    %3681 = vmatpush1.msra.mxu0 0.0
    %3682 = vmatprep.subr.mxu0 0.0
    %3683 = vmatpush1.msra.mxu0 0.0
    %3684 = vmatprep.subr.mxu0 0.0
    %3685 = vmatpush1.msra.mxu0 0.0
    %3686 = vmatprep.subr.mxu0 0.0
    %3687 = vmatpush1.msra.mxu0 0.0
    %3688 = vmatprep.subr.mxu0 0.0
    %3689 = vmatpush1.msra.mxu0 0.0
    %3690 = vmatprep.subr.mxu0 0.0
    %3691 = vmatpush1.msra.mxu0 0.0
    %3692 = vmatprep.subr.mxu0 0.0
    %3693 = vmatpush1.msra.mxu0 0.0
    %3694 = vmatprep.subr.mxu0 0.0
    %3695 = vmatpush1.msra.mxu0 0.0
    %3696 = vmatprep.subr.mxu0 0.0
    %3697 = vmatpush1.msra.mxu0 0.0
    %3698 = vmatprep.subr.mxu0 0.0
    %3699 = vmatpush1.msra.mxu0 0.0
    %3700 = vmatprep.subr.mxu0 0.0
    %3701 = vmatpush1.msra.mxu0 0.0
    %3702 = vmatprep.subr.mxu0 0.0
    %3703 = vmatpush1.msra.mxu0 0.0
    %3704 = vmatprep.subr.mxu0 0.0
    %3705 = vmatpush1.msra.mxu0 0.0
    %3706 = vmatprep.subr.mxu0 0.0
    %3707 = vmatpush1.msra.mxu0 0.0
    %3708 = vmatprep.subr.mxu0 0.0
    %3709 = vmatpush1.msra.mxu0 0.0
    %3710 = vmatprep.subr.mxu0 0.0
    %3711 = vmatpush1.msra.mxu0 0.0
    %3712 = vmatprep.subr.mxu0 0.0
    %3713 = vmatpush1.msra.mxu0 0.0
    %3714 = vmatprep.subr.mxu0 0.0
    %3715 = vmatpush1.msra.mxu0 0.0
    %3716 = vmatprep.subr.mxu0 0.0
    %3717 = vmatpush1.msra.mxu0 0.0
    %3718 = vmatprep.subr.mxu0 0.0
    %3719 = vmatpush1.msra.mxu0 0.0
    %3720 = vmatprep.subr.mxu0 0.0
    %3721 = vmatpush1.msra.mxu0 0.0
    %3722 = vmatprep.mubr.f32.mxu0 0.0
    %3723 = vmatmul.mubr.f32.gmra.mrb[0].mxu0 %v3656
    %v3724 = vpop.f32.mrb[0].mxu0
    %v3725 = vadd.f32 0.0, %v3724
    %v3726 = vpop.f32.mrb[0].mxu0
    %3727 = vdwg.mxu0
    %v3728 = vadd.f32 %v3644, %v3725
    %v3729 = vld [vmem:[#allocation3 + $0x20] sm:$0x3]
    %s3730 = scalar_lea.vmem [#allocation2], 1024
    %v3731 = vld [vmem:[%s3730] sm:$0xff]
    %v3732 = vld [vmem:[%s3730 + $0x8] sm:$0xff]
    %v3733 = vld [vmem:[%s3730 + $0x10] sm:$0xff]
    %v3734 = vld [vmem:[%s3730 + $0x18] sm:$0xff]
    %v3735 = vld [vmem:[%s3730 + $0x20] sm:$0xff]
    %v3736 = vld [vmem:[%s3730 + $0x28] sm:$0xff]
    %v3737 = vld [vmem:[%s3730 + $0x30] sm:$0xff]
    %v3738 = vld [vmem:[%s3730 + $0x38] sm:$0xff]
    %v3740 = vsel %vm2367, %v3729, 0
    %3742 = vmatprep.subr.mxu0 0.0
    %3743 = vmatpush1.msra.mxu0 %v3731
    %3744 = vmatprep.subr.mxu0 0.0
    %3745 = vmatpush1.msra.mxu0 %v3732
    %3746 = vmatprep.subr.mxu0 0.0
    %3747 = vmatpush1.msra.mxu0 %v3733
    %3748 = vmatprep.subr.mxu0 0.0
    %3749 = vmatpush1.msra.mxu0 %v3734
    %3750 = vmatprep.subr.mxu0 0.0
    %3751 = vmatpush1.msra.mxu0 %v3735
    %3752 = vmatprep.subr.mxu0 0.0
    %3753 = vmatpush1.msra.mxu0 %v3736
    %3754 = vmatprep.subr.mxu0 0.0
    %3755 = vmatpush1.msra.mxu0 %v3737
    %3756 = vmatprep.subr.mxu0 0.0
    %3757 = vmatpush1.msra.mxu0 %v3738
    %3758 = vmatprep.subr.mxu0 0.0
    %3759 = vmatpush1.msra.mxu0 0.0
    %3760 = vmatprep.subr.mxu0 0.0
    %3761 = vmatpush1.msra.mxu0 0.0
    %3762 = vmatprep.subr.mxu0 0.0
    %3763 = vmatpush1.msra.mxu0 0.0
    %3764 = vmatprep.subr.mxu0 0.0
    %3765 = vmatpush1.msra.mxu0 0.0
    %3766 = vmatprep.subr.mxu0 0.0
    %3767 = vmatpush1.msra.mxu0 0.0
    %3768 = vmatprep.subr.mxu0 0.0
    %3769 = vmatpush1.msra.mxu0 0.0
    %3770 = vmatprep.subr.mxu0 0.0
    %3771 = vmatpush1.msra.mxu0 0.0
    %3772 = vmatprep.subr.mxu0 0.0
    %3773 = vmatpush1.msra.mxu0 0.0
    %3774 = vmatprep.subr.mxu0 0.0
    %3775 = vmatpush1.msra.mxu0 0.0
    %3776 = vmatprep.subr.mxu0 0.0
    %3777 = vmatpush1.msra.mxu0 0.0
    %3778 = vmatprep.subr.mxu0 0.0
    %3779 = vmatpush1.msra.mxu0 0.0
    %3780 = vmatprep.subr.mxu0 0.0
    %3781 = vmatpush1.msra.mxu0 0.0
    %3782 = vmatprep.subr.mxu0 0.0
    %3783 = vmatpush1.msra.mxu0 0.0
    %3784 = vmatprep.subr.mxu0 0.0
    %3785 = vmatpush1.msra.mxu0 0.0
    %3786 = vmatprep.subr.mxu0 0.0
    %3787 = vmatpush1.msra.mxu0 0.0
    %3788 = vmatprep.subr.mxu0 0.0
    %3789 = vmatpush1.msra.mxu0 0.0
    %3790 = vmatprep.subr.mxu0 0.0
    %3791 = vmatpush1.msra.mxu0 0.0
    %3792 = vmatprep.subr.mxu0 0.0
    %3793 = vmatpush1.msra.mxu0 0.0
    %3794 = vmatprep.subr.mxu0 0.0
    %3795 = vmatpush1.msra.mxu0 0.0
    %3796 = vmatprep.subr.mxu0 0.0
    %3797 = vmatpush1.msra.mxu0 0.0
    %3798 = vmatprep.subr.mxu0 0.0
    %3799 = vmatpush1.msra.mxu0 0.0
    %3800 = vmatprep.subr.mxu0 0.0
    %3801 = vmatpush1.msra.mxu0 0.0
    %3802 = vmatprep.subr.mxu0 0.0
    %3803 = vmatpush1.msra.mxu0 0.0
    %3804 = vmatprep.subr.mxu0 0.0
    %3805 = vmatpush1.msra.mxu0 0.0
    %3806 = vmatprep.mubr.f32.mxu0 0.0
    %3807 = vmatmul.mubr.f32.gmra.mrb[0].mxu0 %v3740
    %v3808 = vpop.f32.mrb[0].mxu0
    %v3809 = vadd.f32 0.0, %v3808
    %v3810 = vpop.f32.mrb[0].mxu0
    %3811 = vdwg.mxu0
    %v3812 = vadd.f32 %v3728, %v3809
    %v3813 = vld [vmem:[#allocation3 + $0x22] sm:$0x3]
    %s3814 = scalar_lea.vmem [#allocation2], 1088
    %v3815 = vld [vmem:[%s3814] sm:$0xff]
    %v3816 = vld [vmem:[%s3814 + $0x8] sm:$0xff]
    %v3817 = vld [vmem:[%s3814 + $0x10] sm:$0xff]
    %v3818 = vld [vmem:[%s3814 + $0x18] sm:$0xff]
    %v3819 = vld [vmem:[%s3814 + $0x20] sm:$0xff]
    %v3820 = vld [vmem:[%s3814 + $0x28] sm:$0xff]
    %v3821 = vld [vmem:[%s3814 + $0x30] sm:$0xff]
    %v3822 = vld [vmem:[%s3814 + $0x38] sm:$0xff]
    %v3824 = vsel %vm2367, %v3813, 0
    %3826 = vmatprep.subr.mxu0 0.0
    %3827 = vmatpush1.msra.mxu0 %v3815
    %3828 = vmatprep.subr.mxu0 0.0
    %3829 = vmatpush1.msra.mxu0 %v3816
    %3830 = vmatprep.subr.mxu0 0.0
    %3831 = vmatpush1.msra.mxu0 %v3817
    %3832 = vmatprep.subr.mxu0 0.0
    %3833 = vmatpush1.msra.mxu0 %v3818
    %3834 = vmatprep.subr.mxu0 0.0
    %3835 = vmatpush1.msra.mxu0 %v3819
    %3836 = vmatprep.subr.mxu0 0.0
    %3837 = vmatpush1.msra.mxu0 %v3820
    %3838 = vmatprep.subr.mxu0 0.0
    %3839 = vmatpush1.msra.mxu0 %v3821
    %3840 = vmatprep.subr.mxu0 0.0
    %3841 = vmatpush1.msra.mxu0 %v3822
    %3842 = vmatprep.subr.mxu0 0.0
    %3843 = vmatpush1.msra.mxu0 0.0
    %3844 = vmatprep.subr.mxu0 0.0
    %3845 = vmatpush1.msra.mxu0 0.0
    %3846 = vmatprep.subr.mxu0 0.0
    %3847 = vmatpush1.msra.mxu0 0.0
    %3848 = vmatprep.subr.mxu0 0.0
    %3849 = vmatpush1.msra.mxu0 0.0
    %3850 = vmatprep.subr.mxu0 0.0
    %3851 = vmatpush1.msra.mxu0 0.0
    %3852 = vmatprep.subr.mxu0 0.0
    %3853 = vmatpush1.msra.mxu0 0.0
    %3854 = vmatprep.subr.mxu0 0.0
    %3855 = vmatpush1.msra.mxu0 0.0
    %3856 = vmatprep.subr.mxu0 0.0
    %3857 = vmatpush1.msra.mxu0 0.0
    %3858 = vmatprep.subr.mxu0 0.0
    %3859 = vmatpush1.msra.mxu0 0.0
    %3860 = vmatprep.subr.mxu0 0.0
    %3861 = vmatpush1.msra.mxu0 0.0
    %3862 = vmatprep.subr.mxu0 0.0
    %3863 = vmatpush1.msra.mxu0 0.0
    %3864 = vmatprep.subr.mxu0 0.0
    %3865 = vmatpush1.msra.mxu0 0.0
    %3866 = vmatprep.subr.mxu0 0.0
    %3867 = vmatpush1.msra.mxu0 0.0
    %3868 = vmatprep.subr.mxu0 0.0
    %3869 = vmatpush1.msra.mxu0 0.0
    %3870 = vmatprep.subr.mxu0 0.0
    %3871 = vmatpush1.msra.mxu0 0.0
    %3872 = vmatprep.subr.mxu0 0.0
    %3873 = vmatpush1.msra.mxu0 0.0
    %3874 = vmatprep.subr.mxu0 0.0
    %3875 = vmatpush1.msra.mxu0 0.0
    %3876 = vmatprep.subr.mxu0 0.0
    %3877 = vmatpush1.msra.mxu0 0.0
    %3878 = vmatprep.subr.mxu0 0.0
    %3879 = vmatpush1.msra.mxu0 0.0
    %3880 = vmatprep.subr.mxu0 0.0
    %3881 = vmatpush1.msra.mxu0 0.0
    %3882 = vmatprep.subr.mxu0 0.0
    %3883 = vmatpush1.msra.mxu0 0.0
    %3884 = vmatprep.subr.mxu0 0.0
    %3885 = vmatpush1.msra.mxu0 0.0
    %3886 = vmatprep.subr.mxu0 0.0
    %3887 = vmatpush1.msra.mxu0 0.0
    %3888 = vmatprep.subr.mxu0 0.0
    %3889 = vmatpush1.msra.mxu0 0.0
    %3890 = vmatprep.mubr.f32.mxu0 0.0
    %3891 = vmatmul.mubr.f32.gmra.mrb[0].mxu0 %v3824
    %v3892 = vpop.f32.mrb[0].mxu0
    %v3893 = vadd.f32 0.0, %v3892
    %v3894 = vpop.f32.mrb[0].mxu0
    %3895 = vdwg.mxu0
    %v3896 = vadd.f32 %v3812, %v3893
    %v3897 = vld [vmem:[#allocation3 + $0x24] sm:$0x3]
    %s3898 = scalar_lea.vmem [#allocation2], 1152
    %v3899 = vld [vmem:[%s3898] sm:$0xff]
    %v3900 = vld [vmem:[%s3898 + $0x8] sm:$0xff]
    %v3901 = vld [vmem:[%s3898 + $0x10] sm:$0xff]
    %v3902 = vld [vmem:[%s3898 + $0x18] sm:$0xff]
    %v3903 = vld [vmem:[%s3898 + $0x20] sm:$0xff]
    %v3904 = vld [vmem:[%s3898 + $0x28] sm:$0xff]
    %v3905 = vld [vmem:[%s3898 + $0x30] sm:$0xff]
    %v3906 = vld [vmem:[%s3898 + $0x38] sm:$0xff]
    %v3908 = vsel %vm2367, %v3897, 0
    %3910 = vmatprep.subr.mxu0 0.0
    %3911 = vmatpush1.msra.mxu0 %v3899
    %3912 = vmatprep.subr.mxu0 0.0
    %3913 = vmatpush1.msra.mxu0 %v3900
    %3914 = vmatprep.subr.mxu0 0.0
    %3915 = vmatpush1.msra.mxu0 %v3901
    %3916 = vmatprep.subr.mxu0 0.0
    %3917 = vmatpush1.msra.mxu0 %v3902
    %3918 = vmatprep.subr.mxu0 0.0
    %3919 = vmatpush1.msra.mxu0 %v3903
    %3920 = vmatprep.subr.mxu0 0.0
    %3921 = vmatpush1.msra.mxu0 %v3904
    %3922 = vmatprep.subr.mxu0 0.0
    %3923 = vmatpush1.msra.mxu0 %v3905
    %3924 = vmatprep.subr.mxu0 0.0
    %3925 = vmatpush1.msra.mxu0 %v3906
    %3926 = vmatprep.subr.mxu0 0.0
    %3927 = vmatpush1.msra.mxu0 0.0
    %3928 = vmatprep.subr.mxu0 0.0
    %3929 = vmatpush1.msra.mxu0 0.0
    %3930 = vmatprep.subr.mxu0 0.0
    %3931 = vmatpush1.msra.mxu0 0.0
    %3932 = vmatprep.subr.mxu0 0.0
    %3933 = vmatpush1.msra.mxu0 0.0
    %3934 = vmatprep.subr.mxu0 0.0
    %3935 = vmatpush1.msra.mxu0 0.0
    %3936 = vmatprep.subr.mxu0 0.0
    %3937 = vmatpush1.msra.mxu0 0.0
    %3938 = vmatprep.subr.mxu0 0.0
    %3939 = vmatpush1.msra.mxu0 0.0
    %3940 = vmatprep.subr.mxu0 0.0
    %3941 = vmatpush1.msra.mxu0 0.0
    %3942 = vmatprep.subr.mxu0 0.0
    %3943 = vmatpush1.msra.mxu0 0.0
    %3944 = vmatprep.subr.mxu0 0.0
    %3945 = vmatpush1.msra.mxu0 0.0
    %3946 = vmatprep.subr.mxu0 0.0
    %3947 = vmatpush1.msra.mxu0 0.0
    %3948 = vmatprep.subr.mxu0 0.0
    %3949 = vmatpush1.msra.mxu0 0.0
    %3950 = vmatprep.subr.mxu0 0.0
    %3951 = vmatpush1.msra.mxu0 0.0
    %3952 = vmatprep.subr.mxu0 0.0
    %3953 = vmatpush1.msra.mxu0 0.0
    %3954 = vmatprep.subr.mxu0 0.0
    %3955 = vmatpush1.msra.mxu0 0.0
    %3956 = vmatprep.subr.mxu0 0.0
    %3957 = vmatpush1.msra.mxu0 0.0
    %3958 = vmatprep.subr.mxu0 0.0
    %3959 = vmatpush1.msra.mxu0 0.0
    %3960 = vmatprep.subr.mxu0 0.0
    %3961 = vmatpush1.msra.mxu0 0.0
    %3962 = vmatprep.subr.mxu0 0.0
    %3963 = vmatpush1.msra.mxu0 0.0
    %3964 = vmatprep.subr.mxu0 0.0
    %3965 = vmatpush1.msra.mxu0 0.0
    %3966 = vmatprep.subr.mxu0 0.0
    %3967 = vmatpush1.msra.mxu0 0.0
    %3968 = vmatprep.subr.mxu0 0.0
    %3969 = vmatpush1.msra.mxu0 0.0
    %3970 = vmatprep.subr.mxu0 0.0
    %3971 = vmatpush1.msra.mxu0 0.0
    %3972 = vmatprep.subr.mxu0 0.0
    %3973 = vmatpush1.msra.mxu0 0.0
    %3974 = vmatprep.mubr.f32.mxu0 0.0
    %3975 = vmatmul.mubr.f32.gmra.mrb[0].mxu0 %v3908
    %v3976 = vpop.f32.mrb[0].mxu0
    %v3977 = vadd.f32 0.0, %v3976
    %v3978 = vpop.f32.mrb[0].mxu0
    %3979 = vdwg.mxu0
    %v3980 = vadd.f32 %v3896, %v3977
    %v3981 = vld [vmem:[#allocation3 + $0x26] sm:$0x3]
    %s3982 = scalar_lea.vmem [#allocation2], 1216
    %v3983 = vld [vmem:[%s3982] sm:$0xff]
    %v3984 = vld [vmem:[%s3982 + $0x8] sm:$0xff]
    %v3985 = vld [vmem:[%s3982 + $0x10] sm:$0xff]
    %v3986 = vld [vmem:[%s3982 + $0x18] sm:$0xff]
    %v3987 = vld [vmem:[%s3982 + $0x20] sm:$0xff]
    %v3988 = vld [vmem:[%s3982 + $0x28] sm:$0xff]
    %v3989 = vld [vmem:[%s3982 + $0x30] sm:$0xff]
    %v3990 = vld [vmem:[%s3982 + $0x38] sm:$0xff]
    %v3992 = vsel %vm2367, %v3981, 0
    %3994 = vmatprep.subr.mxu0 0.0
    %3995 = vmatpush1.msra.mxu0 %v3983
    %3996 = vmatprep.subr.mxu0 0.0
    %3997 = vmatpush1.msra.mxu0 %v3984
    %3998 = vmatprep.subr.mxu0 0.0
    %3999 = vmatpush1.msra.mxu0 %v3985
    %4000 = vmatprep.subr.mxu0 0.0
    %4001 = vmatpush1.msra.mxu0 %v3986
    %4002 = vmatprep.subr.mxu0 0.0
    %4003 = vmatpush1.msra.mxu0 %v3987
    %4004 = vmatprep.subr.mxu0 0.0
    %4005 = vmatpush1.msra.mxu0 %v3988
    %4006 = vmatprep.subr.mxu0 0.0
    %4007 = vmatpush1.msra.mxu0 %v3989
    %4008 = vmatprep.subr.mxu0 0.0
    %4009 = vmatpush1.msra.mxu0 %v3990
    %4010 = vmatprep.subr.mxu0 0.0
    %4011 = vmatpush1.msra.mxu0 0.0
    %4012 = vmatprep.subr.mxu0 0.0
    %4013 = vmatpush1.msra.mxu0 0.0
    %4014 = vmatprep.subr.mxu0 0.0
    %4015 = vmatpush1.msra.mxu0 0.0
    %4016 = vmatprep.subr.mxu0 0.0
    %4017 = vmatpush1.msra.mxu0 0.0
    %4018 = vmatprep.subr.mxu0 0.0
    %4019 = vmatpush1.msra.mxu0 0.0
    %4020 = vmatprep.subr.mxu0 0.0
    %4021 = vmatpush1.msra.mxu0 0.0
    %4022 = vmatprep.subr.mxu0 0.0
    %4023 = vmatpush1.msra.mxu0 0.0
    %4024 = vmatprep.subr.mxu0 0.0
    %4025 = vmatpush1.msra.mxu0 0.0
    %4026 = vmatprep.subr.mxu0 0.0
    %4027 = vmatpush1.msra.mxu0 0.0
    %4028 = vmatprep.subr.mxu0 0.0
    %4029 = vmatpush1.msra.mxu0 0.0
    %4030 = vmatprep.subr.mxu0 0.0
    %4031 = vmatpush1.msra.mxu0 0.0
    %4032 = vmatprep.subr.mxu0 0.0
    %4033 = vmatpush1.msra.mxu0 0.0
    %4034 = vmatprep.subr.mxu0 0.0
    %4035 = vmatpush1.msra.mxu0 0.0
    %4036 = vmatprep.subr.mxu0 0.0
    %4037 = vmatpush1.msra.mxu0 0.0
    %4038 = vmatprep.subr.mxu0 0.0
    %4039 = vmatpush1.msra.mxu0 0.0
    %4040 = vmatprep.subr.mxu0 0.0
    %4041 = vmatpush1.msra.mxu0 0.0
    %4042 = vmatprep.subr.mxu0 0.0
    %4043 = vmatpush1.msra.mxu0 0.0
    %4044 = vmatprep.subr.mxu0 0.0
    %4045 = vmatpush1.msra.mxu0 0.0
    %4046 = vmatprep.subr.mxu0 0.0
    %4047 = vmatpush1.msra.mxu0 0.0
    %4048 = vmatprep.subr.mxu0 0.0
    %4049 = vmatpush1.msra.mxu0 0.0
    %4050 = vmatprep.subr.mxu0 0.0
    %4051 = vmatpush1.msra.mxu0 0.0
    %4052 = vmatprep.subr.mxu0 0.0
    %4053 = vmatpush1.msra.mxu0 0.0
    %4054 = vmatprep.subr.mxu0 0.0
    %4055 = vmatpush1.msra.mxu0 0.0
    %4056 = vmatprep.subr.mxu0 0.0
    %4057 = vmatpush1.msra.mxu0 0.0
    %4058 = vmatprep.mubr.f32.mxu0 0.0
    %4059 = vmatmul.mubr.f32.gmra.mrb[0].mxu0 %v3992
    %v4060 = vpop.f32.mrb[0].mxu0
    %v4061 = vadd.f32 0.0, %v4060
    %v4062 = vpop.f32.mrb[0].mxu0
    %4063 = vdwg.mxu0
    %v4064 = vadd.f32 %v3980, %v4061
    %v4065 = vld [vmem:[#allocation3 + $0x28] sm:$0x3]
    %s4066 = scalar_lea.vmem [#allocation2], 1280
    %v4067 = vld [vmem:[%s4066] sm:$0xff]
    %v4068 = vld [vmem:[%s4066 + $0x8] sm:$0xff]
    %v4069 = vld [vmem:[%s4066 + $0x10] sm:$0xff]
    %v4070 = vld [vmem:[%s4066 + $0x18] sm:$0xff]
    %v4071 = vld [vmem:[%s4066 + $0x20] sm:$0xff]
    %v4072 = vld [vmem:[%s4066 + $0x28] sm:$0xff]
    %v4073 = vld [vmem:[%s4066 + $0x30] sm:$0xff]
    %v4074 = vld [vmem:[%s4066 + $0x38] sm:$0xff]
    %v4076 = vsel %vm2367, %v4065, 0
    %4078 = vmatprep.subr.mxu0 0.0
    %4079 = vmatpush1.msra.mxu0 %v4067
    %4080 = vmatprep.subr.mxu0 0.0
    %4081 = vmatpush1.msra.mxu0 %v4068
    %4082 = vmatprep.subr.mxu0 0.0
    %4083 = vmatpush1.msra.mxu0 %v4069
    %4084 = vmatprep.subr.mxu0 0.0
    %4085 = vmatpush1.msra.mxu0 %v4070
    %4086 = vmatprep.subr.mxu0 0.0
    %4087 = vmatpush1.msra.mxu0 %v4071
    %4088 = vmatprep.subr.mxu0 0.0
    %4089 = vmatpush1.msra.mxu0 %v4072
    %4090 = vmatprep.subr.mxu0 0.0
    %4091 = vmatpush1.msra.mxu0 %v4073
    %4092 = vmatprep.subr.mxu0 0.0
    %4093 = vmatpush1.msra.mxu0 %v4074
    %4094 = vmatprep.subr.mxu0 0.0
    %4095 = vmatpush1.msra.mxu0 0.0
    %4096 = vmatprep.subr.mxu0 0.0
    %4097 = vmatpush1.msra.mxu0 0.0
    %4098 = vmatprep.subr.mxu0 0.0
    %4099 = vmatpush1.msra.mxu0 0.0
    %4100 = vmatprep.subr.mxu0 0.0
    %4101 = vmatpush1.msra.mxu0 0.0
    %4102 = vmatprep.subr.mxu0 0.0
    %4103 = vmatpush1.msra.mxu0 0.0
    %4104 = vmatprep.subr.mxu0 0.0
    %4105 = vmatpush1.msra.mxu0 0.0
    %4106 = vmatprep.subr.mxu0 0.0
    %4107 = vmatpush1.msra.mxu0 0.0
    %4108 = vmatprep.subr.mxu0 0.0
    %4109 = vmatpush1.msra.mxu0 0.0
    %4110 = vmatprep.subr.mxu0 0.0
    %4111 = vmatpush1.msra.mxu0 0.0
    %4112 = vmatprep.subr.mxu0 0.0
    %4113 = vmatpush1.msra.mxu0 0.0
    %4114 = vmatprep.subr.mxu0 0.0
    %4115 = vmatpush1.msra.mxu0 0.0
    %4116 = vmatprep.subr.mxu0 0.0
    %4117 = vmatpush1.msra.mxu0 0.0
    %4118 = vmatprep.subr.mxu0 0.0
    %4119 = vmatpush1.msra.mxu0 0.0
    %4120 = vmatprep.subr.mxu0 0.0
    %4121 = vmatpush1.msra.mxu0 0.0
    %4122 = vmatprep.subr.mxu0 0.0
    %4123 = vmatpush1.msra.mxu0 0.0
    %4124 = vmatprep.subr.mxu0 0.0
    %4125 = vmatpush1.msra.mxu0 0.0
    %4126 = vmatprep.subr.mxu0 0.0
    %4127 = vmatpush1.msra.mxu0 0.0
    %4128 = vmatprep.subr.mxu0 0.0
    %4129 = vmatpush1.msra.mxu0 0.0
    %4130 = vmatprep.subr.mxu0 0.0
    %4131 = vmatpush1.msra.mxu0 0.0
    %4132 = vmatprep.subr.mxu0 0.0
    %4133 = vmatpush1.msra.mxu0 0.0
    %4134 = vmatprep.subr.mxu0 0.0
    %4135 = vmatpush1.msra.mxu0 0.0
    %4136 = vmatprep.subr.mxu0 0.0
    %4137 = vmatpush1.msra.mxu0 0.0
    %4138 = vmatprep.subr.mxu0 0.0
    %4139 = vmatpush1.msra.mxu0 0.0
    %4140 = vmatprep.subr.mxu0 0.0
    %4141 = vmatpush1.msra.mxu0 0.0
    %4142 = vmatprep.mubr.f32.mxu0 0.0
    %4143 = vmatmul.mubr.f32.gmra.mrb[0].mxu0 %v4076
    %v4144 = vpop.f32.mrb[0].mxu0
    %v4145 = vadd.f32 0.0, %v4144
    %v4146 = vpop.f32.mrb[0].mxu0
    %4147 = vdwg.mxu0
    %v4148 = vadd.f32 %v4064, %v4145
    %v4149 = vld [vmem:[#allocation3 + $0x2a] sm:$0x3]
    %s4150 = scalar_lea.vmem [#allocation2], 1344
    %v4151 = vld [vmem:[%s4150] sm:$0xff]
    %v4152 = vld [vmem:[%s4150 + $0x8] sm:$0xff]
    %v4153 = vld [vmem:[%s4150 + $0x10] sm:$0xff]
    %v4154 = vld [vmem:[%s4150 + $0x18] sm:$0xff]
    %v4155 = vld [vmem:[%s4150 + $0x20] sm:$0xff]
    %v4156 = vld [vmem:[%s4150 + $0x28] sm:$0xff]
    %v4157 = vld [vmem:[%s4150 + $0x30] sm:$0xff]
    %v4158 = vld [vmem:[%s4150 + $0x38] sm:$0xff]
    %v4160 = vsel %vm2367, %v4149, 0
    %4162 = vmatprep.subr.mxu0 0.0
    %4163 = vmatpush1.msra.mxu0 %v4151
    %4164 = vmatprep.subr.mxu0 0.0
    %4165 = vmatpush1.msra.mxu0 %v4152
    %4166 = vmatprep.subr.mxu0 0.0
    %4167 = vmatpush1.msra.mxu0 %v4153
    %4168 = vmatprep.subr.mxu0 0.0
    %4169 = vmatpush1.msra.mxu0 %v4154
    %4170 = vmatprep.subr.mxu0 0.0
    %4171 = vmatpush1.msra.mxu0 %v4155
    %4172 = vmatprep.subr.mxu0 0.0
    %4173 = vmatpush1.msra.mxu0 %v4156
    %4174 = vmatprep.subr.mxu0 0.0
    %4175 = vmatpush1.msra.mxu0 %v4157
    %4176 = vmatprep.subr.mxu0 0.0
    %4177 = vmatpush1.msra.mxu0 %v4158
    %4178 = vmatprep.subr.mxu0 0.0
    %4179 = vmatpush1.msra.mxu0 0.0
    %4180 = vmatprep.subr.mxu0 0.0
    %4181 = vmatpush1.msra.mxu0 0.0
    %4182 = vmatprep.subr.mxu0 0.0
    %4183 = vmatpush1.msra.mxu0 0.0
    %4184 = vmatprep.subr.mxu0 0.0
    %4185 = vmatpush1.msra.mxu0 0.0
    %4186 = vmatprep.subr.mxu0 0.0
    %4187 = vmatpush1.msra.mxu0 0.0
    %4188 = vmatprep.subr.mxu0 0.0
    %4189 = vmatpush1.msra.mxu0 0.0
    %4190 = vmatprep.subr.mxu0 0.0
    %4191 = vmatpush1.msra.mxu0 0.0
    %4192 = vmatprep.subr.mxu0 0.0
    %4193 = vmatpush1.msra.mxu0 0.0
    %4194 = vmatprep.subr.mxu0 0.0
    %4195 = vmatpush1.msra.mxu0 0.0
    %4196 = vmatprep.subr.mxu0 0.0
    %4197 = vmatpush1.msra.mxu0 0.0
    %4198 = vmatprep.subr.mxu0 0.0
    %4199 = vmatpush1.msra.mxu0 0.0
    %4200 = vmatprep.subr.mxu0 0.0
    %4201 = vmatpush1.msra.mxu0 0.0
    %4202 = vmatprep.subr.mxu0 0.0
    %4203 = vmatpush1.msra.mxu0 0.0
    %4204 = vmatprep.subr.mxu0 0.0
    %4205 = vmatpush1.msra.mxu0 0.0
    %4206 = vmatprep.subr.mxu0 0.0
    %4207 = vmatpush1.msra.mxu0 0.0
    %4208 = vmatprep.subr.mxu0 0.0
    %4209 = vmatpush1.msra.mxu0 0.0
    %4210 = vmatprep.subr.mxu0 0.0
    %4211 = vmatpush1.msra.mxu0 0.0
    %4212 = vmatprep.subr.mxu0 0.0
    %4213 = vmatpush1.msra.mxu0 0.0
    %4214 = vmatprep.subr.mxu0 0.0
    %4215 = vmatpush1.msra.mxu0 0.0
    %4216 = vmatprep.subr.mxu0 0.0
    %4217 = vmatpush1.msra.mxu0 0.0
    %4218 = vmatprep.subr.mxu0 0.0
    %4219 = vmatpush1.msra.mxu0 0.0
    %4220 = vmatprep.subr.mxu0 0.0
    %4221 = vmatpush1.msra.mxu0 0.0
    %4222 = vmatprep.subr.mxu0 0.0
    %4223 = vmatpush1.msra.mxu0 0.0
    %4224 = vmatprep.subr.mxu0 0.0
    %4225 = vmatpush1.msra.mxu0 0.0
    %4226 = vmatprep.mubr.f32.mxu0 0.0
    %4227 = vmatmul.mubr.f32.gmra.mrb[0].mxu0 %v4160
    %v4228 = vpop.f32.mrb[0].mxu0
    %v4229 = vadd.f32 0.0, %v4228
    %v4230 = vpop.f32.mrb[0].mxu0
    %4231 = vdwg.mxu0
    %v4232 = vadd.f32 %v4148, %v4229
    %v4233 = vld [vmem:[#allocation3 + $0x2c] sm:$0x3]
    %s4234 = scalar_lea.vmem [#allocation2], 1408
    %v4235 = vld [vmem:[%s4234] sm:$0xff]
    %v4236 = vld [vmem:[%s4234 + $0x8] sm:$0xff]
    %v4237 = vld [vmem:[%s4234 + $0x10] sm:$0xff]
    %v4238 = vld [vmem:[%s4234 + $0x18] sm:$0xff]
    %v4239 = vld [vmem:[%s4234 + $0x20] sm:$0xff]
    %v4240 = vld [vmem:[%s4234 + $0x28] sm:$0xff]
    %v4241 = vld [vmem:[%s4234 + $0x30] sm:$0xff]
    %v4242 = vld [vmem:[%s4234 + $0x38] sm:$0xff]
    %v4244 = vsel %vm2367, %v4233, 0
    %4246 = vmatprep.subr.mxu0 0.0
    %4247 = vmatpush1.msra.mxu0 %v4235
    %4248 = vmatprep.subr.mxu0 0.0
    %4249 = vmatpush1.msra.mxu0 %v4236
    %4250 = vmatprep.subr.mxu0 0.0
    %4251 = vmatpush1.msra.mxu0 %v4237
    %4252 = vmatprep.subr.mxu0 0.0
    %4253 = vmatpush1.msra.mxu0 %v4238
    %4254 = vmatprep.subr.mxu0 0.0
    %4255 = vmatpush1.msra.mxu0 %v4239
    %4256 = vmatprep.subr.mxu0 0.0
    %4257 = vmatpush1.msra.mxu0 %v4240
    %4258 = vmatprep.subr.mxu0 0.0
    %4259 = vmatpush1.msra.mxu0 %v4241
    %4260 = vmatprep.subr.mxu0 0.0
    %4261 = vmatpush1.msra.mxu0 %v4242
    %4262 = vmatprep.subr.mxu0 0.0
    %4263 = vmatpush1.msra.mxu0 0.0
    %4264 = vmatprep.subr.mxu0 0.0
    %4265 = vmatpush1.msra.mxu0 0.0
    %4266 = vmatprep.subr.mxu0 0.0
    %4267 = vmatpush1.msra.mxu0 0.0
    %4268 = vmatprep.subr.mxu0 0.0
    %4269 = vmatpush1.msra.mxu0 0.0
    %4270 = vmatprep.subr.mxu0 0.0
    %4271 = vmatpush1.msra.mxu0 0.0
    %4272 = vmatprep.subr.mxu0 0.0
    %4273 = vmatpush1.msra.mxu0 0.0
    %4274 = vmatprep.subr.mxu0 0.0
    %4275 = vmatpush1.msra.mxu0 0.0
    %4276 = vmatprep.subr.mxu0 0.0
    %4277 = vmatpush1.msra.mxu0 0.0
    %4278 = vmatprep.subr.mxu0 0.0
    %4279 = vmatpush1.msra.mxu0 0.0
    %4280 = vmatprep.subr.mxu0 0.0
    %4281 = vmatpush1.msra.mxu0 0.0
    %4282 = vmatprep.subr.mxu0 0.0
    %4283 = vmatpush1.msra.mxu0 0.0
    %4284 = vmatprep.subr.mxu0 0.0
    %4285 = vmatpush1.msra.mxu0 0.0
    %4286 = vmatprep.subr.mxu0 0.0
    %4287 = vmatpush1.msra.mxu0 0.0
    %4288 = vmatprep.subr.mxu0 0.0
    %4289 = vmatpush1.msra.mxu0 0.0
    %4290 = vmatprep.subr.mxu0 0.0
    %4291 = vmatpush1.msra.mxu0 0.0
    %4292 = vmatprep.subr.mxu0 0.0
    %4293 = vmatpush1.msra.mxu0 0.0
    %4294 = vmatprep.subr.mxu0 0.0
    %4295 = vmatpush1.msra.mxu0 0.0
    %4296 = vmatprep.subr.mxu0 0.0
    %4297 = vmatpush1.msra.mxu0 0.0
    %4298 = vmatprep.subr.mxu0 0.0
    %4299 = vmatpush1.msra.mxu0 0.0
    %4300 = vmatprep.subr.mxu0 0.0
    %4301 = vmatpush1.msra.mxu0 0.0
    %4302 = vmatprep.subr.mxu0 0.0
    %4303 = vmatpush1.msra.mxu0 0.0
    %4304 = vmatprep.subr.mxu0 0.0
    %4305 = vmatpush1.msra.mxu0 0.0
    %4306 = vmatprep.subr.mxu0 0.0
    %4307 = vmatpush1.msra.mxu0 0.0
    %4308 = vmatprep.subr.mxu0 0.0
    %4309 = vmatpush1.msra.mxu0 0.0
    %4310 = vmatprep.mubr.f32.mxu0 0.0
    %4311 = vmatmul.mubr.f32.gmra.mrb[0].mxu0 %v4244
    %v4312 = vpop.f32.mrb[0].mxu0
    %v4313 = vadd.f32 0.0, %v4312
    %v4314 = vpop.f32.mrb[0].mxu0
    %4315 = vdwg.mxu0
    %v4316 = vadd.f32 %v4232, %v4313
    %v4317 = vld [vmem:[#allocation3 + $0x2e] sm:$0x3]
    %s4318 = scalar_lea.vmem [#allocation2], 1472
    %v4319 = vld [vmem:[%s4318] sm:$0xff]
    %v4320 = vld [vmem:[%s4318 + $0x8] sm:$0xff]
    %v4321 = vld [vmem:[%s4318 + $0x10] sm:$0xff]
    %v4322 = vld [vmem:[%s4318 + $0x18] sm:$0xff]
    %v4323 = vld [vmem:[%s4318 + $0x20] sm:$0xff]
    %v4324 = vld [vmem:[%s4318 + $0x28] sm:$0xff]
    %v4325 = vld [vmem:[%s4318 + $0x30] sm:$0xff]
    %v4326 = vld [vmem:[%s4318 + $0x38] sm:$0xff]
    %v4328 = vsel %vm2367, %v4317, 0
    %4330 = vmatprep.subr.mxu0 0.0
    %4331 = vmatpush1.msra.mxu0 %v4319
    %4332 = vmatprep.subr.mxu0 0.0
    %4333 = vmatpush1.msra.mxu0 %v4320
    %4334 = vmatprep.subr.mxu0 0.0
    %4335 = vmatpush1.msra.mxu0 %v4321
    %4336 = vmatprep.subr.mxu0 0.0
    %4337 = vmatpush1.msra.mxu0 %v4322
    %4338 = vmatprep.subr.mxu0 0.0
    %4339 = vmatpush1.msra.mxu0 %v4323
    %4340 = vmatprep.subr.mxu0 0.0
    %4341 = vmatpush1.msra.mxu0 %v4324
    %4342 = vmatprep.subr.mxu0 0.0
    %4343 = vmatpush1.msra.mxu0 %v4325
    %4344 = vmatprep.subr.mxu0 0.0
    %4345 = vmatpush1.msra.mxu0 %v4326
    %4346 = vmatprep.subr.mxu0 0.0
    %4347 = vmatpush1.msra.mxu0 0.0
    %4348 = vmatprep.subr.mxu0 0.0
    %4349 = vmatpush1.msra.mxu0 0.0
    %4350 = vmatprep.subr.mxu0 0.0
    %4351 = vmatpush1.msra.mxu0 0.0
    %4352 = vmatprep.subr.mxu0 0.0
    %4353 = vmatpush1.msra.mxu0 0.0
    %4354 = vmatprep.subr.mxu0 0.0
    %4355 = vmatpush1.msra.mxu0 0.0
    %4356 = vmatprep.subr.mxu0 0.0
    %4357 = vmatpush1.msra.mxu0 0.0
    %4358 = vmatprep.subr.mxu0 0.0
    %4359 = vmatpush1.msra.mxu0 0.0
    %4360 = vmatprep.subr.mxu0 0.0
    %4361 = vmatpush1.msra.mxu0 0.0
    %4362 = vmatprep.subr.mxu0 0.0
    %4363 = vmatpush1.msra.mxu0 0.0
    %4364 = vmatprep.subr.mxu0 0.0
    %4365 = vmatpush1.msra.mxu0 0.0
    %4366 = vmatprep.subr.mxu0 0.0
    %4367 = vmatpush1.msra.mxu0 0.0
    %4368 = vmatprep.subr.mxu0 0.0
    %4369 = vmatpush1.msra.mxu0 0.0
    %4370 = vmatprep.subr.mxu0 0.0
    %4371 = vmatpush1.msra.mxu0 0.0
    %4372 = vmatprep.subr.mxu0 0.0
    %4373 = vmatpush1.msra.mxu0 0.0
    %4374 = vmatprep.subr.mxu0 0.0
    %4375 = vmatpush1.msra.mxu0 0.0
    %4376 = vmatprep.subr.mxu0 0.0
    %4377 = vmatpush1.msra.mxu0 0.0
    %4378 = vmatprep.subr.mxu0 0.0
    %4379 = vmatpush1.msra.mxu0 0.0
    %4380 = vmatprep.subr.mxu0 0.0
    %4381 = vmatpush1.msra.mxu0 0.0
    %4382 = vmatprep.subr.mxu0 0.0
    %4383 = vmatpush1.msra.mxu0 0.0
    %4384 = vmatprep.subr.mxu0 0.0
    %4385 = vmatpush1.msra.mxu0 0.0
    %4386 = vmatprep.subr.mxu0 0.0
    %4387 = vmatpush1.msra.mxu0 0.0
    %4388 = vmatprep.subr.mxu0 0.0
    %4389 = vmatpush1.msra.mxu0 0.0
    %4390 = vmatprep.subr.mxu0 0.0
    %4391 = vmatpush1.msra.mxu0 0.0
    %4392 = vmatprep.subr.mxu0 0.0
    %4393 = vmatpush1.msra.mxu0 0.0
    %4394 = vmatprep.mubr.f32.mxu0 0.0
    %4395 = vmatmul.mubr.f32.gmra.mrb[0].mxu0 %v4328
    %v4396 = vpop.f32.mrb[0].mxu0
    %v4397 = vadd.f32 0.0, %v4396
    %v4398 = vpop.f32.mrb[0].mxu0
    %4399 = vdwg.mxu0
    %v4400 = vadd.f32 %v4316, %v4397
    %v4401 = vld [vmem:[#allocation3 + $0x30] sm:$0x3]
    %s4402 = scalar_lea.vmem [#allocation2], 1536
    %v4403 = vld [vmem:[%s4402] sm:$0xff]
    %v4404 = vld [vmem:[%s4402 + $0x8] sm:$0xff]
    %v4405 = vld [vmem:[%s4402 + $0x10] sm:$0xff]
    %v4406 = vld [vmem:[%s4402 + $0x18] sm:$0xff]
    %v4407 = vld [vmem:[%s4402 + $0x20] sm:$0xff]
    %v4408 = vld [vmem:[%s4402 + $0x28] sm:$0xff]
    %v4409 = vld [vmem:[%s4402 + $0x30] sm:$0xff]
    %v4410 = vld [vmem:[%s4402 + $0x38] sm:$0xff]
    %v4412 = vsel %vm2367, %v4401, 0
    %4414 = vmatprep.subr.mxu0 0.0
    %4415 = vmatpush1.msra.mxu0 %v4403
    %4416 = vmatprep.subr.mxu0 0.0
    %4417 = vmatpush1.msra.mxu0 %v4404
    %4418 = vmatprep.subr.mxu0 0.0
    %4419 = vmatpush1.msra.mxu0 %v4405
    %4420 = vmatprep.subr.mxu0 0.0
    %4421 = vmatpush1.msra.mxu0 %v4406
    %4422 = vmatprep.subr.mxu0 0.0
    %4423 = vmatpush1.msra.mxu0 %v4407
    %4424 = vmatprep.subr.mxu0 0.0
    %4425 = vmatpush1.msra.mxu0 %v4408
    %4426 = vmatprep.subr.mxu0 0.0
    %4427 = vmatpush1.msra.mxu0 %v4409
    %4428 = vmatprep.subr.mxu0 0.0
    %4429 = vmatpush1.msra.mxu0 %v4410
    %4430 = vmatprep.subr.mxu0 0.0
    %4431 = vmatpush1.msra.mxu0 0.0
    %4432 = vmatprep.subr.mxu0 0.0
    %4433 = vmatpush1.msra.mxu0 0.0
    %4434 = vmatprep.subr.mxu0 0.0
    %4435 = vmatpush1.msra.mxu0 0.0
    %4436 = vmatprep.subr.mxu0 0.0
    %4437 = vmatpush1.msra.mxu0 0.0
    %4438 = vmatprep.subr.mxu0 0.0
    %4439 = vmatpush1.msra.mxu0 0.0
    %4440 = vmatprep.subr.mxu0 0.0
    %4441 = vmatpush1.msra.mxu0 0.0
    %4442 = vmatprep.subr.mxu0 0.0
    %4443 = vmatpush1.msra.mxu0 0.0
    %4444 = vmatprep.subr.mxu0 0.0
    %4445 = vmatpush1.msra.mxu0 0.0
    %4446 = vmatprep.subr.mxu0 0.0
    %4447 = vmatpush1.msra.mxu0 0.0
    %4448 = vmatprep.subr.mxu0 0.0
    %4449 = vmatpush1.msra.mxu0 0.0
    %4450 = vmatprep.subr.mxu0 0.0
    %4451 = vmatpush1.msra.mxu0 0.0
    %4452 = vmatprep.subr.mxu0 0.0
    %4453 = vmatpush1.msra.mxu0 0.0
    %4454 = vmatprep.subr.mxu0 0.0
    %4455 = vmatpush1.msra.mxu0 0.0
    %4456 = vmatprep.subr.mxu0 0.0
    %4457 = vmatpush1.msra.mxu0 0.0
    %4458 = vmatprep.subr.mxu0 0.0
    %4459 = vmatpush1.msra.mxu0 0.0
    %4460 = vmatprep.subr.mxu0 0.0
    %4461 = vmatpush1.msra.mxu0 0.0
    %4462 = vmatprep.subr.mxu0 0.0
    %4463 = vmatpush1.msra.mxu0 0.0
    %4464 = vmatprep.subr.mxu0 0.0
    %4465 = vmatpush1.msra.mxu0 0.0
    %4466 = vmatprep.subr.mxu0 0.0
    %4467 = vmatpush1.msra.mxu0 0.0
    %4468 = vmatprep.subr.mxu0 0.0
    %4469 = vmatpush1.msra.mxu0 0.0
    %4470 = vmatprep.subr.mxu0 0.0
    %4471 = vmatpush1.msra.mxu0 0.0
    %4472 = vmatprep.subr.mxu0 0.0
    %4473 = vmatpush1.msra.mxu0 0.0
    %4474 = vmatprep.subr.mxu0 0.0
    %4475 = vmatpush1.msra.mxu0 0.0
    %4476 = vmatprep.subr.mxu0 0.0
    %4477 = vmatpush1.msra.mxu0 0.0
    %4478 = vmatprep.mubr.f32.mxu0 0.0
    %4479 = vmatmul.mubr.f32.gmra.mrb[0].mxu0 %v4412
    %v4480 = vpop.f32.mrb[0].mxu0
    %v4481 = vadd.f32 0.0, %v4480
    %v4482 = vpop.f32.mrb[0].mxu0
    %4483 = vdwg.mxu0
    %v4484 = vadd.f32 %v4400, %v4481
    %v4485 = vld [vmem:[#allocation3 + $0x32] sm:$0x3]
    %s4486 = scalar_lea.vmem [#allocation2], 1600
    %v4487 = vld [vmem:[%s4486] sm:$0xff]
    %v4488 = vld [vmem:[%s4486 + $0x8] sm:$0xff]
    %v4489 = vld [vmem:[%s4486 + $0x10] sm:$0xff]
    %v4490 = vld [vmem:[%s4486 + $0x18] sm:$0xff]
    %v4491 = vld [vmem:[%s4486 + $0x20] sm:$0xff]
    %v4492 = vld [vmem:[%s4486 + $0x28] sm:$0xff]
    %v4493 = vld [vmem:[%s4486 + $0x30] sm:$0xff]
    %v4494 = vld [vmem:[%s4486 + $0x38] sm:$0xff]
    %v4496 = vsel %vm2367, %v4485, 0
    %4498 = vmatprep.subr.mxu0 0.0
    %4499 = vmatpush1.msra.mxu0 %v4487
    %4500 = vmatprep.subr.mxu0 0.0
    %4501 = vmatpush1.msra.mxu0 %v4488
    %4502 = vmatprep.subr.mxu0 0.0
    %4503 = vmatpush1.msra.mxu0 %v4489
    %4504 = vmatprep.subr.mxu0 0.0
    %4505 = vmatpush1.msra.mxu0 %v4490
    %4506 = vmatprep.subr.mxu0 0.0
    %4507 = vmatpush1.msra.mxu0 %v4491
    %4508 = vmatprep.subr.mxu0 0.0
    %4509 = vmatpush1.msra.mxu0 %v4492
    %4510 = vmatprep.subr.mxu0 0.0
    %4511 = vmatpush1.msra.mxu0 %v4493
    %4512 = vmatprep.subr.mxu0 0.0
    %4513 = vmatpush1.msra.mxu0 %v4494
    %4514 = vmatprep.subr.mxu0 0.0
    %4515 = vmatpush1.msra.mxu0 0.0
    %4516 = vmatprep.subr.mxu0 0.0
    %4517 = vmatpush1.msra.mxu0 0.0
    %4518 = vmatprep.subr.mxu0 0.0
    %4519 = vmatpush1.msra.mxu0 0.0
    %4520 = vmatprep.subr.mxu0 0.0
    %4521 = vmatpush1.msra.mxu0 0.0
    %4522 = vmatprep.subr.mxu0 0.0
    %4523 = vmatpush1.msra.mxu0 0.0
    %4524 = vmatprep.subr.mxu0 0.0
    %4525 = vmatpush1.msra.mxu0 0.0
    %4526 = vmatprep.subr.mxu0 0.0
    %4527 = vmatpush1.msra.mxu0 0.0
    %4528 = vmatprep.subr.mxu0 0.0
    %4529 = vmatpush1.msra.mxu0 0.0
    %4530 = vmatprep.subr.mxu0 0.0
    %4531 = vmatpush1.msra.mxu0 0.0
    %4532 = vmatprep.subr.mxu0 0.0
    %4533 = vmatpush1.msra.mxu0 0.0
    %4534 = vmatprep.subr.mxu0 0.0
    %4535 = vmatpush1.msra.mxu0 0.0
    %4536 = vmatprep.subr.mxu0 0.0
    %4537 = vmatpush1.msra.mxu0 0.0
    %4538 = vmatprep.subr.mxu0 0.0
    %4539 = vmatpush1.msra.mxu0 0.0
    %4540 = vmatprep.subr.mxu0 0.0
    %4541 = vmatpush1.msra.mxu0 0.0
    %4542 = vmatprep.subr.mxu0 0.0
    %4543 = vmatpush1.msra.mxu0 0.0
    %4544 = vmatprep.subr.mxu0 0.0
    %4545 = vmatpush1.msra.mxu0 0.0
    %4546 = vmatprep.subr.mxu0 0.0
    %4547 = vmatpush1.msra.mxu0 0.0
    %4548 = vmatprep.subr.mxu0 0.0
    %4549 = vmatpush1.msra.mxu0 0.0
    %4550 = vmatprep.subr.mxu0 0.0
    %4551 = vmatpush1.msra.mxu0 0.0
    %4552 = vmatprep.subr.mxu0 0.0
    %4553 = vmatpush1.msra.mxu0 0.0
    %4554 = vmatprep.subr.mxu0 0.0
    %4555 = vmatpush1.msra.mxu0 0.0
    %4556 = vmatprep.subr.mxu0 0.0
    %4557 = vmatpush1.msra.mxu0 0.0
    %4558 = vmatprep.subr.mxu0 0.0
    %4559 = vmatpush1.msra.mxu0 0.0
    %4560 = vmatprep.subr.mxu0 0.0
    %4561 = vmatpush1.msra.mxu0 0.0
    %4562 = vmatprep.mubr.f32.mxu0 0.0
    %4563 = vmatmul.mubr.f32.gmra.mrb[0].mxu0 %v4496
    %v4564 = vpop.f32.mrb[0].mxu0
    %v4565 = vadd.f32 0.0, %v4564
    %v4566 = vpop.f32.mrb[0].mxu0
    %4567 = vdwg.mxu0
    %v4568 = vadd.f32 %v4484, %v4565
    %v4569 = vld [vmem:[#allocation3 + $0x34] sm:$0x3]
    %s4570 = scalar_lea.vmem [#allocation2], 1664
    %v4571 = vld [vmem:[%s4570] sm:$0xff]
    %v4572 = vld [vmem:[%s4570 + $0x8] sm:$0xff]
    %v4573 = vld [vmem:[%s4570 + $0x10] sm:$0xff]
    %v4574 = vld [vmem:[%s4570 + $0x18] sm:$0xff]
    %v4575 = vld [vmem:[%s4570 + $0x20] sm:$0xff]
    %v4576 = vld [vmem:[%s4570 + $0x28] sm:$0xff]
    %v4577 = vld [vmem:[%s4570 + $0x30] sm:$0xff]
    %v4578 = vld [vmem:[%s4570 + $0x38] sm:$0xff]
    %v4580 = vsel %vm2367, %v4569, 0
    %4582 = vmatprep.subr.mxu0 0.0
    %4583 = vmatpush1.msra.mxu0 %v4571
    %4584 = vmatprep.subr.mxu0 0.0
    %4585 = vmatpush1.msra.mxu0 %v4572
    %4586 = vmatprep.subr.mxu0 0.0
    %4587 = vmatpush1.msra.mxu0 %v4573
    %4588 = vmatprep.subr.mxu0 0.0
    %4589 = vmatpush1.msra.mxu0 %v4574
    %4590 = vmatprep.subr.mxu0 0.0
    %4591 = vmatpush1.msra.mxu0 %v4575
    %4592 = vmatprep.subr.mxu0 0.0
    %4593 = vmatpush1.msra.mxu0 %v4576
    %4594 = vmatprep.subr.mxu0 0.0
    %4595 = vmatpush1.msra.mxu0 %v4577
    %4596 = vmatprep.subr.mxu0 0.0
    %4597 = vmatpush1.msra.mxu0 %v4578
    %4598 = vmatprep.subr.mxu0 0.0
    %4599 = vmatpush1.msra.mxu0 0.0
    %4600 = vmatprep.subr.mxu0 0.0
    %4601 = vmatpush1.msra.mxu0 0.0
    %4602 = vmatprep.subr.mxu0 0.0
    %4603 = vmatpush1.msra.mxu0 0.0
    %4604 = vmatprep.subr.mxu0 0.0
    %4605 = vmatpush1.msra.mxu0 0.0
    %4606 = vmatprep.subr.mxu0 0.0
    %4607 = vmatpush1.msra.mxu0 0.0
    %4608 = vmatprep.subr.mxu0 0.0
    %4609 = vmatpush1.msra.mxu0 0.0
    %4610 = vmatprep.subr.mxu0 0.0
    %4611 = vmatpush1.msra.mxu0 0.0
    %4612 = vmatprep.subr.mxu0 0.0
    %4613 = vmatpush1.msra.mxu0 0.0
    %4614 = vmatprep.subr.mxu0 0.0
    %4615 = vmatpush1.msra.mxu0 0.0
    %4616 = vmatprep.subr.mxu0 0.0
    %4617 = vmatpush1.msra.mxu0 0.0
    %4618 = vmatprep.subr.mxu0 0.0
    %4619 = vmatpush1.msra.mxu0 0.0
    %4620 = vmatprep.subr.mxu0 0.0
    %4621 = vmatpush1.msra.mxu0 0.0
    %4622 = vmatprep.subr.mxu0 0.0
    %4623 = vmatpush1.msra.mxu0 0.0
    %4624 = vmatprep.subr.mxu0 0.0
    %4625 = vmatpush1.msra.mxu0 0.0
    %4626 = vmatprep.subr.mxu0 0.0
    %4627 = vmatpush1.msra.mxu0 0.0
    %4628 = vmatprep.subr.mxu0 0.0
    %4629 = vmatpush1.msra.mxu0 0.0
    %4630 = vmatprep.subr.mxu0 0.0
    %4631 = vmatpush1.msra.mxu0 0.0
    %4632 = vmatprep.subr.mxu0 0.0
    %4633 = vmatpush1.msra.mxu0 0.0
    %4634 = vmatprep.subr.mxu0 0.0
    %4635 = vmatpush1.msra.mxu0 0.0
    %4636 = vmatprep.subr.mxu0 0.0
    %4637 = vmatpush1.msra.mxu0 0.0
    %4638 = vmatprep.subr.mxu0 0.0
    %4639 = vmatpush1.msra.mxu0 0.0
    %4640 = vmatprep.subr.mxu0 0.0
    %4641 = vmatpush1.msra.mxu0 0.0
    %4642 = vmatprep.subr.mxu0 0.0
    %4643 = vmatpush1.msra.mxu0 0.0
    %4644 = vmatprep.subr.mxu0 0.0
    %4645 = vmatpush1.msra.mxu0 0.0
    %4646 = vmatprep.mubr.f32.mxu0 0.0
    %4647 = vmatmul.mubr.f32.gmra.mrb[0].mxu0 %v4580
    %v4648 = vpop.f32.mrb[0].mxu0
    %v4649 = vadd.f32 0.0, %v4648
    %v4650 = vpop.f32.mrb[0].mxu0
    %4651 = vdwg.mxu0
    %v4652 = vadd.f32 %v4568, %v4649
    %v4653 = vld [vmem:[#allocation3 + $0x36] sm:$0x3]
    %s4654 = scalar_lea.vmem [#allocation2], 1728
    %v4655 = vld [vmem:[%s4654] sm:$0xff]
    %v4656 = vld [vmem:[%s4654 + $0x8] sm:$0xff]
    %v4657 = vld [vmem:[%s4654 + $0x10] sm:$0xff]
    %v4658 = vld [vmem:[%s4654 + $0x18] sm:$0xff]
    %v4659 = vld [vmem:[%s4654 + $0x20] sm:$0xff]
    %v4660 = vld [vmem:[%s4654 + $0x28] sm:$0xff]
    %v4661 = vld [vmem:[%s4654 + $0x30] sm:$0xff]
    %v4662 = vld [vmem:[%s4654 + $0x38] sm:$0xff]
    %v4664 = vsel %vm2367, %v4653, 0
    %4666 = vmatprep.subr.mxu0 0.0
    %4667 = vmatpush1.msra.mxu0 %v4655
    %4668 = vmatprep.subr.mxu0 0.0
    %4669 = vmatpush1.msra.mxu0 %v4656
    %4670 = vmatprep.subr.mxu0 0.0
    %4671 = vmatpush1.msra.mxu0 %v4657
    %4672 = vmatprep.subr.mxu0 0.0
    %4673 = vmatpush1.msra.mxu0 %v4658
    %4674 = vmatprep.subr.mxu0 0.0
    %4675 = vmatpush1.msra.mxu0 %v4659
    %4676 = vmatprep.subr.mxu0 0.0
    %4677 = vmatpush1.msra.mxu0 %v4660
    %4678 = vmatprep.subr.mxu0 0.0
    %4679 = vmatpush1.msra.mxu0 %v4661
    %4680 = vmatprep.subr.mxu0 0.0
    %4681 = vmatpush1.msra.mxu0 %v4662
    %4682 = vmatprep.subr.mxu0 0.0
    %4683 = vmatpush1.msra.mxu0 0.0
    %4684 = vmatprep.subr.mxu0 0.0
    %4685 = vmatpush1.msra.mxu0 0.0
    %4686 = vmatprep.subr.mxu0 0.0
    %4687 = vmatpush1.msra.mxu0 0.0
    %4688 = vmatprep.subr.mxu0 0.0
    %4689 = vmatpush1.msra.mxu0 0.0
    %4690 = vmatprep.subr.mxu0 0.0
    %4691 = vmatpush1.msra.mxu0 0.0
    %4692 = vmatprep.subr.mxu0 0.0
    %4693 = vmatpush1.msra.mxu0 0.0
    %4694 = vmatprep.subr.mxu0 0.0
    %4695 = vmatpush1.msra.mxu0 0.0
    %4696 = vmatprep.subr.mxu0 0.0
    %4697 = vmatpush1.msra.mxu0 0.0
    %4698 = vmatprep.subr.mxu0 0.0
    %4699 = vmatpush1.msra.mxu0 0.0
    %4700 = vmatprep.subr.mxu0 0.0
    %4701 = vmatpush1.msra.mxu0 0.0
    %4702 = vmatprep.subr.mxu0 0.0
    %4703 = vmatpush1.msra.mxu0 0.0
    %4704 = vmatprep.subr.mxu0 0.0
    %4705 = vmatpush1.msra.mxu0 0.0
    %4706 = vmatprep.subr.mxu0 0.0
    %4707 = vmatpush1.msra.mxu0 0.0
    %4708 = vmatprep.subr.mxu0 0.0
    %4709 = vmatpush1.msra.mxu0 0.0
    %4710 = vmatprep.subr.mxu0 0.0
    %4711 = vmatpush1.msra.mxu0 0.0
    %4712 = vmatprep.subr.mxu0 0.0
    %4713 = vmatpush1.msra.mxu0 0.0
    %4714 = vmatprep.subr.mxu0 0.0
    %4715 = vmatpush1.msra.mxu0 0.0
    %4716 = vmatprep.subr.mxu0 0.0
    %4717 = vmatpush1.msra.mxu0 0.0
    %4718 = vmatprep.subr.mxu0 0.0
    %4719 = vmatpush1.msra.mxu0 0.0
    %4720 = vmatprep.subr.mxu0 0.0
    %4721 = vmatpush1.msra.mxu0 0.0
    %4722 = vmatprep.subr.mxu0 0.0
    %4723 = vmatpush1.msra.mxu0 0.0
    %4724 = vmatprep.subr.mxu0 0.0
    %4725 = vmatpush1.msra.mxu0 0.0
    %4726 = vmatprep.subr.mxu0 0.0
    %4727 = vmatpush1.msra.mxu0 0.0
    %4728 = vmatprep.subr.mxu0 0.0
    %4729 = vmatpush1.msra.mxu0 0.0
    %4730 = vmatprep.mubr.f32.mxu0 0.0
    %4731 = vmatmul.mubr.f32.gmra.mrb[0].mxu0 %v4664
    %v4732 = vpop.f32.mrb[0].mxu0
    %v4733 = vadd.f32 0.0, %v4732
    %v4734 = vpop.f32.mrb[0].mxu0
    %4735 = vdwg.mxu0
    %v4736 = vadd.f32 %v4652, %v4733
    %v4737 = vld [vmem:[#allocation3 + $0x38] sm:$0x3]
    %s4738 = scalar_lea.vmem [#allocation2], 1792
    %v4739 = vld [vmem:[%s4738] sm:$0xff]
    %v4740 = vld [vmem:[%s4738 + $0x8] sm:$0xff]
    %v4741 = vld [vmem:[%s4738 + $0x10] sm:$0xff]
    %v4742 = vld [vmem:[%s4738 + $0x18] sm:$0xff]
    %v4743 = vld [vmem:[%s4738 + $0x20] sm:$0xff]
    %v4744 = vld [vmem:[%s4738 + $0x28] sm:$0xff]
    %v4745 = vld [vmem:[%s4738 + $0x30] sm:$0xff]
    %v4746 = vld [vmem:[%s4738 + $0x38] sm:$0xff]
    %v4748 = vsel %vm2367, %v4737, 0
    %4750 = vmatprep.subr.mxu0 0.0
    %4751 = vmatpush1.msra.mxu0 %v4739
    %4752 = vmatprep.subr.mxu0 0.0
    %4753 = vmatpush1.msra.mxu0 %v4740
    %4754 = vmatprep.subr.mxu0 0.0
    %4755 = vmatpush1.msra.mxu0 %v4741
    %4756 = vmatprep.subr.mxu0 0.0
    %4757 = vmatpush1.msra.mxu0 %v4742
    %4758 = vmatprep.subr.mxu0 0.0
    %4759 = vmatpush1.msra.mxu0 %v4743
    %4760 = vmatprep.subr.mxu0 0.0
    %4761 = vmatpush1.msra.mxu0 %v4744
    %4762 = vmatprep.subr.mxu0 0.0
    %4763 = vmatpush1.msra.mxu0 %v4745
    %4764 = vmatprep.subr.mxu0 0.0
    %4765 = vmatpush1.msra.mxu0 %v4746
    %4766 = vmatprep.subr.mxu0 0.0
    %4767 = vmatpush1.msra.mxu0 0.0
    %4768 = vmatprep.subr.mxu0 0.0
    %4769 = vmatpush1.msra.mxu0 0.0
    %4770 = vmatprep.subr.mxu0 0.0
    %4771 = vmatpush1.msra.mxu0 0.0
    %4772 = vmatprep.subr.mxu0 0.0
    %4773 = vmatpush1.msra.mxu0 0.0
    %4774 = vmatprep.subr.mxu0 0.0
    %4775 = vmatpush1.msra.mxu0 0.0
    %4776 = vmatprep.subr.mxu0 0.0
    %4777 = vmatpush1.msra.mxu0 0.0
    %4778 = vmatprep.subr.mxu0 0.0
    %4779 = vmatpush1.msra.mxu0 0.0
    %4780 = vmatprep.subr.mxu0 0.0
    %4781 = vmatpush1.msra.mxu0 0.0
    %4782 = vmatprep.subr.mxu0 0.0
    %4783 = vmatpush1.msra.mxu0 0.0
    %4784 = vmatprep.subr.mxu0 0.0
    %4785 = vmatpush1.msra.mxu0 0.0
    %4786 = vmatprep.subr.mxu0 0.0
    %4787 = vmatpush1.msra.mxu0 0.0
    %4788 = vmatprep.subr.mxu0 0.0
    %4789 = vmatpush1.msra.mxu0 0.0
    %4790 = vmatprep.subr.mxu0 0.0
    %4791 = vmatpush1.msra.mxu0 0.0
    %4792 = vmatprep.subr.mxu0 0.0
    %4793 = vmatpush1.msra.mxu0 0.0
    %4794 = vmatprep.subr.mxu0 0.0
    %4795 = vmatpush1.msra.mxu0 0.0
    %4796 = vmatprep.subr.mxu0 0.0
    %4797 = vmatpush1.msra.mxu0 0.0
    %4798 = vmatprep.subr.mxu0 0.0
    %4799 = vmatpush1.msra.mxu0 0.0
    %4800 = vmatprep.subr.mxu0 0.0
    %4801 = vmatpush1.msra.mxu0 0.0
    %4802 = vmatprep.subr.mxu0 0.0
    %4803 = vmatpush1.msra.mxu0 0.0
    %4804 = vmatprep.subr.mxu0 0.0
    %4805 = vmatpush1.msra.mxu0 0.0
    %4806 = vmatprep.subr.mxu0 0.0
    %4807 = vmatpush1.msra.mxu0 0.0
    %4808 = vmatprep.subr.mxu0 0.0
    %4809 = vmatpush1.msra.mxu0 0.0
    %4810 = vmatprep.subr.mxu0 0.0
    %4811 = vmatpush1.msra.mxu0 0.0
    %4812 = vmatprep.subr.mxu0 0.0
    %4813 = vmatpush1.msra.mxu0 0.0
    %4814 = vmatprep.mubr.f32.mxu0 0.0
    %4815 = vmatmul.mubr.f32.gmra.mrb[0].mxu0 %v4748
    %v4816 = vpop.f32.mrb[0].mxu0
    %v4817 = vadd.f32 0.0, %v4816
    %v4818 = vpop.f32.mrb[0].mxu0
    %4819 = vdwg.mxu0
    %v4820 = vadd.f32 %v4736, %v4817
    %v4821 = vld [vmem:[#allocation3 + $0x3a] sm:$0x3]
    %s4822 = scalar_lea.vmem [#allocation2], 1856
    %v4823 = vld [vmem:[%s4822] sm:$0xff]
    %v4824 = vld [vmem:[%s4822 + $0x8] sm:$0xff]
    %v4825 = vld [vmem:[%s4822 + $0x10] sm:$0xff]
    %v4826 = vld [vmem:[%s4822 + $0x18] sm:$0xff]
    %v4827 = vld [vmem:[%s4822 + $0x20] sm:$0xff]
    %v4828 = vld [vmem:[%s4822 + $0x28] sm:$0xff]
    %v4829 = vld [vmem:[%s4822 + $0x30] sm:$0xff]
    %v4830 = vld [vmem:[%s4822 + $0x38] sm:$0xff]
    %v4832 = vsel %vm2367, %v4821, 0
    %4834 = vmatprep.subr.mxu0 0.0
    %4835 = vmatpush1.msra.mxu0 %v4823
    %4836 = vmatprep.subr.mxu0 0.0
    %4837 = vmatpush1.msra.mxu0 %v4824
    %4838 = vmatprep.subr.mxu0 0.0
    %4839 = vmatpush1.msra.mxu0 %v4825
    %4840 = vmatprep.subr.mxu0 0.0
    %4841 = vmatpush1.msra.mxu0 %v4826
    %4842 = vmatprep.subr.mxu0 0.0
    %4843 = vmatpush1.msra.mxu0 %v4827
    %4844 = vmatprep.subr.mxu0 0.0
    %4845 = vmatpush1.msra.mxu0 %v4828
    %4846 = vmatprep.subr.mxu0 0.0
    %4847 = vmatpush1.msra.mxu0 %v4829
    %4848 = vmatprep.subr.mxu0 0.0
    %4849 = vmatpush1.msra.mxu0 %v4830
    %4850 = vmatprep.subr.mxu0 0.0
    %4851 = vmatpush1.msra.mxu0 0.0
    %4852 = vmatprep.subr.mxu0 0.0
    %4853 = vmatpush1.msra.mxu0 0.0
    %4854 = vmatprep.subr.mxu0 0.0
    %4855 = vmatpush1.msra.mxu0 0.0
    %4856 = vmatprep.subr.mxu0 0.0
    %4857 = vmatpush1.msra.mxu0 0.0
    %4858 = vmatprep.subr.mxu0 0.0
    %4859 = vmatpush1.msra.mxu0 0.0
    %4860 = vmatprep.subr.mxu0 0.0
    %4861 = vmatpush1.msra.mxu0 0.0
    %4862 = vmatprep.subr.mxu0 0.0
    %4863 = vmatpush1.msra.mxu0 0.0
    %4864 = vmatprep.subr.mxu0 0.0
    %4865 = vmatpush1.msra.mxu0 0.0
    %4866 = vmatprep.subr.mxu0 0.0
    %4867 = vmatpush1.msra.mxu0 0.0
    %4868 = vmatprep.subr.mxu0 0.0
    %4869 = vmatpush1.msra.mxu0 0.0
    %4870 = vmatprep.subr.mxu0 0.0
    %4871 = vmatpush1.msra.mxu0 0.0
    %4872 = vmatprep.subr.mxu0 0.0
    %4873 = vmatpush1.msra.mxu0 0.0
    %4874 = vmatprep.subr.mxu0 0.0
    %4875 = vmatpush1.msra.mxu0 0.0
    %4876 = vmatprep.subr.mxu0 0.0
    %4877 = vmatpush1.msra.mxu0 0.0
    %4878 = vmatprep.subr.mxu0 0.0
    %4879 = vmatpush1.msra.mxu0 0.0
    %4880 = vmatprep.subr.mxu0 0.0
    %4881 = vmatpush1.msra.mxu0 0.0
    %4882 = vmatprep.subr.mxu0 0.0
    %4883 = vmatpush1.msra.mxu0 0.0
    %4884 = vmatprep.subr.mxu0 0.0
    %4885 = vmatpush1.msra.mxu0 0.0
    %4886 = vmatprep.subr.mxu0 0.0
    %4887 = vmatpush1.msra.mxu0 0.0
    %4888 = vmatprep.subr.mxu0 0.0
    %4889 = vmatpush1.msra.mxu0 0.0
    %4890 = vmatprep.subr.mxu0 0.0
    %4891 = vmatpush1.msra.mxu0 0.0
    %4892 = vmatprep.subr.mxu0 0.0
    %4893 = vmatpush1.msra.mxu0 0.0
    %4894 = vmatprep.subr.mxu0 0.0
    %4895 = vmatpush1.msra.mxu0 0.0
    %4896 = vmatprep.subr.mxu0 0.0
    %4897 = vmatpush1.msra.mxu0 0.0
    %4898 = vmatprep.mubr.f32.mxu0 0.0
    %4899 = vmatmul.mubr.f32.gmra.mrb[0].mxu0 %v4832
    %v4900 = vpop.f32.mrb[0].mxu0
    %v4901 = vadd.f32 0.0, %v4900
    %v4902 = vpop.f32.mrb[0].mxu0
    %4903 = vdwg.mxu0
    %v4904 = vadd.f32 %v4820, %v4901
    %v4905 = vld [vmem:[#allocation3 + $0x3c] sm:$0x3]
    %s4906 = scalar_lea.vmem [#allocation2], 1920
    %v4907 = vld [vmem:[%s4906] sm:$0xff]
    %v4908 = vld [vmem:[%s4906 + $0x8] sm:$0xff]
    %v4909 = vld [vmem:[%s4906 + $0x10] sm:$0xff]
    %v4910 = vld [vmem:[%s4906 + $0x18] sm:$0xff]
    %v4911 = vld [vmem:[%s4906 + $0x20] sm:$0xff]
    %v4912 = vld [vmem:[%s4906 + $0x28] sm:$0xff]
    %v4913 = vld [vmem:[%s4906 + $0x30] sm:$0xff]
    %v4914 = vld [vmem:[%s4906 + $0x38] sm:$0xff]
    %v4916 = vsel %vm2367, %v4905, 0
    %4918 = vmatprep.subr.mxu0 0.0
    %4919 = vmatpush1.msra.mxu0 %v4907
    %4920 = vmatprep.subr.mxu0 0.0
    %4921 = vmatpush1.msra.mxu0 %v4908
    %4922 = vmatprep.subr.mxu0 0.0
    %4923 = vmatpush1.msra.mxu0 %v4909
    %4924 = vmatprep.subr.mxu0 0.0
    %4925 = vmatpush1.msra.mxu0 %v4910
    %4926 = vmatprep.subr.mxu0 0.0
    %4927 = vmatpush1.msra.mxu0 %v4911
    %4928 = vmatprep.subr.mxu0 0.0
    %4929 = vmatpush1.msra.mxu0 %v4912
    %4930 = vmatprep.subr.mxu0 0.0
    %4931 = vmatpush1.msra.mxu0 %v4913
    %4932 = vmatprep.subr.mxu0 0.0
    %4933 = vmatpush1.msra.mxu0 %v4914
    %4934 = vmatprep.subr.mxu0 0.0
    %4935 = vmatpush1.msra.mxu0 0.0
    %4936 = vmatprep.subr.mxu0 0.0
    %4937 = vmatpush1.msra.mxu0 0.0
    %4938 = vmatprep.subr.mxu0 0.0
    %4939 = vmatpush1.msra.mxu0 0.0
    %4940 = vmatprep.subr.mxu0 0.0
    %4941 = vmatpush1.msra.mxu0 0.0
    %4942 = vmatprep.subr.mxu0 0.0
    %4943 = vmatpush1.msra.mxu0 0.0
    %4944 = vmatprep.subr.mxu0 0.0
    %4945 = vmatpush1.msra.mxu0 0.0
    %4946 = vmatprep.subr.mxu0 0.0
    %4947 = vmatpush1.msra.mxu0 0.0
    %4948 = vmatprep.subr.mxu0 0.0
    %4949 = vmatpush1.msra.mxu0 0.0
    %4950 = vmatprep.subr.mxu0 0.0
    %4951 = vmatpush1.msra.mxu0 0.0
    %4952 = vmatprep.subr.mxu0 0.0
    %4953 = vmatpush1.msra.mxu0 0.0
    %4954 = vmatprep.subr.mxu0 0.0
    %4955 = vmatpush1.msra.mxu0 0.0
    %4956 = vmatprep.subr.mxu0 0.0
    %4957 = vmatpush1.msra.mxu0 0.0
    %4958 = vmatprep.subr.mxu0 0.0
    %4959 = vmatpush1.msra.mxu0 0.0
    %4960 = vmatprep.subr.mxu0 0.0
    %4961 = vmatpush1.msra.mxu0 0.0
    %4962 = vmatprep.subr.mxu0 0.0
    %4963 = vmatpush1.msra.mxu0 0.0
    %4964 = vmatprep.subr.mxu0 0.0
    %4965 = vmatpush1.msra.mxu0 0.0
    %4966 = vmatprep.subr.mxu0 0.0
    %4967 = vmatpush1.msra.mxu0 0.0
    %4968 = vmatprep.subr.mxu0 0.0
    %4969 = vmatpush1.msra.mxu0 0.0
    %4970 = vmatprep.subr.mxu0 0.0
    %4971 = vmatpush1.msra.mxu0 0.0
    %4972 = vmatprep.subr.mxu0 0.0
    %4973 = vmatpush1.msra.mxu0 0.0
    %4974 = vmatprep.subr.mxu0 0.0
    %4975 = vmatpush1.msra.mxu0 0.0
    %4976 = vmatprep.subr.mxu0 0.0
    %4977 = vmatpush1.msra.mxu0 0.0
    %4978 = vmatprep.subr.mxu0 0.0
    %4979 = vmatpush1.msra.mxu0 0.0
    %4980 = vmatprep.subr.mxu0 0.0
    %4981 = vmatpush1.msra.mxu0 0.0
    %4982 = vmatprep.mubr.f32.mxu0 0.0
    %4983 = vmatmul.mubr.f32.gmra.mrb[0].mxu0 %v4916
    %v4984 = vpop.f32.mrb[0].mxu0
    %v4985 = vadd.f32 0.0, %v4984
    %v4986 = vpop.f32.mrb[0].mxu0
    %4987 = vdwg.mxu0
    %v4988 = vadd.f32 %v4904, %v4985
    %v4989 = vld [vmem:[#allocation3 + $0x3e] sm:$0x3]
    %s4990 = scalar_lea.vmem [#allocation2], 1984
    %v4991 = vld [vmem:[%s4990] sm:$0xff]
    %v4992 = vld [vmem:[%s4990 + $0x8] sm:$0xff]
    %v4993 = vld [vmem:[%s4990 + $0x10] sm:$0xff]
    %v4994 = vld [vmem:[%s4990 + $0x18] sm:$0xff]
    %v4995 = vld [vmem:[%s4990 + $0x20] sm:$0xff]
    %v4996 = vld [vmem:[%s4990 + $0x28] sm:$0xff]
    %v4997 = vld [vmem:[%s4990 + $0x30] sm:$0xff]
    %v4998 = vld [vmem:[%s4990 + $0x38] sm:$0xff]
    %v5000 = vsel %vm2367, %v4989, 0
    %5002 = vmatprep.subr.mxu0 0.0
    %5003 = vmatpush1.msra.mxu0 %v4991
    %5004 = vmatprep.subr.mxu0 0.0
    %5005 = vmatpush1.msra.mxu0 %v4992
    %5006 = vmatprep.subr.mxu0 0.0
    %5007 = vmatpush1.msra.mxu0 %v4993
    %5008 = vmatprep.subr.mxu0 0.0
    %5009 = vmatpush1.msra.mxu0 %v4994
    %5010 = vmatprep.subr.mxu0 0.0
    %5011 = vmatpush1.msra.mxu0 %v4995
    %5012 = vmatprep.subr.mxu0 0.0
    %5013 = vmatpush1.msra.mxu0 %v4996
    %5014 = vmatprep.subr.mxu0 0.0
    %5015 = vmatpush1.msra.mxu0 %v4997
    %5016 = vmatprep.subr.mxu0 0.0
    %5017 = vmatpush1.msra.mxu0 %v4998
    %5018 = vmatprep.subr.mxu0 0.0
    %5019 = vmatpush1.msra.mxu0 0.0
    %5020 = vmatprep.subr.mxu0 0.0
    %5021 = vmatpush1.msra.mxu0 0.0
    %5022 = vmatprep.subr.mxu0 0.0
    %5023 = vmatpush1.msra.mxu0 0.0
    %5024 = vmatprep.subr.mxu0 0.0
    %5025 = vmatpush1.msra.mxu0 0.0
    %5026 = vmatprep.subr.mxu0 0.0
    %5027 = vmatpush1.msra.mxu0 0.0
    %5028 = vmatprep.subr.mxu0 0.0
    %5029 = vmatpush1.msra.mxu0 0.0
    %5030 = vmatprep.subr.mxu0 0.0
    %5031 = vmatpush1.msra.mxu0 0.0
    %5032 = vmatprep.subr.mxu0 0.0
    %5033 = vmatpush1.msra.mxu0 0.0
    %5034 = vmatprep.subr.mxu0 0.0
    %5035 = vmatpush1.msra.mxu0 0.0
    %5036 = vmatprep.subr.mxu0 0.0
    %5037 = vmatpush1.msra.mxu0 0.0
    %5038 = vmatprep.subr.mxu0 0.0
    %5039 = vmatpush1.msra.mxu0 0.0
    %5040 = vmatprep.subr.mxu0 0.0
    %5041 = vmatpush1.msra.mxu0 0.0
    %5042 = vmatprep.subr.mxu0 0.0
    %5043 = vmatpush1.msra.mxu0 0.0
    %5044 = vmatprep.subr.mxu0 0.0
    %5045 = vmatpush1.msra.mxu0 0.0
    %5046 = vmatprep.subr.mxu0 0.0
    %5047 = vmatpush1.msra.mxu0 0.0
    %5048 = vmatprep.subr.mxu0 0.0
    %5049 = vmatpush1.msra.mxu0 0.0
    %5050 = vmatprep.subr.mxu0 0.0
    %5051 = vmatpush1.msra.mxu0 0.0
    %5052 = vmatprep.subr.mxu0 0.0
    %5053 = vmatpush1.msra.mxu0 0.0
    %5054 = vmatprep.subr.mxu0 0.0
    %5055 = vmatpush1.msra.mxu0 0.0
    %5056 = vmatprep.subr.mxu0 0.0
    %5057 = vmatpush1.msra.mxu0 0.0
    %5058 = vmatprep.subr.mxu0 0.0
    %5059 = vmatpush1.msra.mxu0 0.0
    %5060 = vmatprep.subr.mxu0 0.0
    %5061 = vmatpush1.msra.mxu0 0.0
    %5062 = vmatprep.subr.mxu0 0.0
    %5063 = vmatpush1.msra.mxu0 0.0
    %5064 = vmatprep.subr.mxu0 0.0
    %5065 = vmatpush1.msra.mxu0 0.0
    %5066 = vmatprep.mubr.f32.mxu0 0.0
    %5067 = vmatmul.mubr.f32.gmra.mrb[0].mxu0 %v5000
    %v5068 = vpop.f32.mrb[0].mxu0
    %v5069 = vadd.f32 0.0, %v5068
    %v5070 = vpop.f32.mrb[0].mxu0
    %5071 = vdwg.mxu0
    %v5072 = vadd.f32 %v4988, %v5069
    %v5073 = vld [vmem:[#allocation3 + $0x40] sm:$0x3]
    %s5074 = scalar_lea.vmem [#allocation2], 2048
    %v5075 = vld [vmem:[%s5074] sm:$0xff]
    %v5076 = vld [vmem:[%s5074 + $0x8] sm:$0xff]
    %v5077 = vld [vmem:[%s5074 + $0x10] sm:$0xff]
    %v5078 = vld [vmem:[%s5074 + $0x18] sm:$0xff]
    %v5079 = vld [vmem:[%s5074 + $0x20] sm:$0xff]
    %v5080 = vld [vmem:[%s5074 + $0x28] sm:$0xff]
    %v5081 = vld [vmem:[%s5074 + $0x30] sm:$0xff]
    %v5082 = vld [vmem:[%s5074 + $0x38] sm:$0xff]
    %v5084 = vsel %vm2367, %v5073, 0
    %5086 = vmatprep.subr.mxu0 0.0
    %5087 = vmatpush1.msra.mxu0 %v5075
    %5088 = vmatprep.subr.mxu0 0.0
    %5089 = vmatpush1.msra.mxu0 %v5076
    %5090 = vmatprep.subr.mxu0 0.0
    %5091 = vmatpush1.msra.mxu0 %v5077
    %5092 = vmatprep.subr.mxu0 0.0
    %5093 = vmatpush1.msra.mxu0 %v5078
    %5094 = vmatprep.subr.mxu0 0.0
    %5095 = vmatpush1.msra.mxu0 %v5079
    %5096 = vmatprep.subr.mxu0 0.0
    %5097 = vmatpush1.msra.mxu0 %v5080
    %5098 = vmatprep.subr.mxu0 0.0
    %5099 = vmatpush1.msra.mxu0 %v5081
    %5100 = vmatprep.subr.mxu0 0.0
    %5101 = vmatpush1.msra.mxu0 %v5082
    %5102 = vmatprep.subr.mxu0 0.0
    %5103 = vmatpush1.msra.mxu0 0.0
    %5104 = vmatprep.subr.mxu0 0.0
    %5105 = vmatpush1.msra.mxu0 0.0
    %5106 = vmatprep.subr.mxu0 0.0
    %5107 = vmatpush1.msra.mxu0 0.0
    %5108 = vmatprep.subr.mxu0 0.0
    %5109 = vmatpush1.msra.mxu0 0.0
    %5110 = vmatprep.subr.mxu0 0.0
    %5111 = vmatpush1.msra.mxu0 0.0
    %5112 = vmatprep.subr.mxu0 0.0
    %5113 = vmatpush1.msra.mxu0 0.0
    %5114 = vmatprep.subr.mxu0 0.0
    %5115 = vmatpush1.msra.mxu0 0.0
    %5116 = vmatprep.subr.mxu0 0.0
    %5117 = vmatpush1.msra.mxu0 0.0
    %5118 = vmatprep.subr.mxu0 0.0
    %5119 = vmatpush1.msra.mxu0 0.0
    %5120 = vmatprep.subr.mxu0 0.0
    %5121 = vmatpush1.msra.mxu0 0.0
    %5122 = vmatprep.subr.mxu0 0.0
    %5123 = vmatpush1.msra.mxu0 0.0
    %5124 = vmatprep.subr.mxu0 0.0
    %5125 = vmatpush1.msra.mxu0 0.0
    %5126 = vmatprep.subr.mxu0 0.0
    %5127 = vmatpush1.msra.mxu0 0.0
    %5128 = vmatprep.subr.mxu0 0.0
    %5129 = vmatpush1.msra.mxu0 0.0
    %5130 = vmatprep.subr.mxu0 0.0
    %5131 = vmatpush1.msra.mxu0 0.0
    %5132 = vmatprep.subr.mxu0 0.0
    %5133 = vmatpush1.msra.mxu0 0.0
    %5134 = vmatprep.subr.mxu0 0.0
    %5135 = vmatpush1.msra.mxu0 0.0
    %5136 = vmatprep.subr.mxu0 0.0
    %5137 = vmatpush1.msra.mxu0 0.0
    %5138 = vmatprep.subr.mxu0 0.0
    %5139 = vmatpush1.msra.mxu0 0.0
    %5140 = vmatprep.subr.mxu0 0.0
    %5141 = vmatpush1.msra.mxu0 0.0
    %5142 = vmatprep.subr.mxu0 0.0
    %5143 = vmatpush1.msra.mxu0 0.0
    %5144 = vmatprep.subr.mxu0 0.0
    %5145 = vmatpush1.msra.mxu0 0.0
    %5146 = vmatprep.subr.mxu0 0.0
    %5147 = vmatpush1.msra.mxu0 0.0
    %5148 = vmatprep.subr.mxu0 0.0
    %5149 = vmatpush1.msra.mxu0 0.0
    %5150 = vmatprep.mubr.f32.mxu0 0.0
    %5151 = vmatmul.mubr.f32.gmra.mrb[0].mxu0 %v5084
    %v5152 = vpop.f32.mrb[0].mxu0
    %v5153 = vadd.f32 0.0, %v5152
    %v5154 = vpop.f32.mrb[0].mxu0
    %5155 = vdwg.mxu0
    %v5156 = vadd.f32 %v5072, %v5153
    %v5157 = vld [vmem:[#allocation3 + $0x42] sm:$0x3]
    %s5158 = scalar_lea.vmem [#allocation2], 2112
    %v5159 = vld [vmem:[%s5158] sm:$0xff]
    %v5160 = vld [vmem:[%s5158 + $0x8] sm:$0xff]
    %v5161 = vld [vmem:[%s5158 + $0x10] sm:$0xff]
    %v5162 = vld [vmem:[%s5158 + $0x18] sm:$0xff]
    %v5163 = vld [vmem:[%s5158 + $0x20] sm:$0xff]
    %v5164 = vld [vmem:[%s5158 + $0x28] sm:$0xff]
    %v5165 = vld [vmem:[%s5158 + $0x30] sm:$0xff]
    %v5166 = vld [vmem:[%s5158 + $0x38] sm:$0xff]
    %v5168 = vsel %vm2367, %v5157, 0
    %5170 = vmatprep.subr.mxu0 0.0
    %5171 = vmatpush1.msra.mxu0 %v5159
    %5172 = vmatprep.subr.mxu0 0.0
    %5173 = vmatpush1.msra.mxu0 %v5160
    %5174 = vmatprep.subr.mxu0 0.0
    %5175 = vmatpush1.msra.mxu0 %v5161
    %5176 = vmatprep.subr.mxu0 0.0
    %5177 = vmatpush1.msra.mxu0 %v5162
    %5178 = vmatprep.subr.mxu0 0.0
    %5179 = vmatpush1.msra.mxu0 %v5163
    %5180 = vmatprep.subr.mxu0 0.0
    %5181 = vmatpush1.msra.mxu0 %v5164
    %5182 = vmatprep.subr.mxu0 0.0
    %5183 = vmatpush1.msra.mxu0 %v5165
    %5184 = vmatprep.subr.mxu0 0.0
    %5185 = vmatpush1.msra.mxu0 %v5166
    %5186 = vmatprep.subr.mxu0 0.0
    %5187 = vmatpush1.msra.mxu0 0.0
    %5188 = vmatprep.subr.mxu0 0.0
    %5189 = vmatpush1.msra.mxu0 0.0
    %5190 = vmatprep.subr.mxu0 0.0
    %5191 = vmatpush1.msra.mxu0 0.0
    %5192 = vmatprep.subr.mxu0 0.0
    %5193 = vmatpush1.msra.mxu0 0.0
    %5194 = vmatprep.subr.mxu0 0.0
    %5195 = vmatpush1.msra.mxu0 0.0
    %5196 = vmatprep.subr.mxu0 0.0
    %5197 = vmatpush1.msra.mxu0 0.0
    %5198 = vmatprep.subr.mxu0 0.0
    %5199 = vmatpush1.msra.mxu0 0.0
    %5200 = vmatprep.subr.mxu0 0.0
    %5201 = vmatpush1.msra.mxu0 0.0
    %5202 = vmatprep.subr.mxu0 0.0
    %5203 = vmatpush1.msra.mxu0 0.0
    %5204 = vmatprep.subr.mxu0 0.0
    %5205 = vmatpush1.msra.mxu0 0.0
    %5206 = vmatprep.subr.mxu0 0.0
    %5207 = vmatpush1.msra.mxu0 0.0
    %5208 = vmatprep.subr.mxu0 0.0
    %5209 = vmatpush1.msra.mxu0 0.0
    %5210 = vmatprep.subr.mxu0 0.0
    %5211 = vmatpush1.msra.mxu0 0.0
    %5212 = vmatprep.subr.mxu0 0.0
    %5213 = vmatpush1.msra.mxu0 0.0
    %5214 = vmatprep.subr.mxu0 0.0
    %5215 = vmatpush1.msra.mxu0 0.0
    %5216 = vmatprep.subr.mxu0 0.0
    %5217 = vmatpush1.msra.mxu0 0.0
    %5218 = vmatprep.subr.mxu0 0.0
    %5219 = vmatpush1.msra.mxu0 0.0
    %5220 = vmatprep.subr.mxu0 0.0
    %5221 = vmatpush1.msra.mxu0 0.0
    %5222 = vmatprep.subr.mxu0 0.0
    %5223 = vmatpush1.msra.mxu0 0.0
    %5224 = vmatprep.subr.mxu0 0.0
    %5225 = vmatpush1.msra.mxu0 0.0
    %5226 = vmatprep.subr.mxu0 0.0
    %5227 = vmatpush1.msra.mxu0 0.0
    %5228 = vmatprep.subr.mxu0 0.0
    %5229 = vmatpush1.msra.mxu0 0.0
    %5230 = vmatprep.subr.mxu0 0.0
    %5231 = vmatpush1.msra.mxu0 0.0
    %5232 = vmatprep.subr.mxu0 0.0
    %5233 = vmatpush1.msra.mxu0 0.0
    %5234 = vmatprep.mubr.f32.mxu0 0.0
    %5235 = vmatmul.mubr.f32.gmra.mrb[0].mxu0 %v5168
    %v5236 = vpop.f32.mrb[0].mxu0
    %v5237 = vadd.f32 0.0, %v5236
    %v5238 = vpop.f32.mrb[0].mxu0
    %5239 = vdwg.mxu0
    %v5240 = vadd.f32 %v5156, %v5237
    %v5241 = vld [vmem:[#allocation3 + $0x44] sm:$0x3]
    %s5242 = scalar_lea.vmem [#allocation2], 2176
    %v5243 = vld [vmem:[%s5242] sm:$0xff]
    %v5244 = vld [vmem:[%s5242 + $0x8] sm:$0xff]
    %v5245 = vld [vmem:[%s5242 + $0x10] sm:$0xff]
    %v5246 = vld [vmem:[%s5242 + $0x18] sm:$0xff]
    %v5247 = vld [vmem:[%s5242 + $0x20] sm:$0xff]
    %v5248 = vld [vmem:[%s5242 + $0x28] sm:$0xff]
    %v5249 = vld [vmem:[%s5242 + $0x30] sm:$0xff]
    %v5250 = vld [vmem:[%s5242 + $0x38] sm:$0xff]
    %v5252 = vsel %vm2367, %v5241, 0
    %5254 = vmatprep.subr.mxu0 0.0
    %5255 = vmatpush1.msra.mxu0 %v5243
    %5256 = vmatprep.subr.mxu0 0.0
    %5257 = vmatpush1.msra.mxu0 %v5244
    %5258 = vmatprep.subr.mxu0 0.0
    %5259 = vmatpush1.msra.mxu0 %v5245
    %5260 = vmatprep.subr.mxu0 0.0
    %5261 = vmatpush1.msra.mxu0 %v5246
    %5262 = vmatprep.subr.mxu0 0.0
    %5263 = vmatpush1.msra.mxu0 %v5247
    %5264 = vmatprep.subr.mxu0 0.0
    %5265 = vmatpush1.msra.mxu0 %v5248
    %5266 = vmatprep.subr.mxu0 0.0
    %5267 = vmatpush1.msra.mxu0 %v5249
    %5268 = vmatprep.subr.mxu0 0.0
    %5269 = vmatpush1.msra.mxu0 %v5250
    %5270 = vmatprep.subr.mxu0 0.0
    %5271 = vmatpush1.msra.mxu0 0.0
    %5272 = vmatprep.subr.mxu0 0.0
    %5273 = vmatpush1.msra.mxu0 0.0
    %5274 = vmatprep.subr.mxu0 0.0
    %5275 = vmatpush1.msra.mxu0 0.0
    %5276 = vmatprep.subr.mxu0 0.0
    %5277 = vmatpush1.msra.mxu0 0.0
    %5278 = vmatprep.subr.mxu0 0.0
    %5279 = vmatpush1.msra.mxu0 0.0
    %5280 = vmatprep.subr.mxu0 0.0
    %5281 = vmatpush1.msra.mxu0 0.0
    %5282 = vmatprep.subr.mxu0 0.0
    %5283 = vmatpush1.msra.mxu0 0.0
    %5284 = vmatprep.subr.mxu0 0.0
    %5285 = vmatpush1.msra.mxu0 0.0
    %5286 = vmatprep.subr.mxu0 0.0
    %5287 = vmatpush1.msra.mxu0 0.0
    %5288 = vmatprep.subr.mxu0 0.0
    %5289 = vmatpush1.msra.mxu0 0.0
    %5290 = vmatprep.subr.mxu0 0.0
    %5291 = vmatpush1.msra.mxu0 0.0
    %5292 = vmatprep.subr.mxu0 0.0
    %5293 = vmatpush1.msra.mxu0 0.0
    %5294 = vmatprep.subr.mxu0 0.0
    %5295 = vmatpush1.msra.mxu0 0.0
    %5296 = vmatprep.subr.mxu0 0.0
    %5297 = vmatpush1.msra.mxu0 0.0
    %5298 = vmatprep.subr.mxu0 0.0
    %5299 = vmatpush1.msra.mxu0 0.0
    %5300 = vmatprep.subr.mxu0 0.0
    %5301 = vmatpush1.msra.mxu0 0.0
    %5302 = vmatprep.subr.mxu0 0.0
    %5303 = vmatpush1.msra.mxu0 0.0
    %5304 = vmatprep.subr.mxu0 0.0
    %5305 = vmatpush1.msra.mxu0 0.0
    %5306 = vmatprep.subr.mxu0 0.0
    %5307 = vmatpush1.msra.mxu0 0.0
    %5308 = vmatprep.subr.mxu0 0.0
    %5309 = vmatpush1.msra.mxu0 0.0
    %5310 = vmatprep.subr.mxu0 0.0
    %5311 = vmatpush1.msra.mxu0 0.0
    %5312 = vmatprep.subr.mxu0 0.0
    %5313 = vmatpush1.msra.mxu0 0.0
    %5314 = vmatprep.subr.mxu0 0.0
    %5315 = vmatpush1.msra.mxu0 0.0
    %5316 = vmatprep.subr.mxu0 0.0
    %5317 = vmatpush1.msra.mxu0 0.0
    %5318 = vmatprep.mubr.f32.mxu0 0.0
    %5319 = vmatmul.mubr.f32.gmra.mrb[0].mxu0 %v5252
    %v5320 = vpop.f32.mrb[0].mxu0
    %v5321 = vadd.f32 0.0, %v5320
    %v5322 = vpop.f32.mrb[0].mxu0
    %5323 = vdwg.mxu0
    %v5324 = vadd.f32 %v5240, %v5321
    %v5325 = vld [vmem:[#allocation3 + $0x46] sm:$0x3]
    %s5326 = scalar_lea.vmem [#allocation2], 2240
    %v5327 = vld [vmem:[%s5326] sm:$0xff]
    %v5328 = vld [vmem:[%s5326 + $0x8] sm:$0xff]
    %v5329 = vld [vmem:[%s5326 + $0x10] sm:$0xff]
    %v5330 = vld [vmem:[%s5326 + $0x18] sm:$0xff]
    %v5331 = vld [vmem:[%s5326 + $0x20] sm:$0xff]
    %v5332 = vld [vmem:[%s5326 + $0x28] sm:$0xff]
    %v5333 = vld [vmem:[%s5326 + $0x30] sm:$0xff]
    %v5334 = vld [vmem:[%s5326 + $0x38] sm:$0xff]
    %v5336 = vsel %vm2367, %v5325, 0
    %5338 = vmatprep.subr.mxu0 0.0
    %5339 = vmatpush1.msra.mxu0 %v5327
    %5340 = vmatprep.subr.mxu0 0.0
    %5341 = vmatpush1.msra.mxu0 %v5328
    %5342 = vmatprep.subr.mxu0 0.0
    %5343 = vmatpush1.msra.mxu0 %v5329
    %5344 = vmatprep.subr.mxu0 0.0
    %5345 = vmatpush1.msra.mxu0 %v5330
    %5346 = vmatprep.subr.mxu0 0.0
    %5347 = vmatpush1.msra.mxu0 %v5331
    %5348 = vmatprep.subr.mxu0 0.0
    %5349 = vmatpush1.msra.mxu0 %v5332
    %5350 = vmatprep.subr.mxu0 0.0
    %5351 = vmatpush1.msra.mxu0 %v5333
    %5352 = vmatprep.subr.mxu0 0.0
    %5353 = vmatpush1.msra.mxu0 %v5334
    %5354 = vmatprep.subr.mxu0 0.0
    %5355 = vmatpush1.msra.mxu0 0.0
    %5356 = vmatprep.subr.mxu0 0.0
    %5357 = vmatpush1.msra.mxu0 0.0
    %5358 = vmatprep.subr.mxu0 0.0
    %5359 = vmatpush1.msra.mxu0 0.0
    %5360 = vmatprep.subr.mxu0 0.0
    %5361 = vmatpush1.msra.mxu0 0.0
    %5362 = vmatprep.subr.mxu0 0.0
    %5363 = vmatpush1.msra.mxu0 0.0
    %5364 = vmatprep.subr.mxu0 0.0
    %5365 = vmatpush1.msra.mxu0 0.0
    %5366 = vmatprep.subr.mxu0 0.0
    %5367 = vmatpush1.msra.mxu0 0.0
    %5368 = vmatprep.subr.mxu0 0.0
    %5369 = vmatpush1.msra.mxu0 0.0
    %5370 = vmatprep.subr.mxu0 0.0
    %5371 = vmatpush1.msra.mxu0 0.0
    %5372 = vmatprep.subr.mxu0 0.0
    %5373 = vmatpush1.msra.mxu0 0.0
    %5374 = vmatprep.subr.mxu0 0.0
    %5375 = vmatpush1.msra.mxu0 0.0
    %5376 = vmatprep.subr.mxu0 0.0
    %5377 = vmatpush1.msra.mxu0 0.0
    %5378 = vmatprep.subr.mxu0 0.0
    %5379 = vmatpush1.msra.mxu0 0.0
    %5380 = vmatprep.subr.mxu0 0.0
    %5381 = vmatpush1.msra.mxu0 0.0
    %5382 = vmatprep.subr.mxu0 0.0
    %5383 = vmatpush1.msra.mxu0 0.0
    %5384 = vmatprep.subr.mxu0 0.0
    %5385 = vmatpush1.msra.mxu0 0.0
    %5386 = vmatprep.subr.mxu0 0.0
    %5387 = vmatpush1.msra.mxu0 0.0
    %5388 = vmatprep.subr.mxu0 0.0
    %5389 = vmatpush1.msra.mxu0 0.0
    %5390 = vmatprep.subr.mxu0 0.0
    %5391 = vmatpush1.msra.mxu0 0.0
    %5392 = vmatprep.subr.mxu0 0.0
    %5393 = vmatpush1.msra.mxu0 0.0
    %5394 = vmatprep.subr.mxu0 0.0
    %5395 = vmatpush1.msra.mxu0 0.0
    %5396 = vmatprep.subr.mxu0 0.0
    %5397 = vmatpush1.msra.mxu0 0.0
    %5398 = vmatprep.subr.mxu0 0.0
    %5399 = vmatpush1.msra.mxu0 0.0
    %5400 = vmatprep.subr.mxu0 0.0
    %5401 = vmatpush1.msra.mxu0 0.0
    %5402 = vmatprep.mubr.f32.mxu0 0.0
    %5403 = vmatmul.mubr.f32.gmra.mrb[0].mxu0 %v5336
    %v5404 = vpop.f32.mrb[0].mxu0
    %v5405 = vadd.f32 0.0, %v5404
    %v5406 = vpop.f32.mrb[0].mxu0
    %5407 = vdwg.mxu0
    %v5408 = vadd.f32 %v5324, %v5405
    %v5409 = vld [vmem:[#allocation3 + $0x48] sm:$0x3]
    %s5410 = scalar_lea.vmem [#allocation2], 2304
    %v5411 = vld [vmem:[%s5410] sm:$0xff]
    %v5412 = vld [vmem:[%s5410 + $0x8] sm:$0xff]
    %v5413 = vld [vmem:[%s5410 + $0x10] sm:$0xff]
    %v5414 = vld [vmem:[%s5410 + $0x18] sm:$0xff]
    %v5415 = vld [vmem:[%s5410 + $0x20] sm:$0xff]
    %v5416 = vld [vmem:[%s5410 + $0x28] sm:$0xff]
    %v5417 = vld [vmem:[%s5410 + $0x30] sm:$0xff]
    %v5418 = vld [vmem:[%s5410 + $0x38] sm:$0xff]
    %v5420 = vsel %vm2367, %v5409, 0
    %5422 = vmatprep.subr.mxu0 0.0
    %5423 = vmatpush1.msra.mxu0 %v5411
    %5424 = vmatprep.subr.mxu0 0.0
    %5425 = vmatpush1.msra.mxu0 %v5412
    %5426 = vmatprep.subr.mxu0 0.0
    %5427 = vmatpush1.msra.mxu0 %v5413
    %5428 = vmatprep.subr.mxu0 0.0
    %5429 = vmatpush1.msra.mxu0 %v5414
    %5430 = vmatprep.subr.mxu0 0.0
    %5431 = vmatpush1.msra.mxu0 %v5415
    %5432 = vmatprep.subr.mxu0 0.0
    %5433 = vmatpush1.msra.mxu0 %v5416
    %5434 = vmatprep.subr.mxu0 0.0
    %5435 = vmatpush1.msra.mxu0 %v5417
    %5436 = vmatprep.subr.mxu0 0.0
    %5437 = vmatpush1.msra.mxu0 %v5418
    %5438 = vmatprep.subr.mxu0 0.0
    %5439 = vmatpush1.msra.mxu0 0.0
    %5440 = vmatprep.subr.mxu0 0.0
    %5441 = vmatpush1.msra.mxu0 0.0
    %5442 = vmatprep.subr.mxu0 0.0
    %5443 = vmatpush1.msra.mxu0 0.0
    %5444 = vmatprep.subr.mxu0 0.0
    %5445 = vmatpush1.msra.mxu0 0.0
    %5446 = vmatprep.subr.mxu0 0.0
    %5447 = vmatpush1.msra.mxu0 0.0
    %5448 = vmatprep.subr.mxu0 0.0
    %5449 = vmatpush1.msra.mxu0 0.0
    %5450 = vmatprep.subr.mxu0 0.0
    %5451 = vmatpush1.msra.mxu0 0.0
    %5452 = vmatprep.subr.mxu0 0.0
    %5453 = vmatpush1.msra.mxu0 0.0
    %5454 = vmatprep.subr.mxu0 0.0
    %5455 = vmatpush1.msra.mxu0 0.0
    %5456 = vmatprep.subr.mxu0 0.0
    %5457 = vmatpush1.msra.mxu0 0.0
    %5458 = vmatprep.subr.mxu0 0.0
    %5459 = vmatpush1.msra.mxu0 0.0
    %5460 = vmatprep.subr.mxu0 0.0
    %5461 = vmatpush1.msra.mxu0 0.0
    %5462 = vmatprep.subr.mxu0 0.0
    %5463 = vmatpush1.msra.mxu0 0.0
    %5464 = vmatprep.subr.mxu0 0.0
    %5465 = vmatpush1.msra.mxu0 0.0
    %5466 = vmatprep.subr.mxu0 0.0
    %5467 = vmatpush1.msra.mxu0 0.0
    %5468 = vmatprep.subr.mxu0 0.0
    %5469 = vmatpush1.msra.mxu0 0.0
    %5470 = vmatprep.subr.mxu0 0.0
    %5471 = vmatpush1.msra.mxu0 0.0
    %5472 = vmatprep.subr.mxu0 0.0
    %5473 = vmatpush1.msra.mxu0 0.0
    %5474 = vmatprep.subr.mxu0 0.0
    %5475 = vmatpush1.msra.mxu0 0.0
    %5476 = vmatprep.subr.mxu0 0.0
    %5477 = vmatpush1.msra.mxu0 0.0
    %5478 = vmatprep.subr.mxu0 0.0
    %5479 = vmatpush1.msra.mxu0 0.0
    %5480 = vmatprep.subr.mxu0 0.0
    %5481 = vmatpush1.msra.mxu0 0.0
    %5482 = vmatprep.subr.mxu0 0.0
    %5483 = vmatpush1.msra.mxu0 0.0
    %5484 = vmatprep.subr.mxu0 0.0
    %5485 = vmatpush1.msra.mxu0 0.0
    %5486 = vmatprep.mubr.f32.mxu0 0.0
    %5487 = vmatmul.mubr.f32.gmra.mrb[0].mxu0 %v5420
    %v5488 = vpop.f32.mrb[0].mxu0
    %v5489 = vadd.f32 0.0, %v5488
    %v5490 = vpop.f32.mrb[0].mxu0
    %5491 = vdwg.mxu0
    %v5492 = vadd.f32 %v5408, %v5489
    %v5493 = vld [vmem:[#allocation3 + $0x4a] sm:$0x3]
    %s5494 = scalar_lea.vmem [#allocation2], 2368
    %v5495 = vld [vmem:[%s5494] sm:$0xff]
    %v5496 = vld [vmem:[%s5494 + $0x8] sm:$0xff]
    %v5497 = vld [vmem:[%s5494 + $0x10] sm:$0xff]
    %v5498 = vld [vmem:[%s5494 + $0x18] sm:$0xff]
    %v5499 = vld [vmem:[%s5494 + $0x20] sm:$0xff]
    %v5500 = vld [vmem:[%s5494 + $0x28] sm:$0xff]
    %v5501 = vld [vmem:[%s5494 + $0x30] sm:$0xff]
    %v5502 = vld [vmem:[%s5494 + $0x38] sm:$0xff]
    %v5504 = vsel %vm2367, %v5493, 0
    %5506 = vmatprep.subr.mxu0 0.0
    %5507 = vmatpush1.msra.mxu0 %v5495
    %5508 = vmatprep.subr.mxu0 0.0
    %5509 = vmatpush1.msra.mxu0 %v5496
    %5510 = vmatprep.subr.mxu0 0.0
    %5511 = vmatpush1.msra.mxu0 %v5497
    %5512 = vmatprep.subr.mxu0 0.0
    %5513 = vmatpush1.msra.mxu0 %v5498
    %5514 = vmatprep.subr.mxu0 0.0
    %5515 = vmatpush1.msra.mxu0 %v5499
    %5516 = vmatprep.subr.mxu0 0.0
    %5517 = vmatpush1.msra.mxu0 %v5500
    %5518 = vmatprep.subr.mxu0 0.0
    %5519 = vmatpush1.msra.mxu0 %v5501
    %5520 = vmatprep.subr.mxu0 0.0
    %5521 = vmatpush1.msra.mxu0 %v5502
    %5522 = vmatprep.subr.mxu0 0.0
    %5523 = vmatpush1.msra.mxu0 0.0
    %5524 = vmatprep.subr.mxu0 0.0
    %5525 = vmatpush1.msra.mxu0 0.0
    %5526 = vmatprep.subr.mxu0 0.0
    %5527 = vmatpush1.msra.mxu0 0.0
    %5528 = vmatprep.subr.mxu0 0.0
    %5529 = vmatpush1.msra.mxu0 0.0
    %5530 = vmatprep.subr.mxu0 0.0
    %5531 = vmatpush1.msra.mxu0 0.0
    %5532 = vmatprep.subr.mxu0 0.0
    %5533 = vmatpush1.msra.mxu0 0.0
    %5534 = vmatprep.subr.mxu0 0.0
    %5535 = vmatpush1.msra.mxu0 0.0
    %5536 = vmatprep.subr.mxu0 0.0
    %5537 = vmatpush1.msra.mxu0 0.0
    %5538 = vmatprep.subr.mxu0 0.0
    %5539 = vmatpush1.msra.mxu0 0.0
    %5540 = vmatprep.subr.mxu0 0.0
    %5541 = vmatpush1.msra.mxu0 0.0
    %5542 = vmatprep.subr.mxu0 0.0
    %5543 = vmatpush1.msra.mxu0 0.0
    %5544 = vmatprep.subr.mxu0 0.0
    %5545 = vmatpush1.msra.mxu0 0.0
    %5546 = vmatprep.subr.mxu0 0.0
    %5547 = vmatpush1.msra.mxu0 0.0
    %5548 = vmatprep.subr.mxu0 0.0
    %5549 = vmatpush1.msra.mxu0 0.0
    %5550 = vmatprep.subr.mxu0 0.0
    %5551 = vmatpush1.msra.mxu0 0.0
    %5552 = vmatprep.subr.mxu0 0.0
    %5553 = vmatpush1.msra.mxu0 0.0
    %5554 = vmatprep.subr.mxu0 0.0
    %5555 = vmatpush1.msra.mxu0 0.0
    %5556 = vmatprep.subr.mxu0 0.0
    %5557 = vmatpush1.msra.mxu0 0.0
    %5558 = vmatprep.subr.mxu0 0.0
    %5559 = vmatpush1.msra.mxu0 0.0
    %5560 = vmatprep.subr.mxu0 0.0
    %5561 = vmatpush1.msra.mxu0 0.0
    %5562 = vmatprep.subr.mxu0 0.0
    %5563 = vmatpush1.msra.mxu0 0.0
    %5564 = vmatprep.subr.mxu0 0.0
    %5565 = vmatpush1.msra.mxu0 0.0
    %5566 = vmatprep.subr.mxu0 0.0
    %5567 = vmatpush1.msra.mxu0 0.0
    %5568 = vmatprep.subr.mxu0 0.0
    %5569 = vmatpush1.msra.mxu0 0.0
    %5570 = vmatprep.mubr.f32.mxu0 0.0
    %5571 = vmatmul.mubr.f32.gmra.mrb[0].mxu0 %v5504
    %v5572 = vpop.f32.mrb[0].mxu0
    %v5573 = vadd.f32 0.0, %v5572
    %v5574 = vpop.f32.mrb[0].mxu0
    %5575 = vdwg.mxu0
    %v5576 = vadd.f32 %v5492, %v5573
    %v5577 = vld [vmem:[#allocation3 + $0x4c] sm:$0x3]
    %s5578 = scalar_lea.vmem [#allocation2], 2432
    %v5579 = vld [vmem:[%s5578] sm:$0xff]
    %v5580 = vld [vmem:[%s5578 + $0x8] sm:$0xff]
    %v5581 = vld [vmem:[%s5578 + $0x10] sm:$0xff]
    %v5582 = vld [vmem:[%s5578 + $0x18] sm:$0xff]
    %v5583 = vld [vmem:[%s5578 + $0x20] sm:$0xff]
    %v5584 = vld [vmem:[%s5578 + $0x28] sm:$0xff]
    %v5585 = vld [vmem:[%s5578 + $0x30] sm:$0xff]
    %v5586 = vld [vmem:[%s5578 + $0x38] sm:$0xff]
    %v5588 = vsel %vm2367, %v5577, 0
    %5590 = vmatprep.subr.mxu0 0.0
    %5591 = vmatpush1.msra.mxu0 %v5579
    %5592 = vmatprep.subr.mxu0 0.0
    %5593 = vmatpush1.msra.mxu0 %v5580
    %5594 = vmatprep.subr.mxu0 0.0
    %5595 = vmatpush1.msra.mxu0 %v5581
    %5596 = vmatprep.subr.mxu0 0.0
    %5597 = vmatpush1.msra.mxu0 %v5582
    %5598 = vmatprep.subr.mxu0 0.0
    %5599 = vmatpush1.msra.mxu0 %v5583
    %5600 = vmatprep.subr.mxu0 0.0
    %5601 = vmatpush1.msra.mxu0 %v5584
    %5602 = vmatprep.subr.mxu0 0.0
    %5603 = vmatpush1.msra.mxu0 %v5585
    %5604 = vmatprep.subr.mxu0 0.0
    %5605 = vmatpush1.msra.mxu0 %v5586
    %5606 = vmatprep.subr.mxu0 0.0
    %5607 = vmatpush1.msra.mxu0 0.0
    %5608 = vmatprep.subr.mxu0 0.0
    %5609 = vmatpush1.msra.mxu0 0.0
    %5610 = vmatprep.subr.mxu0 0.0
    %5611 = vmatpush1.msra.mxu0 0.0
    %5612 = vmatprep.subr.mxu0 0.0
    %5613 = vmatpush1.msra.mxu0 0.0
    %5614 = vmatprep.subr.mxu0 0.0
    %5615 = vmatpush1.msra.mxu0 0.0
    %5616 = vmatprep.subr.mxu0 0.0
    %5617 = vmatpush1.msra.mxu0 0.0
    %5618 = vmatprep.subr.mxu0 0.0
    %5619 = vmatpush1.msra.mxu0 0.0
    %5620 = vmatprep.subr.mxu0 0.0
    %5621 = vmatpush1.msra.mxu0 0.0
    %5622 = vmatprep.subr.mxu0 0.0
    %5623 = vmatpush1.msra.mxu0 0.0
    %5624 = vmatprep.subr.mxu0 0.0
    %5625 = vmatpush1.msra.mxu0 0.0
    %5626 = vmatprep.subr.mxu0 0.0
    %5627 = vmatpush1.msra.mxu0 0.0
    %5628 = vmatprep.subr.mxu0 0.0
    %5629 = vmatpush1.msra.mxu0 0.0
    %5630 = vmatprep.subr.mxu0 0.0
    %5631 = vmatpush1.msra.mxu0 0.0
    %5632 = vmatprep.subr.mxu0 0.0
    %5633 = vmatpush1.msra.mxu0 0.0
    %5634 = vmatprep.subr.mxu0 0.0
    %5635 = vmatpush1.msra.mxu0 0.0
    %5636 = vmatprep.subr.mxu0 0.0
    %5637 = vmatpush1.msra.mxu0 0.0
    %5638 = vmatprep.subr.mxu0 0.0
    %5639 = vmatpush1.msra.mxu0 0.0
    %5640 = vmatprep.subr.mxu0 0.0
    %5641 = vmatpush1.msra.mxu0 0.0
    %5642 = vmatprep.subr.mxu0 0.0
    %5643 = vmatpush1.msra.mxu0 0.0
    %5644 = vmatprep.subr.mxu0 0.0
    %5645 = vmatpush1.msra.mxu0 0.0
    %5646 = vmatprep.subr.mxu0 0.0
    %5647 = vmatpush1.msra.mxu0 0.0
    %5648 = vmatprep.subr.mxu0 0.0
    %5649 = vmatpush1.msra.mxu0 0.0
    %5650 = vmatprep.subr.mxu0 0.0
    %5651 = vmatpush1.msra.mxu0 0.0
    %5652 = vmatprep.subr.mxu0 0.0
    %5653 = vmatpush1.msra.mxu0 0.0
    %5654 = vmatprep.mubr.f32.mxu0 0.0
    %5655 = vmatmul.mubr.f32.gmra.mrb[0].mxu0 %v5588
    %v5656 = vpop.f32.mrb[0].mxu0
    %v5657 = vadd.f32 0.0, %v5656
    %v5658 = vpop.f32.mrb[0].mxu0
    %5659 = vdwg.mxu0
    %v5660 = vadd.f32 %v5576, %v5657
    %v5661 = vld [vmem:[#allocation3 + $0x4e] sm:$0x3]
    %s5662 = scalar_lea.vmem [#allocation2], 2496
    %v5663 = vld [vmem:[%s5662] sm:$0xff]
    %v5664 = vld [vmem:[%s5662 + $0x8] sm:$0xff]
    %v5665 = vld [vmem:[%s5662 + $0x10] sm:$0xff]
    %v5666 = vld [vmem:[%s5662 + $0x18] sm:$0xff]
    %v5667 = vld [vmem:[%s5662 + $0x20] sm:$0xff]
    %v5668 = vld [vmem:[%s5662 + $0x28] sm:$0xff]
    %v5669 = vld [vmem:[%s5662 + $0x30] sm:$0xff]
    %v5670 = vld [vmem:[%s5662 + $0x38] sm:$0xff]
    %v5672 = vsel %vm2367, %v5661, 0
    %5674 = vmatprep.subr.mxu0 0.0
    %5675 = vmatpush1.msra.mxu0 %v5663
    %5676 = vmatprep.subr.mxu0 0.0
    %5677 = vmatpush1.msra.mxu0 %v5664
    %5678 = vmatprep.subr.mxu0 0.0
    %5679 = vmatpush1.msra.mxu0 %v5665
    %5680 = vmatprep.subr.mxu0 0.0
    %5681 = vmatpush1.msra.mxu0 %v5666
    %5682 = vmatprep.subr.mxu0 0.0
    %5683 = vmatpush1.msra.mxu0 %v5667
    %5684 = vmatprep.subr.mxu0 0.0
    %5685 = vmatpush1.msra.mxu0 %v5668
    %5686 = vmatprep.subr.mxu0 0.0
    %5687 = vmatpush1.msra.mxu0 %v5669
    %5688 = vmatprep.subr.mxu0 0.0
    %5689 = vmatpush1.msra.mxu0 %v5670
    %5690 = vmatprep.subr.mxu0 0.0
    %5691 = vmatpush1.msra.mxu0 0.0
    %5692 = vmatprep.subr.mxu0 0.0
    %5693 = vmatpush1.msra.mxu0 0.0
    %5694 = vmatprep.subr.mxu0 0.0
    %5695 = vmatpush1.msra.mxu0 0.0
    %5696 = vmatprep.subr.mxu0 0.0
    %5697 = vmatpush1.msra.mxu0 0.0
    %5698 = vmatprep.subr.mxu0 0.0
    %5699 = vmatpush1.msra.mxu0 0.0
    %5700 = vmatprep.subr.mxu0 0.0
    %5701 = vmatpush1.msra.mxu0 0.0
    %5702 = vmatprep.subr.mxu0 0.0
    %5703 = vmatpush1.msra.mxu0 0.0
    %5704 = vmatprep.subr.mxu0 0.0
    %5705 = vmatpush1.msra.mxu0 0.0
    %5706 = vmatprep.subr.mxu0 0.0
    %5707 = vmatpush1.msra.mxu0 0.0
    %5708 = vmatprep.subr.mxu0 0.0
    %5709 = vmatpush1.msra.mxu0 0.0
    %5710 = vmatprep.subr.mxu0 0.0
    %5711 = vmatpush1.msra.mxu0 0.0
    %5712 = vmatprep.subr.mxu0 0.0
    %5713 = vmatpush1.msra.mxu0 0.0
    %5714 = vmatprep.subr.mxu0 0.0
    %5715 = vmatpush1.msra.mxu0 0.0
    %5716 = vmatprep.subr.mxu0 0.0
    %5717 = vmatpush1.msra.mxu0 0.0
    %5718 = vmatprep.subr.mxu0 0.0
    %5719 = vmatpush1.msra.mxu0 0.0
    %5720 = vmatprep.subr.mxu0 0.0
    %5721 = vmatpush1.msra.mxu0 0.0
    %5722 = vmatprep.subr.mxu0 0.0
    %5723 = vmatpush1.msra.mxu0 0.0
    %5724 = vmatprep.subr.mxu0 0.0
    %5725 = vmatpush1.msra.mxu0 0.0
    %5726 = vmatprep.subr.mxu0 0.0
    %5727 = vmatpush1.msra.mxu0 0.0
    %5728 = vmatprep.subr.mxu0 0.0
    %5729 = vmatpush1.msra.mxu0 0.0
    %5730 = vmatprep.subr.mxu0 0.0
    %5731 = vmatpush1.msra.mxu0 0.0
    %5732 = vmatprep.subr.mxu0 0.0
    %5733 = vmatpush1.msra.mxu0 0.0
    %5734 = vmatprep.subr.mxu0 0.0
    %5735 = vmatpush1.msra.mxu0 0.0
    %5736 = vmatprep.subr.mxu0 0.0
    %5737 = vmatpush1.msra.mxu0 0.0
    %5738 = vmatprep.mubr.f32.mxu0 0.0
    %5739 = vmatmul.mubr.f32.gmra.mrb[0].mxu0 %v5672
    %v5740 = vpop.f32.mrb[0].mxu0
    %v5741 = vadd.f32 0.0, %v5740
    %v5742 = vpop.f32.mrb[0].mxu0
    %5743 = vdwg.mxu0
    %v5744 = vadd.f32 %v5660, %v5741
    %v5745 = vld [vmem:[#allocation3 + $0x50] sm:$0x3]
    %s5746 = scalar_lea.vmem [#allocation2], 2560
    %v5747 = vld [vmem:[%s5746] sm:$0xff]
    %v5748 = vld [vmem:[%s5746 + $0x8] sm:$0xff]
    %v5749 = vld [vmem:[%s5746 + $0x10] sm:$0xff]
    %v5750 = vld [vmem:[%s5746 + $0x18] sm:$0xff]
    %v5751 = vld [vmem:[%s5746 + $0x20] sm:$0xff]
    %v5752 = vld [vmem:[%s5746 + $0x28] sm:$0xff]
    %v5753 = vld [vmem:[%s5746 + $0x30] sm:$0xff]
    %v5754 = vld [vmem:[%s5746 + $0x38] sm:$0xff]
    %v5756 = vsel %vm2367, %v5745, 0
    %5758 = vmatprep.subr.mxu0 0.0
    %5759 = vmatpush1.msra.mxu0 %v5747
    %5760 = vmatprep.subr.mxu0 0.0
    %5761 = vmatpush1.msra.mxu0 %v5748
    %5762 = vmatprep.subr.mxu0 0.0
    %5763 = vmatpush1.msra.mxu0 %v5749
    %5764 = vmatprep.subr.mxu0 0.0
    %5765 = vmatpush1.msra.mxu0 %v5750
    %5766 = vmatprep.subr.mxu0 0.0
    %5767 = vmatpush1.msra.mxu0 %v5751
    %5768 = vmatprep.subr.mxu0 0.0
    %5769 = vmatpush1.msra.mxu0 %v5752
    %5770 = vmatprep.subr.mxu0 0.0
    %5771 = vmatpush1.msra.mxu0 %v5753
    %5772 = vmatprep.subr.mxu0 0.0
    %5773 = vmatpush1.msra.mxu0 %v5754
    %5774 = vmatprep.subr.mxu0 0.0
    %5775 = vmatpush1.msra.mxu0 0.0
    %5776 = vmatprep.subr.mxu0 0.0
    %5777 = vmatpush1.msra.mxu0 0.0
    %5778 = vmatprep.subr.mxu0 0.0
    %5779 = vmatpush1.msra.mxu0 0.0
    %5780 = vmatprep.subr.mxu0 0.0
    %5781 = vmatpush1.msra.mxu0 0.0
    %5782 = vmatprep.subr.mxu0 0.0
    %5783 = vmatpush1.msra.mxu0 0.0
    %5784 = vmatprep.subr.mxu0 0.0
    %5785 = vmatpush1.msra.mxu0 0.0
    %5786 = vmatprep.subr.mxu0 0.0
    %5787 = vmatpush1.msra.mxu0 0.0
    %5788 = vmatprep.subr.mxu0 0.0
    %5789 = vmatpush1.msra.mxu0 0.0
    %5790 = vmatprep.subr.mxu0 0.0
    %5791 = vmatpush1.msra.mxu0 0.0
    %5792 = vmatprep.subr.mxu0 0.0
    %5793 = vmatpush1.msra.mxu0 0.0
    %5794 = vmatprep.subr.mxu0 0.0
    %5795 = vmatpush1.msra.mxu0 0.0
    %5796 = vmatprep.subr.mxu0 0.0
    %5797 = vmatpush1.msra.mxu0 0.0
    %5798 = vmatprep.subr.mxu0 0.0
    %5799 = vmatpush1.msra.mxu0 0.0
    %5800 = vmatprep.subr.mxu0 0.0
    %5801 = vmatpush1.msra.mxu0 0.0
    %5802 = vmatprep.subr.mxu0 0.0
    %5803 = vmatpush1.msra.mxu0 0.0
    %5804 = vmatprep.subr.mxu0 0.0
    %5805 = vmatpush1.msra.mxu0 0.0
    %5806 = vmatprep.subr.mxu0 0.0
    %5807 = vmatpush1.msra.mxu0 0.0
    %5808 = vmatprep.subr.mxu0 0.0
    %5809 = vmatpush1.msra.mxu0 0.0
    %5810 = vmatprep.subr.mxu0 0.0
    %5811 = vmatpush1.msra.mxu0 0.0
    %5812 = vmatprep.subr.mxu0 0.0
    %5813 = vmatpush1.msra.mxu0 0.0
    %5814 = vmatprep.subr.mxu0 0.0
    %5815 = vmatpush1.msra.mxu0 0.0
    %5816 = vmatprep.subr.mxu0 0.0
    %5817 = vmatpush1.msra.mxu0 0.0
    %5818 = vmatprep.subr.mxu0 0.0
    %5819 = vmatpush1.msra.mxu0 0.0
    %5820 = vmatprep.subr.mxu0 0.0
    %5821 = vmatpush1.msra.mxu0 0.0
    %5822 = vmatprep.mubr.f32.mxu0 0.0
    %5823 = vmatmul.mubr.f32.gmra.mrb[0].mxu0 %v5756
    %v5824 = vpop.f32.mrb[0].mxu0
    %v5825 = vadd.f32 0.0, %v5824
    %v5826 = vpop.f32.mrb[0].mxu0
    %5827 = vdwg.mxu0
    %v5828 = vadd.f32 %v5744, %v5825
    %v5829 = vld [vmem:[#allocation3 + $0x52] sm:$0x3]
    %s5830 = scalar_lea.vmem [#allocation2], 2624
    %v5831 = vld [vmem:[%s5830] sm:$0xff]
    %v5832 = vld [vmem:[%s5830 + $0x8] sm:$0xff]
    %v5833 = vld [vmem:[%s5830 + $0x10] sm:$0xff]
    %v5834 = vld [vmem:[%s5830 + $0x18] sm:$0xff]
    %v5835 = vld [vmem:[%s5830 + $0x20] sm:$0xff]
    %v5836 = vld [vmem:[%s5830 + $0x28] sm:$0xff]
    %v5837 = vld [vmem:[%s5830 + $0x30] sm:$0xff]
    %v5838 = vld [vmem:[%s5830 + $0x38] sm:$0xff]
    %v5840 = vsel %vm2367, %v5829, 0
    %5842 = vmatprep.subr.mxu0 0.0
    %5843 = vmatpush1.msra.mxu0 %v5831
    %5844 = vmatprep.subr.mxu0 0.0
    %5845 = vmatpush1.msra.mxu0 %v5832
    %5846 = vmatprep.subr.mxu0 0.0
    %5847 = vmatpush1.msra.mxu0 %v5833
    %5848 = vmatprep.subr.mxu0 0.0
    %5849 = vmatpush1.msra.mxu0 %v5834
    %5850 = vmatprep.subr.mxu0 0.0
    %5851 = vmatpush1.msra.mxu0 %v5835
    %5852 = vmatprep.subr.mxu0 0.0
    %5853 = vmatpush1.msra.mxu0 %v5836
    %5854 = vmatprep.subr.mxu0 0.0
    %5855 = vmatpush1.msra.mxu0 %v5837
    %5856 = vmatprep.subr.mxu0 0.0
    %5857 = vmatpush1.msra.mxu0 %v5838
    %5858 = vmatprep.subr.mxu0 0.0
    %5859 = vmatpush1.msra.mxu0 0.0
    %5860 = vmatprep.subr.mxu0 0.0
    %5861 = vmatpush1.msra.mxu0 0.0
    %5862 = vmatprep.subr.mxu0 0.0
    %5863 = vmatpush1.msra.mxu0 0.0
    %5864 = vmatprep.subr.mxu0 0.0
    %5865 = vmatpush1.msra.mxu0 0.0
    %5866 = vmatprep.subr.mxu0 0.0
    %5867 = vmatpush1.msra.mxu0 0.0
    %5868 = vmatprep.subr.mxu0 0.0
    %5869 = vmatpush1.msra.mxu0 0.0
    %5870 = vmatprep.subr.mxu0 0.0
    %5871 = vmatpush1.msra.mxu0 0.0
    %5872 = vmatprep.subr.mxu0 0.0
    %5873 = vmatpush1.msra.mxu0 0.0
    %5874 = vmatprep.subr.mxu0 0.0
    %5875 = vmatpush1.msra.mxu0 0.0
    %5876 = vmatprep.subr.mxu0 0.0
    %5877 = vmatpush1.msra.mxu0 0.0
    %5878 = vmatprep.subr.mxu0 0.0
    %5879 = vmatpush1.msra.mxu0 0.0
    %5880 = vmatprep.subr.mxu0 0.0
    %5881 = vmatpush1.msra.mxu0 0.0
    %5882 = vmatprep.subr.mxu0 0.0
    %5883 = vmatpush1.msra.mxu0 0.0
    %5884 = vmatprep.subr.mxu0 0.0
    %5885 = vmatpush1.msra.mxu0 0.0
    %5886 = vmatprep.subr.mxu0 0.0
    %5887 = vmatpush1.msra.mxu0 0.0
    %5888 = vmatprep.subr.mxu0 0.0
    %5889 = vmatpush1.msra.mxu0 0.0
    %5890 = vmatprep.subr.mxu0 0.0
    %5891 = vmatpush1.msra.mxu0 0.0
    %5892 = vmatprep.subr.mxu0 0.0
    %5893 = vmatpush1.msra.mxu0 0.0
    %5894 = vmatprep.subr.mxu0 0.0
    %5895 = vmatpush1.msra.mxu0 0.0
    %5896 = vmatprep.subr.mxu0 0.0
    %5897 = vmatpush1.msra.mxu0 0.0
    %5898 = vmatprep.subr.mxu0 0.0
    %5899 = vmatpush1.msra.mxu0 0.0
    %5900 = vmatprep.subr.mxu0 0.0
    %5901 = vmatpush1.msra.mxu0 0.0
    %5902 = vmatprep.subr.mxu0 0.0
    %5903 = vmatpush1.msra.mxu0 0.0
    %5904 = vmatprep.subr.mxu0 0.0
    %5905 = vmatpush1.msra.mxu0 0.0
    %5906 = vmatprep.mubr.f32.mxu0 0.0
    %5907 = vmatmul.mubr.f32.gmra.mrb[0].mxu0 %v5840
    %v5908 = vpop.f32.mrb[0].mxu0
    %v5909 = vadd.f32 0.0, %v5908
    %v5910 = vpop.f32.mrb[0].mxu0
    %5911 = vdwg.mxu0
    %v5912 = vadd.f32 %v5828, %v5909
    %v5913 = vld [vmem:[#allocation3 + $0x54] sm:$0x3]
    %s5914 = scalar_lea.vmem [#allocation2], 2688
    %v5915 = vld [vmem:[%s5914] sm:$0xff]
    %v5916 = vld [vmem:[%s5914 + $0x8] sm:$0xff]
    %v5917 = vld [vmem:[%s5914 + $0x10] sm:$0xff]
    %v5918 = vld [vmem:[%s5914 + $0x18] sm:$0xff]
    %v5919 = vld [vmem:[%s5914 + $0x20] sm:$0xff]
    %v5920 = vld [vmem:[%s5914 + $0x28] sm:$0xff]
    %v5921 = vld [vmem:[%s5914 + $0x30] sm:$0xff]
    %v5922 = vld [vmem:[%s5914 + $0x38] sm:$0xff]
    %v5924 = vsel %vm2367, %v5913, 0
    %5926 = vmatprep.subr.mxu0 0.0
    %5927 = vmatpush1.msra.mxu0 %v5915
    %5928 = vmatprep.subr.mxu0 0.0
    %5929 = vmatpush1.msra.mxu0 %v5916
    %5930 = vmatprep.subr.mxu0 0.0
    %5931 = vmatpush1.msra.mxu0 %v5917
    %5932 = vmatprep.subr.mxu0 0.0
    %5933 = vmatpush1.msra.mxu0 %v5918
    %5934 = vmatprep.subr.mxu0 0.0
    %5935 = vmatpush1.msra.mxu0 %v5919
    %5936 = vmatprep.subr.mxu0 0.0
    %5937 = vmatpush1.msra.mxu0 %v5920
    %5938 = vmatprep.subr.mxu0 0.0
    %5939 = vmatpush1.msra.mxu0 %v5921
    %5940 = vmatprep.subr.mxu0 0.0
    %5941 = vmatpush1.msra.mxu0 %v5922
    %5942 = vmatprep.subr.mxu0 0.0
    %5943 = vmatpush1.msra.mxu0 0.0
    %5944 = vmatprep.subr.mxu0 0.0
    %5945 = vmatpush1.msra.mxu0 0.0
    %5946 = vmatprep.subr.mxu0 0.0
    %5947 = vmatpush1.msra.mxu0 0.0
    %5948 = vmatprep.subr.mxu0 0.0
    %5949 = vmatpush1.msra.mxu0 0.0
    %5950 = vmatprep.subr.mxu0 0.0
    %5951 = vmatpush1.msra.mxu0 0.0
    %5952 = vmatprep.subr.mxu0 0.0
    %5953 = vmatpush1.msra.mxu0 0.0
    %5954 = vmatprep.subr.mxu0 0.0
    %5955 = vmatpush1.msra.mxu0 0.0
    %5956 = vmatprep.subr.mxu0 0.0
    %5957 = vmatpush1.msra.mxu0 0.0
    %5958 = vmatprep.subr.mxu0 0.0
    %5959 = vmatpush1.msra.mxu0 0.0
    %5960 = vmatprep.subr.mxu0 0.0
    %5961 = vmatpush1.msra.mxu0 0.0
    %5962 = vmatprep.subr.mxu0 0.0
    %5963 = vmatpush1.msra.mxu0 0.0
    %5964 = vmatprep.subr.mxu0 0.0
    %5965 = vmatpush1.msra.mxu0 0.0
    %5966 = vmatprep.subr.mxu0 0.0
    %5967 = vmatpush1.msra.mxu0 0.0
    %5968 = vmatprep.subr.mxu0 0.0
    %5969 = vmatpush1.msra.mxu0 0.0
    %5970 = vmatprep.subr.mxu0 0.0
    %5971 = vmatpush1.msra.mxu0 0.0
    %5972 = vmatprep.subr.mxu0 0.0
    %5973 = vmatpush1.msra.mxu0 0.0
    %5974 = vmatprep.subr.mxu0 0.0
    %5975 = vmatpush1.msra.mxu0 0.0
    %5976 = vmatprep.subr.mxu0 0.0
    %5977 = vmatpush1.msra.mxu0 0.0
    %5978 = vmatprep.subr.mxu0 0.0
    %5979 = vmatpush1.msra.mxu0 0.0
    %5980 = vmatprep.subr.mxu0 0.0
    %5981 = vmatpush1.msra.mxu0 0.0
    %5982 = vmatprep.subr.mxu0 0.0
    %5983 = vmatpush1.msra.mxu0 0.0
    %5984 = vmatprep.subr.mxu0 0.0
    %5985 = vmatpush1.msra.mxu0 0.0
    %5986 = vmatprep.subr.mxu0 0.0
    %5987 = vmatpush1.msra.mxu0 0.0
    %5988 = vmatprep.subr.mxu0 0.0
    %5989 = vmatpush1.msra.mxu0 0.0
    %5990 = vmatprep.mubr.f32.mxu0 0.0
    %5991 = vmatmul.mubr.f32.gmra.mrb[0].mxu0 %v5924
    %v5992 = vpop.f32.mrb[0].mxu0
    %v5993 = vadd.f32 0.0, %v5992
    %v5994 = vpop.f32.mrb[0].mxu0
    %5995 = vdwg.mxu0
    %v5996 = vadd.f32 %v5912, %v5993
    %v5997 = vld [vmem:[#allocation3 + $0x56] sm:$0x3]
    %s5998 = scalar_lea.vmem [#allocation2], 2752
    %v5999 = vld [vmem:[%s5998] sm:$0xff]
    %v6000 = vld [vmem:[%s5998 + $0x8] sm:$0xff]
    %v6001 = vld [vmem:[%s5998 + $0x10] sm:$0xff]
    %v6002 = vld [vmem:[%s5998 + $0x18] sm:$0xff]
    %v6003 = vld [vmem:[%s5998 + $0x20] sm:$0xff]
    %v6004 = vld [vmem:[%s5998 + $0x28] sm:$0xff]
    %v6005 = vld [vmem:[%s5998 + $0x30] sm:$0xff]
    %v6006 = vld [vmem:[%s5998 + $0x38] sm:$0xff]
    %v6008 = vsel %vm2367, %v5997, 0
    %6010 = vmatprep.subr.mxu0 0.0
    %6011 = vmatpush1.msra.mxu0 %v5999
    %6012 = vmatprep.subr.mxu0 0.0
    %6013 = vmatpush1.msra.mxu0 %v6000
    %6014 = vmatprep.subr.mxu0 0.0
    %6015 = vmatpush1.msra.mxu0 %v6001
    %6016 = vmatprep.subr.mxu0 0.0
    %6017 = vmatpush1.msra.mxu0 %v6002
    %6018 = vmatprep.subr.mxu0 0.0
    %6019 = vmatpush1.msra.mxu0 %v6003
    %6020 = vmatprep.subr.mxu0 0.0
    %6021 = vmatpush1.msra.mxu0 %v6004
    %6022 = vmatprep.subr.mxu0 0.0
    %6023 = vmatpush1.msra.mxu0 %v6005
    %6024 = vmatprep.subr.mxu0 0.0
    %6025 = vmatpush1.msra.mxu0 %v6006
    %6026 = vmatprep.subr.mxu0 0.0
    %6027 = vmatpush1.msra.mxu0 0.0
    %6028 = vmatprep.subr.mxu0 0.0
    %6029 = vmatpush1.msra.mxu0 0.0
    %6030 = vmatprep.subr.mxu0 0.0
    %6031 = vmatpush1.msra.mxu0 0.0
    %6032 = vmatprep.subr.mxu0 0.0
    %6033 = vmatpush1.msra.mxu0 0.0
    %6034 = vmatprep.subr.mxu0 0.0
    %6035 = vmatpush1.msra.mxu0 0.0
    %6036 = vmatprep.subr.mxu0 0.0
    %6037 = vmatpush1.msra.mxu0 0.0
    %6038 = vmatprep.subr.mxu0 0.0
    %6039 = vmatpush1.msra.mxu0 0.0
    %6040 = vmatprep.subr.mxu0 0.0
    %6041 = vmatpush1.msra.mxu0 0.0
    %6042 = vmatprep.subr.mxu0 0.0
    %6043 = vmatpush1.msra.mxu0 0.0
    %6044 = vmatprep.subr.mxu0 0.0
    %6045 = vmatpush1.msra.mxu0 0.0
    %6046 = vmatprep.subr.mxu0 0.0
    %6047 = vmatpush1.msra.mxu0 0.0
    %6048 = vmatprep.subr.mxu0 0.0
    %6049 = vmatpush1.msra.mxu0 0.0
    %6050 = vmatprep.subr.mxu0 0.0
    %6051 = vmatpush1.msra.mxu0 0.0
    %6052 = vmatprep.subr.mxu0 0.0
    %6053 = vmatpush1.msra.mxu0 0.0
    %6054 = vmatprep.subr.mxu0 0.0
    %6055 = vmatpush1.msra.mxu0 0.0
    %6056 = vmatprep.subr.mxu0 0.0
    %6057 = vmatpush1.msra.mxu0 0.0
    %6058 = vmatprep.subr.mxu0 0.0
    %6059 = vmatpush1.msra.mxu0 0.0
    %6060 = vmatprep.subr.mxu0 0.0
    %6061 = vmatpush1.msra.mxu0 0.0
    %6062 = vmatprep.subr.mxu0 0.0
    %6063 = vmatpush1.msra.mxu0 0.0
    %6064 = vmatprep.subr.mxu0 0.0
    %6065 = vmatpush1.msra.mxu0 0.0
    %6066 = vmatprep.subr.mxu0 0.0
    %6067 = vmatpush1.msra.mxu0 0.0
    %6068 = vmatprep.subr.mxu0 0.0
    %6069 = vmatpush1.msra.mxu0 0.0
    %6070 = vmatprep.subr.mxu0 0.0
    %6071 = vmatpush1.msra.mxu0 0.0
    %6072 = vmatprep.subr.mxu0 0.0
    %6073 = vmatpush1.msra.mxu0 0.0
    %6074 = vmatprep.mubr.f32.mxu0 0.0
    %6075 = vmatmul.mubr.f32.gmra.mrb[0].mxu0 %v6008
    %v6076 = vpop.f32.mrb[0].mxu0
    %v6077 = vadd.f32 0.0, %v6076
    %v6078 = vpop.f32.mrb[0].mxu0
    %6079 = vdwg.mxu0
    %v6080 = vadd.f32 %v5996, %v6077
    %v6081 = vld [vmem:[#allocation3 + $0x58] sm:$0x3]
    %s6082 = scalar_lea.vmem [#allocation2], 2816
    %v6083 = vld [vmem:[%s6082] sm:$0xff]
    %v6084 = vld [vmem:[%s6082 + $0x8] sm:$0xff]
    %v6085 = vld [vmem:[%s6082 + $0x10] sm:$0xff]
    %v6086 = vld [vmem:[%s6082 + $0x18] sm:$0xff]
    %v6087 = vld [vmem:[%s6082 + $0x20] sm:$0xff]
    %v6088 = vld [vmem:[%s6082 + $0x28] sm:$0xff]
    %v6089 = vld [vmem:[%s6082 + $0x30] sm:$0xff]
    %v6090 = vld [vmem:[%s6082 + $0x38] sm:$0xff]
    %v6092 = vsel %vm2367, %v6081, 0
    %6094 = vmatprep.subr.mxu0 0.0
    %6095 = vmatpush1.msra.mxu0 %v6083
    %6096 = vmatprep.subr.mxu0 0.0
    %6097 = vmatpush1.msra.mxu0 %v6084
    %6098 = vmatprep.subr.mxu0 0.0
    %6099 = vmatpush1.msra.mxu0 %v6085
    %6100 = vmatprep.subr.mxu0 0.0
    %6101 = vmatpush1.msra.mxu0 %v6086
    %6102 = vmatprep.subr.mxu0 0.0
    %6103 = vmatpush1.msra.mxu0 %v6087
    %6104 = vmatprep.subr.mxu0 0.0
    %6105 = vmatpush1.msra.mxu0 %v6088
    %6106 = vmatprep.subr.mxu0 0.0
    %6107 = vmatpush1.msra.mxu0 %v6089
    %6108 = vmatprep.subr.mxu0 0.0
    %6109 = vmatpush1.msra.mxu0 %v6090
    %6110 = vmatprep.subr.mxu0 0.0
    %6111 = vmatpush1.msra.mxu0 0.0
    %6112 = vmatprep.subr.mxu0 0.0
    %6113 = vmatpush1.msra.mxu0 0.0
    %6114 = vmatprep.subr.mxu0 0.0
    %6115 = vmatpush1.msra.mxu0 0.0
    %6116 = vmatprep.subr.mxu0 0.0
    %6117 = vmatpush1.msra.mxu0 0.0
    %6118 = vmatprep.subr.mxu0 0.0
    %6119 = vmatpush1.msra.mxu0 0.0
    %6120 = vmatprep.subr.mxu0 0.0
    %6121 = vmatpush1.msra.mxu0 0.0
    %6122 = vmatprep.subr.mxu0 0.0
    %6123 = vmatpush1.msra.mxu0 0.0
    %6124 = vmatprep.subr.mxu0 0.0
    %6125 = vmatpush1.msra.mxu0 0.0
    %6126 = vmatprep.subr.mxu0 0.0
    %6127 = vmatpush1.msra.mxu0 0.0
    %6128 = vmatprep.subr.mxu0 0.0
    %6129 = vmatpush1.msra.mxu0 0.0
    %6130 = vmatprep.subr.mxu0 0.0
    %6131 = vmatpush1.msra.mxu0 0.0
    %6132 = vmatprep.subr.mxu0 0.0
    %6133 = vmatpush1.msra.mxu0 0.0
    %6134 = vmatprep.subr.mxu0 0.0
    %6135 = vmatpush1.msra.mxu0 0.0
    %6136 = vmatprep.subr.mxu0 0.0
    %6137 = vmatpush1.msra.mxu0 0.0
    %6138 = vmatprep.subr.mxu0 0.0
    %6139 = vmatpush1.msra.mxu0 0.0
    %6140 = vmatprep.subr.mxu0 0.0
    %6141 = vmatpush1.msra.mxu0 0.0
    %6142 = vmatprep.subr.mxu0 0.0
    %6143 = vmatpush1.msra.mxu0 0.0
    %6144 = vmatprep.subr.mxu0 0.0
    %6145 = vmatpush1.msra.mxu0 0.0
    %6146 = vmatprep.subr.mxu0 0.0
    %6147 = vmatpush1.msra.mxu0 0.0
    %6148 = vmatprep.subr.mxu0 0.0
    %6149 = vmatpush1.msra.mxu0 0.0
    %6150 = vmatprep.subr.mxu0 0.0
    %6151 = vmatpush1.msra.mxu0 0.0
    %6152 = vmatprep.subr.mxu0 0.0
    %6153 = vmatpush1.msra.mxu0 0.0
    %6154 = vmatprep.subr.mxu0 0.0
    %6155 = vmatpush1.msra.mxu0 0.0
    %6156 = vmatprep.subr.mxu0 0.0
    %6157 = vmatpush1.msra.mxu0 0.0
    %6158 = vmatprep.mubr.f32.mxu0 0.0
    %6159 = vmatmul.mubr.f32.gmra.mrb[0].mxu0 %v6092
    %v6160 = vpop.f32.mrb[0].mxu0
    %v6161 = vadd.f32 0.0, %v6160
    %v6162 = vpop.f32.mrb[0].mxu0
    %6163 = vdwg.mxu0
    %v6164 = vadd.f32 %v6080, %v6161
    %v6165 = vld [vmem:[#allocation3 + $0x5a] sm:$0x3]
    %s6166 = scalar_lea.vmem [#allocation2], 2880
    %v6167 = vld [vmem:[%s6166] sm:$0xff]
    %v6168 = vld [vmem:[%s6166 + $0x8] sm:$0xff]
    %v6169 = vld [vmem:[%s6166 + $0x10] sm:$0xff]
    %v6170 = vld [vmem:[%s6166 + $0x18] sm:$0xff]
    %v6171 = vld [vmem:[%s6166 + $0x20] sm:$0xff]
    %v6172 = vld [vmem:[%s6166 + $0x28] sm:$0xff]
    %v6173 = vld [vmem:[%s6166 + $0x30] sm:$0xff]
    %v6174 = vld [vmem:[%s6166 + $0x38] sm:$0xff]
    %v6176 = vsel %vm2367, %v6165, 0
    %6178 = vmatprep.subr.mxu0 0.0
    %6179 = vmatpush1.msra.mxu0 %v6167
    %6180 = vmatprep.subr.mxu0 0.0
    %6181 = vmatpush1.msra.mxu0 %v6168
    %6182 = vmatprep.subr.mxu0 0.0
    %6183 = vmatpush1.msra.mxu0 %v6169
    %6184 = vmatprep.subr.mxu0 0.0
    %6185 = vmatpush1.msra.mxu0 %v6170
    %6186 = vmatprep.subr.mxu0 0.0
    %6187 = vmatpush1.msra.mxu0 %v6171
    %6188 = vmatprep.subr.mxu0 0.0
    %6189 = vmatpush1.msra.mxu0 %v6172
    %6190 = vmatprep.subr.mxu0 0.0
    %6191 = vmatpush1.msra.mxu0 %v6173
    %6192 = vmatprep.subr.mxu0 0.0
    %6193 = vmatpush1.msra.mxu0 %v6174
    %6194 = vmatprep.subr.mxu0 0.0
    %6195 = vmatpush1.msra.mxu0 0.0
    %6196 = vmatprep.subr.mxu0 0.0
    %6197 = vmatpush1.msra.mxu0 0.0
    %6198 = vmatprep.subr.mxu0 0.0
    %6199 = vmatpush1.msra.mxu0 0.0
    %6200 = vmatprep.subr.mxu0 0.0
    %6201 = vmatpush1.msra.mxu0 0.0
    %6202 = vmatprep.subr.mxu0 0.0
    %6203 = vmatpush1.msra.mxu0 0.0
    %6204 = vmatprep.subr.mxu0 0.0
    %6205 = vmatpush1.msra.mxu0 0.0
    %6206 = vmatprep.subr.mxu0 0.0
    %6207 = vmatpush1.msra.mxu0 0.0
    %6208 = vmatprep.subr.mxu0 0.0
    %6209 = vmatpush1.msra.mxu0 0.0
    %6210 = vmatprep.subr.mxu0 0.0
    %6211 = vmatpush1.msra.mxu0 0.0
    %6212 = vmatprep.subr.mxu0 0.0
    %6213 = vmatpush1.msra.mxu0 0.0
    %6214 = vmatprep.subr.mxu0 0.0
    %6215 = vmatpush1.msra.mxu0 0.0
    %6216 = vmatprep.subr.mxu0 0.0
    %6217 = vmatpush1.msra.mxu0 0.0
    %6218 = vmatprep.subr.mxu0 0.0
    %6219 = vmatpush1.msra.mxu0 0.0
    %6220 = vmatprep.subr.mxu0 0.0
    %6221 = vmatpush1.msra.mxu0 0.0
    %6222 = vmatprep.subr.mxu0 0.0
    %6223 = vmatpush1.msra.mxu0 0.0
    %6224 = vmatprep.subr.mxu0 0.0
    %6225 = vmatpush1.msra.mxu0 0.0
    %6226 = vmatprep.subr.mxu0 0.0
    %6227 = vmatpush1.msra.mxu0 0.0
    %6228 = vmatprep.subr.mxu0 0.0
    %6229 = vmatpush1.msra.mxu0 0.0
    %6230 = vmatprep.subr.mxu0 0.0
    %6231 = vmatpush1.msra.mxu0 0.0
    %6232 = vmatprep.subr.mxu0 0.0
    %6233 = vmatpush1.msra.mxu0 0.0
    %6234 = vmatprep.subr.mxu0 0.0
    %6235 = vmatpush1.msra.mxu0 0.0
    %6236 = vmatprep.subr.mxu0 0.0
    %6237 = vmatpush1.msra.mxu0 0.0
    %6238 = vmatprep.subr.mxu0 0.0
    %6239 = vmatpush1.msra.mxu0 0.0
    %6240 = vmatprep.subr.mxu0 0.0
    %6241 = vmatpush1.msra.mxu0 0.0
    %6242 = vmatprep.mubr.f32.mxu0 0.0
    %6243 = vmatmul.mubr.f32.gmra.mrb[0].mxu0 %v6176
    %v6244 = vpop.f32.mrb[0].mxu0
    %v6245 = vadd.f32 0.0, %v6244
    %v6246 = vpop.f32.mrb[0].mxu0
    %6247 = vdwg.mxu0
    %v6248 = vadd.f32 %v6164, %v6245
    %v6249 = vld [vmem:[#allocation3 + $0x5c] sm:$0x3]
    %s6250 = scalar_lea.vmem [#allocation2], 2944
    %v6251 = vld [vmem:[%s6250] sm:$0xff]
    %v6252 = vld [vmem:[%s6250 + $0x8] sm:$0xff]
    %v6253 = vld [vmem:[%s6250 + $0x10] sm:$0xff]
    %v6254 = vld [vmem:[%s6250 + $0x18] sm:$0xff]
    %v6255 = vld [vmem:[%s6250 + $0x20] sm:$0xff]
    %v6256 = vld [vmem:[%s6250 + $0x28] sm:$0xff]
    %v6257 = vld [vmem:[%s6250 + $0x30] sm:$0xff]
    %v6258 = vld [vmem:[%s6250 + $0x38] sm:$0xff]
    %v6260 = vsel %vm2367, %v6249, 0
    %6262 = vmatprep.subr.mxu0 0.0
    %6263 = vmatpush1.msra.mxu0 %v6251
    %6264 = vmatprep.subr.mxu0 0.0
    %6265 = vmatpush1.msra.mxu0 %v6252
    %6266 = vmatprep.subr.mxu0 0.0
    %6267 = vmatpush1.msra.mxu0 %v6253
    %6268 = vmatprep.subr.mxu0 0.0
    %6269 = vmatpush1.msra.mxu0 %v6254
    %6270 = vmatprep.subr.mxu0 0.0
    %6271 = vmatpush1.msra.mxu0 %v6255
    %6272 = vmatprep.subr.mxu0 0.0
    %6273 = vmatpush1.msra.mxu0 %v6256
    %6274 = vmatprep.subr.mxu0 0.0
    %6275 = vmatpush1.msra.mxu0 %v6257
    %6276 = vmatprep.subr.mxu0 0.0
    %6277 = vmatpush1.msra.mxu0 %v6258
    %6278 = vmatprep.subr.mxu0 0.0
    %6279 = vmatpush1.msra.mxu0 0.0
    %6280 = vmatprep.subr.mxu0 0.0
    %6281 = vmatpush1.msra.mxu0 0.0
    %6282 = vmatprep.subr.mxu0 0.0
    %6283 = vmatpush1.msra.mxu0 0.0
    %6284 = vmatprep.subr.mxu0 0.0
    %6285 = vmatpush1.msra.mxu0 0.0
    %6286 = vmatprep.subr.mxu0 0.0
    %6287 = vmatpush1.msra.mxu0 0.0
    %6288 = vmatprep.subr.mxu0 0.0
    %6289 = vmatpush1.msra.mxu0 0.0
    %6290 = vmatprep.subr.mxu0 0.0
    %6291 = vmatpush1.msra.mxu0 0.0
    %6292 = vmatprep.subr.mxu0 0.0
    %6293 = vmatpush1.msra.mxu0 0.0
    %6294 = vmatprep.subr.mxu0 0.0
    %6295 = vmatpush1.msra.mxu0 0.0
    %6296 = vmatprep.subr.mxu0 0.0
    %6297 = vmatpush1.msra.mxu0 0.0
    %6298 = vmatprep.subr.mxu0 0.0
    %6299 = vmatpush1.msra.mxu0 0.0
    %6300 = vmatprep.subr.mxu0 0.0
    %6301 = vmatpush1.msra.mxu0 0.0
    %6302 = vmatprep.subr.mxu0 0.0
    %6303 = vmatpush1.msra.mxu0 0.0
    %6304 = vmatprep.subr.mxu0 0.0
    %6305 = vmatpush1.msra.mxu0 0.0
    %6306 = vmatprep.subr.mxu0 0.0
    %6307 = vmatpush1.msra.mxu0 0.0
    %6308 = vmatprep.subr.mxu0 0.0
    %6309 = vmatpush1.msra.mxu0 0.0
    %6310 = vmatprep.subr.mxu0 0.0
    %6311 = vmatpush1.msra.mxu0 0.0
    %6312 = vmatprep.subr.mxu0 0.0
    %6313 = vmatpush1.msra.mxu0 0.0
    %6314 = vmatprep.subr.mxu0 0.0
    %6315 = vmatpush1.msra.mxu0 0.0
    %6316 = vmatprep.subr.mxu0 0.0
    %6317 = vmatpush1.msra.mxu0 0.0
    %6318 = vmatprep.subr.mxu0 0.0
    %6319 = vmatpush1.msra.mxu0 0.0
    %6320 = vmatprep.subr.mxu0 0.0
    %6321 = vmatpush1.msra.mxu0 0.0
    %6322 = vmatprep.subr.mxu0 0.0
    %6323 = vmatpush1.msra.mxu0 0.0
    %6324 = vmatprep.subr.mxu0 0.0
    %6325 = vmatpush1.msra.mxu0 0.0
    %6326 = vmatprep.mubr.f32.mxu0 0.0
    %6327 = vmatmul.mubr.f32.gmra.mrb[0].mxu0 %v6260
    %v6328 = vpop.f32.mrb[0].mxu0
    %v6329 = vadd.f32 0.0, %v6328
    %v6330 = vpop.f32.mrb[0].mxu0
    %6331 = vdwg.mxu0
    %v6332 = vadd.f32 %v6248, %v6329
    %v6333 = vld [vmem:[#allocation3 + $0x5e] sm:$0x3]
    %s6334 = scalar_lea.vmem [#allocation2], 3008
    %v6335 = vld [vmem:[%s6334] sm:$0xff]
    %v6336 = vld [vmem:[%s6334 + $0x8] sm:$0xff]
    %v6337 = vld [vmem:[%s6334 + $0x10] sm:$0xff]
    %v6338 = vld [vmem:[%s6334 + $0x18] sm:$0xff]
    %v6339 = vld [vmem:[%s6334 + $0x20] sm:$0xff]
    %v6340 = vld [vmem:[%s6334 + $0x28] sm:$0xff]
    %v6341 = vld [vmem:[%s6334 + $0x30] sm:$0xff]
    %v6342 = vld [vmem:[%s6334 + $0x38] sm:$0xff]
    %v6344 = vsel %vm2367, %v6333, 0
    %6346 = vmatprep.subr.mxu0 0.0
    %6347 = vmatpush1.msra.mxu0 %v6335
    %6348 = vmatprep.subr.mxu0 0.0
    %6349 = vmatpush1.msra.mxu0 %v6336
    %6350 = vmatprep.subr.mxu0 0.0
    %6351 = vmatpush1.msra.mxu0 %v6337
    %6352 = vmatprep.subr.mxu0 0.0
    %6353 = vmatpush1.msra.mxu0 %v6338
    %6354 = vmatprep.subr.mxu0 0.0
    %6355 = vmatpush1.msra.mxu0 %v6339
    %6356 = vmatprep.subr.mxu0 0.0
    %6357 = vmatpush1.msra.mxu0 %v6340
    %6358 = vmatprep.subr.mxu0 0.0
    %6359 = vmatpush1.msra.mxu0 %v6341
    %6360 = vmatprep.subr.mxu0 0.0
    %6361 = vmatpush1.msra.mxu0 %v6342
    %6362 = vmatprep.subr.mxu0 0.0
    %6363 = vmatpush1.msra.mxu0 0.0
    %6364 = vmatprep.subr.mxu0 0.0
    %6365 = vmatpush1.msra.mxu0 0.0
    %6366 = vmatprep.subr.mxu0 0.0
    %6367 = vmatpush1.msra.mxu0 0.0
    %6368 = vmatprep.subr.mxu0 0.0
    %6369 = vmatpush1.msra.mxu0 0.0
    %6370 = vmatprep.subr.mxu0 0.0
    %6371 = vmatpush1.msra.mxu0 0.0
    %6372 = vmatprep.subr.mxu0 0.0
    %6373 = vmatpush1.msra.mxu0 0.0
    %6374 = vmatprep.subr.mxu0 0.0
    %6375 = vmatpush1.msra.mxu0 0.0
    %6376 = vmatprep.subr.mxu0 0.0
    %6377 = vmatpush1.msra.mxu0 0.0
    %6378 = vmatprep.subr.mxu0 0.0
    %6379 = vmatpush1.msra.mxu0 0.0
    %6380 = vmatprep.subr.mxu0 0.0
    %6381 = vmatpush1.msra.mxu0 0.0
    %6382 = vmatprep.subr.mxu0 0.0
    %6383 = vmatpush1.msra.mxu0 0.0
    %6384 = vmatprep.subr.mxu0 0.0
    %6385 = vmatpush1.msra.mxu0 0.0
    %6386 = vmatprep.subr.mxu0 0.0
    %6387 = vmatpush1.msra.mxu0 0.0
    %6388 = vmatprep.subr.mxu0 0.0
    %6389 = vmatpush1.msra.mxu0 0.0
    %6390 = vmatprep.subr.mxu0 0.0
    %6391 = vmatpush1.msra.mxu0 0.0
    %6392 = vmatprep.subr.mxu0 0.0
    %6393 = vmatpush1.msra.mxu0 0.0
    %6394 = vmatprep.subr.mxu0 0.0
    %6395 = vmatpush1.msra.mxu0 0.0
    %6396 = vmatprep.subr.mxu0 0.0
    %6397 = vmatpush1.msra.mxu0 0.0
    %6398 = vmatprep.subr.mxu0 0.0
    %6399 = vmatpush1.msra.mxu0 0.0
    %6400 = vmatprep.subr.mxu0 0.0
    %6401 = vmatpush1.msra.mxu0 0.0
    %6402 = vmatprep.subr.mxu0 0.0
    %6403 = vmatpush1.msra.mxu0 0.0
    %6404 = vmatprep.subr.mxu0 0.0
    %6405 = vmatpush1.msra.mxu0 0.0
    %6406 = vmatprep.subr.mxu0 0.0
    %6407 = vmatpush1.msra.mxu0 0.0
    %6408 = vmatprep.subr.mxu0 0.0
    %6409 = vmatpush1.msra.mxu0 0.0
    %6410 = vmatprep.mubr.f32.mxu0 0.0
    %6411 = vmatmul.mubr.f32.gmra.mrb[0].mxu0 %v6344
    %v6412 = vpop.f32.mrb[0].mxu0
    %v6413 = vadd.f32 0.0, %v6412
    %v6414 = vpop.f32.mrb[0].mxu0
    %6415 = vdwg.mxu0
    %v6416 = vadd.f32 %v6332, %v6413
    %v6417 = vld [vmem:[#allocation3 + $0x60] sm:$0x3]
    %s6418 = scalar_lea.vmem [#allocation2], 3072
    %v6419 = vld [vmem:[%s6418] sm:$0xff]
    %v6420 = vld [vmem:[%s6418 + $0x8] sm:$0xff]
    %v6421 = vld [vmem:[%s6418 + $0x10] sm:$0xff]
    %v6422 = vld [vmem:[%s6418 + $0x18] sm:$0xff]
    %v6423 = vld [vmem:[%s6418 + $0x20] sm:$0xff]
    %v6424 = vld [vmem:[%s6418 + $0x28] sm:$0xff]
    %v6425 = vld [vmem:[%s6418 + $0x30] sm:$0xff]
    %v6426 = vld [vmem:[%s6418 + $0x38] sm:$0xff]
    %v6428 = vsel %vm2367, %v6417, 0
    %6430 = vmatprep.subr.mxu0 0.0
    %6431 = vmatpush1.msra.mxu0 %v6419
    %6432 = vmatprep.subr.mxu0 0.0
    %6433 = vmatpush1.msra.mxu0 %v6420
    %6434 = vmatprep.subr.mxu0 0.0
    %6435 = vmatpush1.msra.mxu0 %v6421
    %6436 = vmatprep.subr.mxu0 0.0
    %6437 = vmatpush1.msra.mxu0 %v6422
    %6438 = vmatprep.subr.mxu0 0.0
    %6439 = vmatpush1.msra.mxu0 %v6423
    %6440 = vmatprep.subr.mxu0 0.0
    %6441 = vmatpush1.msra.mxu0 %v6424
    %6442 = vmatprep.subr.mxu0 0.0
    %6443 = vmatpush1.msra.mxu0 %v6425
    %6444 = vmatprep.subr.mxu0 0.0
    %6445 = vmatpush1.msra.mxu0 %v6426
    %6446 = vmatprep.subr.mxu0 0.0
    %6447 = vmatpush1.msra.mxu0 0.0
    %6448 = vmatprep.subr.mxu0 0.0
    %6449 = vmatpush1.msra.mxu0 0.0
    %6450 = vmatprep.subr.mxu0 0.0
    %6451 = vmatpush1.msra.mxu0 0.0
    %6452 = vmatprep.subr.mxu0 0.0
    %6453 = vmatpush1.msra.mxu0 0.0
    %6454 = vmatprep.subr.mxu0 0.0
    %6455 = vmatpush1.msra.mxu0 0.0
    %6456 = vmatprep.subr.mxu0 0.0
    %6457 = vmatpush1.msra.mxu0 0.0
    %6458 = vmatprep.subr.mxu0 0.0
    %6459 = vmatpush1.msra.mxu0 0.0
    %6460 = vmatprep.subr.mxu0 0.0
    %6461 = vmatpush1.msra.mxu0 0.0
    %6462 = vmatprep.subr.mxu0 0.0
    %6463 = vmatpush1.msra.mxu0 0.0
    %6464 = vmatprep.subr.mxu0 0.0
    %6465 = vmatpush1.msra.mxu0 0.0
    %6466 = vmatprep.subr.mxu0 0.0
    %6467 = vmatpush1.msra.mxu0 0.0
    %6468 = vmatprep.subr.mxu0 0.0
    %6469 = vmatpush1.msra.mxu0 0.0
    %6470 = vmatprep.subr.mxu0 0.0
    %6471 = vmatpush1.msra.mxu0 0.0
    %6472 = vmatprep.subr.mxu0 0.0
    %6473 = vmatpush1.msra.mxu0 0.0
    %6474 = vmatprep.subr.mxu0 0.0
    %6475 = vmatpush1.msra.mxu0 0.0
    %6476 = vmatprep.subr.mxu0 0.0
    %6477 = vmatpush1.msra.mxu0 0.0
    %6478 = vmatprep.subr.mxu0 0.0
    %6479 = vmatpush1.msra.mxu0 0.0
    %6480 = vmatprep.subr.mxu0 0.0
    %6481 = vmatpush1.msra.mxu0 0.0
    %6482 = vmatprep.subr.mxu0 0.0
    %6483 = vmatpush1.msra.mxu0 0.0
    %6484 = vmatprep.subr.mxu0 0.0
    %6485 = vmatpush1.msra.mxu0 0.0
    %6486 = vmatprep.subr.mxu0 0.0
    %6487 = vmatpush1.msra.mxu0 0.0
    %6488 = vmatprep.subr.mxu0 0.0
    %6489 = vmatpush1.msra.mxu0 0.0
    %6490 = vmatprep.subr.mxu0 0.0
    %6491 = vmatpush1.msra.mxu0 0.0
    %6492 = vmatprep.subr.mxu0 0.0
    %6493 = vmatpush1.msra.mxu0 0.0
    %6494 = vmatprep.mubr.f32.mxu0 0.0
    %6495 = vmatmul.mubr.f32.gmra.mrb[0].mxu0 %v6428
    %v6496 = vpop.f32.mrb[0].mxu0
    %v6497 = vadd.f32 0.0, %v6496
    %v6498 = vpop.f32.mrb[0].mxu0
    %6499 = vdwg.mxu0
    %v6500 = vadd.f32 %v6416, %v6497
    %v6501 = vld [vmem:[#allocation3 + $0x62] sm:$0x3]
    %s6502 = scalar_lea.vmem [#allocation2], 3136
    %v6503 = vld [vmem:[%s6502] sm:$0xff]
    %v6504 = vld [vmem:[%s6502 + $0x8] sm:$0xff]
    %v6505 = vld [vmem:[%s6502 + $0x10] sm:$0xff]
    %v6506 = vld [vmem:[%s6502 + $0x18] sm:$0xff]
    %v6507 = vld [vmem:[%s6502 + $0x20] sm:$0xff]
    %v6508 = vld [vmem:[%s6502 + $0x28] sm:$0xff]
    %v6509 = vld [vmem:[%s6502 + $0x30] sm:$0xff]
    %v6510 = vld [vmem:[%s6502 + $0x38] sm:$0xff]
    %v6512 = vsel %vm2367, %v6501, 0
    %6514 = vmatprep.subr.mxu0 0.0
    %6515 = vmatpush1.msra.mxu0 %v6503
    %6516 = vmatprep.subr.mxu0 0.0
    %6517 = vmatpush1.msra.mxu0 %v6504
    %6518 = vmatprep.subr.mxu0 0.0
    %6519 = vmatpush1.msra.mxu0 %v6505
    %6520 = vmatprep.subr.mxu0 0.0
    %6521 = vmatpush1.msra.mxu0 %v6506
    %6522 = vmatprep.subr.mxu0 0.0
    %6523 = vmatpush1.msra.mxu0 %v6507
    %6524 = vmatprep.subr.mxu0 0.0
    %6525 = vmatpush1.msra.mxu0 %v6508
    %6526 = vmatprep.subr.mxu0 0.0
    %6527 = vmatpush1.msra.mxu0 %v6509
    %6528 = vmatprep.subr.mxu0 0.0
    %6529 = vmatpush1.msra.mxu0 %v6510
    %6530 = vmatprep.subr.mxu0 0.0
    %6531 = vmatpush1.msra.mxu0 0.0
    %6532 = vmatprep.subr.mxu0 0.0
    %6533 = vmatpush1.msra.mxu0 0.0
    %6534 = vmatprep.subr.mxu0 0.0
    %6535 = vmatpush1.msra.mxu0 0.0
    %6536 = vmatprep.subr.mxu0 0.0
    %6537 = vmatpush1.msra.mxu0 0.0
    %6538 = vmatprep.subr.mxu0 0.0
    %6539 = vmatpush1.msra.mxu0 0.0
    %6540 = vmatprep.subr.mxu0 0.0
    %6541 = vmatpush1.msra.mxu0 0.0
    %6542 = vmatprep.subr.mxu0 0.0
    %6543 = vmatpush1.msra.mxu0 0.0
    %6544 = vmatprep.subr.mxu0 0.0
    %6545 = vmatpush1.msra.mxu0 0.0
    %6546 = vmatprep.subr.mxu0 0.0
    %6547 = vmatpush1.msra.mxu0 0.0
    %6548 = vmatprep.subr.mxu0 0.0
    %6549 = vmatpush1.msra.mxu0 0.0
    %6550 = vmatprep.subr.mxu0 0.0
    %6551 = vmatpush1.msra.mxu0 0.0
    %6552 = vmatprep.subr.mxu0 0.0
    %6553 = vmatpush1.msra.mxu0 0.0
    %6554 = vmatprep.subr.mxu0 0.0
    %6555 = vmatpush1.msra.mxu0 0.0
    %6556 = vmatprep.subr.mxu0 0.0
    %6557 = vmatpush1.msra.mxu0 0.0
    %6558 = vmatprep.subr.mxu0 0.0
    %6559 = vmatpush1.msra.mxu0 0.0
    %6560 = vmatprep.subr.mxu0 0.0
    %6561 = vmatpush1.msra.mxu0 0.0
    %6562 = vmatprep.subr.mxu0 0.0
    %6563 = vmatpush1.msra.mxu0 0.0
    %6564 = vmatprep.subr.mxu0 0.0
    %6565 = vmatpush1.msra.mxu0 0.0
    %6566 = vmatprep.subr.mxu0 0.0
    %6567 = vmatpush1.msra.mxu0 0.0
    %6568 = vmatprep.subr.mxu0 0.0
    %6569 = vmatpush1.msra.mxu0 0.0
    %6570 = vmatprep.subr.mxu0 0.0
    %6571 = vmatpush1.msra.mxu0 0.0
    %6572 = vmatprep.subr.mxu0 0.0
    %6573 = vmatpush1.msra.mxu0 0.0
    %6574 = vmatprep.subr.mxu0 0.0
    %6575 = vmatpush1.msra.mxu0 0.0
    %6576 = vmatprep.subr.mxu0 0.0
    %6577 = vmatpush1.msra.mxu0 0.0
    %6578 = vmatprep.mubr.f32.mxu0 0.0
    %6579 = vmatmul.mubr.f32.gmra.mrb[0].mxu0 %v6512
    %v6580 = vpop.f32.mrb[0].mxu0
    %v6581 = vadd.f32 0.0, %v6580
    %v6582 = vpop.f32.mrb[0].mxu0
    %6583 = vdwg.mxu0
    %v6584 = vadd.f32 %v6500, %v6581
    %v6585 = vld [vmem:[#allocation3 + $0x64] sm:$0x3]
    %s6586 = scalar_lea.vmem [#allocation2], 3200
    %v6587 = vld [vmem:[%s6586] sm:$0xff]
    %v6588 = vld [vmem:[%s6586 + $0x8] sm:$0xff]
    %v6589 = vld [vmem:[%s6586 + $0x10] sm:$0xff]
    %v6590 = vld [vmem:[%s6586 + $0x18] sm:$0xff]
    %v6591 = vld [vmem:[%s6586 + $0x20] sm:$0xff]
    %v6592 = vld [vmem:[%s6586 + $0x28] sm:$0xff]
    %v6593 = vld [vmem:[%s6586 + $0x30] sm:$0xff]
    %v6594 = vld [vmem:[%s6586 + $0x38] sm:$0xff]
    %v6596 = vsel %vm2367, %v6585, 0
    %6598 = vmatprep.subr.mxu0 0.0
    %6599 = vmatpush1.msra.mxu0 %v6587
    %6600 = vmatprep.subr.mxu0 0.0
    %6601 = vmatpush1.msra.mxu0 %v6588
    %6602 = vmatprep.subr.mxu0 0.0
    %6603 = vmatpush1.msra.mxu0 %v6589
    %6604 = vmatprep.subr.mxu0 0.0
    %6605 = vmatpush1.msra.mxu0 %v6590
    %6606 = vmatprep.subr.mxu0 0.0
    %6607 = vmatpush1.msra.mxu0 %v6591
    %6608 = vmatprep.subr.mxu0 0.0
    %6609 = vmatpush1.msra.mxu0 %v6592
    %6610 = vmatprep.subr.mxu0 0.0
    %6611 = vmatpush1.msra.mxu0 %v6593
    %6612 = vmatprep.subr.mxu0 0.0
    %6613 = vmatpush1.msra.mxu0 %v6594
    %6614 = vmatprep.subr.mxu0 0.0
    %6615 = vmatpush1.msra.mxu0 0.0
    %6616 = vmatprep.subr.mxu0 0.0
    %6617 = vmatpush1.msra.mxu0 0.0
    %6618 = vmatprep.subr.mxu0 0.0
    %6619 = vmatpush1.msra.mxu0 0.0
    %6620 = vmatprep.subr.mxu0 0.0
    %6621 = vmatpush1.msra.mxu0 0.0
    %6622 = vmatprep.subr.mxu0 0.0
    %6623 = vmatpush1.msra.mxu0 0.0
    %6624 = vmatprep.subr.mxu0 0.0
    %6625 = vmatpush1.msra.mxu0 0.0
    %6626 = vmatprep.subr.mxu0 0.0
    %6627 = vmatpush1.msra.mxu0 0.0
    %6628 = vmatprep.subr.mxu0 0.0
    %6629 = vmatpush1.msra.mxu0 0.0
    %6630 = vmatprep.subr.mxu0 0.0
    %6631 = vmatpush1.msra.mxu0 0.0
    %6632 = vmatprep.subr.mxu0 0.0
    %6633 = vmatpush1.msra.mxu0 0.0
    %6634 = vmatprep.subr.mxu0 0.0
    %6635 = vmatpush1.msra.mxu0 0.0
    %6636 = vmatprep.subr.mxu0 0.0
    %6637 = vmatpush1.msra.mxu0 0.0
    %6638 = vmatprep.subr.mxu0 0.0
    %6639 = vmatpush1.msra.mxu0 0.0
    %6640 = vmatprep.subr.mxu0 0.0
    %6641 = vmatpush1.msra.mxu0 0.0
    %6642 = vmatprep.subr.mxu0 0.0
    %6643 = vmatpush1.msra.mxu0 0.0
    %6644 = vmatprep.subr.mxu0 0.0
    %6645 = vmatpush1.msra.mxu0 0.0
    %6646 = vmatprep.subr.mxu0 0.0
    %6647 = vmatpush1.msra.mxu0 0.0
    %6648 = vmatprep.subr.mxu0 0.0
    %6649 = vmatpush1.msra.mxu0 0.0
    %6650 = vmatprep.subr.mxu0 0.0
    %6651 = vmatpush1.msra.mxu0 0.0
    %6652 = vmatprep.subr.mxu0 0.0
    %6653 = vmatpush1.msra.mxu0 0.0
    %6654 = vmatprep.subr.mxu0 0.0
    %6655 = vmatpush1.msra.mxu0 0.0
    %6656 = vmatprep.subr.mxu0 0.0
    %6657 = vmatpush1.msra.mxu0 0.0
    %6658 = vmatprep.subr.mxu0 0.0
    %6659 = vmatpush1.msra.mxu0 0.0
    %6660 = vmatprep.subr.mxu0 0.0
    %6661 = vmatpush1.msra.mxu0 0.0
    %6662 = vmatprep.mubr.f32.mxu0 0.0
    %6663 = vmatmul.mubr.f32.gmra.mrb[0].mxu0 %v6596
    %v6664 = vpop.f32.mrb[0].mxu0
    %v6665 = vadd.f32 0.0, %v6664
    %v6666 = vpop.f32.mrb[0].mxu0
    %6667 = vdwg.mxu0
    %v6668 = vadd.f32 %v6584, %v6665
    %v6669 = vld [vmem:[#allocation3 + $0x66] sm:$0x3]
    %s6670 = scalar_lea.vmem [#allocation2], 3264
    %v6671 = vld [vmem:[%s6670] sm:$0xff]
    %v6672 = vld [vmem:[%s6670 + $0x8] sm:$0xff]
    %v6673 = vld [vmem:[%s6670 + $0x10] sm:$0xff]
    %v6674 = vld [vmem:[%s6670 + $0x18] sm:$0xff]
    %v6675 = vld [vmem:[%s6670 + $0x20] sm:$0xff]
    %v6676 = vld [vmem:[%s6670 + $0x28] sm:$0xff]
    %v6677 = vld [vmem:[%s6670 + $0x30] sm:$0xff]
    %v6678 = vld [vmem:[%s6670 + $0x38] sm:$0xff]
    %v6680 = vsel %vm2367, %v6669, 0
    %6682 = vmatprep.subr.mxu0 0.0
    %6683 = vmatpush1.msra.mxu0 %v6671
    %6684 = vmatprep.subr.mxu0 0.0
    %6685 = vmatpush1.msra.mxu0 %v6672
    %6686 = vmatprep.subr.mxu0 0.0
    %6687 = vmatpush1.msra.mxu0 %v6673
    %6688 = vmatprep.subr.mxu0 0.0
    %6689 = vmatpush1.msra.mxu0 %v6674
    %6690 = vmatprep.subr.mxu0 0.0
    %6691 = vmatpush1.msra.mxu0 %v6675
    %6692 = vmatprep.subr.mxu0 0.0
    %6693 = vmatpush1.msra.mxu0 %v6676
    %6694 = vmatprep.subr.mxu0 0.0
    %6695 = vmatpush1.msra.mxu0 %v6677
    %6696 = vmatprep.subr.mxu0 0.0
    %6697 = vmatpush1.msra.mxu0 %v6678
    %6698 = vmatprep.subr.mxu0 0.0
    %6699 = vmatpush1.msra.mxu0 0.0
    %6700 = vmatprep.subr.mxu0 0.0
    %6701 = vmatpush1.msra.mxu0 0.0
    %6702 = vmatprep.subr.mxu0 0.0
    %6703 = vmatpush1.msra.mxu0 0.0
    %6704 = vmatprep.subr.mxu0 0.0
    %6705 = vmatpush1.msra.mxu0 0.0
    %6706 = vmatprep.subr.mxu0 0.0
    %6707 = vmatpush1.msra.mxu0 0.0
    %6708 = vmatprep.subr.mxu0 0.0
    %6709 = vmatpush1.msra.mxu0 0.0
    %6710 = vmatprep.subr.mxu0 0.0
    %6711 = vmatpush1.msra.mxu0 0.0
    %6712 = vmatprep.subr.mxu0 0.0
    %6713 = vmatpush1.msra.mxu0 0.0
    %6714 = vmatprep.subr.mxu0 0.0
    %6715 = vmatpush1.msra.mxu0 0.0
    %6716 = vmatprep.subr.mxu0 0.0
    %6717 = vmatpush1.msra.mxu0 0.0
    %6718 = vmatprep.subr.mxu0 0.0
    %6719 = vmatpush1.msra.mxu0 0.0
    %6720 = vmatprep.subr.mxu0 0.0
    %6721 = vmatpush1.msra.mxu0 0.0
    %6722 = vmatprep.subr.mxu0 0.0
    %6723 = vmatpush1.msra.mxu0 0.0
    %6724 = vmatprep.subr.mxu0 0.0
    %6725 = vmatpush1.msra.mxu0 0.0
    %6726 = vmatprep.subr.mxu0 0.0
    %6727 = vmatpush1.msra.mxu0 0.0
    %6728 = vmatprep.subr.mxu0 0.0
    %6729 = vmatpush1.msra.mxu0 0.0
    %6730 = vmatprep.subr.mxu0 0.0
    %6731 = vmatpush1.msra.mxu0 0.0
    %6732 = vmatprep.subr.mxu0 0.0
    %6733 = vmatpush1.msra.mxu0 0.0
    %6734 = vmatprep.subr.mxu0 0.0
    %6735 = vmatpush1.msra.mxu0 0.0
    %6736 = vmatprep.subr.mxu0 0.0
    %6737 = vmatpush1.msra.mxu0 0.0
    %6738 = vmatprep.subr.mxu0 0.0
    %6739 = vmatpush1.msra.mxu0 0.0
    %6740 = vmatprep.subr.mxu0 0.0
    %6741 = vmatpush1.msra.mxu0 0.0
    %6742 = vmatprep.subr.mxu0 0.0
    %6743 = vmatpush1.msra.mxu0 0.0
    %6744 = vmatprep.subr.mxu0 0.0
    %6745 = vmatpush1.msra.mxu0 0.0
    %6746 = vmatprep.mubr.f32.mxu0 0.0
    %6747 = vmatmul.mubr.f32.gmra.mrb[0].mxu0 %v6680
    %v6748 = vpop.f32.mrb[0].mxu0
    %v6749 = vadd.f32 0.0, %v6748
    %v6750 = vpop.f32.mrb[0].mxu0
    %6751 = vdwg.mxu0
    %v6752 = vadd.f32 %v6668, %v6749
    %v6753 = vld [vmem:[#allocation3 + $0x68] sm:$0x3]
    %s6754 = scalar_lea.vmem [#allocation2], 3328
    %v6755 = vld [vmem:[%s6754] sm:$0xff]
    %v6756 = vld [vmem:[%s6754 + $0x8] sm:$0xff]
    %v6757 = vld [vmem:[%s6754 + $0x10] sm:$0xff]
    %v6758 = vld [vmem:[%s6754 + $0x18] sm:$0xff]
    %v6759 = vld [vmem:[%s6754 + $0x20] sm:$0xff]
    %v6760 = vld [vmem:[%s6754 + $0x28] sm:$0xff]
    %v6761 = vld [vmem:[%s6754 + $0x30] sm:$0xff]
    %v6762 = vld [vmem:[%s6754 + $0x38] sm:$0xff]
    %v6764 = vsel %vm2367, %v6753, 0
    %6766 = vmatprep.subr.mxu0 0.0
    %6767 = vmatpush1.msra.mxu0 %v6755
    %6768 = vmatprep.subr.mxu0 0.0
    %6769 = vmatpush1.msra.mxu0 %v6756
    %6770 = vmatprep.subr.mxu0 0.0
    %6771 = vmatpush1.msra.mxu0 %v6757
    %6772 = vmatprep.subr.mxu0 0.0
    %6773 = vmatpush1.msra.mxu0 %v6758
    %6774 = vmatprep.subr.mxu0 0.0
    %6775 = vmatpush1.msra.mxu0 %v6759
    %6776 = vmatprep.subr.mxu0 0.0
    %6777 = vmatpush1.msra.mxu0 %v6760
    %6778 = vmatprep.subr.mxu0 0.0
    %6779 = vmatpush1.msra.mxu0 %v6761
    %6780 = vmatprep.subr.mxu0 0.0
    %6781 = vmatpush1.msra.mxu0 %v6762
    %6782 = vmatprep.subr.mxu0 0.0
    %6783 = vmatpush1.msra.mxu0 0.0
    %6784 = vmatprep.subr.mxu0 0.0
    %6785 = vmatpush1.msra.mxu0 0.0
    %6786 = vmatprep.subr.mxu0 0.0
    %6787 = vmatpush1.msra.mxu0 0.0
    %6788 = vmatprep.subr.mxu0 0.0
    %6789 = vmatpush1.msra.mxu0 0.0
    %6790 = vmatprep.subr.mxu0 0.0
    %6791 = vmatpush1.msra.mxu0 0.0
    %6792 = vmatprep.subr.mxu0 0.0
    %6793 = vmatpush1.msra.mxu0 0.0
    %6794 = vmatprep.subr.mxu0 0.0
    %6795 = vmatpush1.msra.mxu0 0.0
    %6796 = vmatprep.subr.mxu0 0.0
    %6797 = vmatpush1.msra.mxu0 0.0
    %6798 = vmatprep.subr.mxu0 0.0
    %6799 = vmatpush1.msra.mxu0 0.0
    %6800 = vmatprep.subr.mxu0 0.0
    %6801 = vmatpush1.msra.mxu0 0.0
    %6802 = vmatprep.subr.mxu0 0.0
    %6803 = vmatpush1.msra.mxu0 0.0
    %6804 = vmatprep.subr.mxu0 0.0
    %6805 = vmatpush1.msra.mxu0 0.0
    %6806 = vmatprep.subr.mxu0 0.0
    %6807 = vmatpush1.msra.mxu0 0.0
    %6808 = vmatprep.subr.mxu0 0.0
    %6809 = vmatpush1.msra.mxu0 0.0
    %6810 = vmatprep.subr.mxu0 0.0
    %6811 = vmatpush1.msra.mxu0 0.0
    %6812 = vmatprep.subr.mxu0 0.0
    %6813 = vmatpush1.msra.mxu0 0.0
    %6814 = vmatprep.subr.mxu0 0.0
    %6815 = vmatpush1.msra.mxu0 0.0
    %6816 = vmatprep.subr.mxu0 0.0
    %6817 = vmatpush1.msra.mxu0 0.0
    %6818 = vmatprep.subr.mxu0 0.0
    %6819 = vmatpush1.msra.mxu0 0.0
    %6820 = vmatprep.subr.mxu0 0.0
    %6821 = vmatpush1.msra.mxu0 0.0
    %6822 = vmatprep.subr.mxu0 0.0
    %6823 = vmatpush1.msra.mxu0 0.0
    %6824 = vmatprep.subr.mxu0 0.0
    %6825 = vmatpush1.msra.mxu0 0.0
    %6826 = vmatprep.subr.mxu0 0.0
    %6827 = vmatpush1.msra.mxu0 0.0
    %6828 = vmatprep.subr.mxu0 0.0
    %6829 = vmatpush1.msra.mxu0 0.0
    %6830 = vmatprep.mubr.f32.mxu0 0.0
    %6831 = vmatmul.mubr.f32.gmra.mrb[0].mxu0 %v6764
    %v6832 = vpop.f32.mrb[0].mxu0
    %v6833 = vadd.f32 0.0, %v6832
    %v6834 = vpop.f32.mrb[0].mxu0
    %6835 = vdwg.mxu0
    %v6836 = vadd.f32 %v6752, %v6833
    %v6837 = vld [vmem:[#allocation3 + $0x6a] sm:$0x3]
    %s6838 = scalar_lea.vmem [#allocation2], 3392
    %v6839 = vld [vmem:[%s6838] sm:$0xff]
    %v6840 = vld [vmem:[%s6838 + $0x8] sm:$0xff]
    %v6841 = vld [vmem:[%s6838 + $0x10] sm:$0xff]
    %v6842 = vld [vmem:[%s6838 + $0x18] sm:$0xff]
    %v6843 = vld [vmem:[%s6838 + $0x20] sm:$0xff]
    %v6844 = vld [vmem:[%s6838 + $0x28] sm:$0xff]
    %v6845 = vld [vmem:[%s6838 + $0x30] sm:$0xff]
    %v6846 = vld [vmem:[%s6838 + $0x38] sm:$0xff]
    %v6848 = vsel %vm2367, %v6837, 0
    %6850 = vmatprep.subr.mxu0 0.0
    %6851 = vmatpush1.msra.mxu0 %v6839
    %6852 = vmatprep.subr.mxu0 0.0
    %6853 = vmatpush1.msra.mxu0 %v6840
    %6854 = vmatprep.subr.mxu0 0.0
    %6855 = vmatpush1.msra.mxu0 %v6841
    %6856 = vmatprep.subr.mxu0 0.0
    %6857 = vmatpush1.msra.mxu0 %v6842
    %6858 = vmatprep.subr.mxu0 0.0
    %6859 = vmatpush1.msra.mxu0 %v6843
    %6860 = vmatprep.subr.mxu0 0.0
    %6861 = vmatpush1.msra.mxu0 %v6844
    %6862 = vmatprep.subr.mxu0 0.0
    %6863 = vmatpush1.msra.mxu0 %v6845
    %6864 = vmatprep.subr.mxu0 0.0
    %6865 = vmatpush1.msra.mxu0 %v6846
    %6866 = vmatprep.subr.mxu0 0.0
    %6867 = vmatpush1.msra.mxu0 0.0
    %6868 = vmatprep.subr.mxu0 0.0
    %6869 = vmatpush1.msra.mxu0 0.0
    %6870 = vmatprep.subr.mxu0 0.0
    %6871 = vmatpush1.msra.mxu0 0.0
    %6872 = vmatprep.subr.mxu0 0.0
    %6873 = vmatpush1.msra.mxu0 0.0
    %6874 = vmatprep.subr.mxu0 0.0
    %6875 = vmatpush1.msra.mxu0 0.0
    %6876 = vmatprep.subr.mxu0 0.0
    %6877 = vmatpush1.msra.mxu0 0.0
    %6878 = vmatprep.subr.mxu0 0.0
    %6879 = vmatpush1.msra.mxu0 0.0
    %6880 = vmatprep.subr.mxu0 0.0
    %6881 = vmatpush1.msra.mxu0 0.0
    %6882 = vmatprep.subr.mxu0 0.0
    %6883 = vmatpush1.msra.mxu0 0.0
    %6884 = vmatprep.subr.mxu0 0.0
    %6885 = vmatpush1.msra.mxu0 0.0
    %6886 = vmatprep.subr.mxu0 0.0
    %6887 = vmatpush1.msra.mxu0 0.0
    %6888 = vmatprep.subr.mxu0 0.0
    %6889 = vmatpush1.msra.mxu0 0.0
    %6890 = vmatprep.subr.mxu0 0.0
    %6891 = vmatpush1.msra.mxu0 0.0
    %6892 = vmatprep.subr.mxu0 0.0
    %6893 = vmatpush1.msra.mxu0 0.0
    %6894 = vmatprep.subr.mxu0 0.0
    %6895 = vmatpush1.msra.mxu0 0.0
    %6896 = vmatprep.subr.mxu0 0.0
    %6897 = vmatpush1.msra.mxu0 0.0
    %6898 = vmatprep.subr.mxu0 0.0
    %6899 = vmatpush1.msra.mxu0 0.0
    %6900 = vmatprep.subr.mxu0 0.0
    %6901 = vmatpush1.msra.mxu0 0.0
    %6902 = vmatprep.subr.mxu0 0.0
    %6903 = vmatpush1.msra.mxu0 0.0
    %6904 = vmatprep.subr.mxu0 0.0
    %6905 = vmatpush1.msra.mxu0 0.0
    %6906 = vmatprep.subr.mxu0 0.0
    %6907 = vmatpush1.msra.mxu0 0.0
    %6908 = vmatprep.subr.mxu0 0.0
    %6909 = vmatpush1.msra.mxu0 0.0
    %6910 = vmatprep.subr.mxu0 0.0
    %6911 = vmatpush1.msra.mxu0 0.0
    %6912 = vmatprep.subr.mxu0 0.0
    %6913 = vmatpush1.msra.mxu0 0.0
    %6914 = vmatprep.mubr.f32.mxu0 0.0
    %6915 = vmatmul.mubr.f32.gmra.mrb[0].mxu0 %v6848
    %v6916 = vpop.f32.mrb[0].mxu0
    %v6917 = vadd.f32 0.0, %v6916
    %v6918 = vpop.f32.mrb[0].mxu0
    %6919 = vdwg.mxu0
    %v6920 = vadd.f32 %v6836, %v6917
    %v6921 = vld [vmem:[#allocation3 + $0x6c] sm:$0x3]
    %s6922 = scalar_lea.vmem [#allocation2], 3456
    %v6923 = vld [vmem:[%s6922] sm:$0xff]
    %v6924 = vld [vmem:[%s6922 + $0x8] sm:$0xff]
    %v6925 = vld [vmem:[%s6922 + $0x10] sm:$0xff]
    %v6926 = vld [vmem:[%s6922 + $0x18] sm:$0xff]
    %v6927 = vld [vmem:[%s6922 + $0x20] sm:$0xff]
    %v6928 = vld [vmem:[%s6922 + $0x28] sm:$0xff]
    %v6929 = vld [vmem:[%s6922 + $0x30] sm:$0xff]
    %v6930 = vld [vmem:[%s6922 + $0x38] sm:$0xff]
    %v6932 = vsel %vm2367, %v6921, 0
    %6934 = vmatprep.subr.mxu0 0.0
    %6935 = vmatpush1.msra.mxu0 %v6923
    %6936 = vmatprep.subr.mxu0 0.0
    %6937 = vmatpush1.msra.mxu0 %v6924
    %6938 = vmatprep.subr.mxu0 0.0
    %6939 = vmatpush1.msra.mxu0 %v6925
    %6940 = vmatprep.subr.mxu0 0.0
    %6941 = vmatpush1.msra.mxu0 %v6926
    %6942 = vmatprep.subr.mxu0 0.0
    %6943 = vmatpush1.msra.mxu0 %v6927
    %6944 = vmatprep.subr.mxu0 0.0
    %6945 = vmatpush1.msra.mxu0 %v6928
    %6946 = vmatprep.subr.mxu0 0.0
    %6947 = vmatpush1.msra.mxu0 %v6929
    %6948 = vmatprep.subr.mxu0 0.0
    %6949 = vmatpush1.msra.mxu0 %v6930
    %6950 = vmatprep.subr.mxu0 0.0
    %6951 = vmatpush1.msra.mxu0 0.0
    %6952 = vmatprep.subr.mxu0 0.0
    %6953 = vmatpush1.msra.mxu0 0.0
    %6954 = vmatprep.subr.mxu0 0.0
    %6955 = vmatpush1.msra.mxu0 0.0
    %6956 = vmatprep.subr.mxu0 0.0
    %6957 = vmatpush1.msra.mxu0 0.0
    %6958 = vmatprep.subr.mxu0 0.0
    %6959 = vmatpush1.msra.mxu0 0.0
    %6960 = vmatprep.subr.mxu0 0.0
    %6961 = vmatpush1.msra.mxu0 0.0
    %6962 = vmatprep.subr.mxu0 0.0
    %6963 = vmatpush1.msra.mxu0 0.0
    %6964 = vmatprep.subr.mxu0 0.0
    %6965 = vmatpush1.msra.mxu0 0.0
    %6966 = vmatprep.subr.mxu0 0.0
    %6967 = vmatpush1.msra.mxu0 0.0
    %6968 = vmatprep.subr.mxu0 0.0
    %6969 = vmatpush1.msra.mxu0 0.0
    %6970 = vmatprep.subr.mxu0 0.0
    %6971 = vmatpush1.msra.mxu0 0.0
    %6972 = vmatprep.subr.mxu0 0.0
    %6973 = vmatpush1.msra.mxu0 0.0
    %6974 = vmatprep.subr.mxu0 0.0
    %6975 = vmatpush1.msra.mxu0 0.0
    %6976 = vmatprep.subr.mxu0 0.0
    %6977 = vmatpush1.msra.mxu0 0.0
    %6978 = vmatprep.subr.mxu0 0.0
    %6979 = vmatpush1.msra.mxu0 0.0
    %6980 = vmatprep.subr.mxu0 0.0
    %6981 = vmatpush1.msra.mxu0 0.0
    %6982 = vmatprep.subr.mxu0 0.0
    %6983 = vmatpush1.msra.mxu0 0.0
    %6984 = vmatprep.subr.mxu0 0.0
    %6985 = vmatpush1.msra.mxu0 0.0
    %6986 = vmatprep.subr.mxu0 0.0
    %6987 = vmatpush1.msra.mxu0 0.0
    %6988 = vmatprep.subr.mxu0 0.0
    %6989 = vmatpush1.msra.mxu0 0.0
    %6990 = vmatprep.subr.mxu0 0.0
    %6991 = vmatpush1.msra.mxu0 0.0
    %6992 = vmatprep.subr.mxu0 0.0
    %6993 = vmatpush1.msra.mxu0 0.0
    %6994 = vmatprep.subr.mxu0 0.0
    %6995 = vmatpush1.msra.mxu0 0.0
    %6996 = vmatprep.subr.mxu0 0.0
    %6997 = vmatpush1.msra.mxu0 0.0
    %6998 = vmatprep.mubr.f32.mxu0 0.0
    %6999 = vmatmul.mubr.f32.gmra.mrb[0].mxu0 %v6932
    %v7000 = vpop.f32.mrb[0].mxu0
    %v7001 = vadd.f32 0.0, %v7000
    %v7002 = vpop.f32.mrb[0].mxu0
    %7003 = vdwg.mxu0
    %v7004 = vadd.f32 %v6920, %v7001
    %v7005 = vld [vmem:[#allocation3 + $0x6e] sm:$0x3]
    %s7006 = scalar_lea.vmem [#allocation2], 3520
    %v7007 = vld [vmem:[%s7006] sm:$0xff]
    %v7008 = vld [vmem:[%s7006 + $0x8] sm:$0xff]
    %v7009 = vld [vmem:[%s7006 + $0x10] sm:$0xff]
    %v7010 = vld [vmem:[%s7006 + $0x18] sm:$0xff]
    %v7011 = vld [vmem:[%s7006 + $0x20] sm:$0xff]
    %v7012 = vld [vmem:[%s7006 + $0x28] sm:$0xff]
    %v7013 = vld [vmem:[%s7006 + $0x30] sm:$0xff]
    %v7014 = vld [vmem:[%s7006 + $0x38] sm:$0xff]
    %v7016 = vsel %vm2367, %v7005, 0
    %7018 = vmatprep.subr.mxu0 0.0
    %7019 = vmatpush1.msra.mxu0 %v7007
    %7020 = vmatprep.subr.mxu0 0.0
    %7021 = vmatpush1.msra.mxu0 %v7008
    %7022 = vmatprep.subr.mxu0 0.0
    %7023 = vmatpush1.msra.mxu0 %v7009
    %7024 = vmatprep.subr.mxu0 0.0
    %7025 = vmatpush1.msra.mxu0 %v7010
    %7026 = vmatprep.subr.mxu0 0.0
    %7027 = vmatpush1.msra.mxu0 %v7011
    %7028 = vmatprep.subr.mxu0 0.0
    %7029 = vmatpush1.msra.mxu0 %v7012
    %7030 = vmatprep.subr.mxu0 0.0
    %7031 = vmatpush1.msra.mxu0 %v7013
    %7032 = vmatprep.subr.mxu0 0.0
    %7033 = vmatpush1.msra.mxu0 %v7014
    %7034 = vmatprep.subr.mxu0 0.0
    %7035 = vmatpush1.msra.mxu0 0.0
    %7036 = vmatprep.subr.mxu0 0.0
    %7037 = vmatpush1.msra.mxu0 0.0
    %7038 = vmatprep.subr.mxu0 0.0
    %7039 = vmatpush1.msra.mxu0 0.0
    %7040 = vmatprep.subr.mxu0 0.0
    %7041 = vmatpush1.msra.mxu0 0.0
    %7042 = vmatprep.subr.mxu0 0.0
    %7043 = vmatpush1.msra.mxu0 0.0
    %7044 = vmatprep.subr.mxu0 0.0
    %7045 = vmatpush1.msra.mxu0 0.0
    %7046 = vmatprep.subr.mxu0 0.0
    %7047 = vmatpush1.msra.mxu0 0.0
    %7048 = vmatprep.subr.mxu0 0.0
    %7049 = vmatpush1.msra.mxu0 0.0
    %7050 = vmatprep.subr.mxu0 0.0
    %7051 = vmatpush1.msra.mxu0 0.0
    %7052 = vmatprep.subr.mxu0 0.0
    %7053 = vmatpush1.msra.mxu0 0.0
    %7054 = vmatprep.subr.mxu0 0.0
    %7055 = vmatpush1.msra.mxu0 0.0
    %7056 = vmatprep.subr.mxu0 0.0
    %7057 = vmatpush1.msra.mxu0 0.0
    %7058 = vmatprep.subr.mxu0 0.0
    %7059 = vmatpush1.msra.mxu0 0.0
    %7060 = vmatprep.subr.mxu0 0.0
    %7061 = vmatpush1.msra.mxu0 0.0
    %7062 = vmatprep.subr.mxu0 0.0
    %7063 = vmatpush1.msra.mxu0 0.0
    %7064 = vmatprep.subr.mxu0 0.0
    %7065 = vmatpush1.msra.mxu0 0.0
    %7066 = vmatprep.subr.mxu0 0.0
    %7067 = vmatpush1.msra.mxu0 0.0
    %7068 = vmatprep.subr.mxu0 0.0
    %7069 = vmatpush1.msra.mxu0 0.0
    %7070 = vmatprep.subr.mxu0 0.0
    %7071 = vmatpush1.msra.mxu0 0.0
    %7072 = vmatprep.subr.mxu0 0.0
    %7073 = vmatpush1.msra.mxu0 0.0
    %7074 = vmatprep.subr.mxu0 0.0
    %7075 = vmatpush1.msra.mxu0 0.0
    %7076 = vmatprep.subr.mxu0 0.0
    %7077 = vmatpush1.msra.mxu0 0.0
    %7078 = vmatprep.subr.mxu0 0.0
    %7079 = vmatpush1.msra.mxu0 0.0
    %7080 = vmatprep.subr.mxu0 0.0
    %7081 = vmatpush1.msra.mxu0 0.0
    %7082 = vmatprep.mubr.f32.mxu0 0.0
    %7083 = vmatmul.mubr.f32.gmra.mrb[0].mxu0 %v7016
    %v7084 = vpop.f32.mrb[0].mxu0
    %v7085 = vadd.f32 0.0, %v7084
    %v7086 = vpop.f32.mrb[0].mxu0
    %7087 = vdwg.mxu0
    %v7088 = vadd.f32 %v7004, %v7085
    %v7089 = vld [vmem:[#allocation3 + $0x70] sm:$0x3]
    %s7090 = scalar_lea.vmem [#allocation2], 3584
    %v7091 = vld [vmem:[%s7090] sm:$0xff]
    %v7092 = vld [vmem:[%s7090 + $0x8] sm:$0xff]
    %v7093 = vld [vmem:[%s7090 + $0x10] sm:$0xff]
    %v7094 = vld [vmem:[%s7090 + $0x18] sm:$0xff]
    %v7095 = vld [vmem:[%s7090 + $0x20] sm:$0xff]
    %v7096 = vld [vmem:[%s7090 + $0x28] sm:$0xff]
    %v7097 = vld [vmem:[%s7090 + $0x30] sm:$0xff]
    %v7098 = vld [vmem:[%s7090 + $0x38] sm:$0xff]
    %v7100 = vsel %vm2367, %v7089, 0
    %7102 = vmatprep.subr.mxu0 0.0
    %7103 = vmatpush1.msra.mxu0 %v7091
    %7104 = vmatprep.subr.mxu0 0.0
    %7105 = vmatpush1.msra.mxu0 %v7092
    %7106 = vmatprep.subr.mxu0 0.0
    %7107 = vmatpush1.msra.mxu0 %v7093
    %7108 = vmatprep.subr.mxu0 0.0
    %7109 = vmatpush1.msra.mxu0 %v7094
    %7110 = vmatprep.subr.mxu0 0.0
    %7111 = vmatpush1.msra.mxu0 %v7095
    %7112 = vmatprep.subr.mxu0 0.0
    %7113 = vmatpush1.msra.mxu0 %v7096
    %7114 = vmatprep.subr.mxu0 0.0
    %7115 = vmatpush1.msra.mxu0 %v7097
    %7116 = vmatprep.subr.mxu0 0.0
    %7117 = vmatpush1.msra.mxu0 %v7098
    %7118 = vmatprep.subr.mxu0 0.0
    %7119 = vmatpush1.msra.mxu0 0.0
    %7120 = vmatprep.subr.mxu0 0.0
    %7121 = vmatpush1.msra.mxu0 0.0
    %7122 = vmatprep.subr.mxu0 0.0
    %7123 = vmatpush1.msra.mxu0 0.0
    %7124 = vmatprep.subr.mxu0 0.0
    %7125 = vmatpush1.msra.mxu0 0.0
    %7126 = vmatprep.subr.mxu0 0.0
    %7127 = vmatpush1.msra.mxu0 0.0
    %7128 = vmatprep.subr.mxu0 0.0
    %7129 = vmatpush1.msra.mxu0 0.0
    %7130 = vmatprep.subr.mxu0 0.0
    %7131 = vmatpush1.msra.mxu0 0.0
    %7132 = vmatprep.subr.mxu0 0.0
    %7133 = vmatpush1.msra.mxu0 0.0
    %7134 = vmatprep.subr.mxu0 0.0
    %7135 = vmatpush1.msra.mxu0 0.0
    %7136 = vmatprep.subr.mxu0 0.0
    %7137 = vmatpush1.msra.mxu0 0.0
    %7138 = vmatprep.subr.mxu0 0.0
    %7139 = vmatpush1.msra.mxu0 0.0
    %7140 = vmatprep.subr.mxu0 0.0
    %7141 = vmatpush1.msra.mxu0 0.0
    %7142 = vmatprep.subr.mxu0 0.0
    %7143 = vmatpush1.msra.mxu0 0.0
    %7144 = vmatprep.subr.mxu0 0.0
    %7145 = vmatpush1.msra.mxu0 0.0
    %7146 = vmatprep.subr.mxu0 0.0
    %7147 = vmatpush1.msra.mxu0 0.0
    %7148 = vmatprep.subr.mxu0 0.0
    %7149 = vmatpush1.msra.mxu0 0.0
    %7150 = vmatprep.subr.mxu0 0.0
    %7151 = vmatpush1.msra.mxu0 0.0
    %7152 = vmatprep.subr.mxu0 0.0
    %7153 = vmatpush1.msra.mxu0 0.0
    %7154 = vmatprep.subr.mxu0 0.0
    %7155 = vmatpush1.msra.mxu0 0.0
    %7156 = vmatprep.subr.mxu0 0.0
    %7157 = vmatpush1.msra.mxu0 0.0
    %7158 = vmatprep.subr.mxu0 0.0
    %7159 = vmatpush1.msra.mxu0 0.0
    %7160 = vmatprep.subr.mxu0 0.0
    %7161 = vmatpush1.msra.mxu0 0.0
    %7162 = vmatprep.subr.mxu0 0.0
    %7163 = vmatpush1.msra.mxu0 0.0
    %7164 = vmatprep.subr.mxu0 0.0
    %7165 = vmatpush1.msra.mxu0 0.0
    %7166 = vmatprep.mubr.f32.mxu0 0.0
    %7167 = vmatmul.mubr.f32.gmra.mrb[0].mxu0 %v7100
    %v7168 = vpop.f32.mrb[0].mxu0
    %v7169 = vadd.f32 0.0, %v7168
    %v7170 = vpop.f32.mrb[0].mxu0
    %7171 = vdwg.mxu0
    %v7172 = vadd.f32 %v7088, %v7169
    %v7173 = vld [vmem:[#allocation3 + $0x72] sm:$0x3]
    %s7174 = scalar_lea.vmem [#allocation2], 3648
    %v7175 = vld [vmem:[%s7174] sm:$0xff]
    %v7176 = vld [vmem:[%s7174 + $0x8] sm:$0xff]
    %v7177 = vld [vmem:[%s7174 + $0x10] sm:$0xff]
    %v7178 = vld [vmem:[%s7174 + $0x18] sm:$0xff]
    %v7179 = vld [vmem:[%s7174 + $0x20] sm:$0xff]
    %v7180 = vld [vmem:[%s7174 + $0x28] sm:$0xff]
    %v7181 = vld [vmem:[%s7174 + $0x30] sm:$0xff]
    %v7182 = vld [vmem:[%s7174 + $0x38] sm:$0xff]
    %v7184 = vsel %vm2367, %v7173, 0
    %7186 = vmatprep.subr.mxu0 0.0
    %7187 = vmatpush1.msra.mxu0 %v7175
    %7188 = vmatprep.subr.mxu0 0.0
    %7189 = vmatpush1.msra.mxu0 %v7176
    %7190 = vmatprep.subr.mxu0 0.0
    %7191 = vmatpush1.msra.mxu0 %v7177
    %7192 = vmatprep.subr.mxu0 0.0
    %7193 = vmatpush1.msra.mxu0 %v7178
    %7194 = vmatprep.subr.mxu0 0.0
    %7195 = vmatpush1.msra.mxu0 %v7179
    %7196 = vmatprep.subr.mxu0 0.0
    %7197 = vmatpush1.msra.mxu0 %v7180
    %7198 = vmatprep.subr.mxu0 0.0
    %7199 = vmatpush1.msra.mxu0 %v7181
    %7200 = vmatprep.subr.mxu0 0.0
    %7201 = vmatpush1.msra.mxu0 %v7182
    %7202 = vmatprep.subr.mxu0 0.0
    %7203 = vmatpush1.msra.mxu0 0.0
    %7204 = vmatprep.subr.mxu0 0.0
    %7205 = vmatpush1.msra.mxu0 0.0
    %7206 = vmatprep.subr.mxu0 0.0
    %7207 = vmatpush1.msra.mxu0 0.0
    %7208 = vmatprep.subr.mxu0 0.0
    %7209 = vmatpush1.msra.mxu0 0.0
    %7210 = vmatprep.subr.mxu0 0.0
    %7211 = vmatpush1.msra.mxu0 0.0
    %7212 = vmatprep.subr.mxu0 0.0
    %7213 = vmatpush1.msra.mxu0 0.0
    %7214 = vmatprep.subr.mxu0 0.0
    %7215 = vmatpush1.msra.mxu0 0.0
    %7216 = vmatprep.subr.mxu0 0.0
    %7217 = vmatpush1.msra.mxu0 0.0
    %7218 = vmatprep.subr.mxu0 0.0
    %7219 = vmatpush1.msra.mxu0 0.0
    %7220 = vmatprep.subr.mxu0 0.0
    %7221 = vmatpush1.msra.mxu0 0.0
    %7222 = vmatprep.subr.mxu0 0.0
    %7223 = vmatpush1.msra.mxu0 0.0
    %7224 = vmatprep.subr.mxu0 0.0
    %7225 = vmatpush1.msra.mxu0 0.0
    %7226 = vmatprep.subr.mxu0 0.0
    %7227 = vmatpush1.msra.mxu0 0.0
    %7228 = vmatprep.subr.mxu0 0.0
    %7229 = vmatpush1.msra.mxu0 0.0
    %7230 = vmatprep.subr.mxu0 0.0
    %7231 = vmatpush1.msra.mxu0 0.0
    %7232 = vmatprep.subr.mxu0 0.0
    %7233 = vmatpush1.msra.mxu0 0.0
    %7234 = vmatprep.subr.mxu0 0.0
    %7235 = vmatpush1.msra.mxu0 0.0
    %7236 = vmatprep.subr.mxu0 0.0
    %7237 = vmatpush1.msra.mxu0 0.0
    %7238 = vmatprep.subr.mxu0 0.0
    %7239 = vmatpush1.msra.mxu0 0.0
    %7240 = vmatprep.subr.mxu0 0.0
    %7241 = vmatpush1.msra.mxu0 0.0
    %7242 = vmatprep.subr.mxu0 0.0
    %7243 = vmatpush1.msra.mxu0 0.0
    %7244 = vmatprep.subr.mxu0 0.0
    %7245 = vmatpush1.msra.mxu0 0.0
    %7246 = vmatprep.subr.mxu0 0.0
    %7247 = vmatpush1.msra.mxu0 0.0
    %7248 = vmatprep.subr.mxu0 0.0
    %7249 = vmatpush1.msra.mxu0 0.0
    %7250 = vmatprep.mubr.f32.mxu0 0.0
    %7251 = vmatmul.mubr.f32.gmra.mrb[0].mxu0 %v7184
    %v7252 = vpop.f32.mrb[0].mxu0
    %v7253 = vadd.f32 0.0, %v7252
    %v7254 = vpop.f32.mrb[0].mxu0
    %7255 = vdwg.mxu0
    %v7256 = vadd.f32 %v7172, %v7253
    %v7257 = vld [vmem:[#allocation3 + $0x74] sm:$0x3]
    %s7258 = scalar_lea.vmem [#allocation2], 3712
    %v7259 = vld [vmem:[%s7258] sm:$0xff]
    %v7260 = vld [vmem:[%s7258 + $0x8] sm:$0xff]
    %v7261 = vld [vmem:[%s7258 + $0x10] sm:$0xff]
    %v7262 = vld [vmem:[%s7258 + $0x18] sm:$0xff]
    %v7263 = vld [vmem:[%s7258 + $0x20] sm:$0xff]
    %v7264 = vld [vmem:[%s7258 + $0x28] sm:$0xff]
    %v7265 = vld [vmem:[%s7258 + $0x30] sm:$0xff]
    %v7266 = vld [vmem:[%s7258 + $0x38] sm:$0xff]
    %v7268 = vsel %vm2367, %v7257, 0
    %7270 = vmatprep.subr.mxu0 0.0
    %7271 = vmatpush1.msra.mxu0 %v7259
    %7272 = vmatprep.subr.mxu0 0.0
    %7273 = vmatpush1.msra.mxu0 %v7260
    %7274 = vmatprep.subr.mxu0 0.0
    %7275 = vmatpush1.msra.mxu0 %v7261
    %7276 = vmatprep.subr.mxu0 0.0
    %7277 = vmatpush1.msra.mxu0 %v7262
    %7278 = vmatprep.subr.mxu0 0.0
    %7279 = vmatpush1.msra.mxu0 %v7263
    %7280 = vmatprep.subr.mxu0 0.0
    %7281 = vmatpush1.msra.mxu0 %v7264
    %7282 = vmatprep.subr.mxu0 0.0
    %7283 = vmatpush1.msra.mxu0 %v7265
    %7284 = vmatprep.subr.mxu0 0.0
    %7285 = vmatpush1.msra.mxu0 %v7266
    %7286 = vmatprep.subr.mxu0 0.0
    %7287 = vmatpush1.msra.mxu0 0.0
    %7288 = vmatprep.subr.mxu0 0.0
    %7289 = vmatpush1.msra.mxu0 0.0
    %7290 = vmatprep.subr.mxu0 0.0
    %7291 = vmatpush1.msra.mxu0 0.0
    %7292 = vmatprep.subr.mxu0 0.0
    %7293 = vmatpush1.msra.mxu0 0.0
    %7294 = vmatprep.subr.mxu0 0.0
    %7295 = vmatpush1.msra.mxu0 0.0
    %7296 = vmatprep.subr.mxu0 0.0
    %7297 = vmatpush1.msra.mxu0 0.0
    %7298 = vmatprep.subr.mxu0 0.0
    %7299 = vmatpush1.msra.mxu0 0.0
    %7300 = vmatprep.subr.mxu0 0.0
    %7301 = vmatpush1.msra.mxu0 0.0
    %7302 = vmatprep.subr.mxu0 0.0
    %7303 = vmatpush1.msra.mxu0 0.0
    %7304 = vmatprep.subr.mxu0 0.0
    %7305 = vmatpush1.msra.mxu0 0.0
    %7306 = vmatprep.subr.mxu0 0.0
    %7307 = vmatpush1.msra.mxu0 0.0
    %7308 = vmatprep.subr.mxu0 0.0
    %7309 = vmatpush1.msra.mxu0 0.0
    %7310 = vmatprep.subr.mxu0 0.0
    %7311 = vmatpush1.msra.mxu0 0.0
    %7312 = vmatprep.subr.mxu0 0.0
    %7313 = vmatpush1.msra.mxu0 0.0
    %7314 = vmatprep.subr.mxu0 0.0
    %7315 = vmatpush1.msra.mxu0 0.0
    %7316 = vmatprep.subr.mxu0 0.0
    %7317 = vmatpush1.msra.mxu0 0.0
    %7318 = vmatprep.subr.mxu0 0.0
    %7319 = vmatpush1.msra.mxu0 0.0
    %7320 = vmatprep.subr.mxu0 0.0
    %7321 = vmatpush1.msra.mxu0 0.0
    %7322 = vmatprep.subr.mxu0 0.0
    %7323 = vmatpush1.msra.mxu0 0.0
    %7324 = vmatprep.subr.mxu0 0.0
    %7325 = vmatpush1.msra.mxu0 0.0
    %7326 = vmatprep.subr.mxu0 0.0
    %7327 = vmatpush1.msra.mxu0 0.0
    %7328 = vmatprep.subr.mxu0 0.0
    %7329 = vmatpush1.msra.mxu0 0.0
    %7330 = vmatprep.subr.mxu0 0.0
    %7331 = vmatpush1.msra.mxu0 0.0
    %7332 = vmatprep.subr.mxu0 0.0
    %7333 = vmatpush1.msra.mxu0 0.0
    %7334 = vmatprep.mubr.f32.mxu0 0.0
    %7335 = vmatmul.mubr.f32.gmra.mrb[0].mxu0 %v7268
    %v7336 = vpop.f32.mrb[0].mxu0
    %v7337 = vadd.f32 0.0, %v7336
    %v7338 = vpop.f32.mrb[0].mxu0
    %7339 = vdwg.mxu0
    %v7340 = vadd.f32 %v7256, %v7337
    %v7341 = vld [vmem:[#allocation3 + $0x76] sm:$0x3]
    %s7342 = scalar_lea.vmem [#allocation2], 3776
    %v7343 = vld [vmem:[%s7342] sm:$0xff]
    %v7344 = vld [vmem:[%s7342 + $0x8] sm:$0xff]
    %v7345 = vld [vmem:[%s7342 + $0x10] sm:$0xff]
    %v7346 = vld [vmem:[%s7342 + $0x18] sm:$0xff]
    %v7347 = vld [vmem:[%s7342 + $0x20] sm:$0xff]
    %v7348 = vld [vmem:[%s7342 + $0x28] sm:$0xff]
    %v7349 = vld [vmem:[%s7342 + $0x30] sm:$0xff]
    %v7350 = vld [vmem:[%s7342 + $0x38] sm:$0xff]
    %v7352 = vsel %vm2367, %v7341, 0
    %7354 = vmatprep.subr.mxu0 0.0
    %7355 = vmatpush1.msra.mxu0 %v7343
    %7356 = vmatprep.subr.mxu0 0.0
    %7357 = vmatpush1.msra.mxu0 %v7344
    %7358 = vmatprep.subr.mxu0 0.0
    %7359 = vmatpush1.msra.mxu0 %v7345
    %7360 = vmatprep.subr.mxu0 0.0
    %7361 = vmatpush1.msra.mxu0 %v7346
    %7362 = vmatprep.subr.mxu0 0.0
    %7363 = vmatpush1.msra.mxu0 %v7347
    %7364 = vmatprep.subr.mxu0 0.0
    %7365 = vmatpush1.msra.mxu0 %v7348
    %7366 = vmatprep.subr.mxu0 0.0
    %7367 = vmatpush1.msra.mxu0 %v7349
    %7368 = vmatprep.subr.mxu0 0.0
    %7369 = vmatpush1.msra.mxu0 %v7350
    %7370 = vmatprep.subr.mxu0 0.0
    %7371 = vmatpush1.msra.mxu0 0.0
    %7372 = vmatprep.subr.mxu0 0.0
    %7373 = vmatpush1.msra.mxu0 0.0
    %7374 = vmatprep.subr.mxu0 0.0
    %7375 = vmatpush1.msra.mxu0 0.0
    %7376 = vmatprep.subr.mxu0 0.0
    %7377 = vmatpush1.msra.mxu0 0.0
    %7378 = vmatprep.subr.mxu0 0.0
    %7379 = vmatpush1.msra.mxu0 0.0
    %7380 = vmatprep.subr.mxu0 0.0
    %7381 = vmatpush1.msra.mxu0 0.0
    %7382 = vmatprep.subr.mxu0 0.0
    %7383 = vmatpush1.msra.mxu0 0.0
    %7384 = vmatprep.subr.mxu0 0.0
    %7385 = vmatpush1.msra.mxu0 0.0
    %7386 = vmatprep.subr.mxu0 0.0
    %7387 = vmatpush1.msra.mxu0 0.0
    %7388 = vmatprep.subr.mxu0 0.0
    %7389 = vmatpush1.msra.mxu0 0.0
    %7390 = vmatprep.subr.mxu0 0.0
    %7391 = vmatpush1.msra.mxu0 0.0
    %7392 = vmatprep.subr.mxu0 0.0
    %7393 = vmatpush1.msra.mxu0 0.0
    %7394 = vmatprep.subr.mxu0 0.0
    %7395 = vmatpush1.msra.mxu0 0.0
    %7396 = vmatprep.subr.mxu0 0.0
    %7397 = vmatpush1.msra.mxu0 0.0
    %7398 = vmatprep.subr.mxu0 0.0
    %7399 = vmatpush1.msra.mxu0 0.0
    %7400 = vmatprep.subr.mxu0 0.0
    %7401 = vmatpush1.msra.mxu0 0.0
    %7402 = vmatprep.subr.mxu0 0.0
    %7403 = vmatpush1.msra.mxu0 0.0
    %7404 = vmatprep.subr.mxu0 0.0
    %7405 = vmatpush1.msra.mxu0 0.0
    %7406 = vmatprep.subr.mxu0 0.0
    %7407 = vmatpush1.msra.mxu0 0.0
    %7408 = vmatprep.subr.mxu0 0.0
    %7409 = vmatpush1.msra.mxu0 0.0
    %7410 = vmatprep.subr.mxu0 0.0
    %7411 = vmatpush1.msra.mxu0 0.0
    %7412 = vmatprep.subr.mxu0 0.0
    %7413 = vmatpush1.msra.mxu0 0.0
    %7414 = vmatprep.subr.mxu0 0.0
    %7415 = vmatpush1.msra.mxu0 0.0
    %7416 = vmatprep.subr.mxu0 0.0
    %7417 = vmatpush1.msra.mxu0 0.0
    %7418 = vmatprep.mubr.f32.mxu0 0.0
    %7419 = vmatmul.mubr.f32.gmra.mrb[0].mxu0 %v7352
    %v7420 = vpop.f32.mrb[0].mxu0
    %v7421 = vadd.f32 0.0, %v7420
    %v7422 = vpop.f32.mrb[0].mxu0
    %7423 = vdwg.mxu0
    %v7424 = vadd.f32 %v7340, %v7421
    %v7425 = vld [vmem:[#allocation3 + $0x78] sm:$0x3]
    %s7426 = scalar_lea.vmem [#allocation2], 3840
    %v7427 = vld [vmem:[%s7426] sm:$0xff]
    %v7428 = vld [vmem:[%s7426 + $0x8] sm:$0xff]
    %v7429 = vld [vmem:[%s7426 + $0x10] sm:$0xff]
    %v7430 = vld [vmem:[%s7426 + $0x18] sm:$0xff]
    %v7431 = vld [vmem:[%s7426 + $0x20] sm:$0xff]
    %v7432 = vld [vmem:[%s7426 + $0x28] sm:$0xff]
    %v7433 = vld [vmem:[%s7426 + $0x30] sm:$0xff]
    %v7434 = vld [vmem:[%s7426 + $0x38] sm:$0xff]
    %v7436 = vsel %vm2367, %v7425, 0
    %7438 = vmatprep.subr.mxu0 0.0
    %7439 = vmatpush1.msra.mxu0 %v7427
    %7440 = vmatprep.subr.mxu0 0.0
    %7441 = vmatpush1.msra.mxu0 %v7428
    %7442 = vmatprep.subr.mxu0 0.0
    %7443 = vmatpush1.msra.mxu0 %v7429
    %7444 = vmatprep.subr.mxu0 0.0
    %7445 = vmatpush1.msra.mxu0 %v7430
    %7446 = vmatprep.subr.mxu0 0.0
    %7447 = vmatpush1.msra.mxu0 %v7431
    %7448 = vmatprep.subr.mxu0 0.0
    %7449 = vmatpush1.msra.mxu0 %v7432
    %7450 = vmatprep.subr.mxu0 0.0
    %7451 = vmatpush1.msra.mxu0 %v7433
    %7452 = vmatprep.subr.mxu0 0.0
    %7453 = vmatpush1.msra.mxu0 %v7434
    %7454 = vmatprep.subr.mxu0 0.0
    %7455 = vmatpush1.msra.mxu0 0.0
    %7456 = vmatprep.subr.mxu0 0.0
    %7457 = vmatpush1.msra.mxu0 0.0
    %7458 = vmatprep.subr.mxu0 0.0
    %7459 = vmatpush1.msra.mxu0 0.0
    %7460 = vmatprep.subr.mxu0 0.0
    %7461 = vmatpush1.msra.mxu0 0.0
    %7462 = vmatprep.subr.mxu0 0.0
    %7463 = vmatpush1.msra.mxu0 0.0
    %7464 = vmatprep.subr.mxu0 0.0
    %7465 = vmatpush1.msra.mxu0 0.0
    %7466 = vmatprep.subr.mxu0 0.0
    %7467 = vmatpush1.msra.mxu0 0.0
    %7468 = vmatprep.subr.mxu0 0.0
    %7469 = vmatpush1.msra.mxu0 0.0
    %7470 = vmatprep.subr.mxu0 0.0
    %7471 = vmatpush1.msra.mxu0 0.0
    %7472 = vmatprep.subr.mxu0 0.0
    %7473 = vmatpush1.msra.mxu0 0.0
    %7474 = vmatprep.subr.mxu0 0.0
    %7475 = vmatpush1.msra.mxu0 0.0
    %7476 = vmatprep.subr.mxu0 0.0
    %7477 = vmatpush1.msra.mxu0 0.0
    %7478 = vmatprep.subr.mxu0 0.0
    %7479 = vmatpush1.msra.mxu0 0.0
    %7480 = vmatprep.subr.mxu0 0.0
    %7481 = vmatpush1.msra.mxu0 0.0
    %7482 = vmatprep.subr.mxu0 0.0
    %7483 = vmatpush1.msra.mxu0 0.0
    %7484 = vmatprep.subr.mxu0 0.0
    %7485 = vmatpush1.msra.mxu0 0.0
    %7486 = vmatprep.subr.mxu0 0.0
    %7487 = vmatpush1.msra.mxu0 0.0
    %7488 = vmatprep.subr.mxu0 0.0
    %7489 = vmatpush1.msra.mxu0 0.0
    %7490 = vmatprep.subr.mxu0 0.0
    %7491 = vmatpush1.msra.mxu0 0.0
    %7492 = vmatprep.subr.mxu0 0.0
    %7493 = vmatpush1.msra.mxu0 0.0
    %7494 = vmatprep.subr.mxu0 0.0
    %7495 = vmatpush1.msra.mxu0 0.0
    %7496 = vmatprep.subr.mxu0 0.0
    %7497 = vmatpush1.msra.mxu0 0.0
    %7498 = vmatprep.subr.mxu0 0.0
    %7499 = vmatpush1.msra.mxu0 0.0
    %7500 = vmatprep.subr.mxu0 0.0
    %7501 = vmatpush1.msra.mxu0 0.0
    %7502 = vmatprep.mubr.f32.mxu0 0.0
    %7503 = vmatmul.mubr.f32.gmra.mrb[0].mxu0 %v7436
    %v7504 = vpop.f32.mrb[0].mxu0
    %v7505 = vadd.f32 0.0, %v7504
    %v7506 = vpop.f32.mrb[0].mxu0
    %7507 = vdwg.mxu0
    %v7508 = vadd.f32 %v7424, %v7505
    %v7509 = vld [vmem:[#allocation3 + $0x7a] sm:$0x3]
    %s7510 = scalar_lea.vmem [#allocation2], 3904
    %v7511 = vld [vmem:[%s7510] sm:$0xff]
    %v7512 = vld [vmem:[%s7510 + $0x8] sm:$0xff]
    %v7513 = vld [vmem:[%s7510 + $0x10] sm:$0xff]
    %v7514 = vld [vmem:[%s7510 + $0x18] sm:$0xff]
    %v7515 = vld [vmem:[%s7510 + $0x20] sm:$0xff]
    %v7516 = vld [vmem:[%s7510 + $0x28] sm:$0xff]
    %v7517 = vld [vmem:[%s7510 + $0x30] sm:$0xff]
    %v7518 = vld [vmem:[%s7510 + $0x38] sm:$0xff]
    %v7520 = vsel %vm2367, %v7509, 0
    %7522 = vmatprep.subr.mxu0 0.0
    %7523 = vmatpush1.msra.mxu0 %v7511
    %7524 = vmatprep.subr.mxu0 0.0
    %7525 = vmatpush1.msra.mxu0 %v7512
    %7526 = vmatprep.subr.mxu0 0.0
    %7527 = vmatpush1.msra.mxu0 %v7513
    %7528 = vmatprep.subr.mxu0 0.0
    %7529 = vmatpush1.msra.mxu0 %v7514
    %7530 = vmatprep.subr.mxu0 0.0
    %7531 = vmatpush1.msra.mxu0 %v7515
    %7532 = vmatprep.subr.mxu0 0.0
    %7533 = vmatpush1.msra.mxu0 %v7516
    %7534 = vmatprep.subr.mxu0 0.0
    %7535 = vmatpush1.msra.mxu0 %v7517
    %7536 = vmatprep.subr.mxu0 0.0
    %7537 = vmatpush1.msra.mxu0 %v7518
    %7538 = vmatprep.subr.mxu0 0.0
    %7539 = vmatpush1.msra.mxu0 0.0
    %7540 = vmatprep.subr.mxu0 0.0
    %7541 = vmatpush1.msra.mxu0 0.0
    %7542 = vmatprep.subr.mxu0 0.0
    %7543 = vmatpush1.msra.mxu0 0.0
    %7544 = vmatprep.subr.mxu0 0.0
    %7545 = vmatpush1.msra.mxu0 0.0
    %7546 = vmatprep.subr.mxu0 0.0
    %7547 = vmatpush1.msra.mxu0 0.0
    %7548 = vmatprep.subr.mxu0 0.0
    %7549 = vmatpush1.msra.mxu0 0.0
    %7550 = vmatprep.subr.mxu0 0.0
    %7551 = vmatpush1.msra.mxu0 0.0
    %7552 = vmatprep.subr.mxu0 0.0
    %7553 = vmatpush1.msra.mxu0 0.0
    %7554 = vmatprep.subr.mxu0 0.0
    %7555 = vmatpush1.msra.mxu0 0.0
    %7556 = vmatprep.subr.mxu0 0.0
    %7557 = vmatpush1.msra.mxu0 0.0
    %7558 = vmatprep.subr.mxu0 0.0
    %7559 = vmatpush1.msra.mxu0 0.0
    %7560 = vmatprep.subr.mxu0 0.0
    %7561 = vmatpush1.msra.mxu0 0.0
    %7562 = vmatprep.subr.mxu0 0.0
    %7563 = vmatpush1.msra.mxu0 0.0
    %7564 = vmatprep.subr.mxu0 0.0
    %7565 = vmatpush1.msra.mxu0 0.0
    %7566 = vmatprep.subr.mxu0 0.0
    %7567 = vmatpush1.msra.mxu0 0.0
    %7568 = vmatprep.subr.mxu0 0.0
    %7569 = vmatpush1.msra.mxu0 0.0
    %7570 = vmatprep.subr.mxu0 0.0
    %7571 = vmatpush1.msra.mxu0 0.0
    %7572 = vmatprep.subr.mxu0 0.0
    %7573 = vmatpush1.msra.mxu0 0.0
    %7574 = vmatprep.subr.mxu0 0.0
    %7575 = vmatpush1.msra.mxu0 0.0
    %7576 = vmatprep.subr.mxu0 0.0
    %7577 = vmatpush1.msra.mxu0 0.0
    %7578 = vmatprep.subr.mxu0 0.0
    %7579 = vmatpush1.msra.mxu0 0.0
    %7580 = vmatprep.subr.mxu0 0.0
    %7581 = vmatpush1.msra.mxu0 0.0
    %7582 = vmatprep.subr.mxu0 0.0
    %7583 = vmatpush1.msra.mxu0 0.0
    %7584 = vmatprep.subr.mxu0 0.0
    %7585 = vmatpush1.msra.mxu0 0.0
    %7586 = vmatprep.mubr.f32.mxu0 0.0
    %7587 = vmatmul.mubr.f32.gmra.mrb[0].mxu0 %v7520
    %v7588 = vpop.f32.mrb[0].mxu0
    %v7589 = vadd.f32 0.0, %v7588
    %v7590 = vpop.f32.mrb[0].mxu0
    %7591 = vdwg.mxu0
    %v7592 = vadd.f32 %v7508, %v7589
    %v7593 = vld [vmem:[#allocation3 + $0x7c] sm:$0x3]
    %s7594 = scalar_lea.vmem [#allocation2], 3968
    %v7595 = vld [vmem:[%s7594] sm:$0xff]
    %v7596 = vld [vmem:[%s7594 + $0x8] sm:$0xff]
    %v7597 = vld [vmem:[%s7594 + $0x10] sm:$0xff]
    %v7598 = vld [vmem:[%s7594 + $0x18] sm:$0xff]
    %v7599 = vld [vmem:[%s7594 + $0x20] sm:$0xff]
    %v7600 = vld [vmem:[%s7594 + $0x28] sm:$0xff]
    %v7601 = vld [vmem:[%s7594 + $0x30] sm:$0xff]
    %v7602 = vld [vmem:[%s7594 + $0x38] sm:$0xff]
    %v7604 = vsel %vm2367, %v7593, 0
    %7606 = vmatprep.subr.mxu0 0.0
    %7607 = vmatpush1.msra.mxu0 %v7595
    %7608 = vmatprep.subr.mxu0 0.0
    %7609 = vmatpush1.msra.mxu0 %v7596
    %7610 = vmatprep.subr.mxu0 0.0
    %7611 = vmatpush1.msra.mxu0 %v7597
    %7612 = vmatprep.subr.mxu0 0.0
    %7613 = vmatpush1.msra.mxu0 %v7598
    %7614 = vmatprep.subr.mxu0 0.0
    %7615 = vmatpush1.msra.mxu0 %v7599
    %7616 = vmatprep.subr.mxu0 0.0
    %7617 = vmatpush1.msra.mxu0 %v7600
    %7618 = vmatprep.subr.mxu0 0.0
    %7619 = vmatpush1.msra.mxu0 %v7601
    %7620 = vmatprep.subr.mxu0 0.0
    %7621 = vmatpush1.msra.mxu0 %v7602
    %7622 = vmatprep.subr.mxu0 0.0
    %7623 = vmatpush1.msra.mxu0 0.0
    %7624 = vmatprep.subr.mxu0 0.0
    %7625 = vmatpush1.msra.mxu0 0.0
    %7626 = vmatprep.subr.mxu0 0.0
    %7627 = vmatpush1.msra.mxu0 0.0
    %7628 = vmatprep.subr.mxu0 0.0
    %7629 = vmatpush1.msra.mxu0 0.0
    %7630 = vmatprep.subr.mxu0 0.0
    %7631 = vmatpush1.msra.mxu0 0.0
    %7632 = vmatprep.subr.mxu0 0.0
    %7633 = vmatpush1.msra.mxu0 0.0
    %7634 = vmatprep.subr.mxu0 0.0
    %7635 = vmatpush1.msra.mxu0 0.0
    %7636 = vmatprep.subr.mxu0 0.0
    %7637 = vmatpush1.msra.mxu0 0.0
    %7638 = vmatprep.subr.mxu0 0.0
    %7639 = vmatpush1.msra.mxu0 0.0
    %7640 = vmatprep.subr.mxu0 0.0
    %7641 = vmatpush1.msra.mxu0 0.0
    %7642 = vmatprep.subr.mxu0 0.0
    %7643 = vmatpush1.msra.mxu0 0.0
    %7644 = vmatprep.subr.mxu0 0.0
    %7645 = vmatpush1.msra.mxu0 0.0
    %7646 = vmatprep.subr.mxu0 0.0
    %7647 = vmatpush1.msra.mxu0 0.0
    %7648 = vmatprep.subr.mxu0 0.0
    %7649 = vmatpush1.msra.mxu0 0.0
    %7650 = vmatprep.subr.mxu0 0.0
    %7651 = vmatpush1.msra.mxu0 0.0
    %7652 = vmatprep.subr.mxu0 0.0
    %7653 = vmatpush1.msra.mxu0 0.0
    %7654 = vmatprep.subr.mxu0 0.0
    %7655 = vmatpush1.msra.mxu0 0.0
    %7656 = vmatprep.subr.mxu0 0.0
    %7657 = vmatpush1.msra.mxu0 0.0
    %7658 = vmatprep.subr.mxu0 0.0
    %7659 = vmatpush1.msra.mxu0 0.0
    %7660 = vmatprep.subr.mxu0 0.0
    %7661 = vmatpush1.msra.mxu0 0.0
    %7662 = vmatprep.subr.mxu0 0.0
    %7663 = vmatpush1.msra.mxu0 0.0
    %7664 = vmatprep.subr.mxu0 0.0
    %7665 = vmatpush1.msra.mxu0 0.0
    %7666 = vmatprep.subr.mxu0 0.0
    %7667 = vmatpush1.msra.mxu0 0.0
    %7668 = vmatprep.subr.mxu0 0.0
    %7669 = vmatpush1.msra.mxu0 0.0
    %7670 = vmatprep.mubr.f32.mxu0 0.0
    %7671 = vmatmul.mubr.f32.gmra.mrb[0].mxu0 %v7604
    %v7672 = vpop.f32.mrb[0].mxu0
    %v7673 = vadd.f32 0.0, %v7672
    %v7674 = vpop.f32.mrb[0].mxu0
    %7675 = vdwg.mxu0
    %v7676 = vadd.f32 %v7592, %v7673
    %v7677 = vld [vmem:[#allocation3 + $0x7e] sm:$0x3]
    %s7678 = scalar_lea.vmem [#allocation2], 4032
    %v7679 = vld [vmem:[%s7678] sm:$0xff]
    %v7680 = vld [vmem:[%s7678 + $0x8] sm:$0xff]
    %v7681 = vld [vmem:[%s7678 + $0x10] sm:$0xff]
    %v7682 = vld [vmem:[%s7678 + $0x18] sm:$0xff]
    %v7683 = vld [vmem:[%s7678 + $0x20] sm:$0xff]
    %v7684 = vld [vmem:[%s7678 + $0x28] sm:$0xff]
    %v7685 = vld [vmem:[%s7678 + $0x30] sm:$0xff]
    %v7686 = vld [vmem:[%s7678 + $0x38] sm:$0xff]
    %v7688 = vsel %vm2367, %v7677, 0
    %7690 = vmatprep.subr.mxu0 0.0
    %7691 = vmatpush1.msra.mxu0 %v7679
    %7692 = vmatprep.subr.mxu0 0.0
    %7693 = vmatpush1.msra.mxu0 %v7680
    %7694 = vmatprep.subr.mxu0 0.0
    %7695 = vmatpush1.msra.mxu0 %v7681
    %7696 = vmatprep.subr.mxu0 0.0
    %7697 = vmatpush1.msra.mxu0 %v7682
    %7698 = vmatprep.subr.mxu0 0.0
    %7699 = vmatpush1.msra.mxu0 %v7683
    %7700 = vmatprep.subr.mxu0 0.0
    %7701 = vmatpush1.msra.mxu0 %v7684
    %7702 = vmatprep.subr.mxu0 0.0
    %7703 = vmatpush1.msra.mxu0 %v7685
    %7704 = vmatprep.subr.mxu0 0.0
    %7705 = vmatpush1.msra.mxu0 %v7686
    %7706 = vmatprep.subr.mxu0 0.0
    %7707 = vmatpush1.msra.mxu0 0.0
    %7708 = vmatprep.subr.mxu0 0.0
    %7709 = vmatpush1.msra.mxu0 0.0
    %7710 = vmatprep.subr.mxu0 0.0
    %7711 = vmatpush1.msra.mxu0 0.0
    %7712 = vmatprep.subr.mxu0 0.0
    %7713 = vmatpush1.msra.mxu0 0.0
    %7714 = vmatprep.subr.mxu0 0.0
    %7715 = vmatpush1.msra.mxu0 0.0
    %7716 = vmatprep.subr.mxu0 0.0
    %7717 = vmatpush1.msra.mxu0 0.0
    %7718 = vmatprep.subr.mxu0 0.0
    %7719 = vmatpush1.msra.mxu0 0.0
    %7720 = vmatprep.subr.mxu0 0.0
    %7721 = vmatpush1.msra.mxu0 0.0
    %7722 = vmatprep.subr.mxu0 0.0
    %7723 = vmatpush1.msra.mxu0 0.0
    %7724 = vmatprep.subr.mxu0 0.0
    %7725 = vmatpush1.msra.mxu0 0.0
    %7726 = vmatprep.subr.mxu0 0.0
    %7727 = vmatpush1.msra.mxu0 0.0
    %7728 = vmatprep.subr.mxu0 0.0
    %7729 = vmatpush1.msra.mxu0 0.0
    %7730 = vmatprep.subr.mxu0 0.0
    %7731 = vmatpush1.msra.mxu0 0.0
    %7732 = vmatprep.subr.mxu0 0.0
    %7733 = vmatpush1.msra.mxu0 0.0
    %7734 = vmatprep.subr.mxu0 0.0
    %7735 = vmatpush1.msra.mxu0 0.0
    %7736 = vmatprep.subr.mxu0 0.0
    %7737 = vmatpush1.msra.mxu0 0.0
    %7738 = vmatprep.subr.mxu0 0.0
    %7739 = vmatpush1.msra.mxu0 0.0
    %7740 = vmatprep.subr.mxu0 0.0
    %7741 = vmatpush1.msra.mxu0 0.0
    %7742 = vmatprep.subr.mxu0 0.0
    %7743 = vmatpush1.msra.mxu0 0.0
    %7744 = vmatprep.subr.mxu0 0.0
    %7745 = vmatpush1.msra.mxu0 0.0
    %7746 = vmatprep.subr.mxu0 0.0
    %7747 = vmatpush1.msra.mxu0 0.0
    %7748 = vmatprep.subr.mxu0 0.0
    %7749 = vmatpush1.msra.mxu0 0.0
    %7750 = vmatprep.subr.mxu0 0.0
    %7751 = vmatpush1.msra.mxu0 0.0
    %7752 = vmatprep.subr.mxu0 0.0
    %7753 = vmatpush1.msra.mxu0 0.0
    %7754 = vmatprep.mubr.f32.mxu0 0.0
    %7755 = vmatmul.mubr.f32.gmra.mrb[0].mxu0 %v7688
    %v7756 = vpop.f32.mrb[0].mxu0
    %v7757 = vadd.f32 0.0, %v7756
    %v7758 = vpop.f32.mrb[0].mxu0
    %7759 = vdwg.mxu0
    %v7760 = vadd.f32 %v7676, %v7757
    %v7761 = vld [vmem:[%s4] sm:$0x1]
    %v7763 = vlaneseq
    %v7764 = vshrl.u32 %v7763, 7
    %v7765 = vsub.s32 0, %v7764
    %v7766 = vrot.slane %v7761, %v7765
    %v7768 = vadd.f32 %v7760, %v7766
    %v7769 = vmax.f32 %v7768, 0.0
    %v7770 = vld [vmem:[%s5] sm:$0xff]
    %v7771 = vld [vmem:[%s5 + $0x8] sm:$0xff]
    %v7772 = vld [vmem:[%s5 + $0x10] sm:$0xff]
    %v7773 = vld [vmem:[%s5 + $0x18] sm:$0xff]
    %v7774 = vld [vmem:[%s5 + $0x20] sm:$0xff]
    %v7775 = vld [vmem:[%s5 + $0x28] sm:$0xff]
    %v7776 = vld [vmem:[%s5 + $0x30] sm:$0xff]
    %v7777 = vld [vmem:[%s5 + $0x38] sm:$0xff]
    %v7778 = vld [vmem:[%s5 + $0x40] sm:$0xff]
    %v7779 = vld [vmem:[%s5 + $0x48] sm:$0xff]
    %v7780 = vld [vmem:[%s5 + $0x50] sm:$0xff]
    %v7781 = vld [vmem:[%s5 + $0x58] sm:$0xff]
    %v7782 = vld [vmem:[%s5 + $0x60] sm:$0xff]
    %v7783 = vld [vmem:[%s5 + $0x68] sm:$0xff]
    %v7784 = vld [vmem:[%s5 + $0x70] sm:$0xff]
    %v7785 = vld [vmem:[%s5 + $0x78] sm:$0xff]
    %v7786 = vld [vmem:[%s6] sm:$0x1]
    %v7788 = vlaneseq
    %v7789 = vshrl.u32 %v7788, 7
    %v7790 = vsub.s32 0, %v7789
    %v7791 = vrot.slane %v7786, %v7790
    %7793 = vmatprep.subr.mxu0 0.0
    %7794 = vmatpush1.msra.mxu0 %v7770
    %7795 = vmatprep.subr.mxu0 0.0
    %7796 = vmatpush1.msra.mxu0 %v7771
    %7797 = vmatprep.subr.mxu0 0.0
    %7798 = vmatpush1.msra.mxu0 %v7772
    %7799 = vmatprep.subr.mxu0 0.0
    %7800 = vmatpush1.msra.mxu0 %v7773
    %7801 = vmatprep.subr.mxu0 0.0
    %7802 = vmatpush1.msra.mxu0 %v7774
    %7803 = vmatprep.subr.mxu0 0.0
    %7804 = vmatpush1.msra.mxu0 %v7775
    %7805 = vmatprep.subr.mxu0 0.0
    %7806 = vmatpush1.msra.mxu0 %v7776
    %7807 = vmatprep.subr.mxu0 0.0
    %7808 = vmatpush1.msra.mxu0 %v7777
    %7809 = vmatprep.subr.mxu0 0.0
    %7810 = vmatpush1.msra.mxu0 %v7778
    %7811 = vmatprep.subr.mxu0 0.0
    %7812 = vmatpush1.msra.mxu0 %v7779
    %7813 = vmatprep.subr.mxu0 0.0
    %7814 = vmatpush1.msra.mxu0 %v7780
    %7815 = vmatprep.subr.mxu0 0.0
    %7816 = vmatpush1.msra.mxu0 %v7781
    %7817 = vmatprep.subr.mxu0 0.0
    %7818 = vmatpush1.msra.mxu0 %v7782
    %7819 = vmatprep.subr.mxu0 0.0
    %7820 = vmatpush1.msra.mxu0 %v7783
    %7821 = vmatprep.subr.mxu0 0.0
    %7822 = vmatpush1.msra.mxu0 %v7784
    %7823 = vmatprep.subr.mxu0 0.0
    %7824 = vmatpush1.msra.mxu0 %v7785
    %7825 = vmatprep.subr.mxu0 0.0
    %7826 = vmatpush1.msra.mxu0 0.0
    %7827 = vmatprep.subr.mxu0 0.0
    %7828 = vmatpush1.msra.mxu0 0.0
    %7829 = vmatprep.subr.mxu0 0.0
    %7830 = vmatpush1.msra.mxu0 0.0
    %7831 = vmatprep.subr.mxu0 0.0
    %7832 = vmatpush1.msra.mxu0 0.0
    %7833 = vmatprep.subr.mxu0 0.0
    %7834 = vmatpush1.msra.mxu0 0.0
    %7835 = vmatprep.subr.mxu0 0.0
    %7836 = vmatpush1.msra.mxu0 0.0
    %7837 = vmatprep.subr.mxu0 0.0
    %7838 = vmatpush1.msra.mxu0 0.0
    %7839 = vmatprep.subr.mxu0 0.0
    %7840 = vmatpush1.msra.mxu0 0.0
    %7841 = vmatprep.subr.mxu0 0.0
    %7842 = vmatpush1.msra.mxu0 0.0
    %7843 = vmatprep.subr.mxu0 0.0
    %7844 = vmatpush1.msra.mxu0 0.0
    %7845 = vmatprep.subr.mxu0 0.0
    %7846 = vmatpush1.msra.mxu0 0.0
    %7847 = vmatprep.subr.mxu0 0.0
    %7848 = vmatpush1.msra.mxu0 0.0
    %7849 = vmatprep.subr.mxu0 0.0
    %7850 = vmatpush1.msra.mxu0 0.0
    %7851 = vmatprep.subr.mxu0 0.0
    %7852 = vmatpush1.msra.mxu0 0.0
    %7853 = vmatprep.subr.mxu0 0.0
    %7854 = vmatpush1.msra.mxu0 0.0
    %7855 = vmatprep.subr.mxu0 0.0
    %7856 = vmatpush1.msra.mxu0 0.0
    %7857 = vmatprep.mubr.f32.mxu0 0.0
    %7858 = vmatmul.mubr.f32.gmra.mrb[0].mxu0 %v7769
    %v7859 = vpop.f32.mrb[0].mxu0
    %v7860 = vadd.f32 %v7791, %v7859
    %v7861 = vpop.f32.mrb[0].mxu0
    %7862 = vdwg.mxu0
    %7863 = vst [vmem:[#allocation5] sm:$0x3] %v7860
    // Predicated region
    $region60: #{cnn_forward.3} parent=1 // pred_check
      _
    $region61: #{cnn_forward.3} parent=1 // pred_check_branch
      %7865 = sbr.rel (0) target = $region63
    $region62: #{cnn_forward.3} parent=1 // pred_region
      %s7867 = ssub.s32 32, 32
      %7868 = vsyncadd [#allocation6], %s7867
      %s7870 = sshll.u32 [#allocation5], 4
      %s7871 = int_to_ptr.vmem [resolvable:$true] %s7870
      %7873 = dma.vmem_to_hbm [thread:$0]  %s7871, 32, %s7, [#allocation6]
    $region63: #{cnn_forward.3} parent=1 // pred_fallthru
      _
    // Predicated region
    $region64: #{cnn_forward.3} parent=1 // pred_check
      _
    $region65: #{cnn_forward.3} parent=1 // pred_check_branch
      %7875 = sbr.rel (0) target = $region67
    $region66: #{cnn_forward.3} parent=1 // pred_region
      %7876 = dma.done [#allocation6], 32
    $region67: #{cnn_forward.3} parent=1 // pred_fallthru
      _
    %7877 = vsyncpa [#allocation6], 1
  %7878 = vsyncmov [#allocation4]
  %s7879 = vpop.sfrf %7878
  %p7880 = scmp.eq.s32.totalorder %s7879, 0
  %p7881 = pneg %p7880
  %7883 = shalt.err (%p7881)

</llo_original>
